<compile_context>
chip_gen: v5e
topology: v5e:2x2
jax: 0.10.0
libtpu: 0.0.40
codegen_flags: <defaults>
</compile_context>

<pallas_src>
from functools import partial

import numpy as np
import jax
import jax.numpy as jnp
from jax.experimental import pallas as pl
from jax.experimental.pallas import tpu as pltpu

BIG2 = 1e30   # sentinel > any realistic squared pixel distance (only used inside where/min)


def _slots(n):
    return max(8, ((n + 7) // 8) * 8)


def _tiling(n_pix):
    """Pick (n_pad, tile_m, tile_n); both tiles divide n_pad."""
    n128 = ((n_pix + 127) // 128) * 128
    if n128 <= 2048:
        n_pad, tile_n = n128, n128
        tile_m = 256 if n128 % 256 == 0 else 128
    else:
        # TODO(synk): on v5e a TILE_M of 128 matches the 128-deep MXU contraction; 256 is
        # kept here for v6e/v7x (fills the 256-deep MXU, halves grid steps).
        tile_m, tile_n = 256, 2048
        n_pad = ((n_pix + tile_n - 1) // tile_n) * tile_n
    return n_pad, tile_m, tile_n


def _make_kernel(ls_slots, lg_slots, tile_n):
    def kernel(cnt_sref, ls_sref, lg_sref,                       # SMEM scalar prefetch
               s_mrow_ref,                                       # (1, TM)  S labels, m-tile
               s_col_ref, g_col_ref, y_col_ref, x_col_ref,       # (TM, 1)  m-tile, col orient.
               s_nrow_ref, g_nrow_ref, y_nrow_ref, x_nrow_ref,   # (1, TN)  n-tile, row orient.
               ls_col_ref, lg_row_ref,                           # (LS,1) / (1,LG) label vecs
               d1t_ref, d2_ref, inter_ref,                       # resident (tiny) outputs
               f_ref, gm_ref):                                   # (LG,TN)/(LS,TN) VMEM scratch
        nt = pl.program_id(0)
        mt = pl.program_id(1)
        n_ls = cnt_sref[0]
        n_lg = cnt_sref[1]

        @pl.when(jnp.logical_and(nt == 0, mt == 0))
        def _init_outputs():
            d1t_ref[...] = jnp.full((lg_slots, ls_slots), -1.0, jnp.float32)
            d2_ref[...] = jnp.full((ls_slots, lg_slots), -1.0, jnp.float32)
            inter_ref[...] = jnp.zeros((ls_slots, lg_slots), jnp.float32)

        @pl.when(mt == 0)
        def _init_scratch():
            f_ref[...] = jnp.full((lg_slots, tile_n), BIG2, jnp.float32)
            gm_ref[...] = jnp.full((ls_slots, tile_n), BIG2, jnp.float32)

        # Squared pairwise distances between m-tile pixels (sublanes) and n-tile pixels
        # (lanes); sqrt deferred to the tiny (LS, LG) result in the wrapper.
        dy = y_col_ref[...] - y_nrow_ref[...]                    # (TM, TN)
        dx = x_col_ref[...] - x_nrow_ref[...]
        dist2 = dy * dy + dx * dx

        # Running per-label masked mins: direct single-row scratch writes, padded label
        # slots skipped at runtime (these passes dominate the VALU budget).
        for j in range(lg_slots):
            @pl.when(j < n_lg)
            def _(j=j):
                msk = g_col_ref[...] == lg_sref[j]               # (TM, 1)
                pmin = jnp.min(jnp.where(msk, dist2, BIG2), axis=0, keepdims=True)
                f_ref[j:j + 1, :] = jnp.minimum(f_ref[j:j + 1, :], pmin)

        for i in range(ls_slots):
            @pl.when(i < n_ls)
            def _(i=i):
                msk = s_col_ref[...] == ls_sref[i]               # (TM, 1)
                pmin = jnp.min(jnp.where(msk, dist2, BIG2), axis=0, keepdims=True)
                gm_ref[i:i + 1, :] = jnp.minimum(gm_ref[i:i + 1, :], pmin)

        # Intersection counts on the MXU; each pixel counted once (first n-tile only).
        @pl.when(nt == 0)
        def _intersections():
            a_t = (s_mrow_ref[...] == ls_col_ref[...]).astype(jnp.float32)   # (LS, TM)
            b_t = (g_col_ref[...] == lg_row_ref[...]).astype(jnp.float32)    # (TM, LG)
            inter_ref[...] += jnp.dot(a_t, b_t, preferred_element_type=jnp.float32)

        # Once the m sweep for this n-tile finishes, its distance-field slice is complete:
        # fold the lane-masked max into the resident outputs (running max over n-tiles).
        @pl.when(mt == pl.num_programs(1) - 1)
        def _finalize():
            lane1 = jax.lax.broadcasted_iota(jnp.int32, (lg_slots, ls_slots), 1)
            part1 = jnp.full((lg_slots, ls_slots), -1.0, jnp.float32)
            for i in range(ls_slots):
                arow = s_nrow_ref[...] == ls_sref[i]                         # (1, TN)
                col = jnp.max(jnp.where(arow, f_ref[...], -1.0),
                              axis=-1, keepdims=True)                        # (LG, 1)
                part1 = jnp.where(lane1 == i, col, part1)
            d1t_ref[...] = jnp.maximum(d1t_ref[...], part1)

            lane2 = jax.lax.broadcasted_iota(jnp.int32, (ls_slots, lg_slots), 1)
            part2 = jnp.full((ls_slots, lg_slots), -1.0, jnp.float32)
            for j in range(lg_slots):
                brow = g_nrow_ref[...] == lg_sref[j]                         # (1, TN)
                col = jnp.max(jnp.where(brow, gm_ref[...], -1.0),
                              axis=-1, keepdims=True)                        # (LS, 1)
                part2 = jnp.where(lane2 == j, col, part2)
            d2_ref[...] = jnp.maximum(d2_ref[...], part2)

    return kernel


@partial(jax.jit, static_argnames=("ls_slots", "lg_slots", "tile_m", "tile_n", "n_pad"))
def _pairwise_hausdorff_sq(counts, ls_arr, lg_arr,
                           s_row, g_row, y_row, x_row,
                           s_col, g_col, y_col, x_col,
                           *, ls_slots, lg_slots, tile_m, tile_n, n_pad):
    num_nt = n_pad // tile_n
    num_mt = n_pad // tile_m
    ls_col2 = ls_arr.reshape(ls_slots, 1)
    lg_row2 = lg_arr.reshape(1, lg_slots)

    const_blk = lambda nt, mt, *_: (0, 0)
    m_row = lambda nt, mt, *_: (0, mt)
    m_col = lambda nt, mt, *_: (mt, 0)
    n_row = lambda nt, mt, *_: (0, nt)

    grid_spec = pltpu.PrefetchScalarGridSpec(
        num_scalar_prefetch=3,
        grid=(num_nt, num_mt),
        in_specs=[
            pl.BlockSpec((1, tile_m), m_row),        # S labels, m-tile (matmul LHS)
            pl.BlockSpec((tile_m, 1), m_col),        # S labels, m-tile (mask column)
            pl.BlockSpec((tile_m, 1), m_col),        # G labels, m-tile (mask col / matmul RHS)
            pl.BlockSpec((tile_m, 1), m_col),        # y coords, m-tile
            pl.BlockSpec((tile_m, 1), m_col),        # x coords, m-tile
            pl.BlockSpec((1, tile_n), n_row),        # S labels, n-tile (finalize mask)
            pl.BlockSpec((1, tile_n), n_row),        # G labels, n-tile (finalize mask)
            pl.BlockSpec((1, tile_n), n_row),        # y coords, n-tile
            pl.BlockSpec((1, tile_n), n_row),        # x coords, n-tile
            pl.BlockSpec((ls_slots, 1), const_blk),  # S label table (column vector)
            pl.BlockSpec((1, lg_slots), const_blk),  # G label table (row vector)
        ],
        out_specs=(
            pl.BlockSpec((lg_slots, ls_slots), const_blk),   # d1^T: Hausdorff^2 Si->Gj (transposed)
            pl.BlockSpec((ls_slots, lg_slots), const_blk),   # d2:   Hausdorff^2 Gj->Si
            pl.BlockSpec((ls_slots, lg_slots), const_blk),   # intersection pixel counts
        ),
        scratch_shapes=[
            pltpu.VMEM((lg_slots, tile_n), jnp.float32),     # min dist^2 to each G label (n-slice)
            pltpu.VMEM((ls_slots, tile_n), jnp.float32),     # min dist^2 to each S label (n-slice)
        ],
    )
    return pl.pallas_call(
        _make_kernel(ls_slots, lg_slots, tile_n),
        out_shape=(jax.ShapeDtypeStruct((lg_slots, ls_slots), jnp.float32),
                   jax.ShapeDtypeStruct((ls_slots, lg_slots), jnp.float32),
                   jax.ShapeDtypeStruct((ls_slots, lg_slots), jnp.float32)),
        grid_spec=grid_spec,
        compiler_params=pltpu.CompilerParams(
            # Both axes carry cross-step reductions (f/gm over mt, d1t/d2/inter over nt).
            # TODO(synk): v7x megacore -- make nt "parallel" with per-core partial d1t/d2
            # accumulators + a tiny reduce pass.
            dimension_semantics=("arbitrary", "arbitrary"),
            vmem_limit_bytes=32 * 1024 * 1024),
    )(counts, ls_arr, lg_arr,
      s_row, s_col, g_col, y_col, x_col,
      s_row, g_row, y_row, x_row,
      ls_col2, lg_row2)


def obj_haus_loss(S, G):
    """JAX/Pallas equivalent of ObjHausLoss.forward(S, G)."""
    # TODO(synk): torch.unique / len() / Python branching are data-dependent; label
    # discovery runs host-side.  The kernel is label-set agnostic (label tables + real
    # counts are runtime SMEM inputs), so it only recompiles when shape buckets change.
    S_np = np.asarray(S).astype(np.int32)
    G_np = np.asarray(G).astype(np.int32)
    assert S_np.ndim == 2 and S_np.shape == G_np.shape
    labels_s = [int(v) for v in np.unique(S_np) if v != 0]
    labels_g = [int(v) for v in np.unique(G_np) if v != 0]
    n_ls, n_lg = len(labels_s), len(labels_g)
    if n_ls == 0:
        return jnp.float32(np.nan)
    if n_lg == 0:
        raise ValueError("ObjHausLoss is undefined for numG == 0 (reference errors too)")

    h_img, w_img = S_np.shape
    n_pix = h_img * w_img
    n_pad, tile_m, tile_n = _tiling(n_pix)
    ls_slots, lg_slots = _slots(n_ls), _slots(n_lg)

    # Sentinels derived from the data so even negative labels can never collide.
    min_lbl = int(min(S_np.min(), G_np.min(), 0))
    pad_pixel = min_lbl - 1   # label of padding pixels (matches no real label slot)
    pad_label = min_lbl - 2   # label of unused label-table slots (matches no pixel)

    s_flat = np.full((n_pad,), pad_pixel, np.int32); s_flat[:n_pix] = S_np.reshape(-1)
    g_flat = np.full((n_pad,), pad_pixel, np.int32); g_flat[:n_pix] = G_np.reshape(-1)
    idx = np.arange(n_pix, dtype=np.int64)
    yy = np.zeros((n_pad,), np.float32); yy[:n_pix] = (idx // w_img).astype(np.float32)
    xx = np.zeros((n_pad,), np.float32); xx[:n_pix] = (idx % w_img).astype(np.float32)
    ls_arr = np.full((ls_slots,), pad_label, np.int32); ls_arr[:n_ls] = labels_s
    lg_arr = np.full((lg_slots,), pad_label, np.int32); lg_arr[:n_lg] = labels_g
    counts = np.array([n_ls, n_lg], np.int32)

    d1t, d2, inter_pad = _pairwise_hausdorff_sq(
        jnp.asarray(counts), jnp.asarray(ls_arr), jnp.asarray(lg_arr),
        jnp.asarray(s_flat.reshape(1, n_pad)), jnp.asarray(g_flat.reshape(1, n_pad)),
        jnp.asarray(yy.reshape(1, n_pad)), jnp.asarray(xx.reshape(1, n_pad)),
        jnp.asarray(s_flat.reshape(n_pad, 1)), jnp.asarray(g_flat.reshape(n_pad, 1)),
        jnp.asarray(yy.reshape(n_pad, 1)), jnp.asarray(xx.reshape(n_pad, 1)),
        ls_slots=ls_slots, lg_slots=lg_slots,
        tile_m=tile_m, tile_n=tile_n, n_pad=n_pad)

    # Symmetric Hausdorff distance; sqrt only on the tiny final (LS, LG) matrix.
    h2 = jnp.maximum(d1t.T[:n_ls, :n_lg], d2[:n_ls, :n_lg])
    h_mat = jnp.sqrt(jnp.maximum(h2, 0.0))
    inter = inter_pad[:n_ls, :n_lg]

    # Areas: single vectorized compare-and-reduce per image (no per-label XLA launches).
    S_flat_dev = jnp.asarray(S_np.reshape(-1))
    G_flat_dev = jnp.asarray(G_np.reshape(-1))
    total_area_s = jnp.sum(S_flat_dev > 0).astype(jnp.float32)
    total_area_g = jnp.sum(G_flat_dev > 0).astype(jnp.float32)
    ls_dev = jnp.asarray(np.asarray(labels_s, np.int32))
    lg_dev = jnp.asarray(np.asarray(labels_g, np.int32))
    area_s = jnp.sum((S_flat_dev[None, :] == ls_dev[:, None]).astype(jnp.float32), axis=1)
    area_g = jnp.sum((G_flat_dev[None, :] == lg_dev[:, None]).astype(jnp.float32), axis=1)

    # For each S label: matched G label = argmax of intersection counts (ties -> smallest
    # label; labels sorted ascending so this matches bincount-argmax), else argmin Hausdorff.
    match_s = jnp.where(jnp.sum(inter, axis=1) > 0,
                        jnp.argmax(inter, axis=1), jnp.argmin(h_mat, axis=1))
    h_s = h_mat[jnp.arange(n_ls), match_s]
    temp1 = jnp.sum((area_s / total_area_s) * h_s)

    match_g = jnp.where(jnp.sum(inter, axis=0) > 0,
                        jnp.argmax(inter, axis=0), jnp.argmin(h_mat, axis=0))
    h_g = h_mat[match_g, jnp.arange(n_lg)]
    temp2 = jnp.sum((area_g / total_area_g) * h_g)

    return (temp1 + temp2) / 2.0


# ----------------------- pure-numpy reference (for validation) -----------------------
def _haus_np(A, B):
    pa = np.argwhere(A).astype(np.float64)
    pb = np.argwhere(B).astype(np.float64)
    d = np.sqrt(((pa[:, None, :] - pb[None, :, :]) ** 2).sum(-1))
    return max(d.min(axis=1).max(), d.min(axis=0).max())


def obj_haus_ref(S, G):
    S = np.asarray(S)
    G = np.asarray(G)
    total_s = float((S > 0).sum())
    total_g = float((G > 0).sum())
    l_s = np.unique(S); l_s = l_s[l_s != 0]
    l_g = np.unique(G); l_g = l_g[l_g != 0]
    if len(l_s) == 0:
        return float("nan")
    temp1 = 0.0
    for ls in l_s:
        Si = S == ls
        inter = G[Si]; inter = inter[inter != 0]
        if len(inter):
            Gi = G == np.argmax(np.bincount(inter))
        else:
            dists = [_haus_np(G == lg, Si) for lg in l_g]
            Gi = G == l_g[int(np.argmin(dists))]
        temp1 += (Si.sum() / total_s) * _haus_np(Gi, Si)
    temp2 = 0.0
    for lg in l_g:
        Gj = G == lg
        inter = S[Gj]; inter = inter[inter != 0]
        if len(inter):
            Sj = S == np.argmax(np.bincount(inter))
        else:
            dists = [_haus_np(S == ls, Gj) for ls in l_s]
            Sj = S == l_s[int(np.argmin(dists))]
        temp2 += (Gj.sum() / total_g) * _haus_np(Gj, Sj)
    return (temp1 + temp2) / 2.0


if __name__ == "__main__":
    key = jax.random.PRNGKey(0)
    k1, k2, k3, k4 = jax.random.split(key, 4)

    # Case 1: tiny image -> single grid step (16x16, labels {0..3}).
    S1 = jax.random.randint(k1, (16, 16), 0, 4, dtype=jnp.int32)
    G1 = jax.random.randint(k2, (16, 16), 0, 4, dtype=jnp.int32)
    loss1 = jax.block_until_ready(obj_haus_loss(S1, G1))
    ref1 = obj_haus_ref(np.asarray(S1), np.asarray(G1))
    assert abs(float(loss1) - float(ref1)) < 1e-3, (float(loss1), float(ref1))

    # Case 2: exercises both grid axes (48x48 -> n_pad=4096, grid=(2, 16)) and the
    # runtime gating of padded label slots (5 real labels in 8 slots).
    S2 = jax.random.randint(k3, (48, 48), 0, 6, dtype=jnp.int32)
    G2 = jax.random.randint(k4, (48, 48), 0, 6, dtype=jnp.int32)
    loss2 = jax.block_until_ready(obj_haus_loss(S2, G2))
    ref2 = obj_haus_ref(np.asarray(S2), np.asarray(G2))
    assert abs(float(loss2) - float(ref2)) < 1e-3, (float(loss2), float(ref2))

    print("KERNEL_OK")
</pallas_src>

<mosaic_0001>
module attributes {stable_mosaic.version = 11 : i64} {
  func.func @kernel(%arg0: i32, %arg1: i32, %arg2: memref<2xi32, #tpu.memory_space<smem>>, %arg3: memref<8xi32, #tpu.memory_space<smem>>, %arg4: memref<8xi32, #tpu.memory_space<smem>>, %arg5: memref<1x256xi32, #tpu.memory_space<vmem>>, %arg6: memref<256x1xi32, #tpu.memory_space<vmem>>, %arg7: memref<256x1xi32, #tpu.memory_space<vmem>>, %arg8: memref<256x1xf32, #tpu.memory_space<vmem>>, %arg9: memref<256x1xf32, #tpu.memory_space<vmem>>, %arg10: memref<1x256xi32, #tpu.memory_space<vmem>>, %arg11: memref<1x256xi32, #tpu.memory_space<vmem>>, %arg12: memref<1x256xf32, #tpu.memory_space<vmem>>, %arg13: memref<1x256xf32, #tpu.memory_space<vmem>>, %arg14: memref<8x1xi32, #tpu.memory_space<vmem>>, %arg15: memref<1x8xi32, #tpu.memory_space<vmem>>, %arg16: memref<8x8xf32, #tpu.memory_space<vmem>>, %arg17: memref<8x8xf32, #tpu.memory_space<vmem>>, %arg18: memref<8x8xf32, #tpu.memory_space<vmem>>, %arg19: memref<8x256xf32, #tpu.memory_space<vmem>>, %arg20: memref<8x256xf32, #tpu.memory_space<vmem>>) attributes {dimension_semantics = [#tpu.dimension_semantics<arbitrary>, #tpu.dimension_semantics<arbitrary>], iteration_bounds = array<i64: 1, 1>, scalar_prefetch = 3 : i64, scratch_operands = 2 : i64, tpu.core_type = #tpu.core_type<tc>, window_params = [{transform_indices = @transform_0, window_bounds = array<i64: 1, 256>}, {transform_indices = @transform_1, window_bounds = array<i64: 256, 1>}, {transform_indices = @transform_2, window_bounds = array<i64: 256, 1>}, {transform_indices = @transform_3, window_bounds = array<i64: 256, 1>}, {transform_indices = @transform_4, window_bounds = array<i64: 256, 1>}, {transform_indices = @transform_5, window_bounds = array<i64: 1, 256>}, {transform_indices = @transform_6, window_bounds = array<i64: 1, 256>}, {transform_indices = @transform_7, window_bounds = array<i64: 1, 256>}, {transform_indices = @transform_8, window_bounds = array<i64: 1, 256>}, {pipeline_mode = #tpu.pipeline_mode<synchronous>, transform_indices = @transform_9, window_bounds = array<i64: 8, 1>}, {pipeline_mode = #tpu.pipeline_mode<synchronous>, transform_indices = @transform_10, window_bounds = array<i64: 1, 8>}, {pipeline_mode = #tpu.pipeline_mode<synchronous>, transform_indices = @transform_11, window_bounds = array<i64: 8, 8>}, {pipeline_mode = #tpu.pipeline_mode<synchronous>, transform_indices = @transform_12, window_bounds = array<i64: 8, 8>}, {pipeline_mode = #tpu.pipeline_mode<synchronous>, transform_indices = @transform_13, window_bounds = array<i64: 8, 8>}]} {
    %c0 = arith.constant 0 : index
    %0 = memref.load %arg2[%c0] : memref<2xi32, #tpu.memory_space<smem>>
    %c1 = arith.constant 1 : index
    %1 = memref.load %arg2[%c1] : memref<2xi32, #tpu.memory_space<smem>>
    %c0_i32 = arith.constant 0 : i32
    %2 = arith.cmpi eq, %arg0, %c0_i32 : i32
    %c0_i32_0 = arith.constant 0 : i32
    %3 = arith.cmpi eq, %arg1, %c0_i32_0 : i32
    %4 = arith.andi %2, %3 : i1
    %5 = arith.extui %4 : i1 to i32
    %c0_i32_1 = arith.constant 0 : i32
    %6 = arith.cmpi ne, %5, %c0_i32_1 : i32
    scf.if %6 {
      %cst = arith.constant -1.000000e+00 : f32
      %77 = vector.broadcast %cst : f32 to vector<8x8xf32>
      %c0_41 = arith.constant 0 : index
      %c0_42 = arith.constant 0 : index
      %78 = vector.load %arg16[%c0_41, %c0_42] : memref<8x8xf32, #tpu.memory_space<vmem>>, vector<8x8xf32>
      tpu.vector_store %arg16[%c0_41, %c0_42], %77 {strides = array<i32>} : memref<8x8xf32, #tpu.memory_space<vmem>>, vector<8x8xf32>,
      %cst_43 = arith.constant -1.000000e+00 : f32
      %79 = vector.broadcast %cst_43 : f32 to vector<8x8xf32>
      %c0_44 = arith.constant 0 : index
      %c0_45 = arith.constant 0 : index
      %80 = vector.load %arg17[%c0_44, %c0_45] : memref<8x8xf32, #tpu.memory_space<vmem>>, vector<8x8xf32>
      tpu.vector_store %arg17[%c0_44, %c0_45], %79 {strides = array<i32>} : memref<8x8xf32, #tpu.memory_space<vmem>>, vector<8x8xf32>,
      %cst_46 = arith.constant 0.000000e+00 : f32
      %81 = vector.broadcast %cst_46 : f32 to vector<8x8xf32>
      %c0_47 = arith.constant 0 : index
      %c0_48 = arith.constant 0 : index
      %82 = vector.load %arg18[%c0_47, %c0_48] : memref<8x8xf32, #tpu.memory_space<vmem>>, vector<8x8xf32>
      tpu.vector_store %arg18[%c0_47, %c0_48], %81 {strides = array<i32>} : memref<8x8xf32, #tpu.memory_space<vmem>>, vector<8x8xf32>,
    } else {
    }
    %c0_i32_2 = arith.constant 0 : i32
    %7 = arith.cmpi eq, %arg1, %c0_i32_2 : i32
    %8 = arith.extui %7 : i1 to i32
    %c0_i32_3 = arith.constant 0 : i32
    %9 = arith.cmpi ne, %8, %c0_i32_3 : i32
    scf.if %9 {
      %cst = arith.constant 1.000000e+30 : f32
      %77 = vector.broadcast %cst : f32 to vector<8x256xf32>
      %c0_41 = arith.constant 0 : index
      %c0_42 = arith.constant 0 : index
      %78 = vector.load %arg19[%c0_41, %c0_42] : memref<8x256xf32, #tpu.memory_space<vmem>>, vector<8x256xf32>
      tpu.vector_store %arg19[%c0_41, %c0_42], %77 {strides = array<i32>} : memref<8x256xf32, #tpu.memory_space<vmem>>, vector<8x256xf32>,
      %cst_43 = arith.constant 1.000000e+30 : f32
      %79 = vector.broadcast %cst_43 : f32 to vector<8x256xf32>
      %c0_44 = arith.constant 0 : index
      %c0_45 = arith.constant 0 : index
      %80 = vector.load %arg20[%c0_44, %c0_45] : memref<8x256xf32, #tpu.memory_space<vmem>>, vector<8x256xf32>
      tpu.vector_store %arg20[%c0_44, %c0_45], %79 {strides = array<i32>} : memref<8x256xf32, #tpu.memory_space<vmem>>, vector<8x256xf32>,
    } else {
    }
    %c0_4 = arith.constant 0 : index
    %c0_5 = arith.constant 0 : index
    %10 = vector.load %arg8[%c0_4, %c0_5] : memref<256x1xf32, #tpu.memory_space<vmem>>, vector<256x1xf32>
    %c0_6 = arith.constant 0 : index
    %c0_7 = arith.constant 0 : index
    %11 = vector.load %arg12[%c0_6, %c0_7] : memref<1x256xf32, #tpu.memory_space<vmem>>, vector<1x256xf32>
    %12 = vector.broadcast %10 : vector<256x1xf32> to vector<256x256xf32>
    %13 = vector.broadcast %11 : vector<1x256xf32> to vector<256x256xf32>
    %14 = arith.subf %12, %13 : vector<256x256xf32>
    %c0_8 = arith.constant 0 : index
    %c0_9 = arith.constant 0 : index
    %15 = vector.load %arg9[%c0_8, %c0_9] : memref<256x1xf32, #tpu.memory_space<vmem>>, vector<256x1xf32>
    %c0_10 = arith.constant 0 : index
    %c0_11 = arith.constant 0 : index
    %16 = vector.load %arg13[%c0_10, %c0_11] : memref<1x256xf32, #tpu.memory_space<vmem>>, vector<1x256xf32>
    %17 = vector.broadcast %15 : vector<256x1xf32> to vector<256x256xf32>
    %18 = vector.broadcast %16 : vector<1x256xf32> to vector<256x256xf32>
    %19 = arith.subf %17, %18 : vector<256x256xf32>
    %20 = arith.mulf %14, %14 : vector<256x256xf32>
    %21 = arith.mulf %19, %19 : vector<256x256xf32>
    %22 = arith.addf %20, %21 : vector<256x256xf32>
    %c0_i32_12 = arith.constant 0 : i32
    %23 = arith.cmpi sgt, %1, %c0_i32_12 : i32
    %24 = arith.extui %23 : i1 to i32
    %c0_i32_13 = arith.constant 0 : i32
    %25 = arith.cmpi ne, %24, %c0_i32_13 : i32
    scf.if %25 {
      %c0_41 = arith.constant 0 : index
      %c0_42 = arith.constant 0 : index
      %77 = vector.load %arg7[%c0_41, %c0_42] : memref<256x1xi32, #tpu.memory_space<vmem>>, vector<256x1xi32>
      %c0_43 = arith.constant 0 : index
      %78 = memref.load %arg4[%c0_43] : memref<8xi32, #tpu.memory_space<smem>>
      %79 = vector.broadcast %78 : i32 to vector<256x1xi32>
      %80 = arith.cmpi eq, %77, %79 : vector<256x1xi32>
      %cst = arith.constant 1.000000e+30 : f32
      %81 = vector.shape_cast %80 : vector<256x1xi1> to vector<256x1xi1>
      %82 = vector.broadcast %81 : vector<256x1xi1> to vector<256x256xi1>
      %83 = vector.broadcast %cst : f32 to vector<256x256xf32>
      %84 = arith.select %82, %22, %83 : vector<256x256xi1>, vector<256x256xf32>
      %cst_44 = arith.constant dense<0x7F800000> : vector<256xf32>
      %85 = vector.multi_reduction <minimumf>, %84, %cst_44 [0] : vector<256x256xf32> to vector<256xf32>
      %86 = vector.shape_cast %85 : vector<256xf32> to vector<1x256xf32>
      %c0_45 = arith.constant 0 : index
      %c0_46 = arith.constant 0 : index
      %87 = vector.load %arg19[%c0_45, %c0_46] : memref<8x256xf32, #tpu.memory_space<vmem>>, vector<1x256xf32>
      %88 = arith.minimumf %87, %86 : vector<1x256xf32>
      %c0_47 = arith.constant 0 : index
      %c0_48 = arith.constant 0 : index
      %89 = vector.load %arg19[%c0_47, %c0_48] : memref<8x256xf32, #tpu.memory_space<vmem>>, vector<1x256xf32>
      tpu.vector_store %arg19[%c0_47, %c0_48], %88 {strides = array<i32>} : memref<8x256xf32, #tpu.memory_space<vmem>>, vector<1x256xf32>,
    } else {
    }
    %c1_i32 = arith.constant 1 : i32
    %26 = arith.cmpi sgt, %1, %c1_i32 : i32
    %27 = arith.extui %26 : i1 to i32
    %c0_i32_14 = arith.constant 0 : i32
    %28 = arith.cmpi ne, %27, %c0_i32_14 : i32
    scf.if %28 {
      %c0_41 = arith.constant 0 : index
      %c0_42 = arith.constant 0 : index
      %77 = vector.load %arg7[%c0_41, %c0_42] : memref<256x1xi32, #tpu.memory_space<vmem>>, vector<256x1xi32>
      %c1_43 = arith.constant 1 : index
      %78 = memref.load %arg4[%c1_43] : memref<8xi32, #tpu.memory_space<smem>>
      %79 = vector.broadcast %78 : i32 to vector<256x1xi32>
      %80 = arith.cmpi eq, %77, %79 : vector<256x1xi32>
      %cst = arith.constant 1.000000e+30 : f32
      %81 = vector.shape_cast %80 : vector<256x1xi1> to vector<256x1xi1>
      %82 = vector.broadcast %81 : vector<256x1xi1> to vector<256x256xi1>
      %83 = vector.broadcast %cst : f32 to vector<256x256xf32>
      %84 = arith.select %82, %22, %83 : vector<256x256xi1>, vector<256x256xf32>
      %cst_44 = arith.constant dense<0x7F800000> : vector<256xf32>
      %85 = vector.multi_reduction <minimumf>, %84, %cst_44 [0] : vector<256x256xf32> to vector<256xf32>
      %86 = vector.shape_cast %85 : vector<256xf32> to vector<1x256xf32>
      %c1_45 = arith.constant 1 : index
      %c0_46 = arith.constant 0 : index
      %87 = vector.load %arg19[%c1_45, %c0_46] : memref<8x256xf32, #tpu.memory_space<vmem>>, vector<1x256xf32>
      %88 = arith.minimumf %87, %86 : vector<1x256xf32>
      %c1_47 = arith.constant 1 : index
      %c0_48 = arith.constant 0 : index
      %89 = vector.load %arg19[%c1_47, %c0_48] : memref<8x256xf32, #tpu.memory_space<vmem>>, vector<1x256xf32>
      tpu.vector_store %arg19[%c1_47, %c0_48], %88 {strides = array<i32>} : memref<8x256xf32, #tpu.memory_space<vmem>>, vector<1x256xf32>,
    } else {
    }
    %c2_i32 = arith.constant 2 : i32
    %29 = arith.cmpi sgt, %1, %c2_i32 : i32
    %30 = arith.extui %29 : i1 to i32
    %c0_i32_15 = arith.constant 0 : i32
    %31 = arith.cmpi ne, %30, %c0_i32_15 : i32
    scf.if %31 {
      %c0_41 = arith.constant 0 : index
      %c0_42 = arith.constant 0 : index
      %77 = vector.load %arg7[%c0_41, %c0_42] : memref<256x1xi32, #tpu.memory_space<vmem>>, vector<256x1xi32>
      %c2 = arith.constant 2 : index
      %78 = memref.load %arg4[%c2] : memref<8xi32, #tpu.memory_space<smem>>
      %79 = vector.broadcast %78 : i32 to vector<256x1xi32>
      %80 = arith.cmpi eq, %77, %79 : vector<256x1xi32>
      %cst = arith.constant 1.000000e+30 : f32
      %81 = vector.shape_cast %80 : vector<256x1xi1> to vector<256x1xi1>
      %82 = vector.broadcast %81 : vector<256x1xi1> to vector<256x256xi1>
      %83 = vector.broadcast %cst : f32 to vector<256x256xf32>
      %84 = arith.select %82, %22, %83 : vector<256x256xi1>, vector<256x256xf32>
      %cst_43 = arith.constant dense<0x7F800000> : vector<256xf32>
      %85 = vector.multi_reduction <minimumf>, %84, %cst_43 [0] : vector<256x256xf32> to vector<256xf32>
      %86 = vector.shape_cast %85 : vector<256xf32> to vector<1x256xf32>
      %c2_44 = arith.constant 2 : index
      %c0_45 = arith.constant 0 : index
      %87 = vector.load %arg19[%c2_44, %c0_45] : memref<8x256xf32, #tpu.memory_space<vmem>>, vector<1x256xf32>
      %88 = arith.minimumf %87, %86 : vector<1x256xf32>
      %c2_46 = arith.constant 2 : index
      %c0_47 = arith.constant 0 : index
      %89 = vector.load %arg19[%c2_46, %c0_47] : memref<8x256xf32, #tpu.memory_space<vmem>>, vector<1x256xf32>
      tpu.vector_store %arg19[%c2_46, %c0_47], %88 {strides = array<i32>} : memref<8x256xf32, #tpu.memory_space<vmem>>, vector<1x256xf32>,
    } else {
    }
    %c3_i32 = arith.constant 3 : i32
    %32 = arith.cmpi sgt, %1, %c3_i32 : i32
    %33 = arith.extui %32 : i1 to i32
    %c0_i32_16 = arith.constant 0 : i32
    %34 = arith.cmpi ne, %33, %c0_i32_16 : i32
    scf.if %34 {
      %c0_41 = arith.constant 0 : index
      %c0_42 = arith.constant 0 : index
      %77 = vector.load %arg7[%c0_41, %c0_42] : memref<256x1xi32, #tpu.memory_space<vmem>>, vector<256x1xi32>
      %c3 = arith.constant 3 : index
      %78 = memref.load %arg4[%c3] : memref<8xi32, #tpu.memory_space<smem>>
      %79 = vector.broadcast %78 : i32 to vector<256x1xi32>
      %80 = arith.cmpi eq, %77, %79 : vector<256x1xi32>
      %cst = arith.constant 1.000000e+30 : f32
      %81 = vector.shape_cast %80 : vector<256x1xi1> to vector<256x1xi1>
      %82 = vector.broadcast %81 : vector<256x1xi1> to vector<256x256xi1>
      %83 = vector.broadcast %cst : f32 to vector<256x256xf32>
      %84 = arith.select %82, %22, %83 : vector<256x256xi1>, vector<256x256xf32>
      %cst_43 = arith.constant dense<0x7F800000> : vector<256xf32>
      %85 = vector.multi_reduction <minimumf>, %84, %cst_43 [0] : vector<256x256xf32> to vector<256xf32>
      %86 = vector.shape_cast %85 : vector<256xf32> to vector<1x256xf32>
      %c3_44 = arith.constant 3 : index
      %c0_45 = arith.constant 0 : index
      %87 = vector.load %arg19[%c3_44, %c0_45] : memref<8x256xf32, #tpu.memory_space<vmem>>, vector<1x256xf32>
      %88 = arith.minimumf %87, %86 : vector<1x256xf32>
      %c3_46 = arith.constant 3 : index
      %c0_47 = arith.constant 0 : index
      %89 = vector.load %arg19[%c3_46, %c0_47] : memref<8x256xf32, #tpu.memory_space<vmem>>, vector<1x256xf32>
      tpu.vector_store %arg19[%c3_46, %c0_47], %88 {strides = array<i32>} : memref<8x256xf32, #tpu.memory_space<vmem>>, vector<1x256xf32>,
    } else {
    }
    %c4_i32 = arith.constant 4 : i32
    %35 = arith.cmpi sgt, %1, %c4_i32 : i32
    %36 = arith.extui %35 : i1 to i32
    %c0_i32_17 = arith.constant 0 : i32
    %37 = arith.cmpi ne, %36, %c0_i32_17 : i32
    scf.if %37 {
      %c0_41 = arith.constant 0 : index
      %c0_42 = arith.constant 0 : index
      %77 = vector.load %arg7[%c0_41, %c0_42] : memref<256x1xi32, #tpu.memory_space<vmem>>, vector<256x1xi32>
      %c4 = arith.constant 4 : index
      %78 = memref.load %arg4[%c4] : memref<8xi32, #tpu.memory_space<smem>>
      %79 = vector.broadcast %78 : i32 to vector<256x1xi32>
      %80 = arith.cmpi eq, %77, %79 : vector<256x1xi32>
      %cst = arith.constant 1.000000e+30 : f32
      %81 = vector.shape_cast %80 : vector<256x1xi1> to vector<256x1xi1>
      %82 = vector.broadcast %81 : vector<256x1xi1> to vector<256x256xi1>
      %83 = vector.broadcast %cst : f32 to vector<256x256xf32>
      %84 = arith.select %82, %22, %83 : vector<256x256xi1>, vector<256x256xf32>
      %cst_43 = arith.constant dense<0x7F800000> : vector<256xf32>
      %85 = vector.multi_reduction <minimumf>, %84, %cst_43 [0] : vector<256x256xf32> to vector<256xf32>
      %86 = vector.shape_cast %85 : vector<256xf32> to vector<1x256xf32>
      %c4_44 = arith.constant 4 : index
      %c0_45 = arith.constant 0 : index
      %87 = vector.load %arg19[%c4_44, %c0_45] : memref<8x256xf32, #tpu.memory_space<vmem>>, vector<1x256xf32>
      %88 = arith.minimumf %87, %86 : vector<1x256xf32>
      %c4_46 = arith.constant 4 : index
      %c0_47 = arith.constant 0 : index
      %89 = vector.load %arg19[%c4_46, %c0_47] : memref<8x256xf32, #tpu.memory_space<vmem>>, vector<1x256xf32>
      tpu.vector_store %arg19[%c4_46, %c0_47], %88 {strides = array<i32>} : memref<8x256xf32, #tpu.memory_space<vmem>>, vector<1x256xf32>,
    } else {
    }
    %c5_i32 = arith.constant 5 : i32
    %38 = arith.cmpi sgt, %1, %c5_i32 : i32
    %39 = arith.extui %38 : i1 to i32
    %c0_i32_18 = arith.constant 0 : i32
    %40 = arith.cmpi ne, %39, %c0_i32_18 : i32
    scf.if %40 {
      %c0_41 = arith.constant 0 : index
      %c0_42 = arith.constant 0 : index
      %77 = vector.load %arg7[%c0_41, %c0_42] : memref<256x1xi32, #tpu.memory_space<vmem>>, vector<256x1xi32>
      %c5 = arith.constant 5 : index
      %78 = memref.load %arg4[%c5] : memref<8xi32, #tpu.memory_space<smem>>
      %79 = vector.broadcast %78 : i32 to vector<256x1xi32>
      %80 = arith.cmpi eq, %77, %79 : vector<256x1xi32>
      %cst = arith.constant 1.000000e+30 : f32
      %81 = vector.shape_cast %80 : vector<256x1xi1> to vector<256x1xi1>
      %82 = vector.broadcast %81 : vector<256x1xi1> to vector<256x256xi1>
      %83 = vector.broadcast %cst : f32 to vector<256x256xf32>
      %84 = arith.select %82, %22, %83 : vector<256x256xi1>, vector<256x256xf32>
      %cst_43 = arith.constant dense<0x7F800000> : vector<256xf32>
      %85 = vector.multi_reduction <minimumf>, %84, %cst_43 [0] : vector<256x256xf32> to vector<256xf32>
      %86 = vector.shape_cast %85 : vector<256xf32> to vector<1x256xf32>
      %c5_44 = arith.constant 5 : index
      %c0_45 = arith.constant 0 : index
      %87 = vector.load %arg19[%c5_44, %c0_45] : memref<8x256xf32, #tpu.memory_space<vmem>>, vector<1x256xf32>
      %88 = arith.minimumf %87, %86 : vector<1x256xf32>
      %c5_46 = arith.constant 5 : index
      %c0_47 = arith.constant 0 : index
      %89 = vector.load %arg19[%c5_46, %c0_47] : memref<8x256xf32, #tpu.memory_space<vmem>>, vector<1x256xf32>
      tpu.vector_store %arg19[%c5_46, %c0_47], %88 {strides = array<i32>} : memref<8x256xf32, #tpu.memory_space<vmem>>, vector<1x256xf32>,
    } else {
    }
    %c6_i32 = arith.constant 6 : i32
    %41 = arith.cmpi sgt, %1, %c6_i32 : i32
    %42 = arith.extui %41 : i1 to i32
    %c0_i32_19 = arith.constant 0 : i32
    %43 = arith.cmpi ne, %42, %c0_i32_19 : i32
    scf.if %43 {
      %c0_41 = arith.constant 0 : index
      %c0_42 = arith.constant 0 : index
      %77 = vector.load %arg7[%c0_41, %c0_42] : memref<256x1xi32, #tpu.memory_space<vmem>>, vector<256x1xi32>
      %c6 = arith.constant 6 : index
      %78 = memref.load %arg4[%c6] : memref<8xi32, #tpu.memory_space<smem>>
      %79 = vector.broadcast %78 : i32 to vector<256x1xi32>
      %80 = arith.cmpi eq, %77, %79 : vector<256x1xi32>
      %cst = arith.constant 1.000000e+30 : f32
      %81 = vector.shape_cast %80 : vector<256x1xi1> to vector<256x1xi1>
      %82 = vector.broadcast %81 : vector<256x1xi1> to vector<256x256xi1>
      %83 = vector.broadcast %cst : f32 to vector<256x256xf32>
      %84 = arith.select %82, %22, %83 : vector<256x256xi1>, vector<256x256xf32>
      %cst_43 = arith.constant dense<0x7F800000> : vector<256xf32>
      %85 = vector.multi_reduction <minimumf>, %84, %cst_43 [0] : vector<256x256xf32> to vector<256xf32>
      %86 = vector.shape_cast %85 : vector<256xf32> to vector<1x256xf32>
      %c6_44 = arith.constant 6 : index
      %c0_45 = arith.constant 0 : index
      %87 = vector.load %arg19[%c6_44, %c0_45] : memref<8x256xf32, #tpu.memory_space<vmem>>, vector<1x256xf32>
      %88 = arith.minimumf %87, %86 : vector<1x256xf32>
      %c6_46 = arith.constant 6 : index
      %c0_47 = arith.constant 0 : index
      %89 = vector.load %arg19[%c6_46, %c0_47] : memref<8x256xf32, #tpu.memory_space<vmem>>, vector<1x256xf32>
      tpu.vector_store %arg19[%c6_46, %c0_47], %88 {strides = array<i32>} : memref<8x256xf32, #tpu.memory_space<vmem>>, vector<1x256xf32>,
    } else {
    }
    %c7_i32 = arith.constant 7 : i32
    %44 = arith.cmpi sgt, %1, %c7_i32 : i32
    %45 = arith.extui %44 : i1 to i32
    %c0_i32_20 = arith.constant 0 : i32
    %46 = arith.cmpi ne, %45, %c0_i32_20 : i32
    scf.if %46 {
      %c0_41 = arith.constant 0 : index
      %c0_42 = arith.constant 0 : index
      %77 = vector.load %arg7[%c0_41, %c0_42] : memref<256x1xi32, #tpu.memory_space<vmem>>, vector<256x1xi32>
      %c7 = arith.constant 7 : index
      %78 = memref.load %arg4[%c7] : memref<8xi32, #tpu.memory_space<smem>>
      %79 = vector.broadcast %78 : i32 to vector<256x1xi32>
      %80 = arith.cmpi eq, %77, %79 : vector<256x1xi32>
      %cst = arith.constant 1.000000e+30 : f32
      %81 = vector.shape_cast %80 : vector<256x1xi1> to vector<256x1xi1>
      %82 = vector.broadcast %81 : vector<256x1xi1> to vector<256x256xi1>
      %83 = vector.broadcast %cst : f32 to vector<256x256xf32>
      %84 = arith.select %82, %22, %83 : vector<256x256xi1>, vector<256x256xf32>
      %cst_43 = arith.constant dense<0x7F800000> : vector<256xf32>
      %85 = vector.multi_reduction <minimumf>, %84, %cst_43 [0] : vector<256x256xf32> to vector<256xf32>
      %86 = vector.shape_cast %85 : vector<256xf32> to vector<1x256xf32>
      %c7_44 = arith.constant 7 : index
      %c0_45 = arith.constant 0 : index
      %87 = vector.load %arg19[%c7_44, %c0_45] : memref<8x256xf32, #tpu.memory_space<vmem>>, vector<1x256xf32>
      %88 = arith.minimumf %87, %86 : vector<1x256xf32>
      %c7_46 = arith.constant 7 : index
      %c0_47 = arith.constant 0 : index
      %89 = vector.load %arg19[%c7_46, %c0_47] : memref<8x256xf32, #tpu.memory_space<vmem>>, vector<1x256xf32>
      tpu.vector_store %arg19[%c7_46, %c0_47], %88 {strides = array<i32>} : memref<8x256xf32, #tpu.memory_space<vmem>>, vector<1x256xf32>,
    } else {
    }
    %c0_i32_21 = arith.constant 0 : i32
    %47 = arith.cmpi sgt, %0, %c0_i32_21 : i32
    %48 = arith.extui %47 : i1 to i32
    %c0_i32_22 = arith.constant 0 : i32
    %49 = arith.cmpi ne, %48, %c0_i32_22 : i32
    scf.if %49 {
      %c0_41 = arith.constant 0 : index
      %c0_42 = arith.constant 0 : index
      %77 = vector.load %arg6[%c0_41, %c0_42] : memref<256x1xi32, #tpu.memory_space<vmem>>, vector<256x1xi32>
      %c0_43 = arith.constant 0 : index
      %78 = memref.load %arg3[%c0_43] : memref<8xi32, #tpu.memory_space<smem>>
      %79 = vector.broadcast %78 : i32 to vector<256x1xi32>
      %80 = arith.cmpi eq, %77, %79 : vector<256x1xi32>
      %cst = arith.constant 1.000000e+30 : f32
      %81 = vector.shape_cast %80 : vector<256x1xi1> to vector<256x1xi1>
      %82 = vector.broadcast %81 : vector<256x1xi1> to vector<256x256xi1>
      %83 = vector.broadcast %cst : f32 to vector<256x256xf32>
      %84 = arith.select %82, %22, %83 : vector<256x256xi1>, vector<256x256xf32>
      %cst_44 = arith.constant dense<0x7F800000> : vector<256xf32>
      %85 = vector.multi_reduction <minimumf>, %84, %cst_44 [0] : vector<256x256xf32> to vector<256xf32>
      %86 = vector.shape_cast %85 : vector<256xf32> to vector<1x256xf32>
      %c0_45 = arith.constant 0 : index
      %c0_46 = arith.constant 0 : index
      %87 = vector.load %arg20[%c0_45, %c0_46] : memref<8x256xf32, #tpu.memory_space<vmem>>, vector<1x256xf32>
      %88 = arith.minimumf %87, %86 : vector<1x256xf32>
      %c0_47 = arith.constant 0 : index
      %c0_48 = arith.constant 0 : index
      %89 = vector.load %arg20[%c0_47, %c0_48] : memref<8x256xf32, #tpu.memory_space<vmem>>, vector<1x256xf32>
      tpu.vector_store %arg20[%c0_47, %c0_48], %88 {strides = array<i32>} : memref<8x256xf32, #tpu.memory_space<vmem>>, vector<1x256xf32>,
    } else {
    }
    %c1_i32_23 = arith.constant 1 : i32
    %50 = arith.cmpi sgt, %0, %c1_i32_23 : i32
    %51 = arith.extui %50 : i1 to i32
    %c0_i32_24 = arith.constant 0 : i32
    %52 = arith.cmpi ne, %51, %c0_i32_24 : i32
    scf.if %52 {
      %c0_41 = arith.constant 0 : index
      %c0_42 = arith.constant 0 : index
      %77 = vector.load %arg6[%c0_41, %c0_42] : memref<256x1xi32, #tpu.memory_space<vmem>>, vector<256x1xi32>
      %c1_43 = arith.constant 1 : index
      %78 = memref.load %arg3[%c1_43] : memref<8xi32, #tpu.memory_space<smem>>
      %79 = vector.broadcast %78 : i32 to vector<256x1xi32>
      %80 = arith.cmpi eq, %77, %79 : vector<256x1xi32>
      %cst = arith.constant 1.000000e+30 : f32
      %81 = vector.shape_cast %80 : vector<256x1xi1> to vector<256x1xi1>
      %82 = vector.broadcast %81 : vector<256x1xi1> to vector<256x256xi1>
      %83 = vector.broadcast %cst : f32 to vector<256x256xf32>
      %84 = arith.select %82, %22, %83 : vector<256x256xi1>, vector<256x256xf32>
      %cst_44 = arith.constant dense<0x7F800000> : vector<256xf32>
      %85 = vector.multi_reduction <minimumf>, %84, %cst_44 [0] : vector<256x256xf32> to vector<256xf32>
      %86 = vector.shape_cast %85 : vector<256xf32> to vector<1x256xf32>
      %c1_45 = arith.constant 1 : index
      %c0_46 = arith.constant 0 : index
      %87 = vector.load %arg20[%c1_45, %c0_46] : memref<8x256xf32, #tpu.memory_space<vmem>>, vector<1x256xf32>
      %88 = arith.minimumf %87, %86 : vector<1x256xf32>
      %c1_47 = arith.constant 1 : index
      %c0_48 = arith.constant 0 : index
      %89 = vector.load %arg20[%c1_47, %c0_48] : memref<8x256xf32, #tpu.memory_space<vmem>>, vector<1x256xf32>
      tpu.vector_store %arg20[%c1_47, %c0_48], %88 {strides = array<i32>} : memref<8x256xf32, #tpu.memory_space<vmem>>, vector<1x256xf32>,
    } else {
    }
    %c2_i32_25 = arith.constant 2 : i32
    %53 = arith.cmpi sgt, %0, %c2_i32_25 : i32
    %54 = arith.extui %53 : i1 to i32
    %c0_i32_26 = arith.constant 0 : i32
    %55 = arith.cmpi ne, %54, %c0_i32_26 : i32
    scf.if %55 {
      %c0_41 = arith.constant 0 : index
      %c0_42 = arith.constant 0 : index
      %77 = vector.load %arg6[%c0_41, %c0_42] : memref<256x1xi32, #tpu.memory_space<vmem>>, vector<256x1xi32>
      %c2 = arith.constant 2 : index
      %78 = memref.load %arg3[%c2] : memref<8xi32, #tpu.memory_space<smem>>
      %79 = vector.broadcast %78 : i32 to vector<256x1xi32>
      %80 = arith.cmpi eq, %77, %79 : vector<256x1xi32>
      %cst = arith.constant 1.000000e+30 : f32
      %81 = vector.shape_cast %80 : vector<256x1xi1> to vector<256x1xi1>
      %82 = vector.broadcast %81 : vector<256x1xi1> to vector<256x256xi1>
      %83 = vector.broadcast %cst : f32 to vector<256x256xf32>
      %84 = arith.select %82, %22, %83 : vector<256x256xi1>, vector<256x256xf32>
      %cst_43 = arith.constant dense<0x7F800000> : vector<256xf32>
      %85 = vector.multi_reduction <minimumf>, %84, %cst_43 [0] : vector<256x256xf32> to vector<256xf32>
      %86 = vector.shape_cast %85 : vector<256xf32> to vector<1x256xf32>
      %c2_44 = arith.constant 2 : index
      %c0_45 = arith.constant 0 : index
      %87 = vector.load %arg20[%c2_44, %c0_45] : memref<8x256xf32, #tpu.memory_space<vmem>>, vector<1x256xf32>
      %88 = arith.minimumf %87, %86 : vector<1x256xf32>
      %c2_46 = arith.constant 2 : index
      %c0_47 = arith.constant 0 : index
      %89 = vector.load %arg20[%c2_46, %c0_47] : memref<8x256xf32, #tpu.memory_space<vmem>>, vector<1x256xf32>
      tpu.vector_store %arg20[%c2_46, %c0_47], %88 {strides = array<i32>} : memref<8x256xf32, #tpu.memory_space<vmem>>, vector<1x256xf32>,
    } else {
    }
    %c3_i32_27 = arith.constant 3 : i32
    %56 = arith.cmpi sgt, %0, %c3_i32_27 : i32
    %57 = arith.extui %56 : i1 to i32
    %c0_i32_28 = arith.constant 0 : i32
    %58 = arith.cmpi ne, %57, %c0_i32_28 : i32
    scf.if %58 {
      %c0_41 = arith.constant 0 : index
      %c0_42 = arith.constant 0 : index
      %77 = vector.load %arg6[%c0_41, %c0_42] : memref<256x1xi32, #tpu.memory_space<vmem>>, vector<256x1xi32>
      %c3 = arith.constant 3 : index
      %78 = memref.load %arg3[%c3] : memref<8xi32, #tpu.memory_space<smem>>
      %79 = vector.broadcast %78 : i32 to vector<256x1xi32>
      %80 = arith.cmpi eq, %77, %79 : vector<256x1xi32>
      %cst = arith.constant 1.000000e+30 : f32
      %81 = vector.shape_cast %80 : vector<256x1xi1> to vector<256x1xi1>
      %82 = vector.broadcast %81 : vector<256x1xi1> to vector<256x256xi1>
      %83 = vector.broadcast %cst : f32 to vector<256x256xf32>
      %84 = arith.select %82, %22, %83 : vector<256x256xi1>, vector<256x256xf32>
      %cst_43 = arith.constant dense<0x7F800000> : vector<256xf32>
      %85 = vector.multi_reduction <minimumf>, %84, %cst_43 [0] : vector<256x256xf32> to vector<256xf32>
      %86 = vector.shape_cast %85 : vector<256xf32> to vector<1x256xf32>
      %c3_44 = arith.constant 3 : index
      %c0_45 = arith.constant 0 : index
      %87 = vector.load %arg20[%c3_44, %c0_45] : memref<8x256xf32, #tpu.memory_space<vmem>>, vector<1x256xf32>
      %88 = arith.minimumf %87, %86 : vector<1x256xf32>
      %c3_46 = arith.constant 3 : index
      %c0_47 = arith.constant 0 : index
      %89 = vector.load %arg20[%c3_46, %c0_47] : memref<8x256xf32, #tpu.memory_space<vmem>>, vector<1x256xf32>
      tpu.vector_store %arg20[%c3_46, %c0_47], %88 {strides = array<i32>} : memref<8x256xf32, #tpu.memory_space<vmem>>, vector<1x256xf32>,
    } else {
    }
    %c4_i32_29 = arith.constant 4 : i32
    %59 = arith.cmpi sgt, %0, %c4_i32_29 : i32
    %60 = arith.extui %59 : i1 to i32
    %c0_i32_30 = arith.constant 0 : i32
    %61 = arith.cmpi ne, %60, %c0_i32_30 : i32
    scf.if %61 {
      %c0_41 = arith.constant 0 : index
      %c0_42 = arith.constant 0 : index
      %77 = vector.load %arg6[%c0_41, %c0_42] : memref<256x1xi32, #tpu.memory_space<vmem>>, vector<256x1xi32>
      %c4 = arith.constant 4 : index
      %78 = memref.load %arg3[%c4] : memref<8xi32, #tpu.memory_space<smem>>
      %79 = vector.broadcast %78 : i32 to vector<256x1xi32>
      %80 = arith.cmpi eq, %77, %79 : vector<256x1xi32>
      %cst = arith.constant 1.000000e+30 : f32
      %81 = vector.shape_cast %80 : vector<256x1xi1> to vector<256x1xi1>
      %82 = vector.broadcast %81 : vector<256x1xi1> to vector<256x256xi1>
      %83 = vector.broadcast %cst : f32 to vector<256x256xf32>
      %84 = arith.select %82, %22, %83 : vector<256x256xi1>, vector<256x256xf32>
      %cst_43 = arith.constant dense<0x7F800000> : vector<256xf32>
      %85 = vector.multi_reduction <minimumf>, %84, %cst_43 [0] : vector<256x256xf32> to vector<256xf32>
      %86 = vector.shape_cast %85 : vector<256xf32> to vector<1x256xf32>
      %c4_44 = arith.constant 4 : index
      %c0_45 = arith.constant 0 : index
      %87 = vector.load %arg20[%c4_44, %c0_45] : memref<8x256xf32, #tpu.memory_space<vmem>>, vector<1x256xf32>
      %88 = arith.minimumf %87, %86 : vector<1x256xf32>
      %c4_46 = arith.constant 4 : index
      %c0_47 = arith.constant 0 : index
      %89 = vector.load %arg20[%c4_46, %c0_47] : memref<8x256xf32, #tpu.memory_space<vmem>>, vector<1x256xf32>
      tpu.vector_store %arg20[%c4_46, %c0_47], %88 {strides = array<i32>} : memref<8x256xf32, #tpu.memory_space<vmem>>, vector<1x256xf32>,
    } else {
    }
    %c5_i32_31 = arith.constant 5 : i32
    %62 = arith.cmpi sgt, %0, %c5_i32_31 : i32
    %63 = arith.extui %62 : i1 to i32
    %c0_i32_32 = arith.constant 0 : i32
    %64 = arith.cmpi ne, %63, %c0_i32_32 : i32
    scf.if %64 {
      %c0_41 = arith.constant 0 : index
      %c0_42 = arith.constant 0 : index
      %77 = vector.load %arg6[%c0_41, %c0_42] : memref<256x1xi32, #tpu.memory_space<vmem>>, vector<256x1xi32>
      %c5 = arith.constant 5 : index
      %78 = memref.load %arg3[%c5] : memref<8xi32, #tpu.memory_space<smem>>
      %79 = vector.broadcast %78 : i32 to vector<256x1xi32>
      %80 = arith.cmpi eq, %77, %79 : vector<256x1xi32>
      %cst = arith.constant 1.000000e+30 : f32
      %81 = vector.shape_cast %80 : vector<256x1xi1> to vector<256x1xi1>
      %82 = vector.broadcast %81 : vector<256x1xi1> to vector<256x256xi1>
      %83 = vector.broadcast %cst : f32 to vector<256x256xf32>
      %84 = arith.select %82, %22, %83 : vector<256x256xi1>, vector<256x256xf32>
      %cst_43 = arith.constant dense<0x7F800000> : vector<256xf32>
      %85 = vector.multi_reduction <minimumf>, %84, %cst_43 [0] : vector<256x256xf32> to vector<256xf32>
      %86 = vector.shape_cast %85 : vector<256xf32> to vector<1x256xf32>
      %c5_44 = arith.constant 5 : index
      %c0_45 = arith.constant 0 : index
      %87 = vector.load %arg20[%c5_44, %c0_45] : memref<8x256xf32, #tpu.memory_space<vmem>>, vector<1x256xf32>
      %88 = arith.minimumf %87, %86 : vector<1x256xf32>
      %c5_46 = arith.constant 5 : index
      %c0_47 = arith.constant 0 : index
      %89 = vector.load %arg20[%c5_46, %c0_47] : memref<8x256xf32, #tpu.memory_space<vmem>>, vector<1x256xf32>
      tpu.vector_store %arg20[%c5_46, %c0_47], %88 {strides = array<i32>} : memref<8x256xf32, #tpu.memory_space<vmem>>, vector<1x256xf32>,
    } else {
    }
    %c6_i32_33 = arith.constant 6 : i32
    %65 = arith.cmpi sgt, %0, %c6_i32_33 : i32
    %66 = arith.extui %65 : i1 to i32
    %c0_i32_34 = arith.constant 0 : i32
    %67 = arith.cmpi ne, %66, %c0_i32_34 : i32
    scf.if %67 {
      %c0_41 = arith.constant 0 : index
      %c0_42 = arith.constant 0 : index
      %77 = vector.load %arg6[%c0_41, %c0_42] : memref<256x1xi32, #tpu.memory_space<vmem>>, vector<256x1xi32>
      %c6 = arith.constant 6 : index
      %78 = memref.load %arg3[%c6] : memref<8xi32, #tpu.memory_space<smem>>
      %79 = vector.broadcast %78 : i32 to vector<256x1xi32>
      %80 = arith.cmpi eq, %77, %79 : vector<256x1xi32>
      %cst = arith.constant 1.000000e+30 : f32
      %81 = vector.shape_cast %80 : vector<256x1xi1> to vector<256x1xi1>
      %82 = vector.broadcast %81 : vector<256x1xi1> to vector<256x256xi1>
      %83 = vector.broadcast %cst : f32 to vector<256x256xf32>
      %84 = arith.select %82, %22, %83 : vector<256x256xi1>, vector<256x256xf32>
      %cst_43 = arith.constant dense<0x7F800000> : vector<256xf32>
      %85 = vector.multi_reduction <minimumf>, %84, %cst_43 [0] : vector<256x256xf32> to vector<256xf32>
      %86 = vector.shape_cast %85 : vector<256xf32> to vector<1x256xf32>
      %c6_44 = arith.constant 6 : index
      %c0_45 = arith.constant 0 : index
      %87 = vector.load %arg20[%c6_44, %c0_45] : memref<8x256xf32, #tpu.memory_space<vmem>>, vector<1x256xf32>
      %88 = arith.minimumf %87, %86 : vector<1x256xf32>
      %c6_46 = arith.constant 6 : index
      %c0_47 = arith.constant 0 : index
      %89 = vector.load %arg20[%c6_46, %c0_47] : memref<8x256xf32, #tpu.memory_space<vmem>>, vector<1x256xf32>
      tpu.vector_store %arg20[%c6_46, %c0_47], %88 {strides = array<i32>} : memref<8x256xf32, #tpu.memory_space<vmem>>, vector<1x256xf32>,
    } else {
    }
    %c7_i32_35 = arith.constant 7 : i32
    %68 = arith.cmpi sgt, %0, %c7_i32_35 : i32
    %69 = arith.extui %68 : i1 to i32
    %c0_i32_36 = arith.constant 0 : i32
    %70 = arith.cmpi ne, %69, %c0_i32_36 : i32
    scf.if %70 {
      %c0_41 = arith.constant 0 : index
      %c0_42 = arith.constant 0 : index
      %77 = vector.load %arg6[%c0_41, %c0_42] : memref<256x1xi32, #tpu.memory_space<vmem>>, vector<256x1xi32>
      %c7 = arith.constant 7 : index
      %78 = memref.load %arg3[%c7] : memref<8xi32, #tpu.memory_space<smem>>
      %79 = vector.broadcast %78 : i32 to vector<256x1xi32>
      %80 = arith.cmpi eq, %77, %79 : vector<256x1xi32>
      %cst = arith.constant 1.000000e+30 : f32
      %81 = vector.shape_cast %80 : vector<256x1xi1> to vector<256x1xi1>
      %82 = vector.broadcast %81 : vector<256x1xi1> to vector<256x256xi1>
      %83 = vector.broadcast %cst : f32 to vector<256x256xf32>
      %84 = arith.select %82, %22, %83 : vector<256x256xi1>, vector<256x256xf32>
      %cst_43 = arith.constant dense<0x7F800000> : vector<256xf32>
      %85 = vector.multi_reduction <minimumf>, %84, %cst_43 [0] : vector<256x256xf32> to vector<256xf32>
      %86 = vector.shape_cast %85 : vector<256xf32> to vector<1x256xf32>
      %c7_44 = arith.constant 7 : index
      %c0_45 = arith.constant 0 : index
      %87 = vector.load %arg20[%c7_44, %c0_45] : memref<8x256xf32, #tpu.memory_space<vmem>>, vector<1x256xf32>
      %88 = arith.minimumf %87, %86 : vector<1x256xf32>
      %c7_46 = arith.constant 7 : index
      %c0_47 = arith.constant 0 : index
      %89 = vector.load %arg20[%c7_46, %c0_47] : memref<8x256xf32, #tpu.memory_space<vmem>>, vector<1x256xf32>
      tpu.vector_store %arg20[%c7_46, %c0_47], %88 {strides = array<i32>} : memref<8x256xf32, #tpu.memory_space<vmem>>, vector<1x256xf32>,
    } else {
    }
    %c0_i32_37 = arith.constant 0 : i32
    %71 = arith.cmpi eq, %arg0, %c0_i32_37 : i32
    %72 = arith.extui %71 : i1 to i32
    %c0_i32_38 = arith.constant 0 : i32
    %73 = arith.cmpi ne, %72, %c0_i32_38 : i32
    scf.if %73 {
      %c0_41 = arith.constant 0 : index
      %c0_42 = arith.constant 0 : index
      %77 = vector.load %arg5[%c0_41, %c0_42] : memref<1x256xi32, #tpu.memory_space<vmem>>, vector<1x256xi32>
      %c0_43 = arith.constant 0 : index
      %c0_44 = arith.constant 0 : index
      %78 = vector.load %arg14[%c0_43, %c0_44] : memref<8x1xi32, #tpu.memory_space<vmem>>, vector<8x1xi32>
      %79 = vector.broadcast %77 : vector<1x256xi32> to vector<8x256xi32>
      %80 = vector.broadcast %78 : vector<8x1xi32> to vector<8x256xi32>
      %81 = arith.cmpi eq, %79, %80 : vector<8x256xi32>
      %82 = arith.extui %81 : vector<8x256xi1> to vector<8x256xi32>
      %83 = arith.sitofp %82 : vector<8x256xi32> to vector<8x256xf32>
      %c0_45 = arith.constant 0 : index
      %c0_46 = arith.constant 0 : index
      %84 = vector.load %arg7[%c0_45, %c0_46] : memref<256x1xi32, #tpu.memory_space<vmem>>, vector<256x1xi32>
      %c0_47 = arith.constant 0 : index
      %c0_48 = arith.constant 0 : index
      %85 = vector.load %arg15[%c0_47, %c0_48] : memref<1x8xi32, #tpu.memory_space<vmem>>, vector<1x8xi32>
      %86 = vector.broadcast %84 : vector<256x1xi32> to vector<256x8xi32>
      %87 = vector.broadcast %85 : vector<1x8xi32> to vector<256x8xi32>
      %88 = arith.cmpi eq, %86, %87 : vector<256x8xi32>
      %89 = arith.extui %88 : vector<256x8xi1> to vector<256x8xi32>
      %90 = arith.sitofp %89 : vector<256x8xi32> to vector<256x8xf32>
      %c0_49 = arith.constant 0 : index
      %c0_50 = arith.constant 0 : index
      %91 = vector.load %arg18[%c0_49, %c0_50] : memref<8x8xf32, #tpu.memory_space<vmem>>, vector<8x8xf32>
      %cst = arith.constant dense<0.000000e+00> : vector<8x8xf32>
      %92 = tpu.matmul %83, %90, %cst {dimension_numbers = #tpu.dot_dimension_numbers<[1], [0], [0], [1], [0, 0, 1, 1], [], []>} : vector<8x256xf32>, vector<256x8xf32>, vector<8x8xf32> -> vector<8x8xf32>
      %93 = arith.addf %91, %92 : vector<8x8xf32>
      %c0_51 = arith.constant 0 : index
      %c0_52 = arith.constant 0 : index
      %94 = vector.load %arg18[%c0_51, %c0_52] : memref<8x8xf32, #tpu.memory_space<vmem>>, vector<8x8xf32>
      tpu.vector_store %arg18[%c0_51, %c0_52], %93 {strides = array<i32>} : memref<8x8xf32, #tpu.memory_space<vmem>>, vector<8x8xf32>,
    } else {
    }
    %c0_i32_39 = arith.constant 0 : i32
    %74 = arith.cmpi eq, %arg1, %c0_i32_39 : i32
    %75 = arith.extui %74 : i1 to i32
    %c0_i32_40 = arith.constant 0 : i32
    %76 = arith.cmpi ne, %75, %c0_i32_40 : i32
    scf.if %76 {
      %77 = tpu.iota {dimensions = array<i32: 1>} : vector<8x8xi32>
      %cst = arith.constant -1.000000e+00 : f32
      %78 = vector.broadcast %cst : f32 to vector<8x8xf32>
      %c0_41 = arith.constant 0 : index
      %c0_42 = arith.constant 0 : index
      %79 = vector.load %arg10[%c0_41, %c0_42] : memref<1x256xi32, #tpu.memory_space<vmem>>, vector<1x256xi32>
      %c0_43 = arith.constant 0 : index
      %80 = memref.load %arg3[%c0_43] : memref<8xi32, #tpu.memory_space<smem>>
      %81 = vector.broadcast %80 : i32 to vector<1x256xi32>
      %82 = arith.cmpi eq, %79, %81 : vector<1x256xi32>
      %c0_44 = arith.constant 0 : index
      %c0_45 = arith.constant 0 : index
      %83 = vector.load %arg19[%c0_44, %c0_45] : memref<8x256xf32, #tpu.memory_space<vmem>>, vector<8x256xf32>
      %cst_46 = arith.constant -1.000000e+00 : f32
      %84 = vector.shape_cast %82 : vector<1x256xi1> to vector<1x256xi1>
      %85 = vector.broadcast %84 : vector<1x256xi1> to vector<8x256xi1>
      %86 = vector.broadcast %cst_46 : f32 to vector<8x256xf32>
      %87 = arith.select %85, %83, %86 : vector<8x256xi1>, vector<8x256xf32>
      %cst_47 = arith.constant dense<0xFF800000> : vector<8xf32>
      %88 = vector.multi_reduction <maximumf>, %87, %cst_47 [1] : vector<8x256xf32> to vector<8xf32>
      %89 = vector.shape_cast %88 : vector<8xf32> to vector<8x1xf32>
      %c0_i32_48 = arith.constant 0 : i32
      %90 = vector.broadcast %c0_i32_48 : i32 to vector<8x8xi32>
      %91 = arith.cmpi eq, %77, %90 : vector<8x8xi32>
      %92 = vector.shape_cast %89 : vector<8x1xf32> to vector<8x1xf32>
      %93 = vector.broadcast %92 : vector<8x1xf32> to vector<8x8xf32>
      %94 = arith.select %91, %93, %78 : vector<8x8xi1>, vector<8x8xf32>
      %c0_49 = arith.constant 0 : index
      %c0_50 = arith.constant 0 : index
      %95 = vector.load %arg10[%c0_49, %c0_50] : memref<1x256xi32, #tpu.memory_space<vmem>>, vector<1x256xi32>
      %c1_51 = arith.constant 1 : index
      %96 = memref.load %arg3[%c1_51] : memref<8xi32, #tpu.memory_space<smem>>
      %97 = vector.broadcast %96 : i32 to vector<1x256xi32>
      %98 = arith.cmpi eq, %95, %97 : vector<1x256xi32>
      %c0_52 = arith.constant 0 : index
      %c0_53 = arith.constant 0 : index
      %99 = vector.load %arg19[%c0_52, %c0_53] : memref<8x256xf32, #tpu.memory_space<vmem>>, vector<8x256xf32>
      %cst_54 = arith.constant -1.000000e+00 : f32
      %100 = vector.shape_cast %98 : vector<1x256xi1> to vector<1x256xi1>
      %101 = vector.broadcast %100 : vector<1x256xi1> to vector<8x256xi1>
      %102 = vector.broadcast %cst_54 : f32 to vector<8x256xf32>
      %103 = arith.select %101, %99, %102 : vector<8x256xi1>, vector<8x256xf32>
      %cst_55 = arith.constant dense<0xFF800000> : vector<8xf32>
      %104 = vector.multi_reduction <maximumf>, %103, %cst_55 [1] : vector<8x256xf32> to vector<8xf32>
      %105 = vector.shape_cast %104 : vector<8xf32> to vector<8x1xf32>
      %c1_i32_56 = arith.constant 1 : i32
      %106 = vector.broadcast %c1_i32_56 : i32 to vector<8x8xi32>
      %107 = arith.cmpi eq, %77, %106 : vector<8x8xi32>
      %108 = vector.shape_cast %105 : vector<8x1xf32> to vector<8x1xf32>
      %109 = vector.broadcast %108 : vector<8x1xf32> to vector<8x8xf32>
      %110 = arith.select %107, %109, %94 : vector<8x8xi1>, vector<8x8xf32>
      %c0_57 = arith.constant 0 : index
      %c0_58 = arith.constant 0 : index
      %111 = vector.load %arg10[%c0_57, %c0_58] : memref<1x256xi32, #tpu.memory_space<vmem>>, vector<1x256xi32>
      %c2 = arith.constant 2 : index
      %112 = memref.load %arg3[%c2] : memref<8xi32, #tpu.memory_space<smem>>
      %113 = vector.broadcast %112 : i32 to vector<1x256xi32>
      %114 = arith.cmpi eq, %111, %113 : vector<1x256xi32>
      %c0_59 = arith.constant 0 : index
      %c0_60 = arith.constant 0 : index
      %115 = vector.load %arg19[%c0_59, %c0_60] : memref<8x256xf32, #tpu.memory_space<vmem>>, vector<8x256xf32>
      %cst_61 = arith.constant -1.000000e+00 : f32
      %116 = vector.shape_cast %114 : vector<1x256xi1> to vector<1x256xi1>
      %117 = vector.broadcast %116 : vector<1x256xi1> to vector<8x256xi1>
      %118 = vector.broadcast %cst_61 : f32 to vector<8x256xf32>
      %119 = arith.select %117, %115, %118 : vector<8x256xi1>, vector<8x256xf32>
      %cst_62 = arith.constant dense<0xFF800000> : vector<8xf32>
      %120 = vector.multi_reduction <maximumf>, %119, %cst_62 [1] : vector<8x256xf32> to vector<8xf32>
      %121 = vector.shape_cast %120 : vector<8xf32> to vector<8x1xf32>
      %c2_i32_63 = arith.constant 2 : i32
      %122 = vector.broadcast %c2_i32_63 : i32 to vector<8x8xi32>
      %123 = arith.cmpi eq, %77, %122 : vector<8x8xi32>
      %124 = vector.shape_cast %121 : vector<8x1xf32> to vector<8x1xf32>
      %125 = vector.broadcast %124 : vector<8x1xf32> to vector<8x8xf32>
      %126 = arith.select %123, %125, %110 : vector<8x8xi1>, vector<8x8xf32>
      %c0_64 = arith.constant 0 : index
      %c0_65 = arith.constant 0 : index
      %127 = vector.load %arg10[%c0_64, %c0_65] : memref<1x256xi32, #tpu.memory_space<vmem>>, vector<1x256xi32>
      %c3 = arith.constant 3 : index
      %128 = memref.load %arg3[%c3] : memref<8xi32, #tpu.memory_space<smem>>
      %129 = vector.broadcast %128 : i32 to vector<1x256xi32>
      %130 = arith.cmpi eq, %127, %129 : vector<1x256xi32>
      %c0_66 = arith.constant 0 : index
      %c0_67 = arith.constant 0 : index
      %131 = vector.load %arg19[%c0_66, %c0_67] : memref<8x256xf32, #tpu.memory_space<vmem>>, vector<8x256xf32>
      %cst_68 = arith.constant -1.000000e+00 : f32
      %132 = vector.shape_cast %130 : vector<1x256xi1> to vector<1x256xi1>
      %133 = vector.broadcast %132 : vector<1x256xi1> to vector<8x256xi1>
      %134 = vector.broadcast %cst_68 : f32 to vector<8x256xf32>
      %135 = arith.select %133, %131, %134 : vector<8x256xi1>, vector<8x256xf32>
      %cst_69 = arith.constant dense<0xFF800000> : vector<8xf32>
      %136 = vector.multi_reduction <maximumf>, %135, %cst_69 [1] : vector<8x256xf32> to vector<8xf32>
      %137 = vector.shape_cast %136 : vector<8xf32> to vector<8x1xf32>
      %c3_i32_70 = arith.constant 3 : i32
      %138 = vector.broadcast %c3_i32_70 : i32 to vector<8x8xi32>
      %139 = arith.cmpi eq, %77, %138 : vector<8x8xi32>
      %140 = vector.shape_cast %137 : vector<8x1xf32> to vector<8x1xf32>
      %141 = vector.broadcast %140 : vector<8x1xf32> to vector<8x8xf32>
      %142 = arith.select %139, %141, %126 : vector<8x8xi1>, vector<8x8xf32>
      %c0_71 = arith.constant 0 : index
      %c0_72 = arith.constant 0 : index
      %143 = vector.load %arg10[%c0_71, %c0_72] : memref<1x256xi32, #tpu.memory_space<vmem>>, vector<1x256xi32>
      %c4 = arith.constant 4 : index
      %144 = memref.load %arg3[%c4] : memref<8xi32, #tpu.memory_space<smem>>
      %145 = vector.broadcast %144 : i32 to vector<1x256xi32>
      %146 = arith.cmpi eq, %143, %145 : vector<1x256xi32>
      %c0_73 = arith.constant 0 : index
      %c0_74 = arith.constant 0 : index
      %147 = vector.load %arg19[%c0_73, %c0_74] : memref<8x256xf32, #tpu.memory_space<vmem>>, vector<8x256xf32>
      %cst_75 = arith.constant -1.000000e+00 : f32
      %148 = vector.shape_cast %146 : vector<1x256xi1> to vector<1x256xi1>
      %149 = vector.broadcast %148 : vector<1x256xi1> to vector<8x256xi1>
      %150 = vector.broadcast %cst_75 : f32 to vector<8x256xf32>
      %151 = arith.select %149, %147, %150 : vector<8x256xi1>, vector<8x256xf32>
      %cst_76 = arith.constant dense<0xFF800000> : vector<8xf32>
      %152 = vector.multi_reduction <maximumf>, %151, %cst_76 [1] : vector<8x256xf32> to vector<8xf32>
      %153 = vector.shape_cast %152 : vector<8xf32> to vector<8x1xf32>
      %c4_i32_77 = arith.constant 4 : i32
      %154 = vector.broadcast %c4_i32_77 : i32 to vector<8x8xi32>
      %155 = arith.cmpi eq, %77, %154 : vector<8x8xi32>
      %156 = vector.shape_cast %153 : vector<8x1xf32> to vector<8x1xf32>
      %157 = vector.broadcast %156 : vector<8x1xf32> to vector<8x8xf32>
      %158 = arith.select %155, %157, %142 : vector<8x8xi1>, vector<8x8xf32>
      %c0_78 = arith.constant 0 : index
      %c0_79 = arith.constant 0 : index
      %159 = vector.load %arg10[%c0_78, %c0_79] : memref<1x256xi32, #tpu.memory_space<vmem>>, vector<1x256xi32>
      %c5 = arith.constant 5 : index
      %160 = memref.load %arg3[%c5] : memref<8xi32, #tpu.memory_space<smem>>
      %161 = vector.broadcast %160 : i32 to vector<1x256xi32>
      %162 = arith.cmpi eq, %159, %161 : vector<1x256xi32>
      %c0_80 = arith.constant 0 : index
      %c0_81 = arith.constant 0 : index
      %163 = vector.load %arg19[%c0_80, %c0_81] : memref<8x256xf32, #tpu.memory_space<vmem>>, vector<8x256xf32>
      %cst_82 = arith.constant -1.000000e+00 : f32
      %164 = vector.shape_cast %162 : vector<1x256xi1> to vector<1x256xi1>
      %165 = vector.broadcast %164 : vector<1x256xi1> to vector<8x256xi1>
      %166 = vector.broadcast %cst_82 : f32 to vector<8x256xf32>
      %167 = arith.select %165, %163, %166 : vector<8x256xi1>, vector<8x256xf32>
      %cst_83 = arith.constant dense<0xFF800000> : vector<8xf32>
      %168 = vector.multi_reduction <maximumf>, %167, %cst_83 [1] : vector<8x256xf32> to vector<8xf32>
      %169 = vector.shape_cast %168 : vector<8xf32> to vector<8x1xf32>
      %c5_i32_84 = arith.constant 5 : i32
      %170 = vector.broadcast %c5_i32_84 : i32 to vector<8x8xi32>
      %171 = arith.cmpi eq, %77, %170 : vector<8x8xi32>
      %172 = vector.shape_cast %169 : vector<8x1xf32> to vector<8x1xf32>
      %173 = vector.broadcast %172 : vector<8x1xf32> to vector<8x8xf32>
      %174 = arith.select %171, %173, %158 : vector<8x8xi1>, vector<8x8xf32>
      %c0_85 = arith.constant 0 : index
      %c0_86 = arith.constant 0 : index
      %175 = vector.load %arg10[%c0_85, %c0_86] : memref<1x256xi32, #tpu.memory_space<vmem>>, vector<1x256xi32>
      %c6 = arith.constant 6 : index
      %176 = memref.load %arg3[%c6] : memref<8xi32, #tpu.memory_space<smem>>
      %177 = vector.broadcast %176 : i32 to vector<1x256xi32>
      %178 = arith.cmpi eq, %175, %177 : vector<1x256xi32>
      %c0_87 = arith.constant 0 : index
      %c0_88 = arith.constant 0 : index
      %179 = vector.load %arg19[%c0_87, %c0_88] : memref<8x256xf32, #tpu.memory_space<vmem>>, vector<8x256xf32>
      %cst_89 = arith.constant -1.000000e+00 : f32
      %180 = vector.shape_cast %178 : vector<1x256xi1> to vector<1x256xi1>
      %181 = vector.broadcast %180 : vector<1x256xi1> to vector<8x256xi1>
      %182 = vector.broadcast %cst_89 : f32 to vector<8x256xf32>
      %183 = arith.select %181, %179, %182 : vector<8x256xi1>, vector<8x256xf32>
      %cst_90 = arith.constant dense<0xFF800000> : vector<8xf32>
      %184 = vector.multi_reduction <maximumf>, %183, %cst_90 [1] : vector<8x256xf32> to vector<8xf32>
      %185 = vector.shape_cast %184 : vector<8xf32> to vector<8x1xf32>
      %c6_i32_91 = arith.constant 6 : i32
      %186 = vector.broadcast %c6_i32_91 : i32 to vector<8x8xi32>
      %187 = arith.cmpi eq, %77, %186 : vector<8x8xi32>
      %188 = vector.shape_cast %185 : vector<8x1xf32> to vector<8x1xf32>
      %189 = vector.broadcast %188 : vector<8x1xf32> to vector<8x8xf32>
      %190 = arith.select %187, %189, %174 : vector<8x8xi1>, vector<8x8xf32>
      %c0_92 = arith.constant 0 : index
      %c0_93 = arith.constant 0 : index
      %191 = vector.load %arg10[%c0_92, %c0_93] : memref<1x256xi32, #tpu.memory_space<vmem>>, vector<1x256xi32>
      %c7 = arith.constant 7 : index
      %192 = memref.load %arg3[%c7] : memref<8xi32, #tpu.memory_space<smem>>
      %193 = vector.broadcast %192 : i32 to vector<1x256xi32>
      %194 = arith.cmpi eq, %191, %193 : vector<1x256xi32>
      %c0_94 = arith.constant 0 : index
      %c0_95 = arith.constant 0 : index
      %195 = vector.load %arg19[%c0_94, %c0_95] : memref<8x256xf32, #tpu.memory_space<vmem>>, vector<8x256xf32>
      %cst_96 = arith.constant -1.000000e+00 : f32
      %196 = vector.shape_cast %194 : vector<1x256xi1> to vector<1x256xi1>
      %197 = vector.broadcast %196 : vector<1x256xi1> to vector<8x256xi1>
      %198 = vector.broadcast %cst_96 : f32 to vector<8x256xf32>
      %199 = arith.select %197, %195, %198 : vector<8x256xi1>, vector<8x256xf32>
      %cst_97 = arith.constant dense<0xFF800000> : vector<8xf32>
      %200 = vector.multi_reduction <maximumf>, %199, %cst_97 [1] : vector<8x256xf32> to vector<8xf32>
      %201 = vector.shape_cast %200 : vector<8xf32> to vector<8x1xf32>
      %c7_i32_98 = arith.constant 7 : i32
      %202 = vector.broadcast %c7_i32_98 : i32 to vector<8x8xi32>
      %203 = arith.cmpi eq, %77, %202 : vector<8x8xi32>
      %204 = vector.shape_cast %201 : vector<8x1xf32> to vector<8x1xf32>
      %205 = vector.broadcast %204 : vector<8x1xf32> to vector<8x8xf32>
      %206 = arith.select %203, %205, %190 : vector<8x8xi1>, vector<8x8xf32>
      %c0_99 = arith.constant 0 : index
      %c0_100 = arith.constant 0 : index
      %207 = vector.load %arg16[%c0_99, %c0_100] : memref<8x8xf32, #tpu.memory_space<vmem>>, vector<8x8xf32>
      %208 = arith.maximumf %207, %206 : vector<8x8xf32>
      %c0_101 = arith.constant 0 : index
      %c0_102 = arith.constant 0 : index
      %209 = vector.load %arg16[%c0_101, %c0_102] : memref<8x8xf32, #tpu.memory_space<vmem>>, vector<8x8xf32>
      tpu.vector_store %arg16[%c0_101, %c0_102], %208 {strides = array<i32>} : memref<8x8xf32, #tpu.memory_space<vmem>>, vector<8x8xf32>,
      %210 = tpu.iota {dimensions = array<i32: 1>} : vector<8x8xi32>
      %cst_103 = arith.constant -1.000000e+00 : f32
      %211 = vector.broadcast %cst_103 : f32 to vector<8x8xf32>
      %c0_104 = arith.constant 0 : index
      %c0_105 = arith.constant 0 : index
      %212 = vector.load %arg11[%c0_104, %c0_105] : memref<1x256xi32, #tpu.memory_space<vmem>>, vector<1x256xi32>
      %c0_106 = arith.constant 0 : index
      %213 = memref.load %arg4[%c0_106] : memref<8xi32, #tpu.memory_space<smem>>
      %214 = vector.broadcast %213 : i32 to vector<1x256xi32>
      %215 = arith.cmpi eq, %212, %214 : vector<1x256xi32>
      %c0_107 = arith.constant 0 : index
      %c0_108 = arith.constant 0 : index
      %216 = vector.load %arg20[%c0_107, %c0_108] : memref<8x256xf32, #tpu.memory_space<vmem>>, vector<8x256xf32>
      %cst_109 = arith.constant -1.000000e+00 : f32
      %217 = vector.shape_cast %215 : vector<1x256xi1> to vector<1x256xi1>
      %218 = vector.broadcast %217 : vector<1x256xi1> to vector<8x256xi1>
      %219 = vector.broadcast %cst_109 : f32 to vector<8x256xf32>
      %220 = arith.select %218, %216, %219 : vector<8x256xi1>, vector<8x256xf32>
      %cst_110 = arith.constant dense<0xFF800000> : vector<8xf32>
      %221 = vector.multi_reduction <maximumf>, %220, %cst_110 [1] : vector<8x256xf32> to vector<8xf32>
      %222 = vector.shape_cast %221 : vector<8xf32> to vector<8x1xf32>
      %c0_i32_111 = arith.constant 0 : i32
      %223 = vector.broadcast %c0_i32_111 : i32 to vector<8x8xi32>
      %224 = arith.cmpi eq, %210, %223 : vector<8x8xi32>
      %225 = vector.shape_cast %222 : vector<8x1xf32> to vector<8x1xf32>
      %226 = vector.broadcast %225 : vector<8x1xf32> to vector<8x8xf32>
      %227 = arith.select %224, %226, %211 : vector<8x8xi1>, vector<8x8xf32>
      %c0_112 = arith.constant 0 : index
      %c0_113 = arith.constant 0 : index
      %228 = vector.load %arg11[%c0_112, %c0_113] : memref<1x256xi32, #tpu.memory_space<vmem>>, vector<1x256xi32>
      %c1_114 = arith.constant 1 : index
      %229 = memref.load %arg4[%c1_114] : memref<8xi32, #tpu.memory_space<smem>>
      %230 = vector.broadcast %229 : i32 to vector<1x256xi32>
      %231 = arith.cmpi eq, %228, %230 : vector<1x256xi32>
      %c0_115 = arith.constant 0 : index
      %c0_116 = arith.constant 0 : index
      %232 = vector.load %arg20[%c0_115, %c0_116] : memref<8x256xf32, #tpu.memory_space<vmem>>, vector<8x256xf32>
      %cst_117 = arith.constant -1.000000e+00 : f32
      %233 = vector.shape_cast %231 : vector<1x256xi1> to vector<1x256xi1>
      %234 = vector.broadcast %233 : vector<1x256xi1> to vector<8x256xi1>
      %235 = vector.broadcast %cst_117 : f32 to vector<8x256xf32>
      %236 = arith.select %234, %232, %235 : vector<8x256xi1>, vector<8x256xf32>
      %cst_118 = arith.constant dense<0xFF800000> : vector<8xf32>
      %237 = vector.multi_reduction <maximumf>, %236, %cst_118 [1] : vector<8x256xf32> to vector<8xf32>
      %238 = vector.shape_cast %237 : vector<8xf32> to vector<8x1xf32>
      %c1_i32_119 = arith.constant 1 : i32
      %239 = vector.broadcast %c1_i32_119 : i32 to vector<8x8xi32>
      %240 = arith.cmpi eq, %210, %239 : vector<8x8xi32>
      %241 = vector.shape_cast %238 : vector<8x1xf32> to vector<8x1xf32>
      %242 = vector.broadcast %241 : vector<8x1xf32> to vector<8x8xf32>
      %243 = arith.select %240, %242, %227 : vector<8x8xi1>, vector<8x8xf32>
      %c0_120 = arith.constant 0 : index
      %c0_121 = arith.constant 0 : index
      %244 = vector.load %arg11[%c0_120, %c0_121] : memref<1x256xi32, #tpu.memory_space<vmem>>, vector<1x256xi32>
      %c2_122 = arith.constant 2 : index
      %245 = memref.load %arg4[%c2_122] : memref<8xi32, #tpu.memory_space<smem>>
      %246 = vector.broadcast %245 : i32 to vector<1x256xi32>
      %247 = arith.cmpi eq, %244, %246 : vector<1x256xi32>
      %c0_123 = arith.constant 0 : index
      %c0_124 = arith.constant 0 : index
      %248 = vector.load %arg20[%c0_123, %c0_124] : memref<8x256xf32, #tpu.memory_space<vmem>>, vector<8x256xf32>
      %cst_125 = arith.constant -1.000000e+00 : f32
      %249 = vector.shape_cast %247 : vector<1x256xi1> to vector<1x256xi1>
      %250 = vector.broadcast %249 : vector<1x256xi1> to vector<8x256xi1>
      %251 = vector.broadcast %cst_125 : f32 to vector<8x256xf32>
      %252 = arith.select %250, %248, %251 : vector<8x256xi1>, vector<8x256xf32>
      %cst_126 = arith.constant dense<0xFF800000> : vector<8xf32>
      %253 = vector.multi_reduction <maximumf>, %252, %cst_126 [1] : vector<8x256xf32> to vector<8xf32>
      %254 = vector.shape_cast %253 : vector<8xf32> to vector<8x1xf32>
      %c2_i32_127 = arith.constant 2 : i32
      %255 = vector.broadcast %c2_i32_127 : i32 to vector<8x8xi32>
      %256 = arith.cmpi eq, %210, %255 : vector<8x8xi32>
      %257 = vector.shape_cast %254 : vector<8x1xf32> to vector<8x1xf32>
      %258 = vector.broadcast %257 : vector<8x1xf32> to vector<8x8xf32>
      %259 = arith.select %256, %258, %243 : vector<8x8xi1>, vector<8x8xf32>
      %c0_128 = arith.constant 0 : index
      %c0_129 = arith.constant 0 : index
      %260 = vector.load %arg11[%c0_128, %c0_129] : memref<1x256xi32, #tpu.memory_space<vmem>>, vector<1x256xi32>
      %c3_130 = arith.constant 3 : index
      %261 = memref.load %arg4[%c3_130] : memref<8xi32, #tpu.memory_space<smem>>
      %262 = vector.broadcast %261 : i32 to vector<1x256xi32>
      %263 = arith.cmpi eq, %260, %262 : vector<1x256xi32>
      %c0_131 = arith.constant 0 : index
      %c0_132 = arith.constant 0 : index
      %264 = vector.load %arg20[%c0_131, %c0_132] : memref<8x256xf32, #tpu.memory_space<vmem>>, vector<8x256xf32>
      %cst_133 = arith.constant -1.000000e+00 : f32
      %265 = vector.shape_cast %263 : vector<1x256xi1> to vector<1x256xi1>
      %266 = vector.broadcast %265 : vector<1x256xi1> to vector<8x256xi1>
      %267 = vector.broadcast %cst_133 : f32 to vector<8x256xf32>
      %268 = arith.select %266, %264, %267 : vector<8x256xi1>, vector<8x256xf32>
      %cst_134 = arith.constant dense<0xFF800000> : vector<8xf32>
      %269 = vector.multi_reduction <maximumf>, %268, %cst_134 [1] : vector<8x256xf32> to vector<8xf32>
      %270 = vector.shape_cast %269 : vector<8xf32> to vector<8x1xf32>
      %c3_i32_135 = arith.constant 3 : i32
      %271 = vector.broadcast %c3_i32_135 : i32 to vector<8x8xi32>
      %272 = arith.cmpi eq, %210, %271 : vector<8x8xi32>
      %273 = vector.shape_cast %270 : vector<8x1xf32> to vector<8x1xf32>
      %274 = vector.broadcast %273 : vector<8x1xf32> to vector<8x8xf32>
      %275 = arith.select %272, %274, %259 : vector<8x8xi1>, vector<8x8xf32>
      %c0_136 = arith.constant 0 : index
      %c0_137 = arith.constant 0 : index
      %276 = vector.load %arg11[%c0_136, %c0_137] : memref<1x256xi32, #tpu.memory_space<vmem>>, vector<1x256xi32>
      %c4_138 = arith.constant 4 : index
      %277 = memref.load %arg4[%c4_138] : memref<8xi32, #tpu.memory_space<smem>>
      %278 = vector.broadcast %277 : i32 to vector<1x256xi32>
      %279 = arith.cmpi eq, %276, %278 : vector<1x256xi32>
      %c0_139 = arith.constant 0 : index
      %c0_140 = arith.constant 0 : index
      %280 = vector.load %arg20[%c0_139, %c0_140] : memref<8x256xf32, #tpu.memory_space<vmem>>, vector<8x256xf32>
      %cst_141 = arith.constant -1.000000e+00 : f32
      %281 = vector.shape_cast %279 : vector<1x256xi1> to vector<1x256xi1>
      %282 = vector.broadcast %281 : vector<1x256xi1> to vector<8x256xi1>
      %283 = vector.broadcast %cst_141 : f32 to vector<8x256xf32>
      %284 = arith.select %282, %280, %283 : vector<8x256xi1>, vector<8x256xf32>
      %cst_142 = arith.constant dense<0xFF800000> : vector<8xf32>
      %285 = vector.multi_reduction <maximumf>, %284, %cst_142 [1] : vector<8x256xf32> to vector<8xf32>
      %286 = vector.shape_cast %285 : vector<8xf32> to vector<8x1xf32>
      %c4_i32_143 = arith.constant 4 : i32
      %287 = vector.broadcast %c4_i32_143 : i32 to vector<8x8xi32>
      %288 = arith.cmpi eq, %210, %287 : vector<8x8xi32>
      %289 = vector.shape_cast %286 : vector<8x1xf32> to vector<8x1xf32>
      %290 = vector.broadcast %289 : vector<8x1xf32> to vector<8x8xf32>
      %291 = arith.select %288, %290, %275 : vector<8x8xi1>, vector<8x8xf32>
      %c0_144 = arith.constant 0 : index
      %c0_145 = arith.constant 0 : index
      %292 = vector.load %arg11[%c0_144, %c0_145] : memref<1x256xi32, #tpu.memory_space<vmem>>, vector<1x256xi32>
      %c5_146 = arith.constant 5 : index
      %293 = memref.load %arg4[%c5_146] : memref<8xi32, #tpu.memory_space<smem>>
      %294 = vector.broadcast %293 : i32 to vector<1x256xi32>
      %295 = arith.cmpi eq, %292, %294 : vector<1x256xi32>
      %c0_147 = arith.constant 0 : index
      %c0_148 = arith.constant 0 : index
      %296 = vector.load %arg20[%c0_147, %c0_148] : memref<8x256xf32, #tpu.memory_space<vmem>>, vector<8x256xf32>
      %cst_149 = arith.constant -1.000000e+00 : f32
      %297 = vector.shape_cast %295 : vector<1x256xi1> to vector<1x256xi1>
      %298 = vector.broadcast %297 : vector<1x256xi1> to vector<8x256xi1>
      %299 = vector.broadcast %cst_149 : f32 to vector<8x256xf32>
      %300 = arith.select %298, %296, %299 : vector<8x256xi1>, vector<8x256xf32>
      %cst_150 = arith.constant dense<0xFF800000> : vector<8xf32>
      %301 = vector.multi_reduction <maximumf>, %300, %cst_150 [1] : vector<8x256xf32> to vector<8xf32>
      %302 = vector.shape_cast %301 : vector<8xf32> to vector<8x1xf32>
      %c5_i32_151 = arith.constant 5 : i32
      %303 = vector.broadcast %c5_i32_151 : i32 to vector<8x8xi32>
      %304 = arith.cmpi eq, %210, %303 : vector<8x8xi32>
      %305 = vector.shape_cast %302 : vector<8x1xf32> to vector<8x1xf32>
      %306 = vector.broadcast %305 : vector<8x1xf32> to vector<8x8xf32>
      %307 = arith.select %304, %306, %291 : vector<8x8xi1>, vector<8x8xf32>
      %c0_152 = arith.constant 0 : index
      %c0_153 = arith.constant 0 : index
      %308 = vector.load %arg11[%c0_152, %c0_153] : memref<1x256xi32, #tpu.memory_space<vmem>>, vector<1x256xi32>
      %c6_154 = arith.constant 6 : index
      %309 = memref.load %arg4[%c6_154] : memref<8xi32, #tpu.memory_space<smem>>
      %310 = vector.broadcast %309 : i32 to vector<1x256xi32>
      %311 = arith.cmpi eq, %308, %310 : vector<1x256xi32>
      %c0_155 = arith.constant 0 : index
      %c0_156 = arith.constant 0 : index
      %312 = vector.load %arg20[%c0_155, %c0_156] : memref<8x256xf32, #tpu.memory_space<vmem>>, vector<8x256xf32>
      %cst_157 = arith.constant -1.000000e+00 : f32
      %313 = vector.shape_cast %311 : vector<1x256xi1> to vector<1x256xi1>
      %314 = vector.broadcast %313 : vector<1x256xi1> to vector<8x256xi1>
      %315 = vector.broadcast %cst_157 : f32 to vector<8x256xf32>
      %316 = arith.select %314, %312, %315 : vector<8x256xi1>, vector<8x256xf32>
      %cst_158 = arith.constant dense<0xFF800000> : vector<8xf32>
      %317 = vector.multi_reduction <maximumf>, %316, %cst_158 [1] : vector<8x256xf32> to vector<8xf32>
      %318 = vector.shape_cast %317 : vector<8xf32> to vector<8x1xf32>
      %c6_i32_159 = arith.constant 6 : i32
      %319 = vector.broadcast %c6_i32_159 : i32 to vector<8x8xi32>
      %320 = arith.cmpi eq, %210, %319 : vector<8x8xi32>
      %321 = vector.shape_cast %318 : vector<8x1xf32> to vector<8x1xf32>
      %322 = vector.broadcast %321 : vector<8x1xf32> to vector<8x8xf32>
      %323 = arith.select %320, %322, %307 : vector<8x8xi1>, vector<8x8xf32>
      %c0_160 = arith.constant 0 : index
      %c0_161 = arith.constant 0 : index
      %324 = vector.load %arg11[%c0_160, %c0_161] : memref<1x256xi32, #tpu.memory_space<vmem>>, vector<1x256xi32>
      %c7_162 = arith.constant 7 : index
      %325 = memref.load %arg4[%c7_162] : memref<8xi32, #tpu.memory_space<smem>>
      %326 = vector.broadcast %325 : i32 to vector<1x256xi32>
      %327 = arith.cmpi eq, %324, %326 : vector<1x256xi32>
      %c0_163 = arith.constant 0 : index
      %c0_164 = arith.constant 0 : index
      %328 = vector.load %arg20[%c0_163, %c0_164] : memref<8x256xf32, #tpu.memory_space<vmem>>, vector<8x256xf32>
      %cst_165 = arith.constant -1.000000e+00 : f32
      %329 = vector.shape_cast %327 : vector<1x256xi1> to vector<1x256xi1>
      %330 = vector.broadcast %329 : vector<1x256xi1> to vector<8x256xi1>
      %331 = vector.broadcast %cst_165 : f32 to vector<8x256xf32>
      %332 = arith.select %330, %328, %331 : vector<8x256xi1>, vector<8x256xf32>
      %cst_166 = arith.constant dense<0xFF800000> : vector<8xf32>
      %333 = vector.multi_reduction <maximumf>, %332, %cst_166 [1] : vector<8x256xf32> to vector<8xf32>
      %334 = vector.shape_cast %333 : vector<8xf32> to vector<8x1xf32>
      %c7_i32_167 = arith.constant 7 : i32
      %335 = vector.broadcast %c7_i32_167 : i32 to vector<8x8xi32>
      %336 = arith.cmpi eq, %210, %335 : vector<8x8xi32>
      %337 = vector.shape_cast %334 : vector<8x1xf32> to vector<8x1xf32>
      %338 = vector.broadcast %337 : vector<8x1xf32> to vector<8x8xf32>
      %339 = arith.select %336, %338, %323 : vector<8x8xi1>, vector<8x8xf32>
      %c0_168 = arith.constant 0 : index
      %c0_169 = arith.constant 0 : index
      %340 = vector.load %arg17[%c0_168, %c0_169] : memref<8x8xf32, #tpu.memory_space<vmem>>, vector<8x8xf32>
      %341 = arith.maximumf %340, %339 : vector<8x8xf32>
      %c0_170 = arith.constant 0 : index
      %c0_171 = arith.constant 0 : index
      %342 = vector.load %arg17[%c0_170, %c0_171] : memref<8x8xf32, #tpu.memory_space<vmem>>, vector<8x8xf32>
      tpu.vector_store %arg17[%c0_170, %c0_171], %341 {strides = array<i32>} : memref<8x8xf32, #tpu.memory_space<vmem>>, vector<8x8xf32>,
    } else {
    }
    return
  }
  func.func @transform_0(%arg0: i32, %arg1: i32, %arg2: memref<2xi32, #tpu.memory_space<smem>>, %arg3: memref<8xi32, #tpu.memory_space<smem>>, %arg4: memref<8xi32, #tpu.memory_space<smem>>) -> (i32, i32) {
    %c0_i32 = arith.constant 0 : i32
    %c0_i32_0 = arith.constant 0 : i32
    return %c0_i32, %arg1 : i32, i32
  }
  func.func @transform_1(%arg0: i32, %arg1: i32, %arg2: memref<2xi32, #tpu.memory_space<smem>>, %arg3: memref<8xi32, #tpu.memory_space<smem>>, %arg4: memref<8xi32, #tpu.memory_space<smem>>) -> (i32, i32) {
    %c0_i32 = arith.constant 0 : i32
    %c0_i32_0 = arith.constant 0 : i32
    return %arg1, %c0_i32 : i32, i32
  }
  func.func @transform_2(%arg0: i32, %arg1: i32, %arg2: memref<2xi32, #tpu.memory_space<smem>>, %arg3: memref<8xi32, #tpu.memory_space<smem>>, %arg4: memref<8xi32, #tpu.memory_space<smem>>) -> (i32, i32) {
    %c0_i32 = arith.constant 0 : i32
    %c0_i32_0 = arith.constant 0 : i32
    return %arg1, %c0_i32 : i32, i32
  }
  func.func @transform_3(%arg0: i32, %arg1: i32, %arg2: memref<2xi32, #tpu.memory_space<smem>>, %arg3: memref<8xi32, #tpu.memory_space<smem>>, %arg4: memref<8xi32, #tpu.memory_space<smem>>) -> (i32, i32) {
    %c0_i32 = arith.constant 0 : i32
    %c0_i32_0 = arith.constant 0 : i32
    return %arg1, %c0_i32 : i32, i32
  }
  func.func @transform_4(%arg0: i32, %arg1: i32, %arg2: memref<2xi32, #tpu.memory_space<smem>>, %arg3: memref<8xi32, #tpu.memory_space<smem>>, %arg4: memref<8xi32, #tpu.memory_space<smem>>) -> (i32, i32) {
    %c0_i32 = arith.constant 0 : i32
    %c0_i32_0 = arith.constant 0 : i32
    return %arg1, %c0_i32 : i32, i32
  }
  func.func @transform_5(%arg0: i32, %arg1: i32, %arg2: memref<2xi32, #tpu.memory_space<smem>>, %arg3: memref<8xi32, #tpu.memory_space<smem>>, %arg4: memref<8xi32, #tpu.memory_space<smem>>) -> (i32, i32) {
    %c0_i32 = arith.constant 0 : i32
    %c0_i32_0 = arith.constant 0 : i32
    return %c0_i32, %arg0 : i32, i32
  }
  func.func @transform_6(%arg0: i32, %arg1: i32, %arg2: memref<2xi32, #tpu.memory_space<smem>>, %arg3: memref<8xi32, #tpu.memory_space<smem>>, %arg4: memref<8xi32, #tpu.memory_space<smem>>) -> (i32, i32) {
    %c0_i32 = arith.constant 0 : i32
    %c0_i32_0 = arith.constant 0 : i32
    return %c0_i32, %arg0 : i32, i32
  }
  func.func @transform_7(%arg0: i32, %arg1: i32, %arg2: memref<2xi32, #tpu.memory_space<smem>>, %arg3: memref<8xi32, #tpu.memory_space<smem>>, %arg4: memref<8xi32, #tpu.memory_space<smem>>) -> (i32, i32) {
    %c0_i32 = arith.constant 0 : i32
    %c0_i32_0 = arith.constant 0 : i32
    return %c0_i32, %arg0 : i32, i32
  }
  func.func @transform_8(%arg0: i32, %arg1: i32, %arg2: memref<2xi32, #tpu.memory_space<smem>>, %arg3: memref<8xi32, #tpu.memory_space<smem>>, %arg4: memref<8xi32, #tpu.memory_space<smem>>) -> (i32, i32) {
    %c0_i32 = arith.constant 0 : i32
    %c0_i32_0 = arith.constant 0 : i32
    return %c0_i32, %arg0 : i32, i32
  }
  func.func @transform_9(%arg0: i32, %arg1: i32, %arg2: memref<2xi32, #tpu.memory_space<smem>>, %arg3: memref<8xi32, #tpu.memory_space<smem>>, %arg4: memref<8xi32, #tpu.memory_space<smem>>) -> (i32, i32) {
    %c0_i32 = arith.constant 0 : i32
    %c0_i32_0 = arith.constant 0 : i32
    %c0_i32_1 = arith.constant 0 : i32
    return %c0_i32, %c0_i32_0 : i32, i32
  }
  func.func @transform_10(%arg0: i32, %arg1: i32, %arg2: memref<2xi32, #tpu.memory_space<smem>>, %arg3: memref<8xi32, #tpu.memory_space<smem>>, %arg4: memref<8xi32, #tpu.memory_space<smem>>) -> (i32, i32) {
    %c0_i32 = arith.constant 0 : i32
    %c0_i32_0 = arith.constant 0 : i32
    %c0_i32_1 = arith.constant 0 : i32
    return %c0_i32, %c0_i32_0 : i32, i32
  }
  func.func @transform_11(%arg0: i32, %arg1: i32, %arg2: memref<2xi32, #tpu.memory_space<smem>>, %arg3: memref<8xi32, #tpu.memory_space<smem>>, %arg4: memref<8xi32, #tpu.memory_space<smem>>) -> (i32, i32) {
    %c0_i32 = arith.constant 0 : i32
    %c0_i32_0 = arith.constant 0 : i32
    %c0_i32_1 = arith.constant 0 : i32
    return %c0_i32, %c0_i32_0 : i32, i32
  }
  func.func @transform_12(%arg0: i32, %arg1: i32, %arg2: memref<2xi32, #tpu.memory_space<smem>>, %arg3: memref<8xi32, #tpu.memory_space<smem>>, %arg4: memref<8xi32, #tpu.memory_space<smem>>) -> (i32, i32) {
    %c0_i32 = arith.constant 0 : i32
    %c0_i32_0 = arith.constant 0 : i32
    %c0_i32_1 = arith.constant 0 : i32
    return %c0_i32, %c0_i32_0 : i32, i32
  }
  func.func @transform_13(%arg0: i32, %arg1: i32, %arg2: memref<2xi32, #tpu.memory_space<smem>>, %arg3: memref<8xi32, #tpu.memory_space<smem>>, %arg4: memref<8xi32, #tpu.memory_space<smem>>) -> (i32, i32) {
    %c0_i32 = arith.constant 0 : i32
    %c0_i32_0 = arith.constant 0 : i32
    %c0_i32_1 = arith.constant 0 : i32
    return %c0_i32, %c0_i32_0 : i32, i32
  }
}

</mosaic_0001>

<llo_original>
// kernel: _pairwise_hausdorff_sq.1
$region0: #{_pairwise_hausdorff_sq.1}
  #allocation0 [shape = 'u32[]', space=smem, size = 0x4, offset = 0x4, fixed_abs, tag = 'smem constant byte address 0x4 - core index']
  #allocation1 [shape = 'u32[72,128]{1,0:T(1,128)}', space=vmem, size = 0x9000, scoped, tag = 'internal scratch']
  #allocation2 [shape = 'f32[8,256]{1,0:T(8,128)}', space=vmem, size = 0x2000, scoped, tag = 'scratch operand']
  #allocation3 [shape = 'f32[8,256]{1,0:T(8,128)}', space=vmem, size = 0x2000, scoped, tag = 'scratch operand']
  #allocation4 [shape = 's32[1]{0}', space=sflag, size = 0x4, scoped, tag = 'scoped memory for _pairwise_hausdorff_sq.1']
  #allocation5 [shape = 'u8[512]{0}', space=smem, size = 0x200, scoped, tag = 'prefetched SMEM operand 0']
  #allocation6 [shape = 'u8[512]{0}', space=smem, size = 0x200, scoped, tag = 'prefetched SMEM operand 1']
  #allocation7 [shape = 'u8[512]{0}', space=smem, size = 0x200, scoped, tag = 'prefetched SMEM operand 2']
  %s0 = inlined_call_operand.vmem [shape: s32[2], index: 0, kind: input, shape index: {}]
  %s1 = inlined_call_operand.vmem [shape: s32[8], index: 1, kind: input, shape index: {}]
  %s2 = inlined_call_operand.vmem [shape: s32[8], index: 2, kind: input, shape index: {}, may-alias: {2,13}]
  %s3 = inlined_call_operand.vmem [shape: s32[1,256], index: 3, kind: input, shape index: {}, may-alias: {3,8}]
  %s4 = inlined_call_operand.vmem [shape: s32[256,1], index: 4, kind: input, shape index: {}]
  %s5 = inlined_call_operand.vmem [shape: s32[256,1], index: 5, kind: input, shape index: {}]
  %s6 = inlined_call_operand.vmem [shape: f32[256,1], index: 6, kind: input, shape index: {}]
  %s7 = inlined_call_operand.vmem [shape: f32[256,1], index: 7, kind: input, shape index: {}]
  %s8 = inlined_call_operand.vmem [shape: s32[1,256], index: 8, kind: input, shape index: {}, may-alias: {3,8}]
  %s9 = inlined_call_operand.vmem [shape: s32[1,256], index: 9, kind: input, shape index: {}]
  %s10 = inlined_call_operand.vmem [shape: f32[1,256], index: 10, kind: input, shape index: {}]
  %s11 = inlined_call_operand.vmem [shape: f32[1,256], index: 11, kind: input, shape index: {}]
  %s12 = inlined_call_operand.vmem [shape: s32[8,1], index: 12, kind: input, shape index: {}]
  %s13 = inlined_call_operand.vmem [shape: s32[1,8], index: 13, kind: input, shape index: {}, may-alias: {2,13}]
  %s14 = inlined_call_operand.hbm [shape: f32[8,8], index: 14, kind: output, shape index: {0}]
  %s15 = inlined_call_operand.hbm [shape: f32[8,8], index: 15, kind: output, shape index: {1}]
  %s16 = inlined_call_operand.hbm [shape: f32[8,8], index: 16, kind: output, shape index: {2}]
  %17 = xla_tuple %s14, %s15, %s16
  %s18 = sld [smem:[#allocation0]]
  $region150: #{_pairwise_hausdorff_sq.1} parent=0
    _
  %s20 = ssub.s32 1, %s18
  %s21 = scalar_select 0, %s20, %s18
  %s23 = sshll.u32 %s0, 4
  %s24 = int_to_ptr.vmem [resolvable:$true] %s23
  %26 = dma.vmem_to_smem %s24, 16, [#allocation5], [#allocation4]
  %s28 = sshll.u32 %s1, 4
  %s29 = int_to_ptr.vmem [resolvable:$true] %s28
  %31 = dma.vmem_to_smem %s29, 16, [#allocation6], [#allocation4]
  %s33 = sshll.u32 %s2, 4
  %s34 = int_to_ptr.vmem [resolvable:$true] %s33
  %36 = dma.vmem_to_smem %s34, 16, [#allocation7], [#allocation4]
  %38 = dma.done [#allocation4], 48
  %39 = sfence
  $region1: #{_pairwise_hausdorff_sq.1} parent=0
    #allocation8 [shape = 'u8[4096]{0}', space=vmem, size = 0x1000, scoped, tag = 'output window, operand 0, single buffered']
    #allocation9 [shape = 's32[1]{0}', space=sflag, size = 0x4, scoped, tag = 'scoped memory for _pairwise_hausdorff_sq.1']
    #allocation10 [shape = 'u8[4096]{0}', space=vmem, size = 0x1000, scoped, tag = 'output window, operand 1, single buffered']
    #allocation11 [shape = 's32[1]{0}', space=sflag, size = 0x4, scoped, tag = 'scoped memory for _pairwise_hausdorff_sq.1']
    #allocation12 [shape = 'u8[4096]{0}', space=vmem, size = 0x1000, scoped, tag = 'output window, operand 2, single buffered']
    %40 = vsyncpa [#allocation9], 0
    %41 = vsyncpa [#allocation11], 0
    // Predicated region
    $region2: #{_pairwise_hausdorff_sq.1} parent=1 // pred_check
      _
    $region3: #{_pairwise_hausdorff_sq.1} parent=1 // pred_check_branch
      %43 = sbr.rel (0) target = $region5
    $region4: #{_pairwise_hausdorff_sq.1} parent=1 // pred_region
      _
    $region5: #{_pairwise_hausdorff_sq.1} parent=1 // pred_fallthru
      _
    // Predicated region
    $region6: #{_pairwise_hausdorff_sq.1} parent=1 // pred_check
      _
    $region7: #{_pairwise_hausdorff_sq.1} parent=1 // pred_check_branch
      %45 = sbr.rel (0) target = $region9
    $region8: #{_pairwise_hausdorff_sq.1} parent=1 // pred_region
      _
    $region9: #{_pairwise_hausdorff_sq.1} parent=1 // pred_fallthru
      _
    // Predicated region
    $region10: #{_pairwise_hausdorff_sq.1} parent=1 // pred_check
      _
    $region11: #{_pairwise_hausdorff_sq.1} parent=1 // pred_check_branch
      %47 = sbr.rel (0) target = $region13
    $region12: #{_pairwise_hausdorff_sq.1} parent=1 // pred_region
      _
    $region13: #{_pairwise_hausdorff_sq.1} parent=1 // pred_fallthru
      _
    // Predicated region
    $region14: #{_pairwise_hausdorff_sq.1} parent=1 // pred_check
      _
    $region15: #{_pairwise_hausdorff_sq.1} parent=1 // pred_check_branch
      %49 = sbr.rel (0) target = $region17
    $region16: #{_pairwise_hausdorff_sq.1} parent=1 // pred_region
      _
    $region17: #{_pairwise_hausdorff_sq.1} parent=1 // pred_fallthru
      _
    // Predicated region
    $region18: #{_pairwise_hausdorff_sq.1} parent=1 // pred_check
      _
    $region19: #{_pairwise_hausdorff_sq.1} parent=1 // pred_check_branch
      %51 = sbr.rel (0) target = $region21
    $region20: #{_pairwise_hausdorff_sq.1} parent=1 // pred_region
      _
    $region21: #{_pairwise_hausdorff_sq.1} parent=1 // pred_fallthru
      _
    // Predicated region
    $region22: #{_pairwise_hausdorff_sq.1} parent=1 // pred_check
      _
    $region23: #{_pairwise_hausdorff_sq.1} parent=1 // pred_check_branch
      %53 = sbr.rel (0) target = $region25
    $region24: #{_pairwise_hausdorff_sq.1} parent=1 // pred_region
      _
    $region25: #{_pairwise_hausdorff_sq.1} parent=1 // pred_fallthru
      _
    // Predicated region
    $region26: #{_pairwise_hausdorff_sq.1} parent=1 // pred_check
      _
    $region27: #{_pairwise_hausdorff_sq.1} parent=1 // pred_check_branch
      %55 = sbr.rel (0) target = $region29
    $region28: #{_pairwise_hausdorff_sq.1} parent=1 // pred_region
      _
    $region29: #{_pairwise_hausdorff_sq.1} parent=1 // pred_fallthru
      _
    // Predicated region
    $region30: #{_pairwise_hausdorff_sq.1} parent=1 // pred_check
      _
    $region31: #{_pairwise_hausdorff_sq.1} parent=1 // pred_check_branch
      %57 = sbr.rel (0) target = $region33
    $region32: #{_pairwise_hausdorff_sq.1} parent=1 // pred_region
      _
    $region33: #{_pairwise_hausdorff_sq.1} parent=1 // pred_fallthru
      _
    // Predicated region
    $region34: #{_pairwise_hausdorff_sq.1} parent=1 // pred_check
      _
    $region35: #{_pairwise_hausdorff_sq.1} parent=1 // pred_check_branch
      %59 = sbr.rel (0) target = $region37
    $region36: #{_pairwise_hausdorff_sq.1} parent=1 // pred_region
      _
    $region37: #{_pairwise_hausdorff_sq.1} parent=1 // pred_fallthru
      _
    // Predicated region
    $region38: #{_pairwise_hausdorff_sq.1} parent=1 // pred_check
      _
    $region39: #{_pairwise_hausdorff_sq.1} parent=1 // pred_check_branch
      %61 = sbr.rel (0) target = $region41
    $region40: #{_pairwise_hausdorff_sq.1} parent=1 // pred_region
      _
    $region41: #{_pairwise_hausdorff_sq.1} parent=1 // pred_fallthru
      _
    // Predicated region
    $region42: #{_pairwise_hausdorff_sq.1} parent=1 // pred_check
      _
    $region43: #{_pairwise_hausdorff_sq.1} parent=1 // pred_check_branch
      %63 = sbr.rel (0) target = $region45
    $region44: #{_pairwise_hausdorff_sq.1} parent=1 // pred_region
      _
    $region45: #{_pairwise_hausdorff_sq.1} parent=1 // pred_fallthru
      _
    %s64 = sld [smem:[#allocation5]]
    %s65 = sld [smem:[#allocation5 + $0x1]]
    %p66 = scmp.eq.s32.totalorder 0, 0
    %p67 = scmp.eq.s32.totalorder 0, 0
    %p68 = pnand %p66, %p67
    %p69 = pneg %p68
    // Predicated region
    $region46: #{_pairwise_hausdorff_sq.1} parent=1 // pred_check
      _
    $region47: #{_pairwise_hausdorff_sq.1} parent=1 // pred_check_branch
      %71 = sbr.rel (%p68) target = $region49
    $region48: #{_pairwise_hausdorff_sq.1} parent=1 // pred_region
      %vm72 = vcmask 64512
      %73 = vst.msk [vmem:[#allocation8] sm:$0xff] %vm72, -1.0
      %74 = vst.msk [vmem:[#allocation10] sm:$0xff] %vm72, -1.0
      %75 = vst.msk [vmem:[#allocation12] sm:$0xff] %vm72, 0.0
    $region49: #{_pairwise_hausdorff_sq.1} parent=1 // pred_fallthru
      _
    // Predicated region
    $region50: #{_pairwise_hausdorff_sq.1} parent=1 // pred_check
      %p76 = pneg %p67
    $region51: #{_pairwise_hausdorff_sq.1} parent=1 // pred_check_branch
      %78 = sbr.rel (%p76) target = $region53
    $region52: #{_pairwise_hausdorff_sq.1} parent=1 // pred_region
      %79 = vst [vmem:[#allocation2] sm:$0xff] 1e+30
      %80 = vst [vmem:[#allocation2 + $0x8] sm:$0xff] 1e+30
      %81 = vst [vmem:[#allocation3] sm:$0xff] 1e+30
      %82 = vst [vmem:[#allocation3 + $0x8] sm:$0xff] 1e+30
    $region53: #{_pairwise_hausdorff_sq.1} parent=1 // pred_fallthru
      _
    %v83 = vld [vmem:[%s6] sm:$0xff]
    %v84 = vld [vmem:[%s6 + $0x8] sm:$0xff]
    %v85 = vld [vmem:[%s6 + $0x10] sm:$0xff]
    %v86 = vld [vmem:[%s6 + $0x18] sm:$0xff]
    %v87 = vld [vmem:[%s6 + $0x20] sm:$0xff]
    %v88 = vld [vmem:[%s6 + $0x28] sm:$0xff]
    %v89 = vld [vmem:[%s6 + $0x30] sm:$0xff]
    %v90 = vld [vmem:[%s6 + $0x38] sm:$0xff]
    %v91 = vld [vmem:[%s6 + $0x40] sm:$0xff]
    %v92 = vld [vmem:[%s6 + $0x48] sm:$0xff]
    %v93 = vld [vmem:[%s6 + $0x50] sm:$0xff]
    %v94 = vld [vmem:[%s6 + $0x58] sm:$0xff]
    %v95 = vld [vmem:[%s6 + $0x60] sm:$0xff]
    %v96 = vld [vmem:[%s6 + $0x68] sm:$0xff]
    %v97 = vld [vmem:[%s6 + $0x70] sm:$0xff]
    %v98 = vld [vmem:[%s6 + $0x78] sm:$0xff]
    %v99 = vld [vmem:[%s6 + $0x80] sm:$0xff]
    %v100 = vld [vmem:[%s6 + $0x88] sm:$0xff]
    %v101 = vld [vmem:[%s6 + $0x90] sm:$0xff]
    %v102 = vld [vmem:[%s6 + $0x98] sm:$0xff]
    %v103 = vld [vmem:[%s6 + $0xa0] sm:$0xff]
    %v104 = vld [vmem:[%s6 + $0xa8] sm:$0xff]
    %v105 = vld [vmem:[%s6 + $0xb0] sm:$0xff]
    %v106 = vld [vmem:[%s6 + $0xb8] sm:$0xff]
    %v107 = vld [vmem:[%s6 + $0xc0] sm:$0xff]
    %v108 = vld [vmem:[%s6 + $0xc8] sm:$0xff]
    %v109 = vld [vmem:[%s6 + $0xd0] sm:$0xff]
    %v110 = vld [vmem:[%s6 + $0xd8] sm:$0xff]
    %v111 = vld [vmem:[%s6 + $0xe0] sm:$0xff]
    %v112 = vld [vmem:[%s6 + $0xe8] sm:$0xff]
    %v113 = vld [vmem:[%s6 + $0xf0] sm:$0xff]
    %v114 = vld [vmem:[%s6 + $0xf8] sm:$0xff]
    %v115 = vld [vmem:[%s10] sm:$0x3]
    %117 = vset.pattern.permute.xlu0 0
    %118 = vperm.xlu0 %117, %v83
    %v119 = vpop.permute.xlu0 %118
    %122 = vset.pattern.permute.xlu0 0
    %123 = vperm.xlu0 %122, %v84
    %v124 = vpop.permute.xlu0 %123
    %127 = vset.pattern.permute.xlu0 0
    %128 = vperm.xlu0 %127, %v85
    %v129 = vpop.permute.xlu0 %128
    %132 = vset.pattern.permute.xlu0 0
    %133 = vperm.xlu0 %132, %v86
    %v134 = vpop.permute.xlu0 %133
    %137 = vset.pattern.permute.xlu0 0
    %138 = vperm.xlu0 %137, %v87
    %v139 = vpop.permute.xlu0 %138
    %142 = vset.pattern.permute.xlu0 0
    %143 = vperm.xlu0 %142, %v88
    %v144 = vpop.permute.xlu0 %143
    %147 = vset.pattern.permute.xlu0 0
    %148 = vperm.xlu0 %147, %v89
    %v149 = vpop.permute.xlu0 %148
    %152 = vset.pattern.permute.xlu0 0
    %153 = vperm.xlu0 %152, %v90
    %v154 = vpop.permute.xlu0 %153
    %157 = vset.pattern.permute.xlu0 0
    %158 = vperm.xlu0 %157, %v91
    %v159 = vpop.permute.xlu0 %158
    %162 = vset.pattern.permute.xlu0 0
    %163 = vperm.xlu0 %162, %v92
    %v164 = vpop.permute.xlu0 %163
    %167 = vset.pattern.permute.xlu0 0
    %168 = vperm.xlu0 %167, %v93
    %v169 = vpop.permute.xlu0 %168
    %172 = vset.pattern.permute.xlu0 0
    %173 = vperm.xlu0 %172, %v94
    %v174 = vpop.permute.xlu0 %173
    %177 = vset.pattern.permute.xlu0 0
    %178 = vperm.xlu0 %177, %v95
    %v179 = vpop.permute.xlu0 %178
    %182 = vset.pattern.permute.xlu0 0
    %183 = vperm.xlu0 %182, %v96
    %v184 = vpop.permute.xlu0 %183
    %187 = vset.pattern.permute.xlu0 0
    %188 = vperm.xlu0 %187, %v97
    %v189 = vpop.permute.xlu0 %188
    %192 = vset.pattern.permute.xlu0 0
    %193 = vperm.xlu0 %192, %v98
    %v194 = vpop.permute.xlu0 %193
    %197 = vset.pattern.permute.xlu0 0
    %198 = vperm.xlu0 %197, %v99
    %v199 = vpop.permute.xlu0 %198
    %202 = vset.pattern.permute.xlu0 0
    %203 = vperm.xlu0 %202, %v100
    %v204 = vpop.permute.xlu0 %203
    %207 = vset.pattern.permute.xlu0 0
    %208 = vperm.xlu0 %207, %v101
    %v209 = vpop.permute.xlu0 %208
    %212 = vset.pattern.permute.xlu0 0
    %213 = vperm.xlu0 %212, %v102
    %v214 = vpop.permute.xlu0 %213
    %217 = vset.pattern.permute.xlu0 0
    %218 = vperm.xlu0 %217, %v103
    %v219 = vpop.permute.xlu0 %218
    %222 = vset.pattern.permute.xlu0 0
    %223 = vperm.xlu0 %222, %v104
    %v224 = vpop.permute.xlu0 %223
    %227 = vset.pattern.permute.xlu0 0
    %228 = vperm.xlu0 %227, %v105
    %v229 = vpop.permute.xlu0 %228
    %232 = vset.pattern.permute.xlu0 0
    %233 = vperm.xlu0 %232, %v106
    %v234 = vpop.permute.xlu0 %233
    %237 = vset.pattern.permute.xlu0 0
    %238 = vperm.xlu0 %237, %v107
    %v239 = vpop.permute.xlu0 %238
    %242 = vset.pattern.permute.xlu0 0
    %243 = vperm.xlu0 %242, %v108
    %v244 = vpop.permute.xlu0 %243
    %247 = vset.pattern.permute.xlu0 0
    %248 = vperm.xlu0 %247, %v109
    %v249 = vpop.permute.xlu0 %248
    %252 = vset.pattern.permute.xlu0 0
    %253 = vperm.xlu0 %252, %v110
    %v254 = vpop.permute.xlu0 %253
    %257 = vset.pattern.permute.xlu0 0
    %258 = vperm.xlu0 %257, %v111
    %v259 = vpop.permute.xlu0 %258
    %262 = vset.pattern.permute.xlu0 0
    %263 = vperm.xlu0 %262, %v112
    %v264 = vpop.permute.xlu0 %263
    %267 = vset.pattern.permute.xlu0 0
    %268 = vperm.xlu0 %267, %v113
    %v269 = vpop.permute.xlu0 %268
    %272 = vset.pattern.permute.xlu0 0
    %273 = vperm.xlu0 %272, %v114
    %v274 = vpop.permute.xlu0 %273
    %v277 = vperm.slane %v115, 0
    %v278 = vperm.slane %v115, 1
    %v281 = vsub.f32 %v119, %v277
    %v282 = vsub.f32 %v119, %v278
    %v283 = vsub.f32 %v124, %v277
    %v284 = vsub.f32 %v124, %v278
    %v285 = vsub.f32 %v129, %v277
    %v286 = vsub.f32 %v129, %v278
    %v287 = vsub.f32 %v134, %v277
    %v288 = vsub.f32 %v134, %v278
    %v289 = vsub.f32 %v139, %v277
    %v290 = vsub.f32 %v139, %v278
    %v291 = vsub.f32 %v144, %v277
    %v292 = vsub.f32 %v144, %v278
    %v293 = vsub.f32 %v149, %v277
    %v294 = vsub.f32 %v149, %v278
    %v295 = vsub.f32 %v154, %v277
    %v296 = vsub.f32 %v154, %v278
    %v297 = vsub.f32 %v159, %v277
    %v298 = vsub.f32 %v159, %v278
    %v299 = vsub.f32 %v164, %v277
    %v300 = vsub.f32 %v164, %v278
    %v301 = vsub.f32 %v169, %v277
    %v302 = vsub.f32 %v169, %v278
    %v303 = vsub.f32 %v174, %v277
    %v304 = vsub.f32 %v174, %v278
    %v305 = vsub.f32 %v179, %v277
    %v306 = vsub.f32 %v179, %v278
    %v307 = vsub.f32 %v184, %v277
    %v308 = vsub.f32 %v184, %v278
    %v309 = vsub.f32 %v189, %v277
    %v310 = vsub.f32 %v189, %v278
    %v311 = vsub.f32 %v194, %v277
    %v312 = vsub.f32 %v194, %v278
    %v313 = vsub.f32 %v199, %v277
    %v314 = vsub.f32 %v199, %v278
    %v315 = vsub.f32 %v204, %v277
    %v316 = vsub.f32 %v204, %v278
    %v317 = vsub.f32 %v209, %v277
    %v318 = vsub.f32 %v209, %v278
    %v319 = vsub.f32 %v214, %v277
    %v320 = vsub.f32 %v214, %v278
    %v321 = vsub.f32 %v219, %v277
    %v322 = vsub.f32 %v219, %v278
    %v323 = vsub.f32 %v224, %v277
    %v324 = vsub.f32 %v224, %v278
    %v325 = vsub.f32 %v229, %v277
    %v326 = vsub.f32 %v229, %v278
    %v327 = vsub.f32 %v234, %v277
    %v328 = vsub.f32 %v234, %v278
    %v329 = vsub.f32 %v239, %v277
    %v330 = vsub.f32 %v239, %v278
    %v331 = vsub.f32 %v244, %v277
    %v332 = vsub.f32 %v244, %v278
    %v333 = vsub.f32 %v249, %v277
    %v334 = vsub.f32 %v249, %v278
    %v335 = vsub.f32 %v254, %v277
    %v336 = vsub.f32 %v254, %v278
    %v337 = vsub.f32 %v259, %v277
    %v338 = vsub.f32 %v259, %v278
    %v339 = vsub.f32 %v264, %v277
    %v340 = vsub.f32 %v264, %v278
    %v341 = vsub.f32 %v269, %v277
    %v342 = vsub.f32 %v269, %v278
    %v343 = vsub.f32 %v274, %v277
    %v344 = vsub.f32 %v274, %v278
    %v345 = vld [vmem:[%s7] sm:$0xff]
    %v346 = vld [vmem:[%s7 + $0x8] sm:$0xff]
    %v347 = vld [vmem:[%s7 + $0x10] sm:$0xff]
    %v348 = vld [vmem:[%s7 + $0x18] sm:$0xff]
    %v349 = vld [vmem:[%s7 + $0x20] sm:$0xff]
    %v350 = vld [vmem:[%s7 + $0x28] sm:$0xff]
    %v351 = vld [vmem:[%s7 + $0x30] sm:$0xff]
    %v352 = vld [vmem:[%s7 + $0x38] sm:$0xff]
    %v353 = vld [vmem:[%s7 + $0x40] sm:$0xff]
    %v354 = vld [vmem:[%s7 + $0x48] sm:$0xff]
    %v355 = vld [vmem:[%s7 + $0x50] sm:$0xff]
    %v356 = vld [vmem:[%s7 + $0x58] sm:$0xff]
    %v357 = vld [vmem:[%s7 + $0x60] sm:$0xff]
    %v358 = vld [vmem:[%s7 + $0x68] sm:$0xff]
    %v359 = vld [vmem:[%s7 + $0x70] sm:$0xff]
    %v360 = vld [vmem:[%s7 + $0x78] sm:$0xff]
    %v361 = vld [vmem:[%s7 + $0x80] sm:$0xff]
    %v362 = vld [vmem:[%s7 + $0x88] sm:$0xff]
    %v363 = vld [vmem:[%s7 + $0x90] sm:$0xff]
    %v364 = vld [vmem:[%s7 + $0x98] sm:$0xff]
    %v365 = vld [vmem:[%s7 + $0xa0] sm:$0xff]
    %v366 = vld [vmem:[%s7 + $0xa8] sm:$0xff]
    %v367 = vld [vmem:[%s7 + $0xb0] sm:$0xff]
    %v368 = vld [vmem:[%s7 + $0xb8] sm:$0xff]
    %v369 = vld [vmem:[%s7 + $0xc0] sm:$0xff]
    %v370 = vld [vmem:[%s7 + $0xc8] sm:$0xff]
    %v371 = vld [vmem:[%s7 + $0xd0] sm:$0xff]
    %v372 = vld [vmem:[%s7 + $0xd8] sm:$0xff]
    %v373 = vld [vmem:[%s7 + $0xe0] sm:$0xff]
    %v374 = vld [vmem:[%s7 + $0xe8] sm:$0xff]
    %v375 = vld [vmem:[%s7 + $0xf0] sm:$0xff]
    %v376 = vld [vmem:[%s7 + $0xf8] sm:$0xff]
    %v377 = vld [vmem:[%s11] sm:$0x3]
    %379 = vset.pattern.permute.xlu0 0
    %380 = vperm.xlu0 %379, %v345
    %v381 = vpop.permute.xlu0 %380
    %384 = vset.pattern.permute.xlu0 0
    %385 = vperm.xlu0 %384, %v346
    %v386 = vpop.permute.xlu0 %385
    %389 = vset.pattern.permute.xlu0 0
    %390 = vperm.xlu0 %389, %v347
    %v391 = vpop.permute.xlu0 %390
    %394 = vset.pattern.permute.xlu0 0
    %395 = vperm.xlu0 %394, %v348
    %v396 = vpop.permute.xlu0 %395
    %399 = vset.pattern.permute.xlu0 0
    %400 = vperm.xlu0 %399, %v349
    %v401 = vpop.permute.xlu0 %400
    %404 = vset.pattern.permute.xlu0 0
    %405 = vperm.xlu0 %404, %v350
    %v406 = vpop.permute.xlu0 %405
    %409 = vset.pattern.permute.xlu0 0
    %410 = vperm.xlu0 %409, %v351
    %v411 = vpop.permute.xlu0 %410
    %414 = vset.pattern.permute.xlu0 0
    %415 = vperm.xlu0 %414, %v352
    %v416 = vpop.permute.xlu0 %415
    %419 = vset.pattern.permute.xlu0 0
    %420 = vperm.xlu0 %419, %v353
    %v421 = vpop.permute.xlu0 %420
    %424 = vset.pattern.permute.xlu0 0
    %425 = vperm.xlu0 %424, %v354
    %v426 = vpop.permute.xlu0 %425
    %429 = vset.pattern.permute.xlu0 0
    %430 = vperm.xlu0 %429, %v355
    %v431 = vpop.permute.xlu0 %430
    %434 = vset.pattern.permute.xlu0 0
    %435 = vperm.xlu0 %434, %v356
    %v436 = vpop.permute.xlu0 %435
    %439 = vset.pattern.permute.xlu0 0
    %440 = vperm.xlu0 %439, %v357
    %v441 = vpop.permute.xlu0 %440
    %444 = vset.pattern.permute.xlu0 0
    %445 = vperm.xlu0 %444, %v358
    %v446 = vpop.permute.xlu0 %445
    %449 = vset.pattern.permute.xlu0 0
    %450 = vperm.xlu0 %449, %v359
    %v451 = vpop.permute.xlu0 %450
    %454 = vset.pattern.permute.xlu0 0
    %455 = vperm.xlu0 %454, %v360
    %v456 = vpop.permute.xlu0 %455
    %459 = vset.pattern.permute.xlu0 0
    %460 = vperm.xlu0 %459, %v361
    %v461 = vpop.permute.xlu0 %460
    %464 = vset.pattern.permute.xlu0 0
    %465 = vperm.xlu0 %464, %v362
    %v466 = vpop.permute.xlu0 %465
    %469 = vset.pattern.permute.xlu0 0
    %470 = vperm.xlu0 %469, %v363
    %v471 = vpop.permute.xlu0 %470
    %474 = vset.pattern.permute.xlu0 0
    %475 = vperm.xlu0 %474, %v364
    %v476 = vpop.permute.xlu0 %475
    %479 = vset.pattern.permute.xlu0 0
    %480 = vperm.xlu0 %479, %v365
    %v481 = vpop.permute.xlu0 %480
    %484 = vset.pattern.permute.xlu0 0
    %485 = vperm.xlu0 %484, %v366
    %v486 = vpop.permute.xlu0 %485
    %489 = vset.pattern.permute.xlu0 0
    %490 = vperm.xlu0 %489, %v367
    %v491 = vpop.permute.xlu0 %490
    %494 = vset.pattern.permute.xlu0 0
    %495 = vperm.xlu0 %494, %v368
    %v496 = vpop.permute.xlu0 %495
    %499 = vset.pattern.permute.xlu0 0
    %500 = vperm.xlu0 %499, %v369
    %v501 = vpop.permute.xlu0 %500
    %504 = vset.pattern.permute.xlu0 0
    %505 = vperm.xlu0 %504, %v370
    %v506 = vpop.permute.xlu0 %505
    %509 = vset.pattern.permute.xlu0 0
    %510 = vperm.xlu0 %509, %v371
    %v511 = vpop.permute.xlu0 %510
    %514 = vset.pattern.permute.xlu0 0
    %515 = vperm.xlu0 %514, %v372
    %v516 = vpop.permute.xlu0 %515
    %519 = vset.pattern.permute.xlu0 0
    %520 = vperm.xlu0 %519, %v373
    %v521 = vpop.permute.xlu0 %520
    %524 = vset.pattern.permute.xlu0 0
    %525 = vperm.xlu0 %524, %v374
    %v526 = vpop.permute.xlu0 %525
    %529 = vset.pattern.permute.xlu0 0
    %530 = vperm.xlu0 %529, %v375
    %v531 = vpop.permute.xlu0 %530
    %534 = vset.pattern.permute.xlu0 0
    %535 = vperm.xlu0 %534, %v376
    %v536 = vpop.permute.xlu0 %535
    %v539 = vperm.slane %v377, 0
    %v540 = vperm.slane %v377, 1
    %v543 = vsub.f32 %v381, %v539
    %v544 = vsub.f32 %v381, %v540
    %v545 = vsub.f32 %v386, %v539
    %v546 = vsub.f32 %v386, %v540
    %v547 = vsub.f32 %v391, %v539
    %v548 = vsub.f32 %v391, %v540
    %v549 = vsub.f32 %v396, %v539
    %v550 = vsub.f32 %v396, %v540
    %v551 = vsub.f32 %v401, %v539
    %v552 = vsub.f32 %v401, %v540
    %v553 = vsub.f32 %v406, %v539
    %v554 = vsub.f32 %v406, %v540
    %v555 = vsub.f32 %v411, %v539
    %v556 = vsub.f32 %v411, %v540
    %v557 = vsub.f32 %v416, %v539
    %v558 = vsub.f32 %v416, %v540
    %v559 = vsub.f32 %v421, %v539
    %v560 = vsub.f32 %v421, %v540
    %v561 = vsub.f32 %v426, %v539
    %v562 = vsub.f32 %v426, %v540
    %v563 = vsub.f32 %v431, %v539
    %v564 = vsub.f32 %v431, %v540
    %v565 = vsub.f32 %v436, %v539
    %v566 = vsub.f32 %v436, %v540
    %v567 = vsub.f32 %v441, %v539
    %v568 = vsub.f32 %v441, %v540
    %v569 = vsub.f32 %v446, %v539
    %v570 = vsub.f32 %v446, %v540
    %v571 = vsub.f32 %v451, %v539
    %v572 = vsub.f32 %v451, %v540
    %v573 = vsub.f32 %v456, %v539
    %v574 = vsub.f32 %v456, %v540
    %v575 = vsub.f32 %v461, %v539
    %v576 = vsub.f32 %v461, %v540
    %v577 = vsub.f32 %v466, %v539
    %v578 = vsub.f32 %v466, %v540
    %v579 = vsub.f32 %v471, %v539
    %v580 = vsub.f32 %v471, %v540
    %v581 = vsub.f32 %v476, %v539
    %v582 = vsub.f32 %v476, %v540
    %v583 = vsub.f32 %v481, %v539
    %v584 = vsub.f32 %v481, %v540
    %v585 = vsub.f32 %v486, %v539
    %v586 = vsub.f32 %v486, %v540
    %v587 = vsub.f32 %v491, %v539
    %v588 = vsub.f32 %v491, %v540
    %v589 = vsub.f32 %v496, %v539
    %v590 = vsub.f32 %v496, %v540
    %v591 = vsub.f32 %v501, %v539
    %v592 = vsub.f32 %v501, %v540
    %v593 = vsub.f32 %v506, %v539
    %v594 = vsub.f32 %v506, %v540
    %v595 = vsub.f32 %v511, %v539
    %v596 = vsub.f32 %v511, %v540
    %v597 = vsub.f32 %v516, %v539
    %v598 = vsub.f32 %v516, %v540
    %v599 = vsub.f32 %v521, %v539
    %v600 = vsub.f32 %v521, %v540
    %v601 = vsub.f32 %v526, %v539
    %v602 = vsub.f32 %v526, %v540
    %v603 = vsub.f32 %v531, %v539
    %v604 = vsub.f32 %v531, %v540
    %v605 = vsub.f32 %v536, %v539
    %v606 = vsub.f32 %v536, %v540
    %v607 = vmul.f32 %v281, %v281
    %v608 = vmul.f32 %v282, %v282
    %v609 = vmul.f32 %v283, %v283
    %v610 = vmul.f32 %v284, %v284
    %v611 = vmul.f32 %v285, %v285
    %v612 = vmul.f32 %v286, %v286
    %v613 = vmul.f32 %v287, %v287
    %v614 = vmul.f32 %v288, %v288
    %v615 = vmul.f32 %v289, %v289
    %v616 = vmul.f32 %v290, %v290
    %v617 = vmul.f32 %v291, %v291
    %v618 = vmul.f32 %v292, %v292
    %v619 = vmul.f32 %v293, %v293
    %v620 = vmul.f32 %v294, %v294
    %v621 = vmul.f32 %v295, %v295
    %v622 = vmul.f32 %v296, %v296
    %v623 = vmul.f32 %v297, %v297
    %v624 = vmul.f32 %v298, %v298
    %v625 = vmul.f32 %v299, %v299
    %v626 = vmul.f32 %v300, %v300
    %v627 = vmul.f32 %v301, %v301
    %v628 = vmul.f32 %v302, %v302
    %v629 = vmul.f32 %v303, %v303
    %v630 = vmul.f32 %v304, %v304
    %v631 = vmul.f32 %v305, %v305
    %v632 = vmul.f32 %v306, %v306
    %v633 = vmul.f32 %v307, %v307
    %v634 = vmul.f32 %v308, %v308
    %v635 = vmul.f32 %v309, %v309
    %v636 = vmul.f32 %v310, %v310
    %v637 = vmul.f32 %v311, %v311
    %v638 = vmul.f32 %v312, %v312
    %v639 = vmul.f32 %v313, %v313
    %v640 = vmul.f32 %v314, %v314
    %v641 = vmul.f32 %v315, %v315
    %v642 = vmul.f32 %v316, %v316
    %v643 = vmul.f32 %v317, %v317
    %v644 = vmul.f32 %v318, %v318
    %v645 = vmul.f32 %v319, %v319
    %v646 = vmul.f32 %v320, %v320
    %v647 = vmul.f32 %v321, %v321
    %v648 = vmul.f32 %v322, %v322
    %v649 = vmul.f32 %v323, %v323
    %v650 = vmul.f32 %v324, %v324
    %v651 = vmul.f32 %v325, %v325
    %v652 = vmul.f32 %v326, %v326
    %v653 = vmul.f32 %v327, %v327
    %v654 = vmul.f32 %v328, %v328
    %v655 = vmul.f32 %v329, %v329
    %v656 = vmul.f32 %v330, %v330
    %v657 = vmul.f32 %v331, %v331
    %v658 = vmul.f32 %v332, %v332
    %v659 = vmul.f32 %v333, %v333
    %v660 = vmul.f32 %v334, %v334
    %v661 = vmul.f32 %v335, %v335
    %v662 = vmul.f32 %v336, %v336
    %v663 = vmul.f32 %v337, %v337
    %v664 = vmul.f32 %v338, %v338
    %v665 = vmul.f32 %v339, %v339
    %v666 = vmul.f32 %v340, %v340
    %v667 = vmul.f32 %v341, %v341
    %v668 = vmul.f32 %v342, %v342
    %v669 = vmul.f32 %v343, %v343
    %v670 = vmul.f32 %v344, %v344
    %v671 = vmul.f32 %v543, %v543
    %v672 = vmul.f32 %v544, %v544
    %v673 = vmul.f32 %v545, %v545
    %v674 = vmul.f32 %v546, %v546
    %v675 = vmul.f32 %v547, %v547
    %v676 = vmul.f32 %v548, %v548
    %v677 = vmul.f32 %v549, %v549
    %v678 = vmul.f32 %v550, %v550
    %v679 = vmul.f32 %v551, %v551
    %v680 = vmul.f32 %v552, %v552
    %v681 = vmul.f32 %v553, %v553
    %v682 = vmul.f32 %v554, %v554
    %v683 = vmul.f32 %v555, %v555
    %v684 = vmul.f32 %v556, %v556
    %v685 = vmul.f32 %v557, %v557
    %v686 = vmul.f32 %v558, %v558
    %v687 = vmul.f32 %v559, %v559
    %v688 = vmul.f32 %v560, %v560
    %v689 = vmul.f32 %v561, %v561
    %v690 = vmul.f32 %v562, %v562
    %v691 = vmul.f32 %v563, %v563
    %v692 = vmul.f32 %v564, %v564
    %v693 = vmul.f32 %v565, %v565
    %v694 = vmul.f32 %v566, %v566
    %v695 = vmul.f32 %v567, %v567
    %v696 = vmul.f32 %v568, %v568
    %v697 = vmul.f32 %v569, %v569
    %v698 = vmul.f32 %v570, %v570
    %v699 = vmul.f32 %v571, %v571
    %v700 = vmul.f32 %v572, %v572
    %v701 = vmul.f32 %v573, %v573
    %v702 = vmul.f32 %v574, %v574
    %v703 = vmul.f32 %v575, %v575
    %v704 = vmul.f32 %v576, %v576
    %v705 = vmul.f32 %v577, %v577
    %v706 = vmul.f32 %v578, %v578
    %v707 = vmul.f32 %v579, %v579
    %v708 = vmul.f32 %v580, %v580
    %v709 = vmul.f32 %v581, %v581
    %v710 = vmul.f32 %v582, %v582
    %v711 = vmul.f32 %v583, %v583
    %v712 = vmul.f32 %v584, %v584
    %v713 = vmul.f32 %v585, %v585
    %v714 = vmul.f32 %v586, %v586
    %v715 = vmul.f32 %v587, %v587
    %v716 = vmul.f32 %v588, %v588
    %v717 = vmul.f32 %v589, %v589
    %v718 = vmul.f32 %v590, %v590
    %v719 = vmul.f32 %v591, %v591
    %v720 = vmul.f32 %v592, %v592
    %v721 = vmul.f32 %v593, %v593
    %v722 = vmul.f32 %v594, %v594
    %v723 = vmul.f32 %v595, %v595
    %v724 = vmul.f32 %v596, %v596
    %v725 = vmul.f32 %v597, %v597
    %v726 = vmul.f32 %v598, %v598
    %v727 = vmul.f32 %v599, %v599
    %v728 = vmul.f32 %v600, %v600
    %v729 = vmul.f32 %v601, %v601
    %v730 = vmul.f32 %v602, %v602
    %v731 = vmul.f32 %v603, %v603
    %v732 = vmul.f32 %v604, %v604
    %v733 = vmul.f32 %v605, %v605
    %v734 = vmul.f32 %v606, %v606
    %v735 = vadd.f32 %v607, %v671
    %v736 = vadd.f32 %v608, %v672
    %v737 = vadd.f32 %v609, %v673
    %v738 = vadd.f32 %v610, %v674
    %v739 = vadd.f32 %v611, %v675
    %v740 = vadd.f32 %v612, %v676
    %v741 = vadd.f32 %v613, %v677
    %v742 = vadd.f32 %v614, %v678
    %v743 = vadd.f32 %v615, %v679
    %v744 = vadd.f32 %v616, %v680
    %v745 = vadd.f32 %v617, %v681
    %v746 = vadd.f32 %v618, %v682
    %v747 = vadd.f32 %v619, %v683
    %v748 = vadd.f32 %v620, %v684
    %v749 = vadd.f32 %v621, %v685
    %v750 = vadd.f32 %v622, %v686
    %v751 = vadd.f32 %v623, %v687
    %v752 = vadd.f32 %v624, %v688
    %v753 = vadd.f32 %v625, %v689
    %v754 = vadd.f32 %v626, %v690
    %v755 = vadd.f32 %v627, %v691
    %v756 = vadd.f32 %v628, %v692
    %v757 = vadd.f32 %v629, %v693
    %v758 = vadd.f32 %v630, %v694
    %v759 = vadd.f32 %v631, %v695
    %v760 = vadd.f32 %v632, %v696
    %v761 = vadd.f32 %v633, %v697
    %v762 = vadd.f32 %v634, %v698
    %v763 = vadd.f32 %v635, %v699
    %v764 = vadd.f32 %v636, %v700
    %v765 = vadd.f32 %v637, %v701
    %v766 = vadd.f32 %v638, %v702
    %v767 = vadd.f32 %v639, %v703
    %v768 = vadd.f32 %v640, %v704
    %v769 = vadd.f32 %v641, %v705
    %v770 = vadd.f32 %v642, %v706
    %v771 = vadd.f32 %v643, %v707
    %v772 = vadd.f32 %v644, %v708
    %v773 = vadd.f32 %v645, %v709
    %v774 = vadd.f32 %v646, %v710
    %v775 = vadd.f32 %v647, %v711
    %v776 = vadd.f32 %v648, %v712
    %v777 = vadd.f32 %v649, %v713
    %v778 = vadd.f32 %v650, %v714
    %v779 = vadd.f32 %v651, %v715
    %v780 = vadd.f32 %v652, %v716
    %v781 = vadd.f32 %v653, %v717
    %v782 = vadd.f32 %v654, %v718
    %v783 = vadd.f32 %v655, %v719
    %v784 = vadd.f32 %v656, %v720
    %v785 = vadd.f32 %v657, %v721
    %v786 = vadd.f32 %v658, %v722
    %v787 = vadd.f32 %v659, %v723
    %v788 = vadd.f32 %v660, %v724
    %v789 = vadd.f32 %v661, %v725
    %v790 = vadd.f32 %v662, %v726
    %v791 = vadd.f32 %v663, %v727
    %v792 = vadd.f32 %v664, %v728
    %v793 = vadd.f32 %v665, %v729
    %v794 = vadd.f32 %v666, %v730
    %v795 = vadd.f32 %v667, %v731
    %v796 = vadd.f32 %v668, %v732
    %v797 = vadd.f32 %v669, %v733
    %v798 = vadd.f32 %v670, %v734
    %p799 = scmp.gt.s32.totalorder %s65, 0
    // Predicated region
    $region54: #{_pairwise_hausdorff_sq.1} parent=1 // pred_check
      %p800 = pneg %p799
    $region55: #{_pairwise_hausdorff_sq.1} parent=1 // pred_check_branch
      %802 = sbr.rel (%p800) target = $region57
    $region56: #{_pairwise_hausdorff_sq.1} parent=1 // pred_region
      %v803 = vld [vmem:[%s5] sm:$0xff]
      %v804 = vld [vmem:[%s5 + $0x8] sm:$0xff]
      %v805 = vld [vmem:[%s5 + $0x10] sm:$0xff]
      %v806 = vld [vmem:[%s5 + $0x18] sm:$0xff]
      %v807 = vld [vmem:[%s5 + $0x20] sm:$0xff]
      %v808 = vld [vmem:[%s5 + $0x28] sm:$0xff]
      %v809 = vld [vmem:[%s5 + $0x30] sm:$0xff]
      %v810 = vld [vmem:[%s5 + $0x38] sm:$0xff]
      %v811 = vld [vmem:[%s5 + $0x40] sm:$0xff]
      %v812 = vld [vmem:[%s5 + $0x48] sm:$0xff]
      %v813 = vld [vmem:[%s5 + $0x50] sm:$0xff]
      %v814 = vld [vmem:[%s5 + $0x58] sm:$0xff]
      %v815 = vld [vmem:[%s5 + $0x60] sm:$0xff]
      %v816 = vld [vmem:[%s5 + $0x68] sm:$0xff]
      %v817 = vld [vmem:[%s5 + $0x70] sm:$0xff]
      %v818 = vld [vmem:[%s5 + $0x78] sm:$0xff]
      %v819 = vld [vmem:[%s5 + $0x80] sm:$0xff]
      %v820 = vld [vmem:[%s5 + $0x88] sm:$0xff]
      %v821 = vld [vmem:[%s5 + $0x90] sm:$0xff]
      %v822 = vld [vmem:[%s5 + $0x98] sm:$0xff]
      %v823 = vld [vmem:[%s5 + $0xa0] sm:$0xff]
      %v824 = vld [vmem:[%s5 + $0xa8] sm:$0xff]
      %v825 = vld [vmem:[%s5 + $0xb0] sm:$0xff]
      %v826 = vld [vmem:[%s5 + $0xb8] sm:$0xff]
      %v827 = vld [vmem:[%s5 + $0xc0] sm:$0xff]
      %v828 = vld [vmem:[%s5 + $0xc8] sm:$0xff]
      %v829 = vld [vmem:[%s5 + $0xd0] sm:$0xff]
      %v830 = vld [vmem:[%s5 + $0xd8] sm:$0xff]
      %v831 = vld [vmem:[%s5 + $0xe0] sm:$0xff]
      %v832 = vld [vmem:[%s5 + $0xe8] sm:$0xff]
      %v833 = vld [vmem:[%s5 + $0xf0] sm:$0xff]
      %v834 = vld [vmem:[%s5 + $0xf8] sm:$0xff]
      %s835 = sld [smem:[#allocation7]]
      %v836 = vstv %s835
      %vm837 = vcmp.eq.s32.totalorder %v803, %v836
      %vm838 = vcmp.eq.s32.totalorder %v804, %v836
      %vm839 = vcmp.eq.s32.totalorder %v805, %v836
      %vm840 = vcmp.eq.s32.totalorder %v806, %v836
      %vm841 = vcmp.eq.s32.totalorder %v807, %v836
      %vm842 = vcmp.eq.s32.totalorder %v808, %v836
      %vm843 = vcmp.eq.s32.totalorder %v809, %v836
      %vm844 = vcmp.eq.s32.totalorder %v810, %v836
      %vm845 = vcmp.eq.s32.totalorder %v811, %v836
      %vm846 = vcmp.eq.s32.totalorder %v812, %v836
      %vm847 = vcmp.eq.s32.totalorder %v813, %v836
      %vm848 = vcmp.eq.s32.totalorder %v814, %v836
      %vm849 = vcmp.eq.s32.totalorder %v815, %v836
      %vm850 = vcmp.eq.s32.totalorder %v816, %v836
      %vm851 = vcmp.eq.s32.totalorder %v817, %v836
      %vm852 = vcmp.eq.s32.totalorder %v818, %v836
      %vm853 = vcmp.eq.s32.totalorder %v819, %v836
      %vm854 = vcmp.eq.s32.totalorder %v820, %v836
      %vm855 = vcmp.eq.s32.totalorder %v821, %v836
      %vm856 = vcmp.eq.s32.totalorder %v822, %v836
      %vm857 = vcmp.eq.s32.totalorder %v823, %v836
      %vm858 = vcmp.eq.s32.totalorder %v824, %v836
      %vm859 = vcmp.eq.s32.totalorder %v825, %v836
      %vm860 = vcmp.eq.s32.totalorder %v826, %v836
      %vm861 = vcmp.eq.s32.totalorder %v827, %v836
      %vm862 = vcmp.eq.s32.totalorder %v828, %v836
      %vm863 = vcmp.eq.s32.totalorder %v829, %v836
      %vm864 = vcmp.eq.s32.totalorder %v830, %v836
      %vm865 = vcmp.eq.s32.totalorder %v831, %v836
      %vm866 = vcmp.eq.s32.totalorder %v832, %v836
      %vm867 = vcmp.eq.s32.totalorder %v833, %v836
      %vm868 = vcmp.eq.s32.totalorder %v834, %v836
      %v869 = vsel %vm837, 1, 0
      %v870 = vsel %vm838, 1, 0
      %v871 = vsel %vm839, 1, 0
      %v872 = vsel %vm840, 1, 0
      %v873 = vsel %vm841, 1, 0
      %v874 = vsel %vm842, 1, 0
      %v875 = vsel %vm843, 1, 0
      %v876 = vsel %vm844, 1, 0
      %v877 = vsel %vm845, 1, 0
      %v878 = vsel %vm846, 1, 0
      %v879 = vsel %vm847, 1, 0
      %v880 = vsel %vm848, 1, 0
      %v881 = vsel %vm849, 1, 0
      %v882 = vsel %vm850, 1, 0
      %v883 = vsel %vm851, 1, 0
      %v884 = vsel %vm852, 1, 0
      %v885 = vsel %vm853, 1, 0
      %v886 = vsel %vm854, 1, 0
      %v887 = vsel %vm855, 1, 0
      %v888 = vsel %vm856, 1, 0
      %v889 = vsel %vm857, 1, 0
      %v890 = vsel %vm858, 1, 0
      %v891 = vsel %vm859, 1, 0
      %v892 = vsel %vm860, 1, 0
      %v893 = vsel %vm861, 1, 0
      %v894 = vsel %vm862, 1, 0
      %v895 = vsel %vm863, 1, 0
      %v896 = vsel %vm864, 1, 0
      %v897 = vsel %vm865, 1, 0
      %v898 = vsel %vm866, 1, 0
      %v899 = vsel %vm867, 1, 0
      %v900 = vsel %vm868, 1, 0
      %901 = vset.pattern.permute.xlu0 0
      %902 = vperm.xlu0 %901, %v869
      %v903 = vpop.permute.xlu0 %902
      %904 = vset.pattern.permute.xlu0 0
      %905 = vperm.xlu0 %904, %v870
      %v906 = vpop.permute.xlu0 %905
      %907 = vset.pattern.permute.xlu0 0
      %908 = vperm.xlu0 %907, %v871
      %v909 = vpop.permute.xlu0 %908
      %910 = vset.pattern.permute.xlu0 0
      %911 = vperm.xlu0 %910, %v872
      %v912 = vpop.permute.xlu0 %911
      %913 = vset.pattern.permute.xlu0 0
      %914 = vperm.xlu0 %913, %v873
      %v915 = vpop.permute.xlu0 %914
      %916 = vset.pattern.permute.xlu0 0
      %917 = vperm.xlu0 %916, %v874
      %v918 = vpop.permute.xlu0 %917
      %919 = vset.pattern.permute.xlu0 0
      %920 = vperm.xlu0 %919, %v875
      %v921 = vpop.permute.xlu0 %920
      %922 = vset.pattern.permute.xlu0 0
      %923 = vperm.xlu0 %922, %v876
      %v924 = vpop.permute.xlu0 %923
      %925 = vset.pattern.permute.xlu0 0
      %926 = vperm.xlu0 %925, %v877
      %v927 = vpop.permute.xlu0 %926
      %928 = vset.pattern.permute.xlu0 0
      %929 = vperm.xlu0 %928, %v878
      %v930 = vpop.permute.xlu0 %929
      %931 = vset.pattern.permute.xlu0 0
      %932 = vperm.xlu0 %931, %v879
      %v933 = vpop.permute.xlu0 %932
      %934 = vset.pattern.permute.xlu0 0
      %935 = vperm.xlu0 %934, %v880
      %v936 = vpop.permute.xlu0 %935
      %937 = vset.pattern.permute.xlu0 0
      %938 = vperm.xlu0 %937, %v881
      %v939 = vpop.permute.xlu0 %938
      %940 = vset.pattern.permute.xlu0 0
      %941 = vperm.xlu0 %940, %v882
      %v942 = vpop.permute.xlu0 %941
      %943 = vset.pattern.permute.xlu0 0
      %944 = vperm.xlu0 %943, %v883
      %v945 = vpop.permute.xlu0 %944
      %946 = vset.pattern.permute.xlu0 0
      %947 = vperm.xlu0 %946, %v884
      %v948 = vpop.permute.xlu0 %947
      %949 = vset.pattern.permute.xlu0 0
      %950 = vperm.xlu0 %949, %v885
      %v951 = vpop.permute.xlu0 %950
      %952 = vset.pattern.permute.xlu0 0
      %953 = vperm.xlu0 %952, %v886
      %v954 = vpop.permute.xlu0 %953
      %955 = vset.pattern.permute.xlu0 0
      %956 = vperm.xlu0 %955, %v887
      %v957 = vpop.permute.xlu0 %956
      %958 = vset.pattern.permute.xlu0 0
      %959 = vperm.xlu0 %958, %v888
      %v960 = vpop.permute.xlu0 %959
      %961 = vset.pattern.permute.xlu0 0
      %962 = vperm.xlu0 %961, %v889
      %v963 = vpop.permute.xlu0 %962
      %964 = vset.pattern.permute.xlu0 0
      %965 = vperm.xlu0 %964, %v890
      %v966 = vpop.permute.xlu0 %965
      %967 = vset.pattern.permute.xlu0 0
      %968 = vperm.xlu0 %967, %v891
      %v969 = vpop.permute.xlu0 %968
      %970 = vset.pattern.permute.xlu0 0
      %971 = vperm.xlu0 %970, %v892
      %v972 = vpop.permute.xlu0 %971
      %973 = vset.pattern.permute.xlu0 0
      %974 = vperm.xlu0 %973, %v893
      %v975 = vpop.permute.xlu0 %974
      %976 = vset.pattern.permute.xlu0 0
      %977 = vperm.xlu0 %976, %v894
      %v978 = vpop.permute.xlu0 %977
      %979 = vset.pattern.permute.xlu0 0
      %980 = vperm.xlu0 %979, %v895
      %v981 = vpop.permute.xlu0 %980
      %982 = vset.pattern.permute.xlu0 0
      %983 = vperm.xlu0 %982, %v896
      %v984 = vpop.permute.xlu0 %983
      %985 = vset.pattern.permute.xlu0 0
      %986 = vperm.xlu0 %985, %v897
      %v987 = vpop.permute.xlu0 %986
      %988 = vset.pattern.permute.xlu0 0
      %989 = vperm.xlu0 %988, %v898
      %v990 = vpop.permute.xlu0 %989
      %991 = vset.pattern.permute.xlu0 0
      %992 = vperm.xlu0 %991, %v899
      %v993 = vpop.permute.xlu0 %992
      %994 = vset.pattern.permute.xlu0 0
      %995 = vperm.xlu0 %994, %v900
      %v996 = vpop.permute.xlu0 %995
      %vm997 = vcmp.eq.s32.totalorder %v903, 1
      %vm998 = vcmp.eq.s32.totalorder %v906, 1
      %vm999 = vcmp.eq.s32.totalorder %v909, 1
      %vm1000 = vcmp.eq.s32.totalorder %v912, 1
      %vm1001 = vcmp.eq.s32.totalorder %v915, 1
      %vm1002 = vcmp.eq.s32.totalorder %v918, 1
      %vm1003 = vcmp.eq.s32.totalorder %v921, 1
      %vm1004 = vcmp.eq.s32.totalorder %v924, 1
      %vm1005 = vcmp.eq.s32.totalorder %v927, 1
      %vm1006 = vcmp.eq.s32.totalorder %v930, 1
      %vm1007 = vcmp.eq.s32.totalorder %v933, 1
      %vm1008 = vcmp.eq.s32.totalorder %v936, 1
      %vm1009 = vcmp.eq.s32.totalorder %v939, 1
      %vm1010 = vcmp.eq.s32.totalorder %v942, 1
      %vm1011 = vcmp.eq.s32.totalorder %v945, 1
      %vm1012 = vcmp.eq.s32.totalorder %v948, 1
      %vm1013 = vcmp.eq.s32.totalorder %v951, 1
      %vm1014 = vcmp.eq.s32.totalorder %v954, 1
      %vm1015 = vcmp.eq.s32.totalorder %v957, 1
      %vm1016 = vcmp.eq.s32.totalorder %v960, 1
      %vm1017 = vcmp.eq.s32.totalorder %v963, 1
      %vm1018 = vcmp.eq.s32.totalorder %v966, 1
      %vm1019 = vcmp.eq.s32.totalorder %v969, 1
      %vm1020 = vcmp.eq.s32.totalorder %v972, 1
      %vm1021 = vcmp.eq.s32.totalorder %v975, 1
      %vm1022 = vcmp.eq.s32.totalorder %v978, 1
      %vm1023 = vcmp.eq.s32.totalorder %v981, 1
      %vm1024 = vcmp.eq.s32.totalorder %v984, 1
      %vm1025 = vcmp.eq.s32.totalorder %v987, 1
      %vm1026 = vcmp.eq.s32.totalorder %v990, 1
      %vm1027 = vcmp.eq.s32.totalorder %v993, 1
      %vm1028 = vcmp.eq.s32.totalorder %v996, 1
      %v1029 = vsel %vm997, %v735, 1e+30
      %v1030 = vsel %vm997, %v736, 1e+30
      %v1031 = vsel %vm998, %v737, 1e+30
      %v1032 = vsel %vm998, %v738, 1e+30
      %v1033 = vsel %vm999, %v739, 1e+30
      %v1034 = vsel %vm999, %v740, 1e+30
      %v1035 = vsel %vm1000, %v741, 1e+30
      %v1036 = vsel %vm1000, %v742, 1e+30
      %v1037 = vsel %vm1001, %v743, 1e+30
      %v1038 = vsel %vm1001, %v744, 1e+30
      %v1039 = vsel %vm1002, %v745, 1e+30
      %v1040 = vsel %vm1002, %v746, 1e+30
      %v1041 = vsel %vm1003, %v747, 1e+30
      %v1042 = vsel %vm1003, %v748, 1e+30
      %v1043 = vsel %vm1004, %v749, 1e+30
      %v1044 = vsel %vm1004, %v750, 1e+30
      %v1045 = vsel %vm1005, %v751, 1e+30
      %v1046 = vsel %vm1005, %v752, 1e+30
      %v1047 = vsel %vm1006, %v753, 1e+30
      %v1048 = vsel %vm1006, %v754, 1e+30
      %v1049 = vsel %vm1007, %v755, 1e+30
      %v1050 = vsel %vm1007, %v756, 1e+30
      %v1051 = vsel %vm1008, %v757, 1e+30
      %v1052 = vsel %vm1008, %v758, 1e+30
      %v1053 = vsel %vm1009, %v759, 1e+30
      %v1054 = vsel %vm1009, %v760, 1e+30
      %v1055 = vsel %vm1010, %v761, 1e+30
      %v1056 = vsel %vm1010, %v762, 1e+30
      %v1057 = vsel %vm1011, %v763, 1e+30
      %v1058 = vsel %vm1011, %v764, 1e+30
      %v1059 = vsel %vm1012, %v765, 1e+30
      %v1060 = vsel %vm1012, %v766, 1e+30
      %v1061 = vsel %vm1013, %v767, 1e+30
      %v1062 = vsel %vm1013, %v768, 1e+30
      %v1063 = vsel %vm1014, %v769, 1e+30
      %v1064 = vsel %vm1014, %v770, 1e+30
      %v1065 = vsel %vm1015, %v771, 1e+30
      %v1066 = vsel %vm1015, %v772, 1e+30
      %v1067 = vsel %vm1016, %v773, 1e+30
      %v1068 = vsel %vm1016, %v774, 1e+30
      %v1069 = vsel %vm1017, %v775, 1e+30
      %v1070 = vsel %vm1017, %v776, 1e+30
      %v1071 = vsel %vm1018, %v777, 1e+30
      %v1072 = vsel %vm1018, %v778, 1e+30
      %v1073 = vsel %vm1019, %v779, 1e+30
      %v1074 = vsel %vm1019, %v780, 1e+30
      %v1075 = vsel %vm1020, %v781, 1e+30
      %v1076 = vsel %vm1020, %v782, 1e+30
      %v1077 = vsel %vm1021, %v783, 1e+30
      %v1078 = vsel %vm1021, %v784, 1e+30
      %v1079 = vsel %vm1022, %v785, 1e+30
      %v1080 = vsel %vm1022, %v786, 1e+30
      %v1081 = vsel %vm1023, %v787, 1e+30
      %v1082 = vsel %vm1023, %v788, 1e+30
      %v1083 = vsel %vm1024, %v789, 1e+30
      %v1084 = vsel %vm1024, %v790, 1e+30
      %v1085 = vsel %vm1025, %v791, 1e+30
      %v1086 = vsel %vm1025, %v792, 1e+30
      %v1087 = vsel %vm1026, %v793, 1e+30
      %v1088 = vsel %vm1026, %v794, 1e+30
      %v1089 = vsel %vm1027, %v795, 1e+30
      %v1090 = vsel %vm1027, %v796, 1e+30
      %v1091 = vsel %vm1028, %v797, 1e+30
      %v1092 = vsel %vm1028, %v798, 1e+30
      %v1093 = vmin.f32 %v1029, %v1033
      %v1094 = vmin.f32 %v1031, %v1035
      %v1095 = vmin.f32 %v1093, %v1037
      %v1096 = vmin.f32 %v1094, %v1039
      %v1097 = vmin.f32 %v1095, %v1041
      %v1098 = vmin.f32 %v1096, %v1043
      %v1099 = vmin.f32 %v1097, %v1045
      %v1100 = vmin.f32 %v1098, %v1047
      %v1101 = vmin.f32 %v1099, %v1049
      %v1102 = vmin.f32 %v1100, %v1051
      %v1103 = vmin.f32 %v1101, %v1053
      %v1104 = vmin.f32 %v1102, %v1055
      %v1105 = vmin.f32 %v1103, %v1057
      %v1106 = vmin.f32 %v1104, %v1059
      %v1107 = vmin.f32 %v1105, %v1061
      %v1108 = vmin.f32 %v1106, %v1063
      %v1109 = vmin.f32 %v1107, %v1065
      %v1110 = vmin.f32 %v1108, %v1067
      %v1111 = vmin.f32 %v1109, %v1069
      %v1112 = vmin.f32 %v1110, %v1071
      %v1113 = vmin.f32 %v1111, %v1073
      %v1114 = vmin.f32 %v1112, %v1075
      %v1115 = vmin.f32 %v1113, %v1077
      %v1116 = vmin.f32 %v1114, %v1079
      %v1117 = vmin.f32 %v1115, %v1081
      %v1118 = vmin.f32 %v1116, %v1083
      %v1119 = vmin.f32 %v1117, %v1085
      %v1120 = vmin.f32 %v1118, %v1087
      %v1121 = vmin.f32 %v1119, %v1089
      %v1122 = vmin.f32 %v1120, %v1091
      %v1123 = vmin.f32 %v1121, %v1122
      %v1124 = vrot.slane %v1123, 4
      %v1125 = vmin.f32 %v1123, %v1124
      %v1126 = vrot.slane %v1125, 2
      %v1127 = vmin.f32 %v1125, %v1126
      %v1128 = vrot.slane %v1127, 1
      %v1129 = vmin.f32 %v1127, %v1128
      %v1130 = vmin.f32 %v1030, %v1034
      %v1131 = vmin.f32 %v1032, %v1036
      %v1132 = vmin.f32 %v1130, %v1038
      %v1133 = vmin.f32 %v1131, %v1040
      %v1134 = vmin.f32 %v1132, %v1042
      %v1135 = vmin.f32 %v1133, %v1044
      %v1136 = vmin.f32 %v1134, %v1046
      %v1137 = vmin.f32 %v1135, %v1048
      %v1138 = vmin.f32 %v1136, %v1050
      %v1139 = vmin.f32 %v1137, %v1052
      %v1140 = vmin.f32 %v1138, %v1054
      %v1141 = vmin.f32 %v1139, %v1056
      %v1142 = vmin.f32 %v1140, %v1058
      %v1143 = vmin.f32 %v1141, %v1060
      %v1144 = vmin.f32 %v1142, %v1062
      %v1145 = vmin.f32 %v1143, %v1064
      %v1146 = vmin.f32 %v1144, %v1066
      %v1147 = vmin.f32 %v1145, %v1068
      %v1148 = vmin.f32 %v1146, %v1070
      %v1149 = vmin.f32 %v1147, %v1072
      %v1150 = vmin.f32 %v1148, %v1074
      %v1151 = vmin.f32 %v1149, %v1076
      %v1152 = vmin.f32 %v1150, %v1078
      %v1153 = vmin.f32 %v1151, %v1080
      %v1154 = vmin.f32 %v1152, %v1082
      %v1155 = vmin.f32 %v1153, %v1084
      %v1156 = vmin.f32 %v1154, %v1086
      %v1157 = vmin.f32 %v1155, %v1088
      %v1158 = vmin.f32 %v1156, %v1090
      %v1159 = vmin.f32 %v1157, %v1092
      %v1160 = vmin.f32 %v1158, %v1159
      %v1161 = vrot.slane %v1160, 4
      %v1162 = vmin.f32 %v1160, %v1161
      %v1163 = vrot.slane %v1162, 2
      %v1164 = vmin.f32 %v1162, %v1163
      %v1165 = vrot.slane %v1164, 1
      %v1166 = vmin.f32 %v1164, %v1165
      %v1167 = vld [vmem:[#allocation2] ss:$8 sm:$0x3]
      %v1170 = vrot.slane %v1166, 7
      %vm1171 = vcmask 1040384
      %v1172 = vsel %vm1171, %v1129, %v1170
      %v1174 = vmin.f32 %v1167, %v1172
      %v1175 = vlaneseq
      %vm1176 = vcmp.ge.s32.totalorder %v1175, 0
      %vm1177 = vcmp.lt.s32.totalorder %v1175, 256
      %vm1178 = vmand %vm1176, %vm1177
      %1179 = vst.msk [vmem:[#allocation2] ss:$8 sm:$0x3] %vm1178, %v1174
      %1180 = vst.msk [vmem:[#allocation2] ss:$8 sm:$0x0] %vm1178, %v1174
    $region57: #{_pairwise_hausdorff_sq.1} parent=1 // pred_fallthru
      _
    %p1181 = scmp.gt.s32.totalorder %s65, 1
    // Predicated region
    $region58: #{_pairwise_hausdorff_sq.1} parent=1 // pred_check
      %p1182 = pneg %p1181
    $region59: #{_pairwise_hausdorff_sq.1} parent=1 // pred_check_branch
      %1184 = sbr.rel (%p1182) target = $region61
    $region60: #{_pairwise_hausdorff_sq.1} parent=1 // pred_region
      %v1185 = vld [vmem:[%s5] sm:$0xff]
      %v1186 = vld [vmem:[%s5 + $0x8] sm:$0xff]
      %v1187 = vld [vmem:[%s5 + $0x10] sm:$0xff]
      %v1188 = vld [vmem:[%s5 + $0x18] sm:$0xff]
      %v1189 = vld [vmem:[%s5 + $0x20] sm:$0xff]
      %v1190 = vld [vmem:[%s5 + $0x28] sm:$0xff]
      %v1191 = vld [vmem:[%s5 + $0x30] sm:$0xff]
      %v1192 = vld [vmem:[%s5 + $0x38] sm:$0xff]
      %v1193 = vld [vmem:[%s5 + $0x40] sm:$0xff]
      %v1194 = vld [vmem:[%s5 + $0x48] sm:$0xff]
      %v1195 = vld [vmem:[%s5 + $0x50] sm:$0xff]
      %v1196 = vld [vmem:[%s5 + $0x58] sm:$0xff]
      %v1197 = vld [vmem:[%s5 + $0x60] sm:$0xff]
      %v1198 = vld [vmem:[%s5 + $0x68] sm:$0xff]
      %v1199 = vld [vmem:[%s5 + $0x70] sm:$0xff]
      %v1200 = vld [vmem:[%s5 + $0x78] sm:$0xff]
      %v1201 = vld [vmem:[%s5 + $0x80] sm:$0xff]
      %v1202 = vld [vmem:[%s5 + $0x88] sm:$0xff]
      %v1203 = vld [vmem:[%s5 + $0x90] sm:$0xff]
      %v1204 = vld [vmem:[%s5 + $0x98] sm:$0xff]
      %v1205 = vld [vmem:[%s5 + $0xa0] sm:$0xff]
      %v1206 = vld [vmem:[%s5 + $0xa8] sm:$0xff]
      %v1207 = vld [vmem:[%s5 + $0xb0] sm:$0xff]
      %v1208 = vld [vmem:[%s5 + $0xb8] sm:$0xff]
      %v1209 = vld [vmem:[%s5 + $0xc0] sm:$0xff]
      %v1210 = vld [vmem:[%s5 + $0xc8] sm:$0xff]
      %v1211 = vld [vmem:[%s5 + $0xd0] sm:$0xff]
      %v1212 = vld [vmem:[%s5 + $0xd8] sm:$0xff]
      %v1213 = vld [vmem:[%s5 + $0xe0] sm:$0xff]
      %v1214 = vld [vmem:[%s5 + $0xe8] sm:$0xff]
      %v1215 = vld [vmem:[%s5 + $0xf0] sm:$0xff]
      %v1216 = vld [vmem:[%s5 + $0xf8] sm:$0xff]
      %s1217 = sld [smem:[#allocation7 + $0x1]]
      %v1218 = vstv %s1217
      %vm1219 = vcmp.eq.s32.totalorder %v1185, %v1218
      %vm1220 = vcmp.eq.s32.totalorder %v1186, %v1218
      %vm1221 = vcmp.eq.s32.totalorder %v1187, %v1218
      %vm1222 = vcmp.eq.s32.totalorder %v1188, %v1218
      %vm1223 = vcmp.eq.s32.totalorder %v1189, %v1218
      %vm1224 = vcmp.eq.s32.totalorder %v1190, %v1218
      %vm1225 = vcmp.eq.s32.totalorder %v1191, %v1218
      %vm1226 = vcmp.eq.s32.totalorder %v1192, %v1218
      %vm1227 = vcmp.eq.s32.totalorder %v1193, %v1218
      %vm1228 = vcmp.eq.s32.totalorder %v1194, %v1218
      %vm1229 = vcmp.eq.s32.totalorder %v1195, %v1218
      %vm1230 = vcmp.eq.s32.totalorder %v1196, %v1218
      %vm1231 = vcmp.eq.s32.totalorder %v1197, %v1218
      %vm1232 = vcmp.eq.s32.totalorder %v1198, %v1218
      %vm1233 = vcmp.eq.s32.totalorder %v1199, %v1218
      %vm1234 = vcmp.eq.s32.totalorder %v1200, %v1218
      %vm1235 = vcmp.eq.s32.totalorder %v1201, %v1218
      %vm1236 = vcmp.eq.s32.totalorder %v1202, %v1218
      %vm1237 = vcmp.eq.s32.totalorder %v1203, %v1218
      %vm1238 = vcmp.eq.s32.totalorder %v1204, %v1218
      %vm1239 = vcmp.eq.s32.totalorder %v1205, %v1218
      %vm1240 = vcmp.eq.s32.totalorder %v1206, %v1218
      %vm1241 = vcmp.eq.s32.totalorder %v1207, %v1218
      %vm1242 = vcmp.eq.s32.totalorder %v1208, %v1218
      %vm1243 = vcmp.eq.s32.totalorder %v1209, %v1218
      %vm1244 = vcmp.eq.s32.totalorder %v1210, %v1218
      %vm1245 = vcmp.eq.s32.totalorder %v1211, %v1218
      %vm1246 = vcmp.eq.s32.totalorder %v1212, %v1218
      %vm1247 = vcmp.eq.s32.totalorder %v1213, %v1218
      %vm1248 = vcmp.eq.s32.totalorder %v1214, %v1218
      %vm1249 = vcmp.eq.s32.totalorder %v1215, %v1218
      %vm1250 = vcmp.eq.s32.totalorder %v1216, %v1218
      %v1251 = vsel %vm1219, 1, 0
      %v1252 = vsel %vm1220, 1, 0
      %v1253 = vsel %vm1221, 1, 0
      %v1254 = vsel %vm1222, 1, 0
      %v1255 = vsel %vm1223, 1, 0
      %v1256 = vsel %vm1224, 1, 0
      %v1257 = vsel %vm1225, 1, 0
      %v1258 = vsel %vm1226, 1, 0
      %v1259 = vsel %vm1227, 1, 0
      %v1260 = vsel %vm1228, 1, 0
      %v1261 = vsel %vm1229, 1, 0
      %v1262 = vsel %vm1230, 1, 0
      %v1263 = vsel %vm1231, 1, 0
      %v1264 = vsel %vm1232, 1, 0
      %v1265 = vsel %vm1233, 1, 0
      %v1266 = vsel %vm1234, 1, 0
      %v1267 = vsel %vm1235, 1, 0
      %v1268 = vsel %vm1236, 1, 0
      %v1269 = vsel %vm1237, 1, 0
      %v1270 = vsel %vm1238, 1, 0
      %v1271 = vsel %vm1239, 1, 0
      %v1272 = vsel %vm1240, 1, 0
      %v1273 = vsel %vm1241, 1, 0
      %v1274 = vsel %vm1242, 1, 0
      %v1275 = vsel %vm1243, 1, 0
      %v1276 = vsel %vm1244, 1, 0
      %v1277 = vsel %vm1245, 1, 0
      %v1278 = vsel %vm1246, 1, 0
      %v1279 = vsel %vm1247, 1, 0
      %v1280 = vsel %vm1248, 1, 0
      %v1281 = vsel %vm1249, 1, 0
      %v1282 = vsel %vm1250, 1, 0
      %1283 = vset.pattern.permute.xlu0 0
      %1284 = vperm.xlu0 %1283, %v1251
      %v1285 = vpop.permute.xlu0 %1284
      %1286 = vset.pattern.permute.xlu0 0
      %1287 = vperm.xlu0 %1286, %v1252
      %v1288 = vpop.permute.xlu0 %1287
      %1289 = vset.pattern.permute.xlu0 0
      %1290 = vperm.xlu0 %1289, %v1253
      %v1291 = vpop.permute.xlu0 %1290
      %1292 = vset.pattern.permute.xlu0 0
      %1293 = vperm.xlu0 %1292, %v1254
      %v1294 = vpop.permute.xlu0 %1293
      %1295 = vset.pattern.permute.xlu0 0
      %1296 = vperm.xlu0 %1295, %v1255
      %v1297 = vpop.permute.xlu0 %1296
      %1298 = vset.pattern.permute.xlu0 0
      %1299 = vperm.xlu0 %1298, %v1256
      %v1300 = vpop.permute.xlu0 %1299
      %1301 = vset.pattern.permute.xlu0 0
      %1302 = vperm.xlu0 %1301, %v1257
      %v1303 = vpop.permute.xlu0 %1302
      %1304 = vset.pattern.permute.xlu0 0
      %1305 = vperm.xlu0 %1304, %v1258
      %v1306 = vpop.permute.xlu0 %1305
      %1307 = vset.pattern.permute.xlu0 0
      %1308 = vperm.xlu0 %1307, %v1259
      %v1309 = vpop.permute.xlu0 %1308
      %1310 = vset.pattern.permute.xlu0 0
      %1311 = vperm.xlu0 %1310, %v1260
      %v1312 = vpop.permute.xlu0 %1311
      %1313 = vset.pattern.permute.xlu0 0
      %1314 = vperm.xlu0 %1313, %v1261
      %v1315 = vpop.permute.xlu0 %1314
      %1316 = vset.pattern.permute.xlu0 0
      %1317 = vperm.xlu0 %1316, %v1262
      %v1318 = vpop.permute.xlu0 %1317
      %1319 = vset.pattern.permute.xlu0 0
      %1320 = vperm.xlu0 %1319, %v1263
      %v1321 = vpop.permute.xlu0 %1320
      %1322 = vset.pattern.permute.xlu0 0
      %1323 = vperm.xlu0 %1322, %v1264
      %v1324 = vpop.permute.xlu0 %1323
      %1325 = vset.pattern.permute.xlu0 0
      %1326 = vperm.xlu0 %1325, %v1265
      %v1327 = vpop.permute.xlu0 %1326
      %1328 = vset.pattern.permute.xlu0 0
      %1329 = vperm.xlu0 %1328, %v1266
      %v1330 = vpop.permute.xlu0 %1329
      %1331 = vset.pattern.permute.xlu0 0
      %1332 = vperm.xlu0 %1331, %v1267
      %v1333 = vpop.permute.xlu0 %1332
      %1334 = vset.pattern.permute.xlu0 0
      %1335 = vperm.xlu0 %1334, %v1268
      %v1336 = vpop.permute.xlu0 %1335
      %1337 = vset.pattern.permute.xlu0 0
      %1338 = vperm.xlu0 %1337, %v1269
      %v1339 = vpop.permute.xlu0 %1338
      %1340 = vset.pattern.permute.xlu0 0
      %1341 = vperm.xlu0 %1340, %v1270
      %v1342 = vpop.permute.xlu0 %1341
      %1343 = vset.pattern.permute.xlu0 0
      %1344 = vperm.xlu0 %1343, %v1271
      %v1345 = vpop.permute.xlu0 %1344
      %1346 = vset.pattern.permute.xlu0 0
      %1347 = vperm.xlu0 %1346, %v1272
      %v1348 = vpop.permute.xlu0 %1347
      %1349 = vset.pattern.permute.xlu0 0
      %1350 = vperm.xlu0 %1349, %v1273
      %v1351 = vpop.permute.xlu0 %1350
      %1352 = vset.pattern.permute.xlu0 0
      %1353 = vperm.xlu0 %1352, %v1274
      %v1354 = vpop.permute.xlu0 %1353
      %1355 = vset.pattern.permute.xlu0 0
      %1356 = vperm.xlu0 %1355, %v1275
      %v1357 = vpop.permute.xlu0 %1356
      %1358 = vset.pattern.permute.xlu0 0
      %1359 = vperm.xlu0 %1358, %v1276
      %v1360 = vpop.permute.xlu0 %1359
      %1361 = vset.pattern.permute.xlu0 0
      %1362 = vperm.xlu0 %1361, %v1277
      %v1363 = vpop.permute.xlu0 %1362
      %1364 = vset.pattern.permute.xlu0 0
      %1365 = vperm.xlu0 %1364, %v1278
      %v1366 = vpop.permute.xlu0 %1365
      %1367 = vset.pattern.permute.xlu0 0
      %1368 = vperm.xlu0 %1367, %v1279
      %v1369 = vpop.permute.xlu0 %1368
      %1370 = vset.pattern.permute.xlu0 0
      %1371 = vperm.xlu0 %1370, %v1280
      %v1372 = vpop.permute.xlu0 %1371
      %1373 = vset.pattern.permute.xlu0 0
      %1374 = vperm.xlu0 %1373, %v1281
      %v1375 = vpop.permute.xlu0 %1374
      %1376 = vset.pattern.permute.xlu0 0
      %1377 = vperm.xlu0 %1376, %v1282
      %v1378 = vpop.permute.xlu0 %1377
      %vm1379 = vcmp.eq.s32.totalorder %v1285, 1
      %vm1380 = vcmp.eq.s32.totalorder %v1288, 1
      %vm1381 = vcmp.eq.s32.totalorder %v1291, 1
      %vm1382 = vcmp.eq.s32.totalorder %v1294, 1
      %vm1383 = vcmp.eq.s32.totalorder %v1297, 1
      %vm1384 = vcmp.eq.s32.totalorder %v1300, 1
      %vm1385 = vcmp.eq.s32.totalorder %v1303, 1
      %vm1386 = vcmp.eq.s32.totalorder %v1306, 1
      %vm1387 = vcmp.eq.s32.totalorder %v1309, 1
      %vm1388 = vcmp.eq.s32.totalorder %v1312, 1
      %vm1389 = vcmp.eq.s32.totalorder %v1315, 1
      %vm1390 = vcmp.eq.s32.totalorder %v1318, 1
      %vm1391 = vcmp.eq.s32.totalorder %v1321, 1
      %vm1392 = vcmp.eq.s32.totalorder %v1324, 1
      %vm1393 = vcmp.eq.s32.totalorder %v1327, 1
      %vm1394 = vcmp.eq.s32.totalorder %v1330, 1
      %vm1395 = vcmp.eq.s32.totalorder %v1333, 1
      %vm1396 = vcmp.eq.s32.totalorder %v1336, 1
      %vm1397 = vcmp.eq.s32.totalorder %v1339, 1
      %vm1398 = vcmp.eq.s32.totalorder %v1342, 1
      %vm1399 = vcmp.eq.s32.totalorder %v1345, 1
      %vm1400 = vcmp.eq.s32.totalorder %v1348, 1
      %vm1401 = vcmp.eq.s32.totalorder %v1351, 1
      %vm1402 = vcmp.eq.s32.totalorder %v1354, 1
      %vm1403 = vcmp.eq.s32.totalorder %v1357, 1
      %vm1404 = vcmp.eq.s32.totalorder %v1360, 1
      %vm1405 = vcmp.eq.s32.totalorder %v1363, 1
      %vm1406 = vcmp.eq.s32.totalorder %v1366, 1
      %vm1407 = vcmp.eq.s32.totalorder %v1369, 1
      %vm1408 = vcmp.eq.s32.totalorder %v1372, 1
      %vm1409 = vcmp.eq.s32.totalorder %v1375, 1
      %vm1410 = vcmp.eq.s32.totalorder %v1378, 1
      %v1411 = vsel %vm1379, %v735, 1e+30
      %v1412 = vsel %vm1379, %v736, 1e+30
      %v1413 = vsel %vm1380, %v737, 1e+30
      %v1414 = vsel %vm1380, %v738, 1e+30
      %v1415 = vsel %vm1381, %v739, 1e+30
      %v1416 = vsel %vm1381, %v740, 1e+30
      %v1417 = vsel %vm1382, %v741, 1e+30
      %v1418 = vsel %vm1382, %v742, 1e+30
      %v1419 = vsel %vm1383, %v743, 1e+30
      %v1420 = vsel %vm1383, %v744, 1e+30
      %v1421 = vsel %vm1384, %v745, 1e+30
      %v1422 = vsel %vm1384, %v746, 1e+30
      %v1423 = vsel %vm1385, %v747, 1e+30
      %v1424 = vsel %vm1385, %v748, 1e+30
      %v1425 = vsel %vm1386, %v749, 1e+30
      %v1426 = vsel %vm1386, %v750, 1e+30
      %v1427 = vsel %vm1387, %v751, 1e+30
      %v1428 = vsel %vm1387, %v752, 1e+30
      %v1429 = vsel %vm1388, %v753, 1e+30
      %v1430 = vsel %vm1388, %v754, 1e+30
      %v1431 = vsel %vm1389, %v755, 1e+30
      %v1432 = vsel %vm1389, %v756, 1e+30
      %v1433 = vsel %vm1390, %v757, 1e+30
      %v1434 = vsel %vm1390, %v758, 1e+30
      %v1435 = vsel %vm1391, %v759, 1e+30
      %v1436 = vsel %vm1391, %v760, 1e+30
      %v1437 = vsel %vm1392, %v761, 1e+30
      %v1438 = vsel %vm1392, %v762, 1e+30
      %v1439 = vsel %vm1393, %v763, 1e+30
      %v1440 = vsel %vm1393, %v764, 1e+30
      %v1441 = vsel %vm1394, %v765, 1e+30
      %v1442 = vsel %vm1394, %v766, 1e+30
      %v1443 = vsel %vm1395, %v767, 1e+30
      %v1444 = vsel %vm1395, %v768, 1e+30
      %v1445 = vsel %vm1396, %v769, 1e+30
      %v1446 = vsel %vm1396, %v770, 1e+30
      %v1447 = vsel %vm1397, %v771, 1e+30
      %v1448 = vsel %vm1397, %v772, 1e+30
      %v1449 = vsel %vm1398, %v773, 1e+30
      %v1450 = vsel %vm1398, %v774, 1e+30
      %v1451 = vsel %vm1399, %v775, 1e+30
      %v1452 = vsel %vm1399, %v776, 1e+30
      %v1453 = vsel %vm1400, %v777, 1e+30
      %v1454 = vsel %vm1400, %v778, 1e+30
      %v1455 = vsel %vm1401, %v779, 1e+30
      %v1456 = vsel %vm1401, %v780, 1e+30
      %v1457 = vsel %vm1402, %v781, 1e+30
      %v1458 = vsel %vm1402, %v782, 1e+30
      %v1459 = vsel %vm1403, %v783, 1e+30
      %v1460 = vsel %vm1403, %v784, 1e+30
      %v1461 = vsel %vm1404, %v785, 1e+30
      %v1462 = vsel %vm1404, %v786, 1e+30
      %v1463 = vsel %vm1405, %v787, 1e+30
      %v1464 = vsel %vm1405, %v788, 1e+30
      %v1465 = vsel %vm1406, %v789, 1e+30
      %v1466 = vsel %vm1406, %v790, 1e+30
      %v1467 = vsel %vm1407, %v791, 1e+30
      %v1468 = vsel %vm1407, %v792, 1e+30
      %v1469 = vsel %vm1408, %v793, 1e+30
      %v1470 = vsel %vm1408, %v794, 1e+30
      %v1471 = vsel %vm1409, %v795, 1e+30
      %v1472 = vsel %vm1409, %v796, 1e+30
      %v1473 = vsel %vm1410, %v797, 1e+30
      %v1474 = vsel %vm1410, %v798, 1e+30
      %v1475 = vmin.f32 %v1411, %v1415
      %v1476 = vmin.f32 %v1413, %v1417
      %v1477 = vmin.f32 %v1475, %v1419
      %v1478 = vmin.f32 %v1476, %v1421
      %v1479 = vmin.f32 %v1477, %v1423
      %v1480 = vmin.f32 %v1478, %v1425
      %v1481 = vmin.f32 %v1479, %v1427
      %v1482 = vmin.f32 %v1480, %v1429
      %v1483 = vmin.f32 %v1481, %v1431
      %v1484 = vmin.f32 %v1482, %v1433
      %v1485 = vmin.f32 %v1483, %v1435
      %v1486 = vmin.f32 %v1484, %v1437
      %v1487 = vmin.f32 %v1485, %v1439
      %v1488 = vmin.f32 %v1486, %v1441
      %v1489 = vmin.f32 %v1487, %v1443
      %v1490 = vmin.f32 %v1488, %v1445
      %v1491 = vmin.f32 %v1489, %v1447
      %v1492 = vmin.f32 %v1490, %v1449
      %v1493 = vmin.f32 %v1491, %v1451
      %v1494 = vmin.f32 %v1492, %v1453
      %v1495 = vmin.f32 %v1493, %v1455
      %v1496 = vmin.f32 %v1494, %v1457
      %v1497 = vmin.f32 %v1495, %v1459
      %v1498 = vmin.f32 %v1496, %v1461
      %v1499 = vmin.f32 %v1497, %v1463
      %v1500 = vmin.f32 %v1498, %v1465
      %v1501 = vmin.f32 %v1499, %v1467
      %v1502 = vmin.f32 %v1500, %v1469
      %v1503 = vmin.f32 %v1501, %v1471
      %v1504 = vmin.f32 %v1502, %v1473
      %v1505 = vmin.f32 %v1503, %v1504
      %v1506 = vrot.slane %v1505, 4
      %v1507 = vmin.f32 %v1505, %v1506
      %v1508 = vrot.slane %v1507, 2
      %v1509 = vmin.f32 %v1507, %v1508
      %v1510 = vrot.slane %v1509, 1
      %v1511 = vmin.f32 %v1509, %v1510
      %v1512 = vmin.f32 %v1412, %v1416
      %v1513 = vmin.f32 %v1414, %v1418
      %v1514 = vmin.f32 %v1512, %v1420
      %v1515 = vmin.f32 %v1513, %v1422
      %v1516 = vmin.f32 %v1514, %v1424
      %v1517 = vmin.f32 %v1515, %v1426
      %v1518 = vmin.f32 %v1516, %v1428
      %v1519 = vmin.f32 %v1517, %v1430
      %v1520 = vmin.f32 %v1518, %v1432
      %v1521 = vmin.f32 %v1519, %v1434
      %v1522 = vmin.f32 %v1520, %v1436
      %v1523 = vmin.f32 %v1521, %v1438
      %v1524 = vmin.f32 %v1522, %v1440
      %v1525 = vmin.f32 %v1523, %v1442
      %v1526 = vmin.f32 %v1524, %v1444
      %v1527 = vmin.f32 %v1525, %v1446
      %v1528 = vmin.f32 %v1526, %v1448
      %v1529 = vmin.f32 %v1527, %v1450
      %v1530 = vmin.f32 %v1528, %v1452
      %v1531 = vmin.f32 %v1529, %v1454
      %v1532 = vmin.f32 %v1530, %v1456
      %v1533 = vmin.f32 %v1531, %v1458
      %v1534 = vmin.f32 %v1532, %v1460
      %v1535 = vmin.f32 %v1533, %v1462
      %v1536 = vmin.f32 %v1534, %v1464
      %v1537 = vmin.f32 %v1535, %v1466
      %v1538 = vmin.f32 %v1536, %v1468
      %v1539 = vmin.f32 %v1537, %v1470
      %v1540 = vmin.f32 %v1538, %v1472
      %v1541 = vmin.f32 %v1539, %v1474
      %v1542 = vmin.f32 %v1540, %v1541
      %v1543 = vrot.slane %v1542, 4
      %v1544 = vmin.f32 %v1542, %v1543
      %v1545 = vrot.slane %v1544, 2
      %v1546 = vmin.f32 %v1544, %v1545
      %v1547 = vrot.slane %v1546, 1
      %v1548 = vmin.f32 %v1546, %v1547
      %s1549 = scalar_lea.vmem [#allocation2], 1
      %v1550 = vld [vmem:[%s1549] ss:$8 sm:$0x3]
      %v1553 = vrot.slane %v1548, 7
      %vm1554 = vcmask 1040384
      %v1555 = vsel %vm1554, %v1511, %v1553
      %v1557 = vmin.f32 %v1550, %v1555
      %v1558 = vlaneseq
      %vm1559 = vcmp.ge.s32.totalorder %v1558, 0
      %vm1560 = vcmp.lt.s32.totalorder %v1558, 256
      %vm1561 = vmand %vm1559, %vm1560
      %1562 = vst.msk [vmem:[%s1549] ss:$8 sm:$0x3] %vm1561, %v1557
      %1563 = vst.msk [vmem:[%s1549] ss:$8 sm:$0x0] %vm1561, %v1557
    $region61: #{_pairwise_hausdorff_sq.1} parent=1 // pred_fallthru
      _
    %p1564 = scmp.gt.s32.totalorder %s65, 2
    // Predicated region
    $region62: #{_pairwise_hausdorff_sq.1} parent=1 // pred_check
      %p1565 = pneg %p1564
    $region63: #{_pairwise_hausdorff_sq.1} parent=1 // pred_check_branch
      %1567 = sbr.rel (%p1565) target = $region65
    $region64: #{_pairwise_hausdorff_sq.1} parent=1 // pred_region
      %v1568 = vld [vmem:[%s5] sm:$0xff]
      %v1569 = vld [vmem:[%s5 + $0x8] sm:$0xff]
      %v1570 = vld [vmem:[%s5 + $0x10] sm:$0xff]
      %v1571 = vld [vmem:[%s5 + $0x18] sm:$0xff]
      %v1572 = vld [vmem:[%s5 + $0x20] sm:$0xff]
      %v1573 = vld [vmem:[%s5 + $0x28] sm:$0xff]
      %v1574 = vld [vmem:[%s5 + $0x30] sm:$0xff]
      %v1575 = vld [vmem:[%s5 + $0x38] sm:$0xff]
      %v1576 = vld [vmem:[%s5 + $0x40] sm:$0xff]
      %v1577 = vld [vmem:[%s5 + $0x48] sm:$0xff]
      %v1578 = vld [vmem:[%s5 + $0x50] sm:$0xff]
      %v1579 = vld [vmem:[%s5 + $0x58] sm:$0xff]
      %v1580 = vld [vmem:[%s5 + $0x60] sm:$0xff]
      %v1581 = vld [vmem:[%s5 + $0x68] sm:$0xff]
      %v1582 = vld [vmem:[%s5 + $0x70] sm:$0xff]
      %v1583 = vld [vmem:[%s5 + $0x78] sm:$0xff]
      %v1584 = vld [vmem:[%s5 + $0x80] sm:$0xff]
      %v1585 = vld [vmem:[%s5 + $0x88] sm:$0xff]
      %v1586 = vld [vmem:[%s5 + $0x90] sm:$0xff]
      %v1587 = vld [vmem:[%s5 + $0x98] sm:$0xff]
      %v1588 = vld [vmem:[%s5 + $0xa0] sm:$0xff]
      %v1589 = vld [vmem:[%s5 + $0xa8] sm:$0xff]
      %v1590 = vld [vmem:[%s5 + $0xb0] sm:$0xff]
      %v1591 = vld [vmem:[%s5 + $0xb8] sm:$0xff]
      %v1592 = vld [vmem:[%s5 + $0xc0] sm:$0xff]
      %v1593 = vld [vmem:[%s5 + $0xc8] sm:$0xff]
      %v1594 = vld [vmem:[%s5 + $0xd0] sm:$0xff]
      %v1595 = vld [vmem:[%s5 + $0xd8] sm:$0xff]
      %v1596 = vld [vmem:[%s5 + $0xe0] sm:$0xff]
      %v1597 = vld [vmem:[%s5 + $0xe8] sm:$0xff]
      %v1598 = vld [vmem:[%s5 + $0xf0] sm:$0xff]
      %v1599 = vld [vmem:[%s5 + $0xf8] sm:$0xff]
      %s1600 = sld [smem:[#allocation7 + $0x2]]
      %v1601 = vstv %s1600
      %vm1602 = vcmp.eq.s32.totalorder %v1568, %v1601
      %vm1603 = vcmp.eq.s32.totalorder %v1569, %v1601
      %vm1604 = vcmp.eq.s32.totalorder %v1570, %v1601
      %vm1605 = vcmp.eq.s32.totalorder %v1571, %v1601
      %vm1606 = vcmp.eq.s32.totalorder %v1572, %v1601
      %vm1607 = vcmp.eq.s32.totalorder %v1573, %v1601
      %vm1608 = vcmp.eq.s32.totalorder %v1574, %v1601
      %vm1609 = vcmp.eq.s32.totalorder %v1575, %v1601
      %vm1610 = vcmp.eq.s32.totalorder %v1576, %v1601
      %vm1611 = vcmp.eq.s32.totalorder %v1577, %v1601
      %vm1612 = vcmp.eq.s32.totalorder %v1578, %v1601
      %vm1613 = vcmp.eq.s32.totalorder %v1579, %v1601
      %vm1614 = vcmp.eq.s32.totalorder %v1580, %v1601
      %vm1615 = vcmp.eq.s32.totalorder %v1581, %v1601
      %vm1616 = vcmp.eq.s32.totalorder %v1582, %v1601
      %vm1617 = vcmp.eq.s32.totalorder %v1583, %v1601
      %vm1618 = vcmp.eq.s32.totalorder %v1584, %v1601
      %vm1619 = vcmp.eq.s32.totalorder %v1585, %v1601
      %vm1620 = vcmp.eq.s32.totalorder %v1586, %v1601
      %vm1621 = vcmp.eq.s32.totalorder %v1587, %v1601
      %vm1622 = vcmp.eq.s32.totalorder %v1588, %v1601
      %vm1623 = vcmp.eq.s32.totalorder %v1589, %v1601
      %vm1624 = vcmp.eq.s32.totalorder %v1590, %v1601
      %vm1625 = vcmp.eq.s32.totalorder %v1591, %v1601
      %vm1626 = vcmp.eq.s32.totalorder %v1592, %v1601
      %vm1627 = vcmp.eq.s32.totalorder %v1593, %v1601
      %vm1628 = vcmp.eq.s32.totalorder %v1594, %v1601
      %vm1629 = vcmp.eq.s32.totalorder %v1595, %v1601
      %vm1630 = vcmp.eq.s32.totalorder %v1596, %v1601
      %vm1631 = vcmp.eq.s32.totalorder %v1597, %v1601
      %vm1632 = vcmp.eq.s32.totalorder %v1598, %v1601
      %vm1633 = vcmp.eq.s32.totalorder %v1599, %v1601
      %v1634 = vsel %vm1602, 1, 0
      %v1635 = vsel %vm1603, 1, 0
      %v1636 = vsel %vm1604, 1, 0
      %v1637 = vsel %vm1605, 1, 0
      %v1638 = vsel %vm1606, 1, 0
      %v1639 = vsel %vm1607, 1, 0
      %v1640 = vsel %vm1608, 1, 0
      %v1641 = vsel %vm1609, 1, 0
      %v1642 = vsel %vm1610, 1, 0
      %v1643 = vsel %vm1611, 1, 0
      %v1644 = vsel %vm1612, 1, 0
      %v1645 = vsel %vm1613, 1, 0
      %v1646 = vsel %vm1614, 1, 0
      %v1647 = vsel %vm1615, 1, 0
      %v1648 = vsel %vm1616, 1, 0
      %v1649 = vsel %vm1617, 1, 0
      %v1650 = vsel %vm1618, 1, 0
      %v1651 = vsel %vm1619, 1, 0
      %v1652 = vsel %vm1620, 1, 0
      %v1653 = vsel %vm1621, 1, 0
      %v1654 = vsel %vm1622, 1, 0
      %v1655 = vsel %vm1623, 1, 0
      %v1656 = vsel %vm1624, 1, 0
      %v1657 = vsel %vm1625, 1, 0
      %v1658 = vsel %vm1626, 1, 0
      %v1659 = vsel %vm1627, 1, 0
      %v1660 = vsel %vm1628, 1, 0
      %v1661 = vsel %vm1629, 1, 0
      %v1662 = vsel %vm1630, 1, 0
      %v1663 = vsel %vm1631, 1, 0
      %v1664 = vsel %vm1632, 1, 0
      %v1665 = vsel %vm1633, 1, 0
      %1666 = vset.pattern.permute.xlu0 0
      %1667 = vperm.xlu0 %1666, %v1634
      %v1668 = vpop.permute.xlu0 %1667
      %1669 = vset.pattern.permute.xlu0 0
      %1670 = vperm.xlu0 %1669, %v1635
      %v1671 = vpop.permute.xlu0 %1670
      %1672 = vset.pattern.permute.xlu0 0
      %1673 = vperm.xlu0 %1672, %v1636
      %v1674 = vpop.permute.xlu0 %1673
      %1675 = vset.pattern.permute.xlu0 0
      %1676 = vperm.xlu0 %1675, %v1637
      %v1677 = vpop.permute.xlu0 %1676
      %1678 = vset.pattern.permute.xlu0 0
      %1679 = vperm.xlu0 %1678, %v1638
      %v1680 = vpop.permute.xlu0 %1679
      %1681 = vset.pattern.permute.xlu0 0
      %1682 = vperm.xlu0 %1681, %v1639
      %v1683 = vpop.permute.xlu0 %1682
      %1684 = vset.pattern.permute.xlu0 0
      %1685 = vperm.xlu0 %1684, %v1640
      %v1686 = vpop.permute.xlu0 %1685
      %1687 = vset.pattern.permute.xlu0 0
      %1688 = vperm.xlu0 %1687, %v1641
      %v1689 = vpop.permute.xlu0 %1688
      %1690 = vset.pattern.permute.xlu0 0
      %1691 = vperm.xlu0 %1690, %v1642
      %v1692 = vpop.permute.xlu0 %1691
      %1693 = vset.pattern.permute.xlu0 0
      %1694 = vperm.xlu0 %1693, %v1643
      %v1695 = vpop.permute.xlu0 %1694
      %1696 = vset.pattern.permute.xlu0 0
      %1697 = vperm.xlu0 %1696, %v1644
      %v1698 = vpop.permute.xlu0 %1697
      %1699 = vset.pattern.permute.xlu0 0
      %1700 = vperm.xlu0 %1699, %v1645
      %v1701 = vpop.permute.xlu0 %1700
      %1702 = vset.pattern.permute.xlu0 0
      %1703 = vperm.xlu0 %1702, %v1646
      %v1704 = vpop.permute.xlu0 %1703
      %1705 = vset.pattern.permute.xlu0 0
      %1706 = vperm.xlu0 %1705, %v1647
      %v1707 = vpop.permute.xlu0 %1706
      %1708 = vset.pattern.permute.xlu0 0
      %1709 = vperm.xlu0 %1708, %v1648
      %v1710 = vpop.permute.xlu0 %1709
      %1711 = vset.pattern.permute.xlu0 0
      %1712 = vperm.xlu0 %1711, %v1649
      %v1713 = vpop.permute.xlu0 %1712
      %1714 = vset.pattern.permute.xlu0 0
      %1715 = vperm.xlu0 %1714, %v1650
      %v1716 = vpop.permute.xlu0 %1715
      %1717 = vset.pattern.permute.xlu0 0
      %1718 = vperm.xlu0 %1717, %v1651
      %v1719 = vpop.permute.xlu0 %1718
      %1720 = vset.pattern.permute.xlu0 0
      %1721 = vperm.xlu0 %1720, %v1652
      %v1722 = vpop.permute.xlu0 %1721
      %1723 = vset.pattern.permute.xlu0 0
      %1724 = vperm.xlu0 %1723, %v1653
      %v1725 = vpop.permute.xlu0 %1724
      %1726 = vset.pattern.permute.xlu0 0
      %1727 = vperm.xlu0 %1726, %v1654
      %v1728 = vpop.permute.xlu0 %1727
      %1729 = vset.pattern.permute.xlu0 0
      %1730 = vperm.xlu0 %1729, %v1655
      %v1731 = vpop.permute.xlu0 %1730
      %1732 = vset.pattern.permute.xlu0 0
      %1733 = vperm.xlu0 %1732, %v1656
      %v1734 = vpop.permute.xlu0 %1733
      %1735 = vset.pattern.permute.xlu0 0
      %1736 = vperm.xlu0 %1735, %v1657
      %v1737 = vpop.permute.xlu0 %1736
      %1738 = vset.pattern.permute.xlu0 0
      %1739 = vperm.xlu0 %1738, %v1658
      %v1740 = vpop.permute.xlu0 %1739
      %1741 = vset.pattern.permute.xlu0 0
      %1742 = vperm.xlu0 %1741, %v1659
      %v1743 = vpop.permute.xlu0 %1742
      %1744 = vset.pattern.permute.xlu0 0
      %1745 = vperm.xlu0 %1744, %v1660
      %v1746 = vpop.permute.xlu0 %1745
      %1747 = vset.pattern.permute.xlu0 0
      %1748 = vperm.xlu0 %1747, %v1661
      %v1749 = vpop.permute.xlu0 %1748
      %1750 = vset.pattern.permute.xlu0 0
      %1751 = vperm.xlu0 %1750, %v1662
      %v1752 = vpop.permute.xlu0 %1751
      %1753 = vset.pattern.permute.xlu0 0
      %1754 = vperm.xlu0 %1753, %v1663
      %v1755 = vpop.permute.xlu0 %1754
      %1756 = vset.pattern.permute.xlu0 0
      %1757 = vperm.xlu0 %1756, %v1664
      %v1758 = vpop.permute.xlu0 %1757
      %1759 = vset.pattern.permute.xlu0 0
      %1760 = vperm.xlu0 %1759, %v1665
      %v1761 = vpop.permute.xlu0 %1760
      %vm1762 = vcmp.eq.s32.totalorder %v1668, 1
      %vm1763 = vcmp.eq.s32.totalorder %v1671, 1
      %vm1764 = vcmp.eq.s32.totalorder %v1674, 1
      %vm1765 = vcmp.eq.s32.totalorder %v1677, 1
      %vm1766 = vcmp.eq.s32.totalorder %v1680, 1
      %vm1767 = vcmp.eq.s32.totalorder %v1683, 1
      %vm1768 = vcmp.eq.s32.totalorder %v1686, 1
      %vm1769 = vcmp.eq.s32.totalorder %v1689, 1
      %vm1770 = vcmp.eq.s32.totalorder %v1692, 1
      %vm1771 = vcmp.eq.s32.totalorder %v1695, 1
      %vm1772 = vcmp.eq.s32.totalorder %v1698, 1
      %vm1773 = vcmp.eq.s32.totalorder %v1701, 1
      %vm1774 = vcmp.eq.s32.totalorder %v1704, 1
      %vm1775 = vcmp.eq.s32.totalorder %v1707, 1
      %vm1776 = vcmp.eq.s32.totalorder %v1710, 1
      %vm1777 = vcmp.eq.s32.totalorder %v1713, 1
      %vm1778 = vcmp.eq.s32.totalorder %v1716, 1
      %vm1779 = vcmp.eq.s32.totalorder %v1719, 1
      %vm1780 = vcmp.eq.s32.totalorder %v1722, 1
      %vm1781 = vcmp.eq.s32.totalorder %v1725, 1
      %vm1782 = vcmp.eq.s32.totalorder %v1728, 1
      %vm1783 = vcmp.eq.s32.totalorder %v1731, 1
      %vm1784 = vcmp.eq.s32.totalorder %v1734, 1
      %vm1785 = vcmp.eq.s32.totalorder %v1737, 1
      %vm1786 = vcmp.eq.s32.totalorder %v1740, 1
      %vm1787 = vcmp.eq.s32.totalorder %v1743, 1
      %vm1788 = vcmp.eq.s32.totalorder %v1746, 1
      %vm1789 = vcmp.eq.s32.totalorder %v1749, 1
      %vm1790 = vcmp.eq.s32.totalorder %v1752, 1
      %vm1791 = vcmp.eq.s32.totalorder %v1755, 1
      %vm1792 = vcmp.eq.s32.totalorder %v1758, 1
      %vm1793 = vcmp.eq.s32.totalorder %v1761, 1
      %v1794 = vsel %vm1762, %v735, 1e+30
      %v1795 = vsel %vm1762, %v736, 1e+30
      %v1796 = vsel %vm1763, %v737, 1e+30
      %v1797 = vsel %vm1763, %v738, 1e+30
      %v1798 = vsel %vm1764, %v739, 1e+30
      %v1799 = vsel %vm1764, %v740, 1e+30
      %v1800 = vsel %vm1765, %v741, 1e+30
      %v1801 = vsel %vm1765, %v742, 1e+30
      %v1802 = vsel %vm1766, %v743, 1e+30
      %v1803 = vsel %vm1766, %v744, 1e+30
      %v1804 = vsel %vm1767, %v745, 1e+30
      %v1805 = vsel %vm1767, %v746, 1e+30
      %v1806 = vsel %vm1768, %v747, 1e+30
      %v1807 = vsel %vm1768, %v748, 1e+30
      %v1808 = vsel %vm1769, %v749, 1e+30
      %v1809 = vsel %vm1769, %v750, 1e+30
      %v1810 = vsel %vm1770, %v751, 1e+30
      %v1811 = vsel %vm1770, %v752, 1e+30
      %v1812 = vsel %vm1771, %v753, 1e+30
      %v1813 = vsel %vm1771, %v754, 1e+30
      %v1814 = vsel %vm1772, %v755, 1e+30
      %v1815 = vsel %vm1772, %v756, 1e+30
      %v1816 = vsel %vm1773, %v757, 1e+30
      %v1817 = vsel %vm1773, %v758, 1e+30
      %v1818 = vsel %vm1774, %v759, 1e+30
      %v1819 = vsel %vm1774, %v760, 1e+30
      %v1820 = vsel %vm1775, %v761, 1e+30
      %v1821 = vsel %vm1775, %v762, 1e+30
      %v1822 = vsel %vm1776, %v763, 1e+30
      %v1823 = vsel %vm1776, %v764, 1e+30
      %v1824 = vsel %vm1777, %v765, 1e+30
      %v1825 = vsel %vm1777, %v766, 1e+30
      %v1826 = vsel %vm1778, %v767, 1e+30
      %v1827 = vsel %vm1778, %v768, 1e+30
      %v1828 = vsel %vm1779, %v769, 1e+30
      %v1829 = vsel %vm1779, %v770, 1e+30
      %v1830 = vsel %vm1780, %v771, 1e+30
      %v1831 = vsel %vm1780, %v772, 1e+30
      %v1832 = vsel %vm1781, %v773, 1e+30
      %v1833 = vsel %vm1781, %v774, 1e+30
      %v1834 = vsel %vm1782, %v775, 1e+30
      %v1835 = vsel %vm1782, %v776, 1e+30
      %v1836 = vsel %vm1783, %v777, 1e+30
      %v1837 = vsel %vm1783, %v778, 1e+30
      %v1838 = vsel %vm1784, %v779, 1e+30
      %v1839 = vsel %vm1784, %v780, 1e+30
      %v1840 = vsel %vm1785, %v781, 1e+30
      %v1841 = vsel %vm1785, %v782, 1e+30
      %v1842 = vsel %vm1786, %v783, 1e+30
      %v1843 = vsel %vm1786, %v784, 1e+30
      %v1844 = vsel %vm1787, %v785, 1e+30
      %v1845 = vsel %vm1787, %v786, 1e+30
      %v1846 = vsel %vm1788, %v787, 1e+30
      %v1847 = vsel %vm1788, %v788, 1e+30
      %v1848 = vsel %vm1789, %v789, 1e+30
      %v1849 = vsel %vm1789, %v790, 1e+30
      %v1850 = vsel %vm1790, %v791, 1e+30
      %v1851 = vsel %vm1790, %v792, 1e+30
      %v1852 = vsel %vm1791, %v793, 1e+30
      %v1853 = vsel %vm1791, %v794, 1e+30
      %v1854 = vsel %vm1792, %v795, 1e+30
      %v1855 = vsel %vm1792, %v796, 1e+30
      %v1856 = vsel %vm1793, %v797, 1e+30
      %v1857 = vsel %vm1793, %v798, 1e+30
      %v1858 = vmin.f32 %v1794, %v1798
      %v1859 = vmin.f32 %v1796, %v1800
      %v1860 = vmin.f32 %v1858, %v1802
      %v1861 = vmin.f32 %v1859, %v1804
      %v1862 = vmin.f32 %v1860, %v1806
      %v1863 = vmin.f32 %v1861, %v1808
      %v1864 = vmin.f32 %v1862, %v1810
      %v1865 = vmin.f32 %v1863, %v1812
      %v1866 = vmin.f32 %v1864, %v1814
      %v1867 = vmin.f32 %v1865, %v1816
      %v1868 = vmin.f32 %v1866, %v1818
      %v1869 = vmin.f32 %v1867, %v1820
      %v1870 = vmin.f32 %v1868, %v1822
      %v1871 = vmin.f32 %v1869, %v1824
      %v1872 = vmin.f32 %v1870, %v1826
      %v1873 = vmin.f32 %v1871, %v1828
      %v1874 = vmin.f32 %v1872, %v1830
      %v1875 = vmin.f32 %v1873, %v1832
      %v1876 = vmin.f32 %v1874, %v1834
      %v1877 = vmin.f32 %v1875, %v1836
      %v1878 = vmin.f32 %v1876, %v1838
      %v1879 = vmin.f32 %v1877, %v1840
      %v1880 = vmin.f32 %v1878, %v1842
      %v1881 = vmin.f32 %v1879, %v1844
      %v1882 = vmin.f32 %v1880, %v1846
      %v1883 = vmin.f32 %v1881, %v1848
      %v1884 = vmin.f32 %v1882, %v1850
      %v1885 = vmin.f32 %v1883, %v1852
      %v1886 = vmin.f32 %v1884, %v1854
      %v1887 = vmin.f32 %v1885, %v1856
      %v1888 = vmin.f32 %v1886, %v1887
      %v1889 = vrot.slane %v1888, 4
      %v1890 = vmin.f32 %v1888, %v1889
      %v1891 = vrot.slane %v1890, 2
      %v1892 = vmin.f32 %v1890, %v1891
      %v1893 = vrot.slane %v1892, 1
      %v1894 = vmin.f32 %v1892, %v1893
      %v1895 = vmin.f32 %v1795, %v1799
      %v1896 = vmin.f32 %v1797, %v1801
      %v1897 = vmin.f32 %v1895, %v1803
      %v1898 = vmin.f32 %v1896, %v1805
      %v1899 = vmin.f32 %v1897, %v1807
      %v1900 = vmin.f32 %v1898, %v1809
      %v1901 = vmin.f32 %v1899, %v1811
      %v1902 = vmin.f32 %v1900, %v1813
      %v1903 = vmin.f32 %v1901, %v1815
      %v1904 = vmin.f32 %v1902, %v1817
      %v1905 = vmin.f32 %v1903, %v1819
      %v1906 = vmin.f32 %v1904, %v1821
      %v1907 = vmin.f32 %v1905, %v1823
      %v1908 = vmin.f32 %v1906, %v1825
      %v1909 = vmin.f32 %v1907, %v1827
      %v1910 = vmin.f32 %v1908, %v1829
      %v1911 = vmin.f32 %v1909, %v1831
      %v1912 = vmin.f32 %v1910, %v1833
      %v1913 = vmin.f32 %v1911, %v1835
      %v1914 = vmin.f32 %v1912, %v1837
      %v1915 = vmin.f32 %v1913, %v1839
      %v1916 = vmin.f32 %v1914, %v1841
      %v1917 = vmin.f32 %v1915, %v1843
      %v1918 = vmin.f32 %v1916, %v1845
      %v1919 = vmin.f32 %v1917, %v1847
      %v1920 = vmin.f32 %v1918, %v1849
      %v1921 = vmin.f32 %v1919, %v1851
      %v1922 = vmin.f32 %v1920, %v1853
      %v1923 = vmin.f32 %v1921, %v1855
      %v1924 = vmin.f32 %v1922, %v1857
      %v1925 = vmin.f32 %v1923, %v1924
      %v1926 = vrot.slane %v1925, 4
      %v1927 = vmin.f32 %v1925, %v1926
      %v1928 = vrot.slane %v1927, 2
      %v1929 = vmin.f32 %v1927, %v1928
      %v1930 = vrot.slane %v1929, 1
      %v1931 = vmin.f32 %v1929, %v1930
      %s1932 = scalar_lea.vmem [#allocation2], 2
      %v1933 = vld [vmem:[%s1932] ss:$8 sm:$0x3]
      %v1936 = vrot.slane %v1931, 7
      %vm1937 = vcmask 1040384
      %v1938 = vsel %vm1937, %v1894, %v1936
      %v1940 = vmin.f32 %v1933, %v1938
      %v1941 = vlaneseq
      %vm1942 = vcmp.ge.s32.totalorder %v1941, 0
      %vm1943 = vcmp.lt.s32.totalorder %v1941, 256
      %vm1944 = vmand %vm1942, %vm1943
      %1945 = vst.msk [vmem:[%s1932] ss:$8 sm:$0x3] %vm1944, %v1940
      %1946 = vst.msk [vmem:[%s1932] ss:$8 sm:$0x0] %vm1944, %v1940
    $region65: #{_pairwise_hausdorff_sq.1} parent=1 // pred_fallthru
      _
    %p1947 = scmp.gt.s32.totalorder %s65, 3
    // Predicated region
    $region66: #{_pairwise_hausdorff_sq.1} parent=1 // pred_check
      %p1948 = pneg %p1947
    $region67: #{_pairwise_hausdorff_sq.1} parent=1 // pred_check_branch
      %1950 = sbr.rel (%p1948) target = $region69
    $region68: #{_pairwise_hausdorff_sq.1} parent=1 // pred_region
      %v1951 = vld [vmem:[%s5] sm:$0xff]
      %v1952 = vld [vmem:[%s5 + $0x8] sm:$0xff]
      %v1953 = vld [vmem:[%s5 + $0x10] sm:$0xff]
      %v1954 = vld [vmem:[%s5 + $0x18] sm:$0xff]
      %v1955 = vld [vmem:[%s5 + $0x20] sm:$0xff]
      %v1956 = vld [vmem:[%s5 + $0x28] sm:$0xff]
      %v1957 = vld [vmem:[%s5 + $0x30] sm:$0xff]
      %v1958 = vld [vmem:[%s5 + $0x38] sm:$0xff]
      %v1959 = vld [vmem:[%s5 + $0x40] sm:$0xff]
      %v1960 = vld [vmem:[%s5 + $0x48] sm:$0xff]
      %v1961 = vld [vmem:[%s5 + $0x50] sm:$0xff]
      %v1962 = vld [vmem:[%s5 + $0x58] sm:$0xff]
      %v1963 = vld [vmem:[%s5 + $0x60] sm:$0xff]
      %v1964 = vld [vmem:[%s5 + $0x68] sm:$0xff]
      %v1965 = vld [vmem:[%s5 + $0x70] sm:$0xff]
      %v1966 = vld [vmem:[%s5 + $0x78] sm:$0xff]
      %v1967 = vld [vmem:[%s5 + $0x80] sm:$0xff]
      %v1968 = vld [vmem:[%s5 + $0x88] sm:$0xff]
      %v1969 = vld [vmem:[%s5 + $0x90] sm:$0xff]
      %v1970 = vld [vmem:[%s5 + $0x98] sm:$0xff]
      %v1971 = vld [vmem:[%s5 + $0xa0] sm:$0xff]
      %v1972 = vld [vmem:[%s5 + $0xa8] sm:$0xff]
      %v1973 = vld [vmem:[%s5 + $0xb0] sm:$0xff]
      %v1974 = vld [vmem:[%s5 + $0xb8] sm:$0xff]
      %v1975 = vld [vmem:[%s5 + $0xc0] sm:$0xff]
      %v1976 = vld [vmem:[%s5 + $0xc8] sm:$0xff]
      %v1977 = vld [vmem:[%s5 + $0xd0] sm:$0xff]
      %v1978 = vld [vmem:[%s5 + $0xd8] sm:$0xff]
      %v1979 = vld [vmem:[%s5 + $0xe0] sm:$0xff]
      %v1980 = vld [vmem:[%s5 + $0xe8] sm:$0xff]
      %v1981 = vld [vmem:[%s5 + $0xf0] sm:$0xff]
      %v1982 = vld [vmem:[%s5 + $0xf8] sm:$0xff]
      %s1983 = sld [smem:[#allocation7 + $0x3]]
      %v1984 = vstv %s1983
      %vm1985 = vcmp.eq.s32.totalorder %v1951, %v1984
      %vm1986 = vcmp.eq.s32.totalorder %v1952, %v1984
      %vm1987 = vcmp.eq.s32.totalorder %v1953, %v1984
      %vm1988 = vcmp.eq.s32.totalorder %v1954, %v1984
      %vm1989 = vcmp.eq.s32.totalorder %v1955, %v1984
      %vm1990 = vcmp.eq.s32.totalorder %v1956, %v1984
      %vm1991 = vcmp.eq.s32.totalorder %v1957, %v1984
      %vm1992 = vcmp.eq.s32.totalorder %v1958, %v1984
      %vm1993 = vcmp.eq.s32.totalorder %v1959, %v1984
      %vm1994 = vcmp.eq.s32.totalorder %v1960, %v1984
      %vm1995 = vcmp.eq.s32.totalorder %v1961, %v1984
      %vm1996 = vcmp.eq.s32.totalorder %v1962, %v1984
      %vm1997 = vcmp.eq.s32.totalorder %v1963, %v1984
      %vm1998 = vcmp.eq.s32.totalorder %v1964, %v1984
      %vm1999 = vcmp.eq.s32.totalorder %v1965, %v1984
      %vm2000 = vcmp.eq.s32.totalorder %v1966, %v1984
      %vm2001 = vcmp.eq.s32.totalorder %v1967, %v1984
      %vm2002 = vcmp.eq.s32.totalorder %v1968, %v1984
      %vm2003 = vcmp.eq.s32.totalorder %v1969, %v1984
      %vm2004 = vcmp.eq.s32.totalorder %v1970, %v1984
      %vm2005 = vcmp.eq.s32.totalorder %v1971, %v1984
      %vm2006 = vcmp.eq.s32.totalorder %v1972, %v1984
      %vm2007 = vcmp.eq.s32.totalorder %v1973, %v1984
      %vm2008 = vcmp.eq.s32.totalorder %v1974, %v1984
      %vm2009 = vcmp.eq.s32.totalorder %v1975, %v1984
      %vm2010 = vcmp.eq.s32.totalorder %v1976, %v1984
      %vm2011 = vcmp.eq.s32.totalorder %v1977, %v1984
      %vm2012 = vcmp.eq.s32.totalorder %v1978, %v1984
      %vm2013 = vcmp.eq.s32.totalorder %v1979, %v1984
      %vm2014 = vcmp.eq.s32.totalorder %v1980, %v1984
      %vm2015 = vcmp.eq.s32.totalorder %v1981, %v1984
      %vm2016 = vcmp.eq.s32.totalorder %v1982, %v1984
      %v2017 = vsel %vm1985, 1, 0
      %v2018 = vsel %vm1986, 1, 0
      %v2019 = vsel %vm1987, 1, 0
      %v2020 = vsel %vm1988, 1, 0
      %v2021 = vsel %vm1989, 1, 0
      %v2022 = vsel %vm1990, 1, 0
      %v2023 = vsel %vm1991, 1, 0
      %v2024 = vsel %vm1992, 1, 0
      %v2025 = vsel %vm1993, 1, 0
      %v2026 = vsel %vm1994, 1, 0
      %v2027 = vsel %vm1995, 1, 0
      %v2028 = vsel %vm1996, 1, 0
      %v2029 = vsel %vm1997, 1, 0
      %v2030 = vsel %vm1998, 1, 0
      %v2031 = vsel %vm1999, 1, 0
      %v2032 = vsel %vm2000, 1, 0
      %v2033 = vsel %vm2001, 1, 0
      %v2034 = vsel %vm2002, 1, 0
      %v2035 = vsel %vm2003, 1, 0
      %v2036 = vsel %vm2004, 1, 0
      %v2037 = vsel %vm2005, 1, 0
      %v2038 = vsel %vm2006, 1, 0
      %v2039 = vsel %vm2007, 1, 0
      %v2040 = vsel %vm2008, 1, 0
      %v2041 = vsel %vm2009, 1, 0
      %v2042 = vsel %vm2010, 1, 0
      %v2043 = vsel %vm2011, 1, 0
      %v2044 = vsel %vm2012, 1, 0
      %v2045 = vsel %vm2013, 1, 0
      %v2046 = vsel %vm2014, 1, 0
      %v2047 = vsel %vm2015, 1, 0
      %v2048 = vsel %vm2016, 1, 0
      %2049 = vset.pattern.permute.xlu0 0
      %2050 = vperm.xlu0 %2049, %v2017
      %v2051 = vpop.permute.xlu0 %2050
      %2052 = vset.pattern.permute.xlu0 0
      %2053 = vperm.xlu0 %2052, %v2018
      %v2054 = vpop.permute.xlu0 %2053
      %2055 = vset.pattern.permute.xlu0 0
      %2056 = vperm.xlu0 %2055, %v2019
      %v2057 = vpop.permute.xlu0 %2056
      %2058 = vset.pattern.permute.xlu0 0
      %2059 = vperm.xlu0 %2058, %v2020
      %v2060 = vpop.permute.xlu0 %2059
      %2061 = vset.pattern.permute.xlu0 0
      %2062 = vperm.xlu0 %2061, %v2021
      %v2063 = vpop.permute.xlu0 %2062
      %2064 = vset.pattern.permute.xlu0 0
      %2065 = vperm.xlu0 %2064, %v2022
      %v2066 = vpop.permute.xlu0 %2065
      %2067 = vset.pattern.permute.xlu0 0
      %2068 = vperm.xlu0 %2067, %v2023
      %v2069 = vpop.permute.xlu0 %2068
      %2070 = vset.pattern.permute.xlu0 0
      %2071 = vperm.xlu0 %2070, %v2024
      %v2072 = vpop.permute.xlu0 %2071
      %2073 = vset.pattern.permute.xlu0 0
      %2074 = vperm.xlu0 %2073, %v2025
      %v2075 = vpop.permute.xlu0 %2074
      %2076 = vset.pattern.permute.xlu0 0
      %2077 = vperm.xlu0 %2076, %v2026
      %v2078 = vpop.permute.xlu0 %2077
      %2079 = vset.pattern.permute.xlu0 0
      %2080 = vperm.xlu0 %2079, %v2027
      %v2081 = vpop.permute.xlu0 %2080
      %2082 = vset.pattern.permute.xlu0 0
      %2083 = vperm.xlu0 %2082, %v2028
      %v2084 = vpop.permute.xlu0 %2083
      %2085 = vset.pattern.permute.xlu0 0
      %2086 = vperm.xlu0 %2085, %v2029
      %v2087 = vpop.permute.xlu0 %2086
      %2088 = vset.pattern.permute.xlu0 0
      %2089 = vperm.xlu0 %2088, %v2030
      %v2090 = vpop.permute.xlu0 %2089
      %2091 = vset.pattern.permute.xlu0 0
      %2092 = vperm.xlu0 %2091, %v2031
      %v2093 = vpop.permute.xlu0 %2092
      %2094 = vset.pattern.permute.xlu0 0
      %2095 = vperm.xlu0 %2094, %v2032
      %v2096 = vpop.permute.xlu0 %2095
      %2097 = vset.pattern.permute.xlu0 0
      %2098 = vperm.xlu0 %2097, %v2033
      %v2099 = vpop.permute.xlu0 %2098
      %2100 = vset.pattern.permute.xlu0 0
      %2101 = vperm.xlu0 %2100, %v2034
      %v2102 = vpop.permute.xlu0 %2101
      %2103 = vset.pattern.permute.xlu0 0
      %2104 = vperm.xlu0 %2103, %v2035
      %v2105 = vpop.permute.xlu0 %2104
      %2106 = vset.pattern.permute.xlu0 0
      %2107 = vperm.xlu0 %2106, %v2036
      %v2108 = vpop.permute.xlu0 %2107
      %2109 = vset.pattern.permute.xlu0 0
      %2110 = vperm.xlu0 %2109, %v2037
      %v2111 = vpop.permute.xlu0 %2110
      %2112 = vset.pattern.permute.xlu0 0
      %2113 = vperm.xlu0 %2112, %v2038
      %v2114 = vpop.permute.xlu0 %2113
      %2115 = vset.pattern.permute.xlu0 0
      %2116 = vperm.xlu0 %2115, %v2039
      %v2117 = vpop.permute.xlu0 %2116
      %2118 = vset.pattern.permute.xlu0 0
      %2119 = vperm.xlu0 %2118, %v2040
      %v2120 = vpop.permute.xlu0 %2119
      %2121 = vset.pattern.permute.xlu0 0
      %2122 = vperm.xlu0 %2121, %v2041
      %v2123 = vpop.permute.xlu0 %2122
      %2124 = vset.pattern.permute.xlu0 0
      %2125 = vperm.xlu0 %2124, %v2042
      %v2126 = vpop.permute.xlu0 %2125
      %2127 = vset.pattern.permute.xlu0 0
      %2128 = vperm.xlu0 %2127, %v2043
      %v2129 = vpop.permute.xlu0 %2128
      %2130 = vset.pattern.permute.xlu0 0
      %2131 = vperm.xlu0 %2130, %v2044
      %v2132 = vpop.permute.xlu0 %2131
      %2133 = vset.pattern.permute.xlu0 0
      %2134 = vperm.xlu0 %2133, %v2045
      %v2135 = vpop.permute.xlu0 %2134
      %2136 = vset.pattern.permute.xlu0 0
      %2137 = vperm.xlu0 %2136, %v2046
      %v2138 = vpop.permute.xlu0 %2137
      %2139 = vset.pattern.permute.xlu0 0
      %2140 = vperm.xlu0 %2139, %v2047
      %v2141 = vpop.permute.xlu0 %2140
      %2142 = vset.pattern.permute.xlu0 0
      %2143 = vperm.xlu0 %2142, %v2048
      %v2144 = vpop.permute.xlu0 %2143
      %vm2145 = vcmp.eq.s32.totalorder %v2051, 1
      %vm2146 = vcmp.eq.s32.totalorder %v2054, 1
      %vm2147 = vcmp.eq.s32.totalorder %v2057, 1
      %vm2148 = vcmp.eq.s32.totalorder %v2060, 1
      %vm2149 = vcmp.eq.s32.totalorder %v2063, 1
      %vm2150 = vcmp.eq.s32.totalorder %v2066, 1
      %vm2151 = vcmp.eq.s32.totalorder %v2069, 1
      %vm2152 = vcmp.eq.s32.totalorder %v2072, 1
      %vm2153 = vcmp.eq.s32.totalorder %v2075, 1
      %vm2154 = vcmp.eq.s32.totalorder %v2078, 1
      %vm2155 = vcmp.eq.s32.totalorder %v2081, 1
      %vm2156 = vcmp.eq.s32.totalorder %v2084, 1
      %vm2157 = vcmp.eq.s32.totalorder %v2087, 1
      %vm2158 = vcmp.eq.s32.totalorder %v2090, 1
      %vm2159 = vcmp.eq.s32.totalorder %v2093, 1
      %vm2160 = vcmp.eq.s32.totalorder %v2096, 1
      %vm2161 = vcmp.eq.s32.totalorder %v2099, 1
      %vm2162 = vcmp.eq.s32.totalorder %v2102, 1
      %vm2163 = vcmp.eq.s32.totalorder %v2105, 1
      %vm2164 = vcmp.eq.s32.totalorder %v2108, 1
      %vm2165 = vcmp.eq.s32.totalorder %v2111, 1
      %vm2166 = vcmp.eq.s32.totalorder %v2114, 1
      %vm2167 = vcmp.eq.s32.totalorder %v2117, 1
      %vm2168 = vcmp.eq.s32.totalorder %v2120, 1
      %vm2169 = vcmp.eq.s32.totalorder %v2123, 1
      %vm2170 = vcmp.eq.s32.totalorder %v2126, 1
      %vm2171 = vcmp.eq.s32.totalorder %v2129, 1
      %vm2172 = vcmp.eq.s32.totalorder %v2132, 1
      %vm2173 = vcmp.eq.s32.totalorder %v2135, 1
      %vm2174 = vcmp.eq.s32.totalorder %v2138, 1
      %vm2175 = vcmp.eq.s32.totalorder %v2141, 1
      %vm2176 = vcmp.eq.s32.totalorder %v2144, 1
      %v2177 = vsel %vm2145, %v735, 1e+30
      %v2178 = vsel %vm2145, %v736, 1e+30
      %v2179 = vsel %vm2146, %v737, 1e+30
      %v2180 = vsel %vm2146, %v738, 1e+30
      %v2181 = vsel %vm2147, %v739, 1e+30
      %v2182 = vsel %vm2147, %v740, 1e+30
      %v2183 = vsel %vm2148, %v741, 1e+30
      %v2184 = vsel %vm2148, %v742, 1e+30
      %v2185 = vsel %vm2149, %v743, 1e+30
      %v2186 = vsel %vm2149, %v744, 1e+30
      %v2187 = vsel %vm2150, %v745, 1e+30
      %v2188 = vsel %vm2150, %v746, 1e+30
      %v2189 = vsel %vm2151, %v747, 1e+30
      %v2190 = vsel %vm2151, %v748, 1e+30
      %v2191 = vsel %vm2152, %v749, 1e+30
      %v2192 = vsel %vm2152, %v750, 1e+30
      %v2193 = vsel %vm2153, %v751, 1e+30
      %v2194 = vsel %vm2153, %v752, 1e+30
      %v2195 = vsel %vm2154, %v753, 1e+30
      %v2196 = vsel %vm2154, %v754, 1e+30
      %v2197 = vsel %vm2155, %v755, 1e+30
      %v2198 = vsel %vm2155, %v756, 1e+30
      %v2199 = vsel %vm2156, %v757, 1e+30
      %v2200 = vsel %vm2156, %v758, 1e+30
      %v2201 = vsel %vm2157, %v759, 1e+30
      %v2202 = vsel %vm2157, %v760, 1e+30
      %v2203 = vsel %vm2158, %v761, 1e+30
      %v2204 = vsel %vm2158, %v762, 1e+30
      %v2205 = vsel %vm2159, %v763, 1e+30
      %v2206 = vsel %vm2159, %v764, 1e+30
      %v2207 = vsel %vm2160, %v765, 1e+30
      %v2208 = vsel %vm2160, %v766, 1e+30
      %v2209 = vsel %vm2161, %v767, 1e+30
      %v2210 = vsel %vm2161, %v768, 1e+30
      %v2211 = vsel %vm2162, %v769, 1e+30
      %v2212 = vsel %vm2162, %v770, 1e+30
      %v2213 = vsel %vm2163, %v771, 1e+30
      %v2214 = vsel %vm2163, %v772, 1e+30
      %v2215 = vsel %vm2164, %v773, 1e+30
      %v2216 = vsel %vm2164, %v774, 1e+30
      %v2217 = vsel %vm2165, %v775, 1e+30
      %v2218 = vsel %vm2165, %v776, 1e+30
      %v2219 = vsel %vm2166, %v777, 1e+30
      %v2220 = vsel %vm2166, %v778, 1e+30
      %v2221 = vsel %vm2167, %v779, 1e+30
      %v2222 = vsel %vm2167, %v780, 1e+30
      %v2223 = vsel %vm2168, %v781, 1e+30
      %v2224 = vsel %vm2168, %v782, 1e+30
      %v2225 = vsel %vm2169, %v783, 1e+30
      %v2226 = vsel %vm2169, %v784, 1e+30
      %v2227 = vsel %vm2170, %v785, 1e+30
      %v2228 = vsel %vm2170, %v786, 1e+30
      %v2229 = vsel %vm2171, %v787, 1e+30
      %v2230 = vsel %vm2171, %v788, 1e+30
      %v2231 = vsel %vm2172, %v789, 1e+30
      %v2232 = vsel %vm2172, %v790, 1e+30
      %v2233 = vsel %vm2173, %v791, 1e+30
      %v2234 = vsel %vm2173, %v792, 1e+30
      %v2235 = vsel %vm2174, %v793, 1e+30
      %v2236 = vsel %vm2174, %v794, 1e+30
      %v2237 = vsel %vm2175, %v795, 1e+30
      %v2238 = vsel %vm2175, %v796, 1e+30
      %v2239 = vsel %vm2176, %v797, 1e+30
      %v2240 = vsel %vm2176, %v798, 1e+30
      %v2241 = vmin.f32 %v2177, %v2181
      %v2242 = vmin.f32 %v2179, %v2183
      %v2243 = vmin.f32 %v2241, %v2185
      %v2244 = vmin.f32 %v2242, %v2187
      %v2245 = vmin.f32 %v2243, %v2189
      %v2246 = vmin.f32 %v2244, %v2191
      %v2247 = vmin.f32 %v2245, %v2193
      %v2248 = vmin.f32 %v2246, %v2195
      %v2249 = vmin.f32 %v2247, %v2197
      %v2250 = vmin.f32 %v2248, %v2199
      %v2251 = vmin.f32 %v2249, %v2201
      %v2252 = vmin.f32 %v2250, %v2203
      %v2253 = vmin.f32 %v2251, %v2205
      %v2254 = vmin.f32 %v2252, %v2207
      %v2255 = vmin.f32 %v2253, %v2209
      %v2256 = vmin.f32 %v2254, %v2211
      %v2257 = vmin.f32 %v2255, %v2213
      %v2258 = vmin.f32 %v2256, %v2215
      %v2259 = vmin.f32 %v2257, %v2217
      %v2260 = vmin.f32 %v2258, %v2219
      %v2261 = vmin.f32 %v2259, %v2221
      %v2262 = vmin.f32 %v2260, %v2223
      %v2263 = vmin.f32 %v2261, %v2225
      %v2264 = vmin.f32 %v2262, %v2227
      %v2265 = vmin.f32 %v2263, %v2229
      %v2266 = vmin.f32 %v2264, %v2231
      %v2267 = vmin.f32 %v2265, %v2233
      %v2268 = vmin.f32 %v2266, %v2235
      %v2269 = vmin.f32 %v2267, %v2237
      %v2270 = vmin.f32 %v2268, %v2239
      %v2271 = vmin.f32 %v2269, %v2270
      %v2272 = vrot.slane %v2271, 4
      %v2273 = vmin.f32 %v2271, %v2272
      %v2274 = vrot.slane %v2273, 2
      %v2275 = vmin.f32 %v2273, %v2274
      %v2276 = vrot.slane %v2275, 1
      %v2277 = vmin.f32 %v2275, %v2276
      %v2278 = vmin.f32 %v2178, %v2182
      %v2279 = vmin.f32 %v2180, %v2184
      %v2280 = vmin.f32 %v2278, %v2186
      %v2281 = vmin.f32 %v2279, %v2188
      %v2282 = vmin.f32 %v2280, %v2190
      %v2283 = vmin.f32 %v2281, %v2192
      %v2284 = vmin.f32 %v2282, %v2194
      %v2285 = vmin.f32 %v2283, %v2196
      %v2286 = vmin.f32 %v2284, %v2198
      %v2287 = vmin.f32 %v2285, %v2200
      %v2288 = vmin.f32 %v2286, %v2202
      %v2289 = vmin.f32 %v2287, %v2204
      %v2290 = vmin.f32 %v2288, %v2206
      %v2291 = vmin.f32 %v2289, %v2208
      %v2292 = vmin.f32 %v2290, %v2210
      %v2293 = vmin.f32 %v2291, %v2212
      %v2294 = vmin.f32 %v2292, %v2214
      %v2295 = vmin.f32 %v2293, %v2216
      %v2296 = vmin.f32 %v2294, %v2218
      %v2297 = vmin.f32 %v2295, %v2220
      %v2298 = vmin.f32 %v2296, %v2222
      %v2299 = vmin.f32 %v2297, %v2224
      %v2300 = vmin.f32 %v2298, %v2226
      %v2301 = vmin.f32 %v2299, %v2228
      %v2302 = vmin.f32 %v2300, %v2230
      %v2303 = vmin.f32 %v2301, %v2232
      %v2304 = vmin.f32 %v2302, %v2234
      %v2305 = vmin.f32 %v2303, %v2236
      %v2306 = vmin.f32 %v2304, %v2238
      %v2307 = vmin.f32 %v2305, %v2240
      %v2308 = vmin.f32 %v2306, %v2307
      %v2309 = vrot.slane %v2308, 4
      %v2310 = vmin.f32 %v2308, %v2309
      %v2311 = vrot.slane %v2310, 2
      %v2312 = vmin.f32 %v2310, %v2311
      %v2313 = vrot.slane %v2312, 1
      %v2314 = vmin.f32 %v2312, %v2313
      %s2315 = scalar_lea.vmem [#allocation2], 3
      %v2316 = vld [vmem:[%s2315] ss:$8 sm:$0x3]
      %v2319 = vrot.slane %v2314, 7
      %vm2320 = vcmask 1040384
      %v2321 = vsel %vm2320, %v2277, %v2319
      %v2323 = vmin.f32 %v2316, %v2321
      %v2324 = vlaneseq
      %vm2325 = vcmp.ge.s32.totalorder %v2324, 0
      %vm2326 = vcmp.lt.s32.totalorder %v2324, 256
      %vm2327 = vmand %vm2325, %vm2326
      %2328 = vst.msk [vmem:[%s2315] ss:$8 sm:$0x3] %vm2327, %v2323
      %2329 = vst.msk [vmem:[%s2315] ss:$8 sm:$0x0] %vm2327, %v2323
    $region69: #{_pairwise_hausdorff_sq.1} parent=1 // pred_fallthru
      _
    %p2330 = scmp.gt.s32.totalorder %s65, 4
    // Predicated region
    $region70: #{_pairwise_hausdorff_sq.1} parent=1 // pred_check
      %p2331 = pneg %p2330
    $region71: #{_pairwise_hausdorff_sq.1} parent=1 // pred_check_branch
      %2333 = sbr.rel (%p2331) target = $region73
    $region72: #{_pairwise_hausdorff_sq.1} parent=1 // pred_region
      %v2334 = vld [vmem:[%s5] sm:$0xff]
      %v2335 = vld [vmem:[%s5 + $0x8] sm:$0xff]
      %v2336 = vld [vmem:[%s5 + $0x10] sm:$0xff]
      %v2337 = vld [vmem:[%s5 + $0x18] sm:$0xff]
      %v2338 = vld [vmem:[%s5 + $0x20] sm:$0xff]
      %v2339 = vld [vmem:[%s5 + $0x28] sm:$0xff]
      %v2340 = vld [vmem:[%s5 + $0x30] sm:$0xff]
      %v2341 = vld [vmem:[%s5 + $0x38] sm:$0xff]
      %v2342 = vld [vmem:[%s5 + $0x40] sm:$0xff]
      %v2343 = vld [vmem:[%s5 + $0x48] sm:$0xff]
      %v2344 = vld [vmem:[%s5 + $0x50] sm:$0xff]
      %v2345 = vld [vmem:[%s5 + $0x58] sm:$0xff]
      %v2346 = vld [vmem:[%s5 + $0x60] sm:$0xff]
      %v2347 = vld [vmem:[%s5 + $0x68] sm:$0xff]
      %v2348 = vld [vmem:[%s5 + $0x70] sm:$0xff]
      %v2349 = vld [vmem:[%s5 + $0x78] sm:$0xff]
      %v2350 = vld [vmem:[%s5 + $0x80] sm:$0xff]
      %v2351 = vld [vmem:[%s5 + $0x88] sm:$0xff]
      %v2352 = vld [vmem:[%s5 + $0x90] sm:$0xff]
      %v2353 = vld [vmem:[%s5 + $0x98] sm:$0xff]
      %v2354 = vld [vmem:[%s5 + $0xa0] sm:$0xff]
      %v2355 = vld [vmem:[%s5 + $0xa8] sm:$0xff]
      %v2356 = vld [vmem:[%s5 + $0xb0] sm:$0xff]
      %v2357 = vld [vmem:[%s5 + $0xb8] sm:$0xff]
      %v2358 = vld [vmem:[%s5 + $0xc0] sm:$0xff]
      %v2359 = vld [vmem:[%s5 + $0xc8] sm:$0xff]
      %v2360 = vld [vmem:[%s5 + $0xd0] sm:$0xff]
      %v2361 = vld [vmem:[%s5 + $0xd8] sm:$0xff]
      %v2362 = vld [vmem:[%s5 + $0xe0] sm:$0xff]
      %v2363 = vld [vmem:[%s5 + $0xe8] sm:$0xff]
      %v2364 = vld [vmem:[%s5 + $0xf0] sm:$0xff]
      %v2365 = vld [vmem:[%s5 + $0xf8] sm:$0xff]
      %s2366 = sld [smem:[#allocation7 + $0x4]]
      %v2367 = vstv %s2366
      %vm2368 = vcmp.eq.s32.totalorder %v2334, %v2367
      %vm2369 = vcmp.eq.s32.totalorder %v2335, %v2367
      %vm2370 = vcmp.eq.s32.totalorder %v2336, %v2367
      %vm2371 = vcmp.eq.s32.totalorder %v2337, %v2367
      %vm2372 = vcmp.eq.s32.totalorder %v2338, %v2367
      %vm2373 = vcmp.eq.s32.totalorder %v2339, %v2367
      %vm2374 = vcmp.eq.s32.totalorder %v2340, %v2367
      %vm2375 = vcmp.eq.s32.totalorder %v2341, %v2367
      %vm2376 = vcmp.eq.s32.totalorder %v2342, %v2367
      %vm2377 = vcmp.eq.s32.totalorder %v2343, %v2367
      %vm2378 = vcmp.eq.s32.totalorder %v2344, %v2367
      %vm2379 = vcmp.eq.s32.totalorder %v2345, %v2367
      %vm2380 = vcmp.eq.s32.totalorder %v2346, %v2367
      %vm2381 = vcmp.eq.s32.totalorder %v2347, %v2367
      %vm2382 = vcmp.eq.s32.totalorder %v2348, %v2367
      %vm2383 = vcmp.eq.s32.totalorder %v2349, %v2367
      %vm2384 = vcmp.eq.s32.totalorder %v2350, %v2367
      %vm2385 = vcmp.eq.s32.totalorder %v2351, %v2367
      %vm2386 = vcmp.eq.s32.totalorder %v2352, %v2367
      %vm2387 = vcmp.eq.s32.totalorder %v2353, %v2367
      %vm2388 = vcmp.eq.s32.totalorder %v2354, %v2367
      %vm2389 = vcmp.eq.s32.totalorder %v2355, %v2367
      %vm2390 = vcmp.eq.s32.totalorder %v2356, %v2367
      %vm2391 = vcmp.eq.s32.totalorder %v2357, %v2367
      %vm2392 = vcmp.eq.s32.totalorder %v2358, %v2367
      %vm2393 = vcmp.eq.s32.totalorder %v2359, %v2367
      %vm2394 = vcmp.eq.s32.totalorder %v2360, %v2367
      %vm2395 = vcmp.eq.s32.totalorder %v2361, %v2367
      %vm2396 = vcmp.eq.s32.totalorder %v2362, %v2367
      %vm2397 = vcmp.eq.s32.totalorder %v2363, %v2367
      %vm2398 = vcmp.eq.s32.totalorder %v2364, %v2367
      %vm2399 = vcmp.eq.s32.totalorder %v2365, %v2367
      %v2400 = vsel %vm2368, 1, 0
      %v2401 = vsel %vm2369, 1, 0
      %v2402 = vsel %vm2370, 1, 0
      %v2403 = vsel %vm2371, 1, 0
      %v2404 = vsel %vm2372, 1, 0
      %v2405 = vsel %vm2373, 1, 0
      %v2406 = vsel %vm2374, 1, 0
      %v2407 = vsel %vm2375, 1, 0
      %v2408 = vsel %vm2376, 1, 0
      %v2409 = vsel %vm2377, 1, 0
      %v2410 = vsel %vm2378, 1, 0
      %v2411 = vsel %vm2379, 1, 0
      %v2412 = vsel %vm2380, 1, 0
      %v2413 = vsel %vm2381, 1, 0
      %v2414 = vsel %vm2382, 1, 0
      %v2415 = vsel %vm2383, 1, 0
      %v2416 = vsel %vm2384, 1, 0
      %v2417 = vsel %vm2385, 1, 0
      %v2418 = vsel %vm2386, 1, 0
      %v2419 = vsel %vm2387, 1, 0
      %v2420 = vsel %vm2388, 1, 0
      %v2421 = vsel %vm2389, 1, 0
      %v2422 = vsel %vm2390, 1, 0
      %v2423 = vsel %vm2391, 1, 0
      %v2424 = vsel %vm2392, 1, 0
      %v2425 = vsel %vm2393, 1, 0
      %v2426 = vsel %vm2394, 1, 0
      %v2427 = vsel %vm2395, 1, 0
      %v2428 = vsel %vm2396, 1, 0
      %v2429 = vsel %vm2397, 1, 0
      %v2430 = vsel %vm2398, 1, 0
      %v2431 = vsel %vm2399, 1, 0
      %2432 = vset.pattern.permute.xlu0 0
      %2433 = vperm.xlu0 %2432, %v2400
      %v2434 = vpop.permute.xlu0 %2433
      %2435 = vset.pattern.permute.xlu0 0
      %2436 = vperm.xlu0 %2435, %v2401
      %v2437 = vpop.permute.xlu0 %2436
      %2438 = vset.pattern.permute.xlu0 0
      %2439 = vperm.xlu0 %2438, %v2402
      %v2440 = vpop.permute.xlu0 %2439
      %2441 = vset.pattern.permute.xlu0 0
      %2442 = vperm.xlu0 %2441, %v2403
      %v2443 = vpop.permute.xlu0 %2442
      %2444 = vset.pattern.permute.xlu0 0
      %2445 = vperm.xlu0 %2444, %v2404
      %v2446 = vpop.permute.xlu0 %2445
      %2447 = vset.pattern.permute.xlu0 0
      %2448 = vperm.xlu0 %2447, %v2405
      %v2449 = vpop.permute.xlu0 %2448
      %2450 = vset.pattern.permute.xlu0 0
      %2451 = vperm.xlu0 %2450, %v2406
      %v2452 = vpop.permute.xlu0 %2451
      %2453 = vset.pattern.permute.xlu0 0
      %2454 = vperm.xlu0 %2453, %v2407
      %v2455 = vpop.permute.xlu0 %2454
      %2456 = vset.pattern.permute.xlu0 0
      %2457 = vperm.xlu0 %2456, %v2408
      %v2458 = vpop.permute.xlu0 %2457
      %2459 = vset.pattern.permute.xlu0 0
      %2460 = vperm.xlu0 %2459, %v2409
      %v2461 = vpop.permute.xlu0 %2460
      %2462 = vset.pattern.permute.xlu0 0
      %2463 = vperm.xlu0 %2462, %v2410
      %v2464 = vpop.permute.xlu0 %2463
      %2465 = vset.pattern.permute.xlu0 0
      %2466 = vperm.xlu0 %2465, %v2411
      %v2467 = vpop.permute.xlu0 %2466
      %2468 = vset.pattern.permute.xlu0 0
      %2469 = vperm.xlu0 %2468, %v2412
      %v2470 = vpop.permute.xlu0 %2469
      %2471 = vset.pattern.permute.xlu0 0
      %2472 = vperm.xlu0 %2471, %v2413
      %v2473 = vpop.permute.xlu0 %2472
      %2474 = vset.pattern.permute.xlu0 0
      %2475 = vperm.xlu0 %2474, %v2414
      %v2476 = vpop.permute.xlu0 %2475
      %2477 = vset.pattern.permute.xlu0 0
      %2478 = vperm.xlu0 %2477, %v2415
      %v2479 = vpop.permute.xlu0 %2478
      %2480 = vset.pattern.permute.xlu0 0
      %2481 = vperm.xlu0 %2480, %v2416
      %v2482 = vpop.permute.xlu0 %2481
      %2483 = vset.pattern.permute.xlu0 0
      %2484 = vperm.xlu0 %2483, %v2417
      %v2485 = vpop.permute.xlu0 %2484
      %2486 = vset.pattern.permute.xlu0 0
      %2487 = vperm.xlu0 %2486, %v2418
      %v2488 = vpop.permute.xlu0 %2487
      %2489 = vset.pattern.permute.xlu0 0
      %2490 = vperm.xlu0 %2489, %v2419
      %v2491 = vpop.permute.xlu0 %2490
      %2492 = vset.pattern.permute.xlu0 0
      %2493 = vperm.xlu0 %2492, %v2420
      %v2494 = vpop.permute.xlu0 %2493
      %2495 = vset.pattern.permute.xlu0 0
      %2496 = vperm.xlu0 %2495, %v2421
      %v2497 = vpop.permute.xlu0 %2496
      %2498 = vset.pattern.permute.xlu0 0
      %2499 = vperm.xlu0 %2498, %v2422
      %v2500 = vpop.permute.xlu0 %2499
      %2501 = vset.pattern.permute.xlu0 0
      %2502 = vperm.xlu0 %2501, %v2423
      %v2503 = vpop.permute.xlu0 %2502
      %2504 = vset.pattern.permute.xlu0 0
      %2505 = vperm.xlu0 %2504, %v2424
      %v2506 = vpop.permute.xlu0 %2505
      %2507 = vset.pattern.permute.xlu0 0
      %2508 = vperm.xlu0 %2507, %v2425
      %v2509 = vpop.permute.xlu0 %2508
      %2510 = vset.pattern.permute.xlu0 0
      %2511 = vperm.xlu0 %2510, %v2426
      %v2512 = vpop.permute.xlu0 %2511
      %2513 = vset.pattern.permute.xlu0 0
      %2514 = vperm.xlu0 %2513, %v2427
      %v2515 = vpop.permute.xlu0 %2514
      %2516 = vset.pattern.permute.xlu0 0
      %2517 = vperm.xlu0 %2516, %v2428
      %v2518 = vpop.permute.xlu0 %2517
      %2519 = vset.pattern.permute.xlu0 0
      %2520 = vperm.xlu0 %2519, %v2429
      %v2521 = vpop.permute.xlu0 %2520
      %2522 = vset.pattern.permute.xlu0 0
      %2523 = vperm.xlu0 %2522, %v2430
      %v2524 = vpop.permute.xlu0 %2523
      %2525 = vset.pattern.permute.xlu0 0
      %2526 = vperm.xlu0 %2525, %v2431
      %v2527 = vpop.permute.xlu0 %2526
      %vm2528 = vcmp.eq.s32.totalorder %v2434, 1
      %vm2529 = vcmp.eq.s32.totalorder %v2437, 1
      %vm2530 = vcmp.eq.s32.totalorder %v2440, 1
      %vm2531 = vcmp.eq.s32.totalorder %v2443, 1
      %vm2532 = vcmp.eq.s32.totalorder %v2446, 1
      %vm2533 = vcmp.eq.s32.totalorder %v2449, 1
      %vm2534 = vcmp.eq.s32.totalorder %v2452, 1
      %vm2535 = vcmp.eq.s32.totalorder %v2455, 1
      %vm2536 = vcmp.eq.s32.totalorder %v2458, 1
      %vm2537 = vcmp.eq.s32.totalorder %v2461, 1
      %vm2538 = vcmp.eq.s32.totalorder %v2464, 1
      %vm2539 = vcmp.eq.s32.totalorder %v2467, 1
      %vm2540 = vcmp.eq.s32.totalorder %v2470, 1
      %vm2541 = vcmp.eq.s32.totalorder %v2473, 1
      %vm2542 = vcmp.eq.s32.totalorder %v2476, 1
      %vm2543 = vcmp.eq.s32.totalorder %v2479, 1
      %vm2544 = vcmp.eq.s32.totalorder %v2482, 1
      %vm2545 = vcmp.eq.s32.totalorder %v2485, 1
      %vm2546 = vcmp.eq.s32.totalorder %v2488, 1
      %vm2547 = vcmp.eq.s32.totalorder %v2491, 1
      %vm2548 = vcmp.eq.s32.totalorder %v2494, 1
      %vm2549 = vcmp.eq.s32.totalorder %v2497, 1
      %vm2550 = vcmp.eq.s32.totalorder %v2500, 1
      %vm2551 = vcmp.eq.s32.totalorder %v2503, 1
      %vm2552 = vcmp.eq.s32.totalorder %v2506, 1
      %vm2553 = vcmp.eq.s32.totalorder %v2509, 1
      %vm2554 = vcmp.eq.s32.totalorder %v2512, 1
      %vm2555 = vcmp.eq.s32.totalorder %v2515, 1
      %vm2556 = vcmp.eq.s32.totalorder %v2518, 1
      %vm2557 = vcmp.eq.s32.totalorder %v2521, 1
      %vm2558 = vcmp.eq.s32.totalorder %v2524, 1
      %vm2559 = vcmp.eq.s32.totalorder %v2527, 1
      %v2560 = vsel %vm2528, %v735, 1e+30
      %v2561 = vsel %vm2528, %v736, 1e+30
      %v2562 = vsel %vm2529, %v737, 1e+30
      %v2563 = vsel %vm2529, %v738, 1e+30
      %v2564 = vsel %vm2530, %v739, 1e+30
      %v2565 = vsel %vm2530, %v740, 1e+30
      %v2566 = vsel %vm2531, %v741, 1e+30
      %v2567 = vsel %vm2531, %v742, 1e+30
      %v2568 = vsel %vm2532, %v743, 1e+30
      %v2569 = vsel %vm2532, %v744, 1e+30
      %v2570 = vsel %vm2533, %v745, 1e+30
      %v2571 = vsel %vm2533, %v746, 1e+30
      %v2572 = vsel %vm2534, %v747, 1e+30
      %v2573 = vsel %vm2534, %v748, 1e+30
      %v2574 = vsel %vm2535, %v749, 1e+30
      %v2575 = vsel %vm2535, %v750, 1e+30
      %v2576 = vsel %vm2536, %v751, 1e+30
      %v2577 = vsel %vm2536, %v752, 1e+30
      %v2578 = vsel %vm2537, %v753, 1e+30
      %v2579 = vsel %vm2537, %v754, 1e+30
      %v2580 = vsel %vm2538, %v755, 1e+30
      %v2581 = vsel %vm2538, %v756, 1e+30
      %v2582 = vsel %vm2539, %v757, 1e+30
      %v2583 = vsel %vm2539, %v758, 1e+30
      %v2584 = vsel %vm2540, %v759, 1e+30
      %v2585 = vsel %vm2540, %v760, 1e+30
      %v2586 = vsel %vm2541, %v761, 1e+30
      %v2587 = vsel %vm2541, %v762, 1e+30
      %v2588 = vsel %vm2542, %v763, 1e+30
      %v2589 = vsel %vm2542, %v764, 1e+30
      %v2590 = vsel %vm2543, %v765, 1e+30
      %v2591 = vsel %vm2543, %v766, 1e+30
      %v2592 = vsel %vm2544, %v767, 1e+30
      %v2593 = vsel %vm2544, %v768, 1e+30
      %v2594 = vsel %vm2545, %v769, 1e+30
      %v2595 = vsel %vm2545, %v770, 1e+30
      %v2596 = vsel %vm2546, %v771, 1e+30
      %v2597 = vsel %vm2546, %v772, 1e+30
      %v2598 = vsel %vm2547, %v773, 1e+30
      %v2599 = vsel %vm2547, %v774, 1e+30
      %v2600 = vsel %vm2548, %v775, 1e+30
      %v2601 = vsel %vm2548, %v776, 1e+30
      %v2602 = vsel %vm2549, %v777, 1e+30
      %v2603 = vsel %vm2549, %v778, 1e+30
      %v2604 = vsel %vm2550, %v779, 1e+30
      %v2605 = vsel %vm2550, %v780, 1e+30
      %v2606 = vsel %vm2551, %v781, 1e+30
      %v2607 = vsel %vm2551, %v782, 1e+30
      %v2608 = vsel %vm2552, %v783, 1e+30
      %v2609 = vsel %vm2552, %v784, 1e+30
      %v2610 = vsel %vm2553, %v785, 1e+30
      %v2611 = vsel %vm2553, %v786, 1e+30
      %v2612 = vsel %vm2554, %v787, 1e+30
      %v2613 = vsel %vm2554, %v788, 1e+30
      %v2614 = vsel %vm2555, %v789, 1e+30
      %v2615 = vsel %vm2555, %v790, 1e+30
      %v2616 = vsel %vm2556, %v791, 1e+30
      %v2617 = vsel %vm2556, %v792, 1e+30
      %v2618 = vsel %vm2557, %v793, 1e+30
      %v2619 = vsel %vm2557, %v794, 1e+30
      %v2620 = vsel %vm2558, %v795, 1e+30
      %v2621 = vsel %vm2558, %v796, 1e+30
      %v2622 = vsel %vm2559, %v797, 1e+30
      %v2623 = vsel %vm2559, %v798, 1e+30
      %v2624 = vmin.f32 %v2560, %v2564
      %v2625 = vmin.f32 %v2562, %v2566
      %v2626 = vmin.f32 %v2624, %v2568
      %v2627 = vmin.f32 %v2625, %v2570
      %v2628 = vmin.f32 %v2626, %v2572
      %v2629 = vmin.f32 %v2627, %v2574
      %v2630 = vmin.f32 %v2628, %v2576
      %v2631 = vmin.f32 %v2629, %v2578
      %v2632 = vmin.f32 %v2630, %v2580
      %v2633 = vmin.f32 %v2631, %v2582
      %v2634 = vmin.f32 %v2632, %v2584
      %v2635 = vmin.f32 %v2633, %v2586
      %v2636 = vmin.f32 %v2634, %v2588
      %v2637 = vmin.f32 %v2635, %v2590
      %v2638 = vmin.f32 %v2636, %v2592
      %v2639 = vmin.f32 %v2637, %v2594
      %v2640 = vmin.f32 %v2638, %v2596
      %v2641 = vmin.f32 %v2639, %v2598
      %v2642 = vmin.f32 %v2640, %v2600
      %v2643 = vmin.f32 %v2641, %v2602
      %v2644 = vmin.f32 %v2642, %v2604
      %v2645 = vmin.f32 %v2643, %v2606
      %v2646 = vmin.f32 %v2644, %v2608
      %v2647 = vmin.f32 %v2645, %v2610
      %v2648 = vmin.f32 %v2646, %v2612
      %v2649 = vmin.f32 %v2647, %v2614
      %v2650 = vmin.f32 %v2648, %v2616
      %v2651 = vmin.f32 %v2649, %v2618
      %v2652 = vmin.f32 %v2650, %v2620
      %v2653 = vmin.f32 %v2651, %v2622
      %v2654 = vmin.f32 %v2652, %v2653
      %v2655 = vrot.slane %v2654, 4
      %v2656 = vmin.f32 %v2654, %v2655
      %v2657 = vrot.slane %v2656, 2
      %v2658 = vmin.f32 %v2656, %v2657
      %v2659 = vrot.slane %v2658, 1
      %v2660 = vmin.f32 %v2658, %v2659
      %v2661 = vmin.f32 %v2561, %v2565
      %v2662 = vmin.f32 %v2563, %v2567
      %v2663 = vmin.f32 %v2661, %v2569
      %v2664 = vmin.f32 %v2662, %v2571
      %v2665 = vmin.f32 %v2663, %v2573
      %v2666 = vmin.f32 %v2664, %v2575
      %v2667 = vmin.f32 %v2665, %v2577
      %v2668 = vmin.f32 %v2666, %v2579
      %v2669 = vmin.f32 %v2667, %v2581
      %v2670 = vmin.f32 %v2668, %v2583
      %v2671 = vmin.f32 %v2669, %v2585
      %v2672 = vmin.f32 %v2670, %v2587
      %v2673 = vmin.f32 %v2671, %v2589
      %v2674 = vmin.f32 %v2672, %v2591
      %v2675 = vmin.f32 %v2673, %v2593
      %v2676 = vmin.f32 %v2674, %v2595
      %v2677 = vmin.f32 %v2675, %v2597
      %v2678 = vmin.f32 %v2676, %v2599
      %v2679 = vmin.f32 %v2677, %v2601
      %v2680 = vmin.f32 %v2678, %v2603
      %v2681 = vmin.f32 %v2679, %v2605
      %v2682 = vmin.f32 %v2680, %v2607
      %v2683 = vmin.f32 %v2681, %v2609
      %v2684 = vmin.f32 %v2682, %v2611
      %v2685 = vmin.f32 %v2683, %v2613
      %v2686 = vmin.f32 %v2684, %v2615
      %v2687 = vmin.f32 %v2685, %v2617
      %v2688 = vmin.f32 %v2686, %v2619
      %v2689 = vmin.f32 %v2687, %v2621
      %v2690 = vmin.f32 %v2688, %v2623
      %v2691 = vmin.f32 %v2689, %v2690
      %v2692 = vrot.slane %v2691, 4
      %v2693 = vmin.f32 %v2691, %v2692
      %v2694 = vrot.slane %v2693, 2
      %v2695 = vmin.f32 %v2693, %v2694
      %v2696 = vrot.slane %v2695, 1
      %v2697 = vmin.f32 %v2695, %v2696
      %s2698 = scalar_lea.vmem [#allocation2], 4
      %v2699 = vld [vmem:[%s2698] ss:$8 sm:$0x3]
      %v2702 = vrot.slane %v2697, 7
      %vm2703 = vcmask 1040384
      %v2704 = vsel %vm2703, %v2660, %v2702
      %v2706 = vmin.f32 %v2699, %v2704
      %v2707 = vlaneseq
      %vm2708 = vcmp.ge.s32.totalorder %v2707, 0
      %vm2709 = vcmp.lt.s32.totalorder %v2707, 256
      %vm2710 = vmand %vm2708, %vm2709
      %2711 = vst.msk [vmem:[%s2698] ss:$8 sm:$0x3] %vm2710, %v2706
      %2712 = vst.msk [vmem:[%s2698] ss:$8 sm:$0x0] %vm2710, %v2706
    $region73: #{_pairwise_hausdorff_sq.1} parent=1 // pred_fallthru
      _
    %p2713 = scmp.gt.s32.totalorder %s65, 5
    // Predicated region
    $region74: #{_pairwise_hausdorff_sq.1} parent=1 // pred_check
      %p2714 = pneg %p2713
    $region75: #{_pairwise_hausdorff_sq.1} parent=1 // pred_check_branch
      %2716 = sbr.rel (%p2714) target = $region77
    $region76: #{_pairwise_hausdorff_sq.1} parent=1 // pred_region
      %v2717 = vld [vmem:[%s5] sm:$0xff]
      %v2718 = vld [vmem:[%s5 + $0x8] sm:$0xff]
      %v2719 = vld [vmem:[%s5 + $0x10] sm:$0xff]
      %v2720 = vld [vmem:[%s5 + $0x18] sm:$0xff]
      %v2721 = vld [vmem:[%s5 + $0x20] sm:$0xff]
      %v2722 = vld [vmem:[%s5 + $0x28] sm:$0xff]
      %v2723 = vld [vmem:[%s5 + $0x30] sm:$0xff]
      %v2724 = vld [vmem:[%s5 + $0x38] sm:$0xff]
      %v2725 = vld [vmem:[%s5 + $0x40] sm:$0xff]
      %v2726 = vld [vmem:[%s5 + $0x48] sm:$0xff]
      %v2727 = vld [vmem:[%s5 + $0x50] sm:$0xff]
      %v2728 = vld [vmem:[%s5 + $0x58] sm:$0xff]
      %v2729 = vld [vmem:[%s5 + $0x60] sm:$0xff]
      %v2730 = vld [vmem:[%s5 + $0x68] sm:$0xff]
      %v2731 = vld [vmem:[%s5 + $0x70] sm:$0xff]
      %v2732 = vld [vmem:[%s5 + $0x78] sm:$0xff]
      %v2733 = vld [vmem:[%s5 + $0x80] sm:$0xff]
      %v2734 = vld [vmem:[%s5 + $0x88] sm:$0xff]
      %v2735 = vld [vmem:[%s5 + $0x90] sm:$0xff]
      %v2736 = vld [vmem:[%s5 + $0x98] sm:$0xff]
      %v2737 = vld [vmem:[%s5 + $0xa0] sm:$0xff]
      %v2738 = vld [vmem:[%s5 + $0xa8] sm:$0xff]
      %v2739 = vld [vmem:[%s5 + $0xb0] sm:$0xff]
      %v2740 = vld [vmem:[%s5 + $0xb8] sm:$0xff]
      %v2741 = vld [vmem:[%s5 + $0xc0] sm:$0xff]
      %v2742 = vld [vmem:[%s5 + $0xc8] sm:$0xff]
      %v2743 = vld [vmem:[%s5 + $0xd0] sm:$0xff]
      %v2744 = vld [vmem:[%s5 + $0xd8] sm:$0xff]
      %v2745 = vld [vmem:[%s5 + $0xe0] sm:$0xff]
      %v2746 = vld [vmem:[%s5 + $0xe8] sm:$0xff]
      %v2747 = vld [vmem:[%s5 + $0xf0] sm:$0xff]
      %v2748 = vld [vmem:[%s5 + $0xf8] sm:$0xff]
      %s2749 = sld [smem:[#allocation7 + $0x5]]
      %v2750 = vstv %s2749
      %vm2751 = vcmp.eq.s32.totalorder %v2717, %v2750
      %vm2752 = vcmp.eq.s32.totalorder %v2718, %v2750
      %vm2753 = vcmp.eq.s32.totalorder %v2719, %v2750
      %vm2754 = vcmp.eq.s32.totalorder %v2720, %v2750
      %vm2755 = vcmp.eq.s32.totalorder %v2721, %v2750
      %vm2756 = vcmp.eq.s32.totalorder %v2722, %v2750
      %vm2757 = vcmp.eq.s32.totalorder %v2723, %v2750
      %vm2758 = vcmp.eq.s32.totalorder %v2724, %v2750
      %vm2759 = vcmp.eq.s32.totalorder %v2725, %v2750
      %vm2760 = vcmp.eq.s32.totalorder %v2726, %v2750
      %vm2761 = vcmp.eq.s32.totalorder %v2727, %v2750
      %vm2762 = vcmp.eq.s32.totalorder %v2728, %v2750
      %vm2763 = vcmp.eq.s32.totalorder %v2729, %v2750
      %vm2764 = vcmp.eq.s32.totalorder %v2730, %v2750
      %vm2765 = vcmp.eq.s32.totalorder %v2731, %v2750
      %vm2766 = vcmp.eq.s32.totalorder %v2732, %v2750
      %vm2767 = vcmp.eq.s32.totalorder %v2733, %v2750
      %vm2768 = vcmp.eq.s32.totalorder %v2734, %v2750
      %vm2769 = vcmp.eq.s32.totalorder %v2735, %v2750
      %vm2770 = vcmp.eq.s32.totalorder %v2736, %v2750
      %vm2771 = vcmp.eq.s32.totalorder %v2737, %v2750
      %vm2772 = vcmp.eq.s32.totalorder %v2738, %v2750
      %vm2773 = vcmp.eq.s32.totalorder %v2739, %v2750
      %vm2774 = vcmp.eq.s32.totalorder %v2740, %v2750
      %vm2775 = vcmp.eq.s32.totalorder %v2741, %v2750
      %vm2776 = vcmp.eq.s32.totalorder %v2742, %v2750
      %vm2777 = vcmp.eq.s32.totalorder %v2743, %v2750
      %vm2778 = vcmp.eq.s32.totalorder %v2744, %v2750
      %vm2779 = vcmp.eq.s32.totalorder %v2745, %v2750
      %vm2780 = vcmp.eq.s32.totalorder %v2746, %v2750
      %vm2781 = vcmp.eq.s32.totalorder %v2747, %v2750
      %vm2782 = vcmp.eq.s32.totalorder %v2748, %v2750
      %v2783 = vsel %vm2751, 1, 0
      %v2784 = vsel %vm2752, 1, 0
      %v2785 = vsel %vm2753, 1, 0
      %v2786 = vsel %vm2754, 1, 0
      %v2787 = vsel %vm2755, 1, 0
      %v2788 = vsel %vm2756, 1, 0
      %v2789 = vsel %vm2757, 1, 0
      %v2790 = vsel %vm2758, 1, 0
      %v2791 = vsel %vm2759, 1, 0
      %v2792 = vsel %vm2760, 1, 0
      %v2793 = vsel %vm2761, 1, 0
      %v2794 = vsel %vm2762, 1, 0
      %v2795 = vsel %vm2763, 1, 0
      %v2796 = vsel %vm2764, 1, 0
      %v2797 = vsel %vm2765, 1, 0
      %v2798 = vsel %vm2766, 1, 0
      %v2799 = vsel %vm2767, 1, 0
      %v2800 = vsel %vm2768, 1, 0
      %v2801 = vsel %vm2769, 1, 0
      %v2802 = vsel %vm2770, 1, 0
      %v2803 = vsel %vm2771, 1, 0
      %v2804 = vsel %vm2772, 1, 0
      %v2805 = vsel %vm2773, 1, 0
      %v2806 = vsel %vm2774, 1, 0
      %v2807 = vsel %vm2775, 1, 0
      %v2808 = vsel %vm2776, 1, 0
      %v2809 = vsel %vm2777, 1, 0
      %v2810 = vsel %vm2778, 1, 0
      %v2811 = vsel %vm2779, 1, 0
      %v2812 = vsel %vm2780, 1, 0
      %v2813 = vsel %vm2781, 1, 0
      %v2814 = vsel %vm2782, 1, 0
      %2815 = vset.pattern.permute.xlu0 0
      %2816 = vperm.xlu0 %2815, %v2783
      %v2817 = vpop.permute.xlu0 %2816
      %2818 = vset.pattern.permute.xlu0 0
      %2819 = vperm.xlu0 %2818, %v2784
      %v2820 = vpop.permute.xlu0 %2819
      %2821 = vset.pattern.permute.xlu0 0
      %2822 = vperm.xlu0 %2821, %v2785
      %v2823 = vpop.permute.xlu0 %2822
      %2824 = vset.pattern.permute.xlu0 0
      %2825 = vperm.xlu0 %2824, %v2786
      %v2826 = vpop.permute.xlu0 %2825
      %2827 = vset.pattern.permute.xlu0 0
      %2828 = vperm.xlu0 %2827, %v2787
      %v2829 = vpop.permute.xlu0 %2828
      %2830 = vset.pattern.permute.xlu0 0
      %2831 = vperm.xlu0 %2830, %v2788
      %v2832 = vpop.permute.xlu0 %2831
      %2833 = vset.pattern.permute.xlu0 0
      %2834 = vperm.xlu0 %2833, %v2789
      %v2835 = vpop.permute.xlu0 %2834
      %2836 = vset.pattern.permute.xlu0 0
      %2837 = vperm.xlu0 %2836, %v2790
      %v2838 = vpop.permute.xlu0 %2837
      %2839 = vset.pattern.permute.xlu0 0
      %2840 = vperm.xlu0 %2839, %v2791
      %v2841 = vpop.permute.xlu0 %2840
      %2842 = vset.pattern.permute.xlu0 0
      %2843 = vperm.xlu0 %2842, %v2792
      %v2844 = vpop.permute.xlu0 %2843
      %2845 = vset.pattern.permute.xlu0 0
      %2846 = vperm.xlu0 %2845, %v2793
      %v2847 = vpop.permute.xlu0 %2846
      %2848 = vset.pattern.permute.xlu0 0
      %2849 = vperm.xlu0 %2848, %v2794
      %v2850 = vpop.permute.xlu0 %2849
      %2851 = vset.pattern.permute.xlu0 0
      %2852 = vperm.xlu0 %2851, %v2795
      %v2853 = vpop.permute.xlu0 %2852
      %2854 = vset.pattern.permute.xlu0 0
      %2855 = vperm.xlu0 %2854, %v2796
      %v2856 = vpop.permute.xlu0 %2855
      %2857 = vset.pattern.permute.xlu0 0
      %2858 = vperm.xlu0 %2857, %v2797
      %v2859 = vpop.permute.xlu0 %2858
      %2860 = vset.pattern.permute.xlu0 0
      %2861 = vperm.xlu0 %2860, %v2798
      %v2862 = vpop.permute.xlu0 %2861
      %2863 = vset.pattern.permute.xlu0 0
      %2864 = vperm.xlu0 %2863, %v2799
      %v2865 = vpop.permute.xlu0 %2864
      %2866 = vset.pattern.permute.xlu0 0
      %2867 = vperm.xlu0 %2866, %v2800
      %v2868 = vpop.permute.xlu0 %2867
      %2869 = vset.pattern.permute.xlu0 0
      %2870 = vperm.xlu0 %2869, %v2801
      %v2871 = vpop.permute.xlu0 %2870
      %2872 = vset.pattern.permute.xlu0 0
      %2873 = vperm.xlu0 %2872, %v2802
      %v2874 = vpop.permute.xlu0 %2873
      %2875 = vset.pattern.permute.xlu0 0
      %2876 = vperm.xlu0 %2875, %v2803
      %v2877 = vpop.permute.xlu0 %2876
      %2878 = vset.pattern.permute.xlu0 0
      %2879 = vperm.xlu0 %2878, %v2804
      %v2880 = vpop.permute.xlu0 %2879
      %2881 = vset.pattern.permute.xlu0 0
      %2882 = vperm.xlu0 %2881, %v2805
      %v2883 = vpop.permute.xlu0 %2882
      %2884 = vset.pattern.permute.xlu0 0
      %2885 = vperm.xlu0 %2884, %v2806
      %v2886 = vpop.permute.xlu0 %2885
      %2887 = vset.pattern.permute.xlu0 0
      %2888 = vperm.xlu0 %2887, %v2807
      %v2889 = vpop.permute.xlu0 %2888
      %2890 = vset.pattern.permute.xlu0 0
      %2891 = vperm.xlu0 %2890, %v2808
      %v2892 = vpop.permute.xlu0 %2891
      %2893 = vset.pattern.permute.xlu0 0
      %2894 = vperm.xlu0 %2893, %v2809
      %v2895 = vpop.permute.xlu0 %2894
      %2896 = vset.pattern.permute.xlu0 0
      %2897 = vperm.xlu0 %2896, %v2810
      %v2898 = vpop.permute.xlu0 %2897
      %2899 = vset.pattern.permute.xlu0 0
      %2900 = vperm.xlu0 %2899, %v2811
      %v2901 = vpop.permute.xlu0 %2900
      %2902 = vset.pattern.permute.xlu0 0
      %2903 = vperm.xlu0 %2902, %v2812
      %v2904 = vpop.permute.xlu0 %2903
      %2905 = vset.pattern.permute.xlu0 0
      %2906 = vperm.xlu0 %2905, %v2813
      %v2907 = vpop.permute.xlu0 %2906
      %2908 = vset.pattern.permute.xlu0 0
      %2909 = vperm.xlu0 %2908, %v2814
      %v2910 = vpop.permute.xlu0 %2909
      %vm2911 = vcmp.eq.s32.totalorder %v2817, 1
      %vm2912 = vcmp.eq.s32.totalorder %v2820, 1
      %vm2913 = vcmp.eq.s32.totalorder %v2823, 1
      %vm2914 = vcmp.eq.s32.totalorder %v2826, 1
      %vm2915 = vcmp.eq.s32.totalorder %v2829, 1
      %vm2916 = vcmp.eq.s32.totalorder %v2832, 1
      %vm2917 = vcmp.eq.s32.totalorder %v2835, 1
      %vm2918 = vcmp.eq.s32.totalorder %v2838, 1
      %vm2919 = vcmp.eq.s32.totalorder %v2841, 1
      %vm2920 = vcmp.eq.s32.totalorder %v2844, 1
      %vm2921 = vcmp.eq.s32.totalorder %v2847, 1
      %vm2922 = vcmp.eq.s32.totalorder %v2850, 1
      %vm2923 = vcmp.eq.s32.totalorder %v2853, 1
      %vm2924 = vcmp.eq.s32.totalorder %v2856, 1
      %vm2925 = vcmp.eq.s32.totalorder %v2859, 1
      %vm2926 = vcmp.eq.s32.totalorder %v2862, 1
      %vm2927 = vcmp.eq.s32.totalorder %v2865, 1
      %vm2928 = vcmp.eq.s32.totalorder %v2868, 1
      %vm2929 = vcmp.eq.s32.totalorder %v2871, 1
      %vm2930 = vcmp.eq.s32.totalorder %v2874, 1
      %vm2931 = vcmp.eq.s32.totalorder %v2877, 1
      %vm2932 = vcmp.eq.s32.totalorder %v2880, 1
      %vm2933 = vcmp.eq.s32.totalorder %v2883, 1
      %vm2934 = vcmp.eq.s32.totalorder %v2886, 1
      %vm2935 = vcmp.eq.s32.totalorder %v2889, 1
      %vm2936 = vcmp.eq.s32.totalorder %v2892, 1
      %vm2937 = vcmp.eq.s32.totalorder %v2895, 1
      %vm2938 = vcmp.eq.s32.totalorder %v2898, 1
      %vm2939 = vcmp.eq.s32.totalorder %v2901, 1
      %vm2940 = vcmp.eq.s32.totalorder %v2904, 1
      %vm2941 = vcmp.eq.s32.totalorder %v2907, 1
      %vm2942 = vcmp.eq.s32.totalorder %v2910, 1
      %v2943 = vsel %vm2911, %v735, 1e+30
      %v2944 = vsel %vm2911, %v736, 1e+30
      %v2945 = vsel %vm2912, %v737, 1e+30
      %v2946 = vsel %vm2912, %v738, 1e+30
      %v2947 = vsel %vm2913, %v739, 1e+30
      %v2948 = vsel %vm2913, %v740, 1e+30
      %v2949 = vsel %vm2914, %v741, 1e+30
      %v2950 = vsel %vm2914, %v742, 1e+30
      %v2951 = vsel %vm2915, %v743, 1e+30
      %v2952 = vsel %vm2915, %v744, 1e+30
      %v2953 = vsel %vm2916, %v745, 1e+30
      %v2954 = vsel %vm2916, %v746, 1e+30
      %v2955 = vsel %vm2917, %v747, 1e+30
      %v2956 = vsel %vm2917, %v748, 1e+30
      %v2957 = vsel %vm2918, %v749, 1e+30
      %v2958 = vsel %vm2918, %v750, 1e+30
      %v2959 = vsel %vm2919, %v751, 1e+30
      %v2960 = vsel %vm2919, %v752, 1e+30
      %v2961 = vsel %vm2920, %v753, 1e+30
      %v2962 = vsel %vm2920, %v754, 1e+30
      %v2963 = vsel %vm2921, %v755, 1e+30
      %v2964 = vsel %vm2921, %v756, 1e+30
      %v2965 = vsel %vm2922, %v757, 1e+30
      %v2966 = vsel %vm2922, %v758, 1e+30
      %v2967 = vsel %vm2923, %v759, 1e+30
      %v2968 = vsel %vm2923, %v760, 1e+30
      %v2969 = vsel %vm2924, %v761, 1e+30
      %v2970 = vsel %vm2924, %v762, 1e+30
      %v2971 = vsel %vm2925, %v763, 1e+30
      %v2972 = vsel %vm2925, %v764, 1e+30
      %v2973 = vsel %vm2926, %v765, 1e+30
      %v2974 = vsel %vm2926, %v766, 1e+30
      %v2975 = vsel %vm2927, %v767, 1e+30
      %v2976 = vsel %vm2927, %v768, 1e+30
      %v2977 = vsel %vm2928, %v769, 1e+30
      %v2978 = vsel %vm2928, %v770, 1e+30
      %v2979 = vsel %vm2929, %v771, 1e+30
      %v2980 = vsel %vm2929, %v772, 1e+30
      %v2981 = vsel %vm2930, %v773, 1e+30
      %v2982 = vsel %vm2930, %v774, 1e+30
      %v2983 = vsel %vm2931, %v775, 1e+30
      %v2984 = vsel %vm2931, %v776, 1e+30
      %v2985 = vsel %vm2932, %v777, 1e+30
      %v2986 = vsel %vm2932, %v778, 1e+30
      %v2987 = vsel %vm2933, %v779, 1e+30
      %v2988 = vsel %vm2933, %v780, 1e+30
      %v2989 = vsel %vm2934, %v781, 1e+30
      %v2990 = vsel %vm2934, %v782, 1e+30
      %v2991 = vsel %vm2935, %v783, 1e+30
      %v2992 = vsel %vm2935, %v784, 1e+30
      %v2993 = vsel %vm2936, %v785, 1e+30
      %v2994 = vsel %vm2936, %v786, 1e+30
      %v2995 = vsel %vm2937, %v787, 1e+30
      %v2996 = vsel %vm2937, %v788, 1e+30
      %v2997 = vsel %vm2938, %v789, 1e+30
      %v2998 = vsel %vm2938, %v790, 1e+30
      %v2999 = vsel %vm2939, %v791, 1e+30
      %v3000 = vsel %vm2939, %v792, 1e+30
      %v3001 = vsel %vm2940, %v793, 1e+30
      %v3002 = vsel %vm2940, %v794, 1e+30
      %v3003 = vsel %vm2941, %v795, 1e+30
      %v3004 = vsel %vm2941, %v796, 1e+30
      %v3005 = vsel %vm2942, %v797, 1e+30
      %v3006 = vsel %vm2942, %v798, 1e+30
      %v3007 = vmin.f32 %v2943, %v2947
      %v3008 = vmin.f32 %v2945, %v2949
      %v3009 = vmin.f32 %v3007, %v2951
      %v3010 = vmin.f32 %v3008, %v2953
      %v3011 = vmin.f32 %v3009, %v2955
      %v3012 = vmin.f32 %v3010, %v2957
      %v3013 = vmin.f32 %v3011, %v2959
      %v3014 = vmin.f32 %v3012, %v2961
      %v3015 = vmin.f32 %v3013, %v2963
      %v3016 = vmin.f32 %v3014, %v2965
      %v3017 = vmin.f32 %v3015, %v2967
      %v3018 = vmin.f32 %v3016, %v2969
      %v3019 = vmin.f32 %v3017, %v2971
      %v3020 = vmin.f32 %v3018, %v2973
      %v3021 = vmin.f32 %v3019, %v2975
      %v3022 = vmin.f32 %v3020, %v2977
      %v3023 = vmin.f32 %v3021, %v2979
      %v3024 = vmin.f32 %v3022, %v2981
      %v3025 = vmin.f32 %v3023, %v2983
      %v3026 = vmin.f32 %v3024, %v2985
      %v3027 = vmin.f32 %v3025, %v2987
      %v3028 = vmin.f32 %v3026, %v2989
      %v3029 = vmin.f32 %v3027, %v2991
      %v3030 = vmin.f32 %v3028, %v2993
      %v3031 = vmin.f32 %v3029, %v2995
      %v3032 = vmin.f32 %v3030, %v2997
      %v3033 = vmin.f32 %v3031, %v2999
      %v3034 = vmin.f32 %v3032, %v3001
      %v3035 = vmin.f32 %v3033, %v3003
      %v3036 = vmin.f32 %v3034, %v3005
      %v3037 = vmin.f32 %v3035, %v3036
      %v3038 = vrot.slane %v3037, 4
      %v3039 = vmin.f32 %v3037, %v3038
      %v3040 = vrot.slane %v3039, 2
      %v3041 = vmin.f32 %v3039, %v3040
      %v3042 = vrot.slane %v3041, 1
      %v3043 = vmin.f32 %v3041, %v3042
      %v3044 = vmin.f32 %v2944, %v2948
      %v3045 = vmin.f32 %v2946, %v2950
      %v3046 = vmin.f32 %v3044, %v2952
      %v3047 = vmin.f32 %v3045, %v2954
      %v3048 = vmin.f32 %v3046, %v2956
      %v3049 = vmin.f32 %v3047, %v2958
      %v3050 = vmin.f32 %v3048, %v2960
      %v3051 = vmin.f32 %v3049, %v2962
      %v3052 = vmin.f32 %v3050, %v2964
      %v3053 = vmin.f32 %v3051, %v2966
      %v3054 = vmin.f32 %v3052, %v2968
      %v3055 = vmin.f32 %v3053, %v2970
      %v3056 = vmin.f32 %v3054, %v2972
      %v3057 = vmin.f32 %v3055, %v2974
      %v3058 = vmin.f32 %v3056, %v2976
      %v3059 = vmin.f32 %v3057, %v2978
      %v3060 = vmin.f32 %v3058, %v2980
      %v3061 = vmin.f32 %v3059, %v2982
      %v3062 = vmin.f32 %v3060, %v2984
      %v3063 = vmin.f32 %v3061, %v2986
      %v3064 = vmin.f32 %v3062, %v2988
      %v3065 = vmin.f32 %v3063, %v2990
      %v3066 = vmin.f32 %v3064, %v2992
      %v3067 = vmin.f32 %v3065, %v2994
      %v3068 = vmin.f32 %v3066, %v2996
      %v3069 = vmin.f32 %v3067, %v2998
      %v3070 = vmin.f32 %v3068, %v3000
      %v3071 = vmin.f32 %v3069, %v3002
      %v3072 = vmin.f32 %v3070, %v3004
      %v3073 = vmin.f32 %v3071, %v3006
      %v3074 = vmin.f32 %v3072, %v3073
      %v3075 = vrot.slane %v3074, 4
      %v3076 = vmin.f32 %v3074, %v3075
      %v3077 = vrot.slane %v3076, 2
      %v3078 = vmin.f32 %v3076, %v3077
      %v3079 = vrot.slane %v3078, 1
      %v3080 = vmin.f32 %v3078, %v3079
      %s3081 = scalar_lea.vmem [#allocation2], 5
      %v3082 = vld [vmem:[%s3081] ss:$8 sm:$0x3]
      %v3085 = vrot.slane %v3080, 7
      %vm3086 = vcmask 1040384
      %v3087 = vsel %vm3086, %v3043, %v3085
      %v3089 = vmin.f32 %v3082, %v3087
      %v3090 = vlaneseq
      %vm3091 = vcmp.ge.s32.totalorder %v3090, 0
      %vm3092 = vcmp.lt.s32.totalorder %v3090, 256
      %vm3093 = vmand %vm3091, %vm3092
      %3094 = vst.msk [vmem:[%s3081] ss:$8 sm:$0x3] %vm3093, %v3089
      %3095 = vst.msk [vmem:[%s3081] ss:$8 sm:$0x0] %vm3093, %v3089
    $region77: #{_pairwise_hausdorff_sq.1} parent=1 // pred_fallthru
      _
    %p3096 = scmp.gt.s32.totalorder %s65, 6
    // Predicated region
    $region78: #{_pairwise_hausdorff_sq.1} parent=1 // pred_check
      %p3097 = pneg %p3096
    $region79: #{_pairwise_hausdorff_sq.1} parent=1 // pred_check_branch
      %3099 = sbr.rel (%p3097) target = $region81
    $region80: #{_pairwise_hausdorff_sq.1} parent=1 // pred_region
      %v3100 = vld [vmem:[%s5] sm:$0xff]
      %v3101 = vld [vmem:[%s5 + $0x8] sm:$0xff]
      %v3102 = vld [vmem:[%s5 + $0x10] sm:$0xff]
      %v3103 = vld [vmem:[%s5 + $0x18] sm:$0xff]
      %v3104 = vld [vmem:[%s5 + $0x20] sm:$0xff]
      %v3105 = vld [vmem:[%s5 + $0x28] sm:$0xff]
      %v3106 = vld [vmem:[%s5 + $0x30] sm:$0xff]
      %v3107 = vld [vmem:[%s5 + $0x38] sm:$0xff]
      %v3108 = vld [vmem:[%s5 + $0x40] sm:$0xff]
      %v3109 = vld [vmem:[%s5 + $0x48] sm:$0xff]
      %v3110 = vld [vmem:[%s5 + $0x50] sm:$0xff]
      %v3111 = vld [vmem:[%s5 + $0x58] sm:$0xff]
      %v3112 = vld [vmem:[%s5 + $0x60] sm:$0xff]
      %v3113 = vld [vmem:[%s5 + $0x68] sm:$0xff]
      %v3114 = vld [vmem:[%s5 + $0x70] sm:$0xff]
      %v3115 = vld [vmem:[%s5 + $0x78] sm:$0xff]
      %v3116 = vld [vmem:[%s5 + $0x80] sm:$0xff]
      %v3117 = vld [vmem:[%s5 + $0x88] sm:$0xff]
      %v3118 = vld [vmem:[%s5 + $0x90] sm:$0xff]
      %v3119 = vld [vmem:[%s5 + $0x98] sm:$0xff]
      %v3120 = vld [vmem:[%s5 + $0xa0] sm:$0xff]
      %v3121 = vld [vmem:[%s5 + $0xa8] sm:$0xff]
      %v3122 = vld [vmem:[%s5 + $0xb0] sm:$0xff]
      %v3123 = vld [vmem:[%s5 + $0xb8] sm:$0xff]
      %v3124 = vld [vmem:[%s5 + $0xc0] sm:$0xff]
      %v3125 = vld [vmem:[%s5 + $0xc8] sm:$0xff]
      %v3126 = vld [vmem:[%s5 + $0xd0] sm:$0xff]
      %v3127 = vld [vmem:[%s5 + $0xd8] sm:$0xff]
      %v3128 = vld [vmem:[%s5 + $0xe0] sm:$0xff]
      %v3129 = vld [vmem:[%s5 + $0xe8] sm:$0xff]
      %v3130 = vld [vmem:[%s5 + $0xf0] sm:$0xff]
      %v3131 = vld [vmem:[%s5 + $0xf8] sm:$0xff]
      %s3132 = sld [smem:[#allocation7 + $0x6]]
      %v3133 = vstv %s3132
      %vm3134 = vcmp.eq.s32.totalorder %v3100, %v3133
      %vm3135 = vcmp.eq.s32.totalorder %v3101, %v3133
      %vm3136 = vcmp.eq.s32.totalorder %v3102, %v3133
      %vm3137 = vcmp.eq.s32.totalorder %v3103, %v3133
      %vm3138 = vcmp.eq.s32.totalorder %v3104, %v3133
      %vm3139 = vcmp.eq.s32.totalorder %v3105, %v3133
      %vm3140 = vcmp.eq.s32.totalorder %v3106, %v3133
      %vm3141 = vcmp.eq.s32.totalorder %v3107, %v3133
      %vm3142 = vcmp.eq.s32.totalorder %v3108, %v3133
      %vm3143 = vcmp.eq.s32.totalorder %v3109, %v3133
      %vm3144 = vcmp.eq.s32.totalorder %v3110, %v3133
      %vm3145 = vcmp.eq.s32.totalorder %v3111, %v3133
      %vm3146 = vcmp.eq.s32.totalorder %v3112, %v3133
      %vm3147 = vcmp.eq.s32.totalorder %v3113, %v3133
      %vm3148 = vcmp.eq.s32.totalorder %v3114, %v3133
      %vm3149 = vcmp.eq.s32.totalorder %v3115, %v3133
      %vm3150 = vcmp.eq.s32.totalorder %v3116, %v3133
      %vm3151 = vcmp.eq.s32.totalorder %v3117, %v3133
      %vm3152 = vcmp.eq.s32.totalorder %v3118, %v3133
      %vm3153 = vcmp.eq.s32.totalorder %v3119, %v3133
      %vm3154 = vcmp.eq.s32.totalorder %v3120, %v3133
      %vm3155 = vcmp.eq.s32.totalorder %v3121, %v3133
      %vm3156 = vcmp.eq.s32.totalorder %v3122, %v3133
      %vm3157 = vcmp.eq.s32.totalorder %v3123, %v3133
      %vm3158 = vcmp.eq.s32.totalorder %v3124, %v3133
      %vm3159 = vcmp.eq.s32.totalorder %v3125, %v3133
      %vm3160 = vcmp.eq.s32.totalorder %v3126, %v3133
      %vm3161 = vcmp.eq.s32.totalorder %v3127, %v3133
      %vm3162 = vcmp.eq.s32.totalorder %v3128, %v3133
      %vm3163 = vcmp.eq.s32.totalorder %v3129, %v3133
      %vm3164 = vcmp.eq.s32.totalorder %v3130, %v3133
      %vm3165 = vcmp.eq.s32.totalorder %v3131, %v3133
      %v3166 = vsel %vm3134, 1, 0
      %v3167 = vsel %vm3135, 1, 0
      %v3168 = vsel %vm3136, 1, 0
      %v3169 = vsel %vm3137, 1, 0
      %v3170 = vsel %vm3138, 1, 0
      %v3171 = vsel %vm3139, 1, 0
      %v3172 = vsel %vm3140, 1, 0
      %v3173 = vsel %vm3141, 1, 0
      %v3174 = vsel %vm3142, 1, 0
      %v3175 = vsel %vm3143, 1, 0
      %v3176 = vsel %vm3144, 1, 0
      %v3177 = vsel %vm3145, 1, 0
      %v3178 = vsel %vm3146, 1, 0
      %v3179 = vsel %vm3147, 1, 0
      %v3180 = vsel %vm3148, 1, 0
      %v3181 = vsel %vm3149, 1, 0
      %v3182 = vsel %vm3150, 1, 0
      %v3183 = vsel %vm3151, 1, 0
      %v3184 = vsel %vm3152, 1, 0
      %v3185 = vsel %vm3153, 1, 0
      %v3186 = vsel %vm3154, 1, 0
      %v3187 = vsel %vm3155, 1, 0
      %v3188 = vsel %vm3156, 1, 0
      %v3189 = vsel %vm3157, 1, 0
      %v3190 = vsel %vm3158, 1, 0
      %v3191 = vsel %vm3159, 1, 0
      %v3192 = vsel %vm3160, 1, 0
      %v3193 = vsel %vm3161, 1, 0
      %v3194 = vsel %vm3162, 1, 0
      %v3195 = vsel %vm3163, 1, 0
      %v3196 = vsel %vm3164, 1, 0
      %v3197 = vsel %vm3165, 1, 0
      %3198 = vset.pattern.permute.xlu0 0
      %3199 = vperm.xlu0 %3198, %v3166
      %v3200 = vpop.permute.xlu0 %3199
      %3201 = vset.pattern.permute.xlu0 0
      %3202 = vperm.xlu0 %3201, %v3167
      %v3203 = vpop.permute.xlu0 %3202
      %3204 = vset.pattern.permute.xlu0 0
      %3205 = vperm.xlu0 %3204, %v3168
      %v3206 = vpop.permute.xlu0 %3205
      %3207 = vset.pattern.permute.xlu0 0
      %3208 = vperm.xlu0 %3207, %v3169
      %v3209 = vpop.permute.xlu0 %3208
      %3210 = vset.pattern.permute.xlu0 0
      %3211 = vperm.xlu0 %3210, %v3170
      %v3212 = vpop.permute.xlu0 %3211
      %3213 = vset.pattern.permute.xlu0 0
      %3214 = vperm.xlu0 %3213, %v3171
      %v3215 = vpop.permute.xlu0 %3214
      %3216 = vset.pattern.permute.xlu0 0
      %3217 = vperm.xlu0 %3216, %v3172
      %v3218 = vpop.permute.xlu0 %3217
      %3219 = vset.pattern.permute.xlu0 0
      %3220 = vperm.xlu0 %3219, %v3173
      %v3221 = vpop.permute.xlu0 %3220
      %3222 = vset.pattern.permute.xlu0 0
      %3223 = vperm.xlu0 %3222, %v3174
      %v3224 = vpop.permute.xlu0 %3223
      %3225 = vset.pattern.permute.xlu0 0
      %3226 = vperm.xlu0 %3225, %v3175
      %v3227 = vpop.permute.xlu0 %3226
      %3228 = vset.pattern.permute.xlu0 0
      %3229 = vperm.xlu0 %3228, %v3176
      %v3230 = vpop.permute.xlu0 %3229
      %3231 = vset.pattern.permute.xlu0 0
      %3232 = vperm.xlu0 %3231, %v3177
      %v3233 = vpop.permute.xlu0 %3232
      %3234 = vset.pattern.permute.xlu0 0
      %3235 = vperm.xlu0 %3234, %v3178
      %v3236 = vpop.permute.xlu0 %3235
      %3237 = vset.pattern.permute.xlu0 0
      %3238 = vperm.xlu0 %3237, %v3179
      %v3239 = vpop.permute.xlu0 %3238
      %3240 = vset.pattern.permute.xlu0 0
      %3241 = vperm.xlu0 %3240, %v3180
      %v3242 = vpop.permute.xlu0 %3241
      %3243 = vset.pattern.permute.xlu0 0
      %3244 = vperm.xlu0 %3243, %v3181
      %v3245 = vpop.permute.xlu0 %3244
      %3246 = vset.pattern.permute.xlu0 0
      %3247 = vperm.xlu0 %3246, %v3182
      %v3248 = vpop.permute.xlu0 %3247
      %3249 = vset.pattern.permute.xlu0 0
      %3250 = vperm.xlu0 %3249, %v3183
      %v3251 = vpop.permute.xlu0 %3250
      %3252 = vset.pattern.permute.xlu0 0
      %3253 = vperm.xlu0 %3252, %v3184
      %v3254 = vpop.permute.xlu0 %3253
      %3255 = vset.pattern.permute.xlu0 0
      %3256 = vperm.xlu0 %3255, %v3185
      %v3257 = vpop.permute.xlu0 %3256
      %3258 = vset.pattern.permute.xlu0 0
      %3259 = vperm.xlu0 %3258, %v3186
      %v3260 = vpop.permute.xlu0 %3259
      %3261 = vset.pattern.permute.xlu0 0
      %3262 = vperm.xlu0 %3261, %v3187
      %v3263 = vpop.permute.xlu0 %3262
      %3264 = vset.pattern.permute.xlu0 0
      %3265 = vperm.xlu0 %3264, %v3188
      %v3266 = vpop.permute.xlu0 %3265
      %3267 = vset.pattern.permute.xlu0 0
      %3268 = vperm.xlu0 %3267, %v3189
      %v3269 = vpop.permute.xlu0 %3268
      %3270 = vset.pattern.permute.xlu0 0
      %3271 = vperm.xlu0 %3270, %v3190
      %v3272 = vpop.permute.xlu0 %3271
      %3273 = vset.pattern.permute.xlu0 0
      %3274 = vperm.xlu0 %3273, %v3191
      %v3275 = vpop.permute.xlu0 %3274
      %3276 = vset.pattern.permute.xlu0 0
      %3277 = vperm.xlu0 %3276, %v3192
      %v3278 = vpop.permute.xlu0 %3277
      %3279 = vset.pattern.permute.xlu0 0
      %3280 = vperm.xlu0 %3279, %v3193
      %v3281 = vpop.permute.xlu0 %3280
      %3282 = vset.pattern.permute.xlu0 0
      %3283 = vperm.xlu0 %3282, %v3194
      %v3284 = vpop.permute.xlu0 %3283
      %3285 = vset.pattern.permute.xlu0 0
      %3286 = vperm.xlu0 %3285, %v3195
      %v3287 = vpop.permute.xlu0 %3286
      %3288 = vset.pattern.permute.xlu0 0
      %3289 = vperm.xlu0 %3288, %v3196
      %v3290 = vpop.permute.xlu0 %3289
      %3291 = vset.pattern.permute.xlu0 0
      %3292 = vperm.xlu0 %3291, %v3197
      %v3293 = vpop.permute.xlu0 %3292
      %vm3294 = vcmp.eq.s32.totalorder %v3200, 1
      %vm3295 = vcmp.eq.s32.totalorder %v3203, 1
      %vm3296 = vcmp.eq.s32.totalorder %v3206, 1
      %vm3297 = vcmp.eq.s32.totalorder %v3209, 1
      %vm3298 = vcmp.eq.s32.totalorder %v3212, 1
      %vm3299 = vcmp.eq.s32.totalorder %v3215, 1
      %vm3300 = vcmp.eq.s32.totalorder %v3218, 1
      %vm3301 = vcmp.eq.s32.totalorder %v3221, 1
      %vm3302 = vcmp.eq.s32.totalorder %v3224, 1
      %vm3303 = vcmp.eq.s32.totalorder %v3227, 1
      %vm3304 = vcmp.eq.s32.totalorder %v3230, 1
      %vm3305 = vcmp.eq.s32.totalorder %v3233, 1
      %vm3306 = vcmp.eq.s32.totalorder %v3236, 1
      %vm3307 = vcmp.eq.s32.totalorder %v3239, 1
      %vm3308 = vcmp.eq.s32.totalorder %v3242, 1
      %vm3309 = vcmp.eq.s32.totalorder %v3245, 1
      %vm3310 = vcmp.eq.s32.totalorder %v3248, 1
      %vm3311 = vcmp.eq.s32.totalorder %v3251, 1
      %vm3312 = vcmp.eq.s32.totalorder %v3254, 1
      %vm3313 = vcmp.eq.s32.totalorder %v3257, 1
      %vm3314 = vcmp.eq.s32.totalorder %v3260, 1
      %vm3315 = vcmp.eq.s32.totalorder %v3263, 1
      %vm3316 = vcmp.eq.s32.totalorder %v3266, 1
      %vm3317 = vcmp.eq.s32.totalorder %v3269, 1
      %vm3318 = vcmp.eq.s32.totalorder %v3272, 1
      %vm3319 = vcmp.eq.s32.totalorder %v3275, 1
      %vm3320 = vcmp.eq.s32.totalorder %v3278, 1
      %vm3321 = vcmp.eq.s32.totalorder %v3281, 1
      %vm3322 = vcmp.eq.s32.totalorder %v3284, 1
      %vm3323 = vcmp.eq.s32.totalorder %v3287, 1
      %vm3324 = vcmp.eq.s32.totalorder %v3290, 1
      %vm3325 = vcmp.eq.s32.totalorder %v3293, 1
      %v3326 = vsel %vm3294, %v735, 1e+30
      %v3327 = vsel %vm3294, %v736, 1e+30
      %v3328 = vsel %vm3295, %v737, 1e+30
      %v3329 = vsel %vm3295, %v738, 1e+30
      %v3330 = vsel %vm3296, %v739, 1e+30
      %v3331 = vsel %vm3296, %v740, 1e+30
      %v3332 = vsel %vm3297, %v741, 1e+30
      %v3333 = vsel %vm3297, %v742, 1e+30
      %v3334 = vsel %vm3298, %v743, 1e+30
      %v3335 = vsel %vm3298, %v744, 1e+30
      %v3336 = vsel %vm3299, %v745, 1e+30
      %v3337 = vsel %vm3299, %v746, 1e+30
      %v3338 = vsel %vm3300, %v747, 1e+30
      %v3339 = vsel %vm3300, %v748, 1e+30
      %v3340 = vsel %vm3301, %v749, 1e+30
      %v3341 = vsel %vm3301, %v750, 1e+30
      %v3342 = vsel %vm3302, %v751, 1e+30
      %v3343 = vsel %vm3302, %v752, 1e+30
      %v3344 = vsel %vm3303, %v753, 1e+30
      %v3345 = vsel %vm3303, %v754, 1e+30
      %v3346 = vsel %vm3304, %v755, 1e+30
      %v3347 = vsel %vm3304, %v756, 1e+30
      %v3348 = vsel %vm3305, %v757, 1e+30
      %v3349 = vsel %vm3305, %v758, 1e+30
      %v3350 = vsel %vm3306, %v759, 1e+30
      %v3351 = vsel %vm3306, %v760, 1e+30
      %v3352 = vsel %vm3307, %v761, 1e+30
      %v3353 = vsel %vm3307, %v762, 1e+30
      %v3354 = vsel %vm3308, %v763, 1e+30
      %v3355 = vsel %vm3308, %v764, 1e+30
      %v3356 = vsel %vm3309, %v765, 1e+30
      %v3357 = vsel %vm3309, %v766, 1e+30
      %v3358 = vsel %vm3310, %v767, 1e+30
      %v3359 = vsel %vm3310, %v768, 1e+30
      %v3360 = vsel %vm3311, %v769, 1e+30
      %v3361 = vsel %vm3311, %v770, 1e+30
      %v3362 = vsel %vm3312, %v771, 1e+30
      %v3363 = vsel %vm3312, %v772, 1e+30
      %v3364 = vsel %vm3313, %v773, 1e+30
      %v3365 = vsel %vm3313, %v774, 1e+30
      %v3366 = vsel %vm3314, %v775, 1e+30
      %v3367 = vsel %vm3314, %v776, 1e+30
      %v3368 = vsel %vm3315, %v777, 1e+30
      %v3369 = vsel %vm3315, %v778, 1e+30
      %v3370 = vsel %vm3316, %v779, 1e+30
      %v3371 = vsel %vm3316, %v780, 1e+30
      %v3372 = vsel %vm3317, %v781, 1e+30
      %v3373 = vsel %vm3317, %v782, 1e+30
      %v3374 = vsel %vm3318, %v783, 1e+30
      %v3375 = vsel %vm3318, %v784, 1e+30
      %v3376 = vsel %vm3319, %v785, 1e+30
      %v3377 = vsel %vm3319, %v786, 1e+30
      %v3378 = vsel %vm3320, %v787, 1e+30
      %v3379 = vsel %vm3320, %v788, 1e+30
      %v3380 = vsel %vm3321, %v789, 1e+30
      %v3381 = vsel %vm3321, %v790, 1e+30
      %v3382 = vsel %vm3322, %v791, 1e+30
      %v3383 = vsel %vm3322, %v792, 1e+30
      %v3384 = vsel %vm3323, %v793, 1e+30
      %v3385 = vsel %vm3323, %v794, 1e+30
      %v3386 = vsel %vm3324, %v795, 1e+30
      %v3387 = vsel %vm3324, %v796, 1e+30
      %v3388 = vsel %vm3325, %v797, 1e+30
      %v3389 = vsel %vm3325, %v798, 1e+30
      %v3390 = vmin.f32 %v3326, %v3330
      %v3391 = vmin.f32 %v3328, %v3332
      %v3392 = vmin.f32 %v3390, %v3334
      %v3393 = vmin.f32 %v3391, %v3336
      %v3394 = vmin.f32 %v3392, %v3338
      %v3395 = vmin.f32 %v3393, %v3340
      %v3396 = vmin.f32 %v3394, %v3342
      %v3397 = vmin.f32 %v3395, %v3344
      %v3398 = vmin.f32 %v3396, %v3346
      %v3399 = vmin.f32 %v3397, %v3348
      %v3400 = vmin.f32 %v3398, %v3350
      %v3401 = vmin.f32 %v3399, %v3352
      %v3402 = vmin.f32 %v3400, %v3354
      %v3403 = vmin.f32 %v3401, %v3356
      %v3404 = vmin.f32 %v3402, %v3358
      %v3405 = vmin.f32 %v3403, %v3360
      %v3406 = vmin.f32 %v3404, %v3362
      %v3407 = vmin.f32 %v3405, %v3364
      %v3408 = vmin.f32 %v3406, %v3366
      %v3409 = vmin.f32 %v3407, %v3368
      %v3410 = vmin.f32 %v3408, %v3370
      %v3411 = vmin.f32 %v3409, %v3372
      %v3412 = vmin.f32 %v3410, %v3374
      %v3413 = vmin.f32 %v3411, %v3376
      %v3414 = vmin.f32 %v3412, %v3378
      %v3415 = vmin.f32 %v3413, %v3380
      %v3416 = vmin.f32 %v3414, %v3382
      %v3417 = vmin.f32 %v3415, %v3384
      %v3418 = vmin.f32 %v3416, %v3386
      %v3419 = vmin.f32 %v3417, %v3388
      %v3420 = vmin.f32 %v3418, %v3419
      %v3421 = vrot.slane %v3420, 4
      %v3422 = vmin.f32 %v3420, %v3421
      %v3423 = vrot.slane %v3422, 2
      %v3424 = vmin.f32 %v3422, %v3423
      %v3425 = vrot.slane %v3424, 1
      %v3426 = vmin.f32 %v3424, %v3425
      %v3427 = vmin.f32 %v3327, %v3331
      %v3428 = vmin.f32 %v3329, %v3333
      %v3429 = vmin.f32 %v3427, %v3335
      %v3430 = vmin.f32 %v3428, %v3337
      %v3431 = vmin.f32 %v3429, %v3339
      %v3432 = vmin.f32 %v3430, %v3341
      %v3433 = vmin.f32 %v3431, %v3343
      %v3434 = vmin.f32 %v3432, %v3345
      %v3435 = vmin.f32 %v3433, %v3347
      %v3436 = vmin.f32 %v3434, %v3349
      %v3437 = vmin.f32 %v3435, %v3351
      %v3438 = vmin.f32 %v3436, %v3353
      %v3439 = vmin.f32 %v3437, %v3355
      %v3440 = vmin.f32 %v3438, %v3357
      %v3441 = vmin.f32 %v3439, %v3359
      %v3442 = vmin.f32 %v3440, %v3361
      %v3443 = vmin.f32 %v3441, %v3363
      %v3444 = vmin.f32 %v3442, %v3365
      %v3445 = vmin.f32 %v3443, %v3367
      %v3446 = vmin.f32 %v3444, %v3369
      %v3447 = vmin.f32 %v3445, %v3371
      %v3448 = vmin.f32 %v3446, %v3373
      %v3449 = vmin.f32 %v3447, %v3375
      %v3450 = vmin.f32 %v3448, %v3377
      %v3451 = vmin.f32 %v3449, %v3379
      %v3452 = vmin.f32 %v3450, %v3381
      %v3453 = vmin.f32 %v3451, %v3383
      %v3454 = vmin.f32 %v3452, %v3385
      %v3455 = vmin.f32 %v3453, %v3387
      %v3456 = vmin.f32 %v3454, %v3389
      %v3457 = vmin.f32 %v3455, %v3456
      %v3458 = vrot.slane %v3457, 4
      %v3459 = vmin.f32 %v3457, %v3458
      %v3460 = vrot.slane %v3459, 2
      %v3461 = vmin.f32 %v3459, %v3460
      %v3462 = vrot.slane %v3461, 1
      %v3463 = vmin.f32 %v3461, %v3462
      %s3464 = scalar_lea.vmem [#allocation2], 6
      %v3465 = vld [vmem:[%s3464] ss:$8 sm:$0x3]
      %v3468 = vrot.slane %v3463, 7
      %vm3469 = vcmask 1040384
      %v3470 = vsel %vm3469, %v3426, %v3468
      %v3472 = vmin.f32 %v3465, %v3470
      %v3473 = vlaneseq
      %vm3474 = vcmp.ge.s32.totalorder %v3473, 0
      %vm3475 = vcmp.lt.s32.totalorder %v3473, 256
      %vm3476 = vmand %vm3474, %vm3475
      %3477 = vst.msk [vmem:[%s3464] ss:$8 sm:$0x3] %vm3476, %v3472
      %3478 = vst.msk [vmem:[%s3464] ss:$8 sm:$0x0] %vm3476, %v3472
    $region81: #{_pairwise_hausdorff_sq.1} parent=1 // pred_fallthru
      _
    %p3479 = scmp.gt.s32.totalorder %s65, 7
    // Predicated region
    $region82: #{_pairwise_hausdorff_sq.1} parent=1 // pred_check
      %p3480 = pneg %p3479
    $region83: #{_pairwise_hausdorff_sq.1} parent=1 // pred_check_branch
      %3482 = sbr.rel (%p3480) target = $region85
    $region84: #{_pairwise_hausdorff_sq.1} parent=1 // pred_region
      %v3483 = vld [vmem:[%s5] sm:$0xff]
      %v3484 = vld [vmem:[%s5 + $0x8] sm:$0xff]
      %v3485 = vld [vmem:[%s5 + $0x10] sm:$0xff]
      %v3486 = vld [vmem:[%s5 + $0x18] sm:$0xff]
      %v3487 = vld [vmem:[%s5 + $0x20] sm:$0xff]
      %v3488 = vld [vmem:[%s5 + $0x28] sm:$0xff]
      %v3489 = vld [vmem:[%s5 + $0x30] sm:$0xff]
      %v3490 = vld [vmem:[%s5 + $0x38] sm:$0xff]
      %v3491 = vld [vmem:[%s5 + $0x40] sm:$0xff]
      %v3492 = vld [vmem:[%s5 + $0x48] sm:$0xff]
      %v3493 = vld [vmem:[%s5 + $0x50] sm:$0xff]
      %v3494 = vld [vmem:[%s5 + $0x58] sm:$0xff]
      %v3495 = vld [vmem:[%s5 + $0x60] sm:$0xff]
      %v3496 = vld [vmem:[%s5 + $0x68] sm:$0xff]
      %v3497 = vld [vmem:[%s5 + $0x70] sm:$0xff]
      %v3498 = vld [vmem:[%s5 + $0x78] sm:$0xff]
      %v3499 = vld [vmem:[%s5 + $0x80] sm:$0xff]
      %v3500 = vld [vmem:[%s5 + $0x88] sm:$0xff]
      %v3501 = vld [vmem:[%s5 + $0x90] sm:$0xff]
      %v3502 = vld [vmem:[%s5 + $0x98] sm:$0xff]
      %v3503 = vld [vmem:[%s5 + $0xa0] sm:$0xff]
      %v3504 = vld [vmem:[%s5 + $0xa8] sm:$0xff]
      %v3505 = vld [vmem:[%s5 + $0xb0] sm:$0xff]
      %v3506 = vld [vmem:[%s5 + $0xb8] sm:$0xff]
      %v3507 = vld [vmem:[%s5 + $0xc0] sm:$0xff]
      %v3508 = vld [vmem:[%s5 + $0xc8] sm:$0xff]
      %v3509 = vld [vmem:[%s5 + $0xd0] sm:$0xff]
      %v3510 = vld [vmem:[%s5 + $0xd8] sm:$0xff]
      %v3511 = vld [vmem:[%s5 + $0xe0] sm:$0xff]
      %v3512 = vld [vmem:[%s5 + $0xe8] sm:$0xff]
      %v3513 = vld [vmem:[%s5 + $0xf0] sm:$0xff]
      %v3514 = vld [vmem:[%s5 + $0xf8] sm:$0xff]
      %s3515 = sld [smem:[#allocation7 + $0x7]]
      %v3516 = vstv %s3515
      %vm3517 = vcmp.eq.s32.totalorder %v3483, %v3516
      %vm3518 = vcmp.eq.s32.totalorder %v3484, %v3516
      %vm3519 = vcmp.eq.s32.totalorder %v3485, %v3516
      %vm3520 = vcmp.eq.s32.totalorder %v3486, %v3516
      %vm3521 = vcmp.eq.s32.totalorder %v3487, %v3516
      %vm3522 = vcmp.eq.s32.totalorder %v3488, %v3516
      %vm3523 = vcmp.eq.s32.totalorder %v3489, %v3516
      %vm3524 = vcmp.eq.s32.totalorder %v3490, %v3516
      %vm3525 = vcmp.eq.s32.totalorder %v3491, %v3516
      %vm3526 = vcmp.eq.s32.totalorder %v3492, %v3516
      %vm3527 = vcmp.eq.s32.totalorder %v3493, %v3516
      %vm3528 = vcmp.eq.s32.totalorder %v3494, %v3516
      %vm3529 = vcmp.eq.s32.totalorder %v3495, %v3516
      %vm3530 = vcmp.eq.s32.totalorder %v3496, %v3516
      %vm3531 = vcmp.eq.s32.totalorder %v3497, %v3516
      %vm3532 = vcmp.eq.s32.totalorder %v3498, %v3516
      %vm3533 = vcmp.eq.s32.totalorder %v3499, %v3516
      %vm3534 = vcmp.eq.s32.totalorder %v3500, %v3516
      %vm3535 = vcmp.eq.s32.totalorder %v3501, %v3516
      %vm3536 = vcmp.eq.s32.totalorder %v3502, %v3516
      %vm3537 = vcmp.eq.s32.totalorder %v3503, %v3516
      %vm3538 = vcmp.eq.s32.totalorder %v3504, %v3516
      %vm3539 = vcmp.eq.s32.totalorder %v3505, %v3516
      %vm3540 = vcmp.eq.s32.totalorder %v3506, %v3516
      %vm3541 = vcmp.eq.s32.totalorder %v3507, %v3516
      %vm3542 = vcmp.eq.s32.totalorder %v3508, %v3516
      %vm3543 = vcmp.eq.s32.totalorder %v3509, %v3516
      %vm3544 = vcmp.eq.s32.totalorder %v3510, %v3516
      %vm3545 = vcmp.eq.s32.totalorder %v3511, %v3516
      %vm3546 = vcmp.eq.s32.totalorder %v3512, %v3516
      %vm3547 = vcmp.eq.s32.totalorder %v3513, %v3516
      %vm3548 = vcmp.eq.s32.totalorder %v3514, %v3516
      %v3549 = vsel %vm3517, 1, 0
      %v3550 = vsel %vm3518, 1, 0
      %v3551 = vsel %vm3519, 1, 0
      %v3552 = vsel %vm3520, 1, 0
      %v3553 = vsel %vm3521, 1, 0
      %v3554 = vsel %vm3522, 1, 0
      %v3555 = vsel %vm3523, 1, 0
      %v3556 = vsel %vm3524, 1, 0
      %v3557 = vsel %vm3525, 1, 0
      %v3558 = vsel %vm3526, 1, 0
      %v3559 = vsel %vm3527, 1, 0
      %v3560 = vsel %vm3528, 1, 0
      %v3561 = vsel %vm3529, 1, 0
      %v3562 = vsel %vm3530, 1, 0
      %v3563 = vsel %vm3531, 1, 0
      %v3564 = vsel %vm3532, 1, 0
      %v3565 = vsel %vm3533, 1, 0
      %v3566 = vsel %vm3534, 1, 0
      %v3567 = vsel %vm3535, 1, 0
      %v3568 = vsel %vm3536, 1, 0
      %v3569 = vsel %vm3537, 1, 0
      %v3570 = vsel %vm3538, 1, 0
      %v3571 = vsel %vm3539, 1, 0
      %v3572 = vsel %vm3540, 1, 0
      %v3573 = vsel %vm3541, 1, 0
      %v3574 = vsel %vm3542, 1, 0
      %v3575 = vsel %vm3543, 1, 0
      %v3576 = vsel %vm3544, 1, 0
      %v3577 = vsel %vm3545, 1, 0
      %v3578 = vsel %vm3546, 1, 0
      %v3579 = vsel %vm3547, 1, 0
      %v3580 = vsel %vm3548, 1, 0
      %3581 = vset.pattern.permute.xlu0 0
      %3582 = vperm.xlu0 %3581, %v3549
      %v3583 = vpop.permute.xlu0 %3582
      %3584 = vset.pattern.permute.xlu0 0
      %3585 = vperm.xlu0 %3584, %v3550
      %v3586 = vpop.permute.xlu0 %3585
      %3587 = vset.pattern.permute.xlu0 0
      %3588 = vperm.xlu0 %3587, %v3551
      %v3589 = vpop.permute.xlu0 %3588
      %3590 = vset.pattern.permute.xlu0 0
      %3591 = vperm.xlu0 %3590, %v3552
      %v3592 = vpop.permute.xlu0 %3591
      %3593 = vset.pattern.permute.xlu0 0
      %3594 = vperm.xlu0 %3593, %v3553
      %v3595 = vpop.permute.xlu0 %3594
      %3596 = vset.pattern.permute.xlu0 0
      %3597 = vperm.xlu0 %3596, %v3554
      %v3598 = vpop.permute.xlu0 %3597
      %3599 = vset.pattern.permute.xlu0 0
      %3600 = vperm.xlu0 %3599, %v3555
      %v3601 = vpop.permute.xlu0 %3600
      %3602 = vset.pattern.permute.xlu0 0
      %3603 = vperm.xlu0 %3602, %v3556
      %v3604 = vpop.permute.xlu0 %3603
      %3605 = vset.pattern.permute.xlu0 0
      %3606 = vperm.xlu0 %3605, %v3557
      %v3607 = vpop.permute.xlu0 %3606
      %3608 = vset.pattern.permute.xlu0 0
      %3609 = vperm.xlu0 %3608, %v3558
      %v3610 = vpop.permute.xlu0 %3609
      %3611 = vset.pattern.permute.xlu0 0
      %3612 = vperm.xlu0 %3611, %v3559
      %v3613 = vpop.permute.xlu0 %3612
      %3614 = vset.pattern.permute.xlu0 0
      %3615 = vperm.xlu0 %3614, %v3560
      %v3616 = vpop.permute.xlu0 %3615
      %3617 = vset.pattern.permute.xlu0 0
      %3618 = vperm.xlu0 %3617, %v3561
      %v3619 = vpop.permute.xlu0 %3618
      %3620 = vset.pattern.permute.xlu0 0
      %3621 = vperm.xlu0 %3620, %v3562
      %v3622 = vpop.permute.xlu0 %3621
      %3623 = vset.pattern.permute.xlu0 0
      %3624 = vperm.xlu0 %3623, %v3563
      %v3625 = vpop.permute.xlu0 %3624
      %3626 = vset.pattern.permute.xlu0 0
      %3627 = vperm.xlu0 %3626, %v3564
      %v3628 = vpop.permute.xlu0 %3627
      %3629 = vset.pattern.permute.xlu0 0
      %3630 = vperm.xlu0 %3629, %v3565
      %v3631 = vpop.permute.xlu0 %3630
      %3632 = vset.pattern.permute.xlu0 0
      %3633 = vperm.xlu0 %3632, %v3566
      %v3634 = vpop.permute.xlu0 %3633
      %3635 = vset.pattern.permute.xlu0 0
      %3636 = vperm.xlu0 %3635, %v3567
      %v3637 = vpop.permute.xlu0 %3636
      %3638 = vset.pattern.permute.xlu0 0
      %3639 = vperm.xlu0 %3638, %v3568
      %v3640 = vpop.permute.xlu0 %3639
      %3641 = vset.pattern.permute.xlu0 0
      %3642 = vperm.xlu0 %3641, %v3569
      %v3643 = vpop.permute.xlu0 %3642
      %3644 = vset.pattern.permute.xlu0 0
      %3645 = vperm.xlu0 %3644, %v3570
      %v3646 = vpop.permute.xlu0 %3645
      %3647 = vset.pattern.permute.xlu0 0
      %3648 = vperm.xlu0 %3647, %v3571
      %v3649 = vpop.permute.xlu0 %3648
      %3650 = vset.pattern.permute.xlu0 0
      %3651 = vperm.xlu0 %3650, %v3572
      %v3652 = vpop.permute.xlu0 %3651
      %3653 = vset.pattern.permute.xlu0 0
      %3654 = vperm.xlu0 %3653, %v3573
      %v3655 = vpop.permute.xlu0 %3654
      %3656 = vset.pattern.permute.xlu0 0
      %3657 = vperm.xlu0 %3656, %v3574
      %v3658 = vpop.permute.xlu0 %3657
      %3659 = vset.pattern.permute.xlu0 0
      %3660 = vperm.xlu0 %3659, %v3575
      %v3661 = vpop.permute.xlu0 %3660
      %3662 = vset.pattern.permute.xlu0 0
      %3663 = vperm.xlu0 %3662, %v3576
      %v3664 = vpop.permute.xlu0 %3663
      %3665 = vset.pattern.permute.xlu0 0
      %3666 = vperm.xlu0 %3665, %v3577
      %v3667 = vpop.permute.xlu0 %3666
      %3668 = vset.pattern.permute.xlu0 0
      %3669 = vperm.xlu0 %3668, %v3578
      %v3670 = vpop.permute.xlu0 %3669
      %3671 = vset.pattern.permute.xlu0 0
      %3672 = vperm.xlu0 %3671, %v3579
      %v3673 = vpop.permute.xlu0 %3672
      %3674 = vset.pattern.permute.xlu0 0
      %3675 = vperm.xlu0 %3674, %v3580
      %v3676 = vpop.permute.xlu0 %3675
      %vm3677 = vcmp.eq.s32.totalorder %v3583, 1
      %vm3678 = vcmp.eq.s32.totalorder %v3586, 1
      %vm3679 = vcmp.eq.s32.totalorder %v3589, 1
      %vm3680 = vcmp.eq.s32.totalorder %v3592, 1
      %vm3681 = vcmp.eq.s32.totalorder %v3595, 1
      %vm3682 = vcmp.eq.s32.totalorder %v3598, 1
      %vm3683 = vcmp.eq.s32.totalorder %v3601, 1
      %vm3684 = vcmp.eq.s32.totalorder %v3604, 1
      %vm3685 = vcmp.eq.s32.totalorder %v3607, 1
      %vm3686 = vcmp.eq.s32.totalorder %v3610, 1
      %vm3687 = vcmp.eq.s32.totalorder %v3613, 1
      %vm3688 = vcmp.eq.s32.totalorder %v3616, 1
      %vm3689 = vcmp.eq.s32.totalorder %v3619, 1
      %vm3690 = vcmp.eq.s32.totalorder %v3622, 1
      %vm3691 = vcmp.eq.s32.totalorder %v3625, 1
      %vm3692 = vcmp.eq.s32.totalorder %v3628, 1
      %vm3693 = vcmp.eq.s32.totalorder %v3631, 1
      %vm3694 = vcmp.eq.s32.totalorder %v3634, 1
      %vm3695 = vcmp.eq.s32.totalorder %v3637, 1
      %vm3696 = vcmp.eq.s32.totalorder %v3640, 1
      %vm3697 = vcmp.eq.s32.totalorder %v3643, 1
      %vm3698 = vcmp.eq.s32.totalorder %v3646, 1
      %vm3699 = vcmp.eq.s32.totalorder %v3649, 1
      %vm3700 = vcmp.eq.s32.totalorder %v3652, 1
      %vm3701 = vcmp.eq.s32.totalorder %v3655, 1
      %vm3702 = vcmp.eq.s32.totalorder %v3658, 1
      %vm3703 = vcmp.eq.s32.totalorder %v3661, 1
      %vm3704 = vcmp.eq.s32.totalorder %v3664, 1
      %vm3705 = vcmp.eq.s32.totalorder %v3667, 1
      %vm3706 = vcmp.eq.s32.totalorder %v3670, 1
      %vm3707 = vcmp.eq.s32.totalorder %v3673, 1
      %vm3708 = vcmp.eq.s32.totalorder %v3676, 1
      %v3709 = vsel %vm3677, %v735, 1e+30
      %v3710 = vsel %vm3677, %v736, 1e+30
      %v3711 = vsel %vm3678, %v737, 1e+30
      %v3712 = vsel %vm3678, %v738, 1e+30
      %v3713 = vsel %vm3679, %v739, 1e+30
      %v3714 = vsel %vm3679, %v740, 1e+30
      %v3715 = vsel %vm3680, %v741, 1e+30
      %v3716 = vsel %vm3680, %v742, 1e+30
      %v3717 = vsel %vm3681, %v743, 1e+30
      %v3718 = vsel %vm3681, %v744, 1e+30
      %v3719 = vsel %vm3682, %v745, 1e+30
      %v3720 = vsel %vm3682, %v746, 1e+30
      %v3721 = vsel %vm3683, %v747, 1e+30
      %v3722 = vsel %vm3683, %v748, 1e+30
      %v3723 = vsel %vm3684, %v749, 1e+30
      %v3724 = vsel %vm3684, %v750, 1e+30
      %v3725 = vsel %vm3685, %v751, 1e+30
      %v3726 = vsel %vm3685, %v752, 1e+30
      %v3727 = vsel %vm3686, %v753, 1e+30
      %v3728 = vsel %vm3686, %v754, 1e+30
      %v3729 = vsel %vm3687, %v755, 1e+30
      %v3730 = vsel %vm3687, %v756, 1e+30
      %v3731 = vsel %vm3688, %v757, 1e+30
      %v3732 = vsel %vm3688, %v758, 1e+30
      %v3733 = vsel %vm3689, %v759, 1e+30
      %v3734 = vsel %vm3689, %v760, 1e+30
      %v3735 = vsel %vm3690, %v761, 1e+30
      %v3736 = vsel %vm3690, %v762, 1e+30
      %v3737 = vsel %vm3691, %v763, 1e+30
      %v3738 = vsel %vm3691, %v764, 1e+30
      %v3739 = vsel %vm3692, %v765, 1e+30
      %v3740 = vsel %vm3692, %v766, 1e+30
      %v3741 = vsel %vm3693, %v767, 1e+30
      %v3742 = vsel %vm3693, %v768, 1e+30
      %v3743 = vsel %vm3694, %v769, 1e+30
      %v3744 = vsel %vm3694, %v770, 1e+30
      %v3745 = vsel %vm3695, %v771, 1e+30
      %v3746 = vsel %vm3695, %v772, 1e+30
      %v3747 = vsel %vm3696, %v773, 1e+30
      %v3748 = vsel %vm3696, %v774, 1e+30
      %v3749 = vsel %vm3697, %v775, 1e+30
      %v3750 = vsel %vm3697, %v776, 1e+30
      %v3751 = vsel %vm3698, %v777, 1e+30
      %v3752 = vsel %vm3698, %v778, 1e+30
      %v3753 = vsel %vm3699, %v779, 1e+30
      %v3754 = vsel %vm3699, %v780, 1e+30
      %v3755 = vsel %vm3700, %v781, 1e+30
      %v3756 = vsel %vm3700, %v782, 1e+30
      %v3757 = vsel %vm3701, %v783, 1e+30
      %v3758 = vsel %vm3701, %v784, 1e+30
      %v3759 = vsel %vm3702, %v785, 1e+30
      %v3760 = vsel %vm3702, %v786, 1e+30
      %v3761 = vsel %vm3703, %v787, 1e+30
      %v3762 = vsel %vm3703, %v788, 1e+30
      %v3763 = vsel %vm3704, %v789, 1e+30
      %v3764 = vsel %vm3704, %v790, 1e+30
      %v3765 = vsel %vm3705, %v791, 1e+30
      %v3766 = vsel %vm3705, %v792, 1e+30
      %v3767 = vsel %vm3706, %v793, 1e+30
      %v3768 = vsel %vm3706, %v794, 1e+30
      %v3769 = vsel %vm3707, %v795, 1e+30
      %v3770 = vsel %vm3707, %v796, 1e+30
      %v3771 = vsel %vm3708, %v797, 1e+30
      %v3772 = vsel %vm3708, %v798, 1e+30
      %v3773 = vmin.f32 %v3709, %v3713
      %v3774 = vmin.f32 %v3711, %v3715
      %v3775 = vmin.f32 %v3773, %v3717
      %v3776 = vmin.f32 %v3774, %v3719
      %v3777 = vmin.f32 %v3775, %v3721
      %v3778 = vmin.f32 %v3776, %v3723
      %v3779 = vmin.f32 %v3777, %v3725
      %v3780 = vmin.f32 %v3778, %v3727
      %v3781 = vmin.f32 %v3779, %v3729
      %v3782 = vmin.f32 %v3780, %v3731
      %v3783 = vmin.f32 %v3781, %v3733
      %v3784 = vmin.f32 %v3782, %v3735
      %v3785 = vmin.f32 %v3783, %v3737
      %v3786 = vmin.f32 %v3784, %v3739
      %v3787 = vmin.f32 %v3785, %v3741
      %v3788 = vmin.f32 %v3786, %v3743
      %v3789 = vmin.f32 %v3787, %v3745
      %v3790 = vmin.f32 %v3788, %v3747
      %v3791 = vmin.f32 %v3789, %v3749
      %v3792 = vmin.f32 %v3790, %v3751
      %v3793 = vmin.f32 %v3791, %v3753
      %v3794 = vmin.f32 %v3792, %v3755
      %v3795 = vmin.f32 %v3793, %v3757
      %v3796 = vmin.f32 %v3794, %v3759
      %v3797 = vmin.f32 %v3795, %v3761
      %v3798 = vmin.f32 %v3796, %v3763
      %v3799 = vmin.f32 %v3797, %v3765
      %v3800 = vmin.f32 %v3798, %v3767
      %v3801 = vmin.f32 %v3799, %v3769
      %v3802 = vmin.f32 %v3800, %v3771
      %v3803 = vmin.f32 %v3801, %v3802
      %v3804 = vrot.slane %v3803, 4
      %v3805 = vmin.f32 %v3803, %v3804
      %v3806 = vrot.slane %v3805, 2
      %v3807 = vmin.f32 %v3805, %v3806
      %v3808 = vrot.slane %v3807, 1
      %v3809 = vmin.f32 %v3807, %v3808
      %v3810 = vmin.f32 %v3710, %v3714
      %v3811 = vmin.f32 %v3712, %v3716
      %v3812 = vmin.f32 %v3810, %v3718
      %v3813 = vmin.f32 %v3811, %v3720
      %v3814 = vmin.f32 %v3812, %v3722
      %v3815 = vmin.f32 %v3813, %v3724
      %v3816 = vmin.f32 %v3814, %v3726
      %v3817 = vmin.f32 %v3815, %v3728
      %v3818 = vmin.f32 %v3816, %v3730
      %v3819 = vmin.f32 %v3817, %v3732
      %v3820 = vmin.f32 %v3818, %v3734
      %v3821 = vmin.f32 %v3819, %v3736
      %v3822 = vmin.f32 %v3820, %v3738
      %v3823 = vmin.f32 %v3821, %v3740
      %v3824 = vmin.f32 %v3822, %v3742
      %v3825 = vmin.f32 %v3823, %v3744
      %v3826 = vmin.f32 %v3824, %v3746
      %v3827 = vmin.f32 %v3825, %v3748
      %v3828 = vmin.f32 %v3826, %v3750
      %v3829 = vmin.f32 %v3827, %v3752
      %v3830 = vmin.f32 %v3828, %v3754
      %v3831 = vmin.f32 %v3829, %v3756
      %v3832 = vmin.f32 %v3830, %v3758
      %v3833 = vmin.f32 %v3831, %v3760
      %v3834 = vmin.f32 %v3832, %v3762
      %v3835 = vmin.f32 %v3833, %v3764
      %v3836 = vmin.f32 %v3834, %v3766
      %v3837 = vmin.f32 %v3835, %v3768
      %v3838 = vmin.f32 %v3836, %v3770
      %v3839 = vmin.f32 %v3837, %v3772
      %v3840 = vmin.f32 %v3838, %v3839
      %v3841 = vrot.slane %v3840, 4
      %v3842 = vmin.f32 %v3840, %v3841
      %v3843 = vrot.slane %v3842, 2
      %v3844 = vmin.f32 %v3842, %v3843
      %v3845 = vrot.slane %v3844, 1
      %v3846 = vmin.f32 %v3844, %v3845
      %s3847 = scalar_lea.vmem [#allocation2], 7
      %v3848 = vld [vmem:[%s3847] ss:$8 sm:$0x3]
      %v3851 = vrot.slane %v3846, 7
      %vm3852 = vcmask 1040384
      %v3853 = vsel %vm3852, %v3809, %v3851
      %v3855 = vmin.f32 %v3848, %v3853
      %v3856 = vlaneseq
      %vm3857 = vcmp.ge.s32.totalorder %v3856, 0
      %vm3858 = vcmp.lt.s32.totalorder %v3856, 256
      %vm3859 = vmand %vm3857, %vm3858
      %3860 = vst.msk [vmem:[%s3847] ss:$8 sm:$0x3] %vm3859, %v3855
      %3861 = vst.msk [vmem:[%s3847] ss:$8 sm:$0x0] %vm3859, %v3855
    $region85: #{_pairwise_hausdorff_sq.1} parent=1 // pred_fallthru
      _
    %p3862 = scmp.gt.s32.totalorder %s64, 0
    // Predicated region
    $region86: #{_pairwise_hausdorff_sq.1} parent=1 // pred_check
      %p3863 = pneg %p3862
    $region87: #{_pairwise_hausdorff_sq.1} parent=1 // pred_check_branch
      %3865 = sbr.rel (%p3863) target = $region89
    $region88: #{_pairwise_hausdorff_sq.1} parent=1 // pred_region
      %v3866 = vld [vmem:[%s4] sm:$0xff]
      %v3867 = vld [vmem:[%s4 + $0x8] sm:$0xff]
      %v3868 = vld [vmem:[%s4 + $0x10] sm:$0xff]
      %v3869 = vld [vmem:[%s4 + $0x18] sm:$0xff]
      %v3870 = vld [vmem:[%s4 + $0x20] sm:$0xff]
      %v3871 = vld [vmem:[%s4 + $0x28] sm:$0xff]
      %v3872 = vld [vmem:[%s4 + $0x30] sm:$0xff]
      %v3873 = vld [vmem:[%s4 + $0x38] sm:$0xff]
      %v3874 = vld [vmem:[%s4 + $0x40] sm:$0xff]
      %v3875 = vld [vmem:[%s4 + $0x48] sm:$0xff]
      %v3876 = vld [vmem:[%s4 + $0x50] sm:$0xff]
      %v3877 = vld [vmem:[%s4 + $0x58] sm:$0xff]
      %v3878 = vld [vmem:[%s4 + $0x60] sm:$0xff]
      %v3879 = vld [vmem:[%s4 + $0x68] sm:$0xff]
      %v3880 = vld [vmem:[%s4 + $0x70] sm:$0xff]
      %v3881 = vld [vmem:[%s4 + $0x78] sm:$0xff]
      %v3882 = vld [vmem:[%s4 + $0x80] sm:$0xff]
      %v3883 = vld [vmem:[%s4 + $0x88] sm:$0xff]
      %v3884 = vld [vmem:[%s4 + $0x90] sm:$0xff]
      %v3885 = vld [vmem:[%s4 + $0x98] sm:$0xff]
      %v3886 = vld [vmem:[%s4 + $0xa0] sm:$0xff]
      %v3887 = vld [vmem:[%s4 + $0xa8] sm:$0xff]
      %v3888 = vld [vmem:[%s4 + $0xb0] sm:$0xff]
      %v3889 = vld [vmem:[%s4 + $0xb8] sm:$0xff]
      %v3890 = vld [vmem:[%s4 + $0xc0] sm:$0xff]
      %v3891 = vld [vmem:[%s4 + $0xc8] sm:$0xff]
      %v3892 = vld [vmem:[%s4 + $0xd0] sm:$0xff]
      %v3893 = vld [vmem:[%s4 + $0xd8] sm:$0xff]
      %v3894 = vld [vmem:[%s4 + $0xe0] sm:$0xff]
      %v3895 = vld [vmem:[%s4 + $0xe8] sm:$0xff]
      %v3896 = vld [vmem:[%s4 + $0xf0] sm:$0xff]
      %v3897 = vld [vmem:[%s4 + $0xf8] sm:$0xff]
      %s3898 = sld [smem:[#allocation6]]
      %v3899 = vstv %s3898
      %vm3900 = vcmp.eq.s32.totalorder %v3866, %v3899
      %vm3901 = vcmp.eq.s32.totalorder %v3867, %v3899
      %vm3902 = vcmp.eq.s32.totalorder %v3868, %v3899
      %vm3903 = vcmp.eq.s32.totalorder %v3869, %v3899
      %vm3904 = vcmp.eq.s32.totalorder %v3870, %v3899
      %vm3905 = vcmp.eq.s32.totalorder %v3871, %v3899
      %vm3906 = vcmp.eq.s32.totalorder %v3872, %v3899
      %vm3907 = vcmp.eq.s32.totalorder %v3873, %v3899
      %vm3908 = vcmp.eq.s32.totalorder %v3874, %v3899
      %vm3909 = vcmp.eq.s32.totalorder %v3875, %v3899
      %vm3910 = vcmp.eq.s32.totalorder %v3876, %v3899
      %vm3911 = vcmp.eq.s32.totalorder %v3877, %v3899
      %vm3912 = vcmp.eq.s32.totalorder %v3878, %v3899
      %vm3913 = vcmp.eq.s32.totalorder %v3879, %v3899
      %vm3914 = vcmp.eq.s32.totalorder %v3880, %v3899
      %vm3915 = vcmp.eq.s32.totalorder %v3881, %v3899
      %vm3916 = vcmp.eq.s32.totalorder %v3882, %v3899
      %vm3917 = vcmp.eq.s32.totalorder %v3883, %v3899
      %vm3918 = vcmp.eq.s32.totalorder %v3884, %v3899
      %vm3919 = vcmp.eq.s32.totalorder %v3885, %v3899
      %vm3920 = vcmp.eq.s32.totalorder %v3886, %v3899
      %vm3921 = vcmp.eq.s32.totalorder %v3887, %v3899
      %vm3922 = vcmp.eq.s32.totalorder %v3888, %v3899
      %vm3923 = vcmp.eq.s32.totalorder %v3889, %v3899
      %vm3924 = vcmp.eq.s32.totalorder %v3890, %v3899
      %vm3925 = vcmp.eq.s32.totalorder %v3891, %v3899
      %vm3926 = vcmp.eq.s32.totalorder %v3892, %v3899
      %vm3927 = vcmp.eq.s32.totalorder %v3893, %v3899
      %vm3928 = vcmp.eq.s32.totalorder %v3894, %v3899
      %vm3929 = vcmp.eq.s32.totalorder %v3895, %v3899
      %vm3930 = vcmp.eq.s32.totalorder %v3896, %v3899
      %vm3931 = vcmp.eq.s32.totalorder %v3897, %v3899
      %v3932 = vsel %vm3900, 1, 0
      %v3933 = vsel %vm3901, 1, 0
      %v3934 = vsel %vm3902, 1, 0
      %v3935 = vsel %vm3903, 1, 0
      %v3936 = vsel %vm3904, 1, 0
      %v3937 = vsel %vm3905, 1, 0
      %v3938 = vsel %vm3906, 1, 0
      %v3939 = vsel %vm3907, 1, 0
      %v3940 = vsel %vm3908, 1, 0
      %v3941 = vsel %vm3909, 1, 0
      %v3942 = vsel %vm3910, 1, 0
      %v3943 = vsel %vm3911, 1, 0
      %v3944 = vsel %vm3912, 1, 0
      %v3945 = vsel %vm3913, 1, 0
      %v3946 = vsel %vm3914, 1, 0
      %v3947 = vsel %vm3915, 1, 0
      %v3948 = vsel %vm3916, 1, 0
      %v3949 = vsel %vm3917, 1, 0
      %v3950 = vsel %vm3918, 1, 0
      %v3951 = vsel %vm3919, 1, 0
      %v3952 = vsel %vm3920, 1, 0
      %v3953 = vsel %vm3921, 1, 0
      %v3954 = vsel %vm3922, 1, 0
      %v3955 = vsel %vm3923, 1, 0
      %v3956 = vsel %vm3924, 1, 0
      %v3957 = vsel %vm3925, 1, 0
      %v3958 = vsel %vm3926, 1, 0
      %v3959 = vsel %vm3927, 1, 0
      %v3960 = vsel %vm3928, 1, 0
      %v3961 = vsel %vm3929, 1, 0
      %v3962 = vsel %vm3930, 1, 0
      %v3963 = vsel %vm3931, 1, 0
      %3964 = vset.pattern.permute.xlu0 0
      %3965 = vperm.xlu0 %3964, %v3932
      %v3966 = vpop.permute.xlu0 %3965
      %3967 = vset.pattern.permute.xlu0 0
      %3968 = vperm.xlu0 %3967, %v3933
      %v3969 = vpop.permute.xlu0 %3968
      %3970 = vset.pattern.permute.xlu0 0
      %3971 = vperm.xlu0 %3970, %v3934
      %v3972 = vpop.permute.xlu0 %3971
      %3973 = vset.pattern.permute.xlu0 0
      %3974 = vperm.xlu0 %3973, %v3935
      %v3975 = vpop.permute.xlu0 %3974
      %3976 = vset.pattern.permute.xlu0 0
      %3977 = vperm.xlu0 %3976, %v3936
      %v3978 = vpop.permute.xlu0 %3977
      %3979 = vset.pattern.permute.xlu0 0
      %3980 = vperm.xlu0 %3979, %v3937
      %v3981 = vpop.permute.xlu0 %3980
      %3982 = vset.pattern.permute.xlu0 0
      %3983 = vperm.xlu0 %3982, %v3938
      %v3984 = vpop.permute.xlu0 %3983
      %3985 = vset.pattern.permute.xlu0 0
      %3986 = vperm.xlu0 %3985, %v3939
      %v3987 = vpop.permute.xlu0 %3986
      %3988 = vset.pattern.permute.xlu0 0
      %3989 = vperm.xlu0 %3988, %v3940
      %v3990 = vpop.permute.xlu0 %3989
      %3991 = vset.pattern.permute.xlu0 0
      %3992 = vperm.xlu0 %3991, %v3941
      %v3993 = vpop.permute.xlu0 %3992
      %3994 = vset.pattern.permute.xlu0 0
      %3995 = vperm.xlu0 %3994, %v3942
      %v3996 = vpop.permute.xlu0 %3995
      %3997 = vset.pattern.permute.xlu0 0
      %3998 = vperm.xlu0 %3997, %v3943
      %v3999 = vpop.permute.xlu0 %3998
      %4000 = vset.pattern.permute.xlu0 0
      %4001 = vperm.xlu0 %4000, %v3944
      %v4002 = vpop.permute.xlu0 %4001
      %4003 = vset.pattern.permute.xlu0 0
      %4004 = vperm.xlu0 %4003, %v3945
      %v4005 = vpop.permute.xlu0 %4004
      %4006 = vset.pattern.permute.xlu0 0
      %4007 = vperm.xlu0 %4006, %v3946
      %v4008 = vpop.permute.xlu0 %4007
      %4009 = vset.pattern.permute.xlu0 0
      %4010 = vperm.xlu0 %4009, %v3947
      %v4011 = vpop.permute.xlu0 %4010
      %4012 = vset.pattern.permute.xlu0 0
      %4013 = vperm.xlu0 %4012, %v3948
      %v4014 = vpop.permute.xlu0 %4013
      %4015 = vset.pattern.permute.xlu0 0
      %4016 = vperm.xlu0 %4015, %v3949
      %v4017 = vpop.permute.xlu0 %4016
      %4018 = vset.pattern.permute.xlu0 0
      %4019 = vperm.xlu0 %4018, %v3950
      %v4020 = vpop.permute.xlu0 %4019
      %4021 = vset.pattern.permute.xlu0 0
      %4022 = vperm.xlu0 %4021, %v3951
      %v4023 = vpop.permute.xlu0 %4022
      %4024 = vset.pattern.permute.xlu0 0
      %4025 = vperm.xlu0 %4024, %v3952
      %v4026 = vpop.permute.xlu0 %4025
      %4027 = vset.pattern.permute.xlu0 0
      %4028 = vperm.xlu0 %4027, %v3953
      %v4029 = vpop.permute.xlu0 %4028
      %4030 = vset.pattern.permute.xlu0 0
      %4031 = vperm.xlu0 %4030, %v3954
      %v4032 = vpop.permute.xlu0 %4031
      %4033 = vset.pattern.permute.xlu0 0
      %4034 = vperm.xlu0 %4033, %v3955
      %v4035 = vpop.permute.xlu0 %4034
      %4036 = vset.pattern.permute.xlu0 0
      %4037 = vperm.xlu0 %4036, %v3956
      %v4038 = vpop.permute.xlu0 %4037
      %4039 = vset.pattern.permute.xlu0 0
      %4040 = vperm.xlu0 %4039, %v3957
      %v4041 = vpop.permute.xlu0 %4040
      %4042 = vset.pattern.permute.xlu0 0
      %4043 = vperm.xlu0 %4042, %v3958
      %v4044 = vpop.permute.xlu0 %4043
      %4045 = vset.pattern.permute.xlu0 0
      %4046 = vperm.xlu0 %4045, %v3959
      %v4047 = vpop.permute.xlu0 %4046
      %4048 = vset.pattern.permute.xlu0 0
      %4049 = vperm.xlu0 %4048, %v3960
      %v4050 = vpop.permute.xlu0 %4049
      %4051 = vset.pattern.permute.xlu0 0
      %4052 = vperm.xlu0 %4051, %v3961
      %v4053 = vpop.permute.xlu0 %4052
      %4054 = vset.pattern.permute.xlu0 0
      %4055 = vperm.xlu0 %4054, %v3962
      %v4056 = vpop.permute.xlu0 %4055
      %4057 = vset.pattern.permute.xlu0 0
      %4058 = vperm.xlu0 %4057, %v3963
      %v4059 = vpop.permute.xlu0 %4058
      %vm4060 = vcmp.eq.s32.totalorder %v3966, 1
      %vm4061 = vcmp.eq.s32.totalorder %v3969, 1
      %vm4062 = vcmp.eq.s32.totalorder %v3972, 1
      %vm4063 = vcmp.eq.s32.totalorder %v3975, 1
      %vm4064 = vcmp.eq.s32.totalorder %v3978, 1
      %vm4065 = vcmp.eq.s32.totalorder %v3981, 1
      %vm4066 = vcmp.eq.s32.totalorder %v3984, 1
      %vm4067 = vcmp.eq.s32.totalorder %v3987, 1
      %vm4068 = vcmp.eq.s32.totalorder %v3990, 1
      %vm4069 = vcmp.eq.s32.totalorder %v3993, 1
      %vm4070 = vcmp.eq.s32.totalorder %v3996, 1
      %vm4071 = vcmp.eq.s32.totalorder %v3999, 1
      %vm4072 = vcmp.eq.s32.totalorder %v4002, 1
      %vm4073 = vcmp.eq.s32.totalorder %v4005, 1
      %vm4074 = vcmp.eq.s32.totalorder %v4008, 1
      %vm4075 = vcmp.eq.s32.totalorder %v4011, 1
      %vm4076 = vcmp.eq.s32.totalorder %v4014, 1
      %vm4077 = vcmp.eq.s32.totalorder %v4017, 1
      %vm4078 = vcmp.eq.s32.totalorder %v4020, 1
      %vm4079 = vcmp.eq.s32.totalorder %v4023, 1
      %vm4080 = vcmp.eq.s32.totalorder %v4026, 1
      %vm4081 = vcmp.eq.s32.totalorder %v4029, 1
      %vm4082 = vcmp.eq.s32.totalorder %v4032, 1
      %vm4083 = vcmp.eq.s32.totalorder %v4035, 1
      %vm4084 = vcmp.eq.s32.totalorder %v4038, 1
      %vm4085 = vcmp.eq.s32.totalorder %v4041, 1
      %vm4086 = vcmp.eq.s32.totalorder %v4044, 1
      %vm4087 = vcmp.eq.s32.totalorder %v4047, 1
      %vm4088 = vcmp.eq.s32.totalorder %v4050, 1
      %vm4089 = vcmp.eq.s32.totalorder %v4053, 1
      %vm4090 = vcmp.eq.s32.totalorder %v4056, 1
      %vm4091 = vcmp.eq.s32.totalorder %v4059, 1
      %v4092 = vsel %vm4060, %v735, 1e+30
      %v4093 = vsel %vm4060, %v736, 1e+30
      %v4094 = vsel %vm4061, %v737, 1e+30
      %v4095 = vsel %vm4061, %v738, 1e+30
      %v4096 = vsel %vm4062, %v739, 1e+30
      %v4097 = vsel %vm4062, %v740, 1e+30
      %v4098 = vsel %vm4063, %v741, 1e+30
      %v4099 = vsel %vm4063, %v742, 1e+30
      %v4100 = vsel %vm4064, %v743, 1e+30
      %v4101 = vsel %vm4064, %v744, 1e+30
      %v4102 = vsel %vm4065, %v745, 1e+30
      %v4103 = vsel %vm4065, %v746, 1e+30
      %v4104 = vsel %vm4066, %v747, 1e+30
      %v4105 = vsel %vm4066, %v748, 1e+30
      %v4106 = vsel %vm4067, %v749, 1e+30
      %v4107 = vsel %vm4067, %v750, 1e+30
      %v4108 = vsel %vm4068, %v751, 1e+30
      %v4109 = vsel %vm4068, %v752, 1e+30
      %v4110 = vsel %vm4069, %v753, 1e+30
      %v4111 = vsel %vm4069, %v754, 1e+30
      %v4112 = vsel %vm4070, %v755, 1e+30
      %v4113 = vsel %vm4070, %v756, 1e+30
      %v4114 = vsel %vm4071, %v757, 1e+30
      %v4115 = vsel %vm4071, %v758, 1e+30
      %v4116 = vsel %vm4072, %v759, 1e+30
      %v4117 = vsel %vm4072, %v760, 1e+30
      %v4118 = vsel %vm4073, %v761, 1e+30
      %v4119 = vsel %vm4073, %v762, 1e+30
      %v4120 = vsel %vm4074, %v763, 1e+30
      %v4121 = vsel %vm4074, %v764, 1e+30
      %v4122 = vsel %vm4075, %v765, 1e+30
      %v4123 = vsel %vm4075, %v766, 1e+30
      %v4124 = vsel %vm4076, %v767, 1e+30
      %v4125 = vsel %vm4076, %v768, 1e+30
      %v4126 = vsel %vm4077, %v769, 1e+30
      %v4127 = vsel %vm4077, %v770, 1e+30
      %v4128 = vsel %vm4078, %v771, 1e+30
      %v4129 = vsel %vm4078, %v772, 1e+30
      %v4130 = vsel %vm4079, %v773, 1e+30
      %v4131 = vsel %vm4079, %v774, 1e+30
      %v4132 = vsel %vm4080, %v775, 1e+30
      %v4133 = vsel %vm4080, %v776, 1e+30
      %v4134 = vsel %vm4081, %v777, 1e+30
      %v4135 = vsel %vm4081, %v778, 1e+30
      %v4136 = vsel %vm4082, %v779, 1e+30
      %v4137 = vsel %vm4082, %v780, 1e+30
      %v4138 = vsel %vm4083, %v781, 1e+30
      %v4139 = vsel %vm4083, %v782, 1e+30
      %v4140 = vsel %vm4084, %v783, 1e+30
      %v4141 = vsel %vm4084, %v784, 1e+30
      %v4142 = vsel %vm4085, %v785, 1e+30
      %v4143 = vsel %vm4085, %v786, 1e+30
      %v4144 = vsel %vm4086, %v787, 1e+30
      %v4145 = vsel %vm4086, %v788, 1e+30
      %v4146 = vsel %vm4087, %v789, 1e+30
      %v4147 = vsel %vm4087, %v790, 1e+30
      %v4148 = vsel %vm4088, %v791, 1e+30
      %v4149 = vsel %vm4088, %v792, 1e+30
      %v4150 = vsel %vm4089, %v793, 1e+30
      %v4151 = vsel %vm4089, %v794, 1e+30
      %v4152 = vsel %vm4090, %v795, 1e+30
      %v4153 = vsel %vm4090, %v796, 1e+30
      %v4154 = vsel %vm4091, %v797, 1e+30
      %v4155 = vsel %vm4091, %v798, 1e+30
      %v4156 = vmin.f32 %v4092, %v4096
      %v4157 = vmin.f32 %v4094, %v4098
      %v4158 = vmin.f32 %v4156, %v4100
      %v4159 = vmin.f32 %v4157, %v4102
      %v4160 = vmin.f32 %v4158, %v4104
      %v4161 = vmin.f32 %v4159, %v4106
      %v4162 = vmin.f32 %v4160, %v4108
      %v4163 = vmin.f32 %v4161, %v4110
      %v4164 = vmin.f32 %v4162, %v4112
      %v4165 = vmin.f32 %v4163, %v4114
      %v4166 = vmin.f32 %v4164, %v4116
      %v4167 = vmin.f32 %v4165, %v4118
      %v4168 = vmin.f32 %v4166, %v4120
      %v4169 = vmin.f32 %v4167, %v4122
      %v4170 = vmin.f32 %v4168, %v4124
      %v4171 = vmin.f32 %v4169, %v4126
      %v4172 = vmin.f32 %v4170, %v4128
      %v4173 = vmin.f32 %v4171, %v4130
      %v4174 = vmin.f32 %v4172, %v4132
      %v4175 = vmin.f32 %v4173, %v4134
      %v4176 = vmin.f32 %v4174, %v4136
      %v4177 = vmin.f32 %v4175, %v4138
      %v4178 = vmin.f32 %v4176, %v4140
      %v4179 = vmin.f32 %v4177, %v4142
      %v4180 = vmin.f32 %v4178, %v4144
      %v4181 = vmin.f32 %v4179, %v4146
      %v4182 = vmin.f32 %v4180, %v4148
      %v4183 = vmin.f32 %v4181, %v4150
      %v4184 = vmin.f32 %v4182, %v4152
      %v4185 = vmin.f32 %v4183, %v4154
      %v4186 = vmin.f32 %v4184, %v4185
      %v4187 = vrot.slane %v4186, 4
      %v4188 = vmin.f32 %v4186, %v4187
      %v4189 = vrot.slane %v4188, 2
      %v4190 = vmin.f32 %v4188, %v4189
      %v4191 = vrot.slane %v4190, 1
      %v4192 = vmin.f32 %v4190, %v4191
      %v4193 = vmin.f32 %v4093, %v4097
      %v4194 = vmin.f32 %v4095, %v4099
      %v4195 = vmin.f32 %v4193, %v4101
      %v4196 = vmin.f32 %v4194, %v4103
      %v4197 = vmin.f32 %v4195, %v4105
      %v4198 = vmin.f32 %v4196, %v4107
      %v4199 = vmin.f32 %v4197, %v4109
      %v4200 = vmin.f32 %v4198, %v4111
      %v4201 = vmin.f32 %v4199, %v4113
      %v4202 = vmin.f32 %v4200, %v4115
      %v4203 = vmin.f32 %v4201, %v4117
      %v4204 = vmin.f32 %v4202, %v4119
      %v4205 = vmin.f32 %v4203, %v4121
      %v4206 = vmin.f32 %v4204, %v4123
      %v4207 = vmin.f32 %v4205, %v4125
      %v4208 = vmin.f32 %v4206, %v4127
      %v4209 = vmin.f32 %v4207, %v4129
      %v4210 = vmin.f32 %v4208, %v4131
      %v4211 = vmin.f32 %v4209, %v4133
      %v4212 = vmin.f32 %v4210, %v4135
      %v4213 = vmin.f32 %v4211, %v4137
      %v4214 = vmin.f32 %v4212, %v4139
      %v4215 = vmin.f32 %v4213, %v4141
      %v4216 = vmin.f32 %v4214, %v4143
      %v4217 = vmin.f32 %v4215, %v4145
      %v4218 = vmin.f32 %v4216, %v4147
      %v4219 = vmin.f32 %v4217, %v4149
      %v4220 = vmin.f32 %v4218, %v4151
      %v4221 = vmin.f32 %v4219, %v4153
      %v4222 = vmin.f32 %v4220, %v4155
      %v4223 = vmin.f32 %v4221, %v4222
      %v4224 = vrot.slane %v4223, 4
      %v4225 = vmin.f32 %v4223, %v4224
      %v4226 = vrot.slane %v4225, 2
      %v4227 = vmin.f32 %v4225, %v4226
      %v4228 = vrot.slane %v4227, 1
      %v4229 = vmin.f32 %v4227, %v4228
      %v4230 = vld [vmem:[#allocation3] ss:$8 sm:$0x3]
      %v4233 = vrot.slane %v4229, 7
      %vm4234 = vcmask 1040384
      %v4235 = vsel %vm4234, %v4192, %v4233
      %v4237 = vmin.f32 %v4230, %v4235
      %v4238 = vlaneseq
      %vm4239 = vcmp.ge.s32.totalorder %v4238, 0
      %vm4240 = vcmp.lt.s32.totalorder %v4238, 256
      %vm4241 = vmand %vm4239, %vm4240
      %4242 = vst.msk [vmem:[#allocation3] ss:$8 sm:$0x3] %vm4241, %v4237
      %4243 = vst.msk [vmem:[#allocation3] ss:$8 sm:$0x0] %vm4241, %v4237
    $region89: #{_pairwise_hausdorff_sq.1} parent=1 // pred_fallthru
      _
    %p4244 = scmp.gt.s32.totalorder %s64, 1
    // Predicated region
    $region90: #{_pairwise_hausdorff_sq.1} parent=1 // pred_check
      %p4245 = pneg %p4244
    $region91: #{_pairwise_hausdorff_sq.1} parent=1 // pred_check_branch
      %4247 = sbr.rel (%p4245) target = $region93
    $region92: #{_pairwise_hausdorff_sq.1} parent=1 // pred_region
      %v4248 = vld [vmem:[%s4] sm:$0xff]
      %v4249 = vld [vmem:[%s4 + $0x8] sm:$0xff]
      %v4250 = vld [vmem:[%s4 + $0x10] sm:$0xff]
      %v4251 = vld [vmem:[%s4 + $0x18] sm:$0xff]
      %v4252 = vld [vmem:[%s4 + $0x20] sm:$0xff]
      %v4253 = vld [vmem:[%s4 + $0x28] sm:$0xff]
      %v4254 = vld [vmem:[%s4 + $0x30] sm:$0xff]
      %v4255 = vld [vmem:[%s4 + $0x38] sm:$0xff]
      %v4256 = vld [vmem:[%s4 + $0x40] sm:$0xff]
      %v4257 = vld [vmem:[%s4 + $0x48] sm:$0xff]
      %v4258 = vld [vmem:[%s4 + $0x50] sm:$0xff]
      %v4259 = vld [vmem:[%s4 + $0x58] sm:$0xff]
      %v4260 = vld [vmem:[%s4 + $0x60] sm:$0xff]
      %v4261 = vld [vmem:[%s4 + $0x68] sm:$0xff]
      %v4262 = vld [vmem:[%s4 + $0x70] sm:$0xff]
      %v4263 = vld [vmem:[%s4 + $0x78] sm:$0xff]
      %v4264 = vld [vmem:[%s4 + $0x80] sm:$0xff]
      %v4265 = vld [vmem:[%s4 + $0x88] sm:$0xff]
      %v4266 = vld [vmem:[%s4 + $0x90] sm:$0xff]
      %v4267 = vld [vmem:[%s4 + $0x98] sm:$0xff]
      %v4268 = vld [vmem:[%s4 + $0xa0] sm:$0xff]
      %v4269 = vld [vmem:[%s4 + $0xa8] sm:$0xff]
      %v4270 = vld [vmem:[%s4 + $0xb0] sm:$0xff]
      %v4271 = vld [vmem:[%s4 + $0xb8] sm:$0xff]
      %v4272 = vld [vmem:[%s4 + $0xc0] sm:$0xff]
      %v4273 = vld [vmem:[%s4 + $0xc8] sm:$0xff]
      %v4274 = vld [vmem:[%s4 + $0xd0] sm:$0xff]
      %v4275 = vld [vmem:[%s4 + $0xd8] sm:$0xff]
      %v4276 = vld [vmem:[%s4 + $0xe0] sm:$0xff]
      %v4277 = vld [vmem:[%s4 + $0xe8] sm:$0xff]
      %v4278 = vld [vmem:[%s4 + $0xf0] sm:$0xff]
      %v4279 = vld [vmem:[%s4 + $0xf8] sm:$0xff]
      %s4280 = sld [smem:[#allocation6 + $0x1]]
      %v4281 = vstv %s4280
      %vm4282 = vcmp.eq.s32.totalorder %v4248, %v4281
      %vm4283 = vcmp.eq.s32.totalorder %v4249, %v4281
      %vm4284 = vcmp.eq.s32.totalorder %v4250, %v4281
      %vm4285 = vcmp.eq.s32.totalorder %v4251, %v4281
      %vm4286 = vcmp.eq.s32.totalorder %v4252, %v4281
      %vm4287 = vcmp.eq.s32.totalorder %v4253, %v4281
      %vm4288 = vcmp.eq.s32.totalorder %v4254, %v4281
      %vm4289 = vcmp.eq.s32.totalorder %v4255, %v4281
      %vm4290 = vcmp.eq.s32.totalorder %v4256, %v4281
      %vm4291 = vcmp.eq.s32.totalorder %v4257, %v4281
      %vm4292 = vcmp.eq.s32.totalorder %v4258, %v4281
      %vm4293 = vcmp.eq.s32.totalorder %v4259, %v4281
      %vm4294 = vcmp.eq.s32.totalorder %v4260, %v4281
      %vm4295 = vcmp.eq.s32.totalorder %v4261, %v4281
      %vm4296 = vcmp.eq.s32.totalorder %v4262, %v4281
      %vm4297 = vcmp.eq.s32.totalorder %v4263, %v4281
      %vm4298 = vcmp.eq.s32.totalorder %v4264, %v4281
      %vm4299 = vcmp.eq.s32.totalorder %v4265, %v4281
      %vm4300 = vcmp.eq.s32.totalorder %v4266, %v4281
      %vm4301 = vcmp.eq.s32.totalorder %v4267, %v4281
      %vm4302 = vcmp.eq.s32.totalorder %v4268, %v4281
      %vm4303 = vcmp.eq.s32.totalorder %v4269, %v4281
      %vm4304 = vcmp.eq.s32.totalorder %v4270, %v4281
      %vm4305 = vcmp.eq.s32.totalorder %v4271, %v4281
      %vm4306 = vcmp.eq.s32.totalorder %v4272, %v4281
      %vm4307 = vcmp.eq.s32.totalorder %v4273, %v4281
      %vm4308 = vcmp.eq.s32.totalorder %v4274, %v4281
      %vm4309 = vcmp.eq.s32.totalorder %v4275, %v4281
      %vm4310 = vcmp.eq.s32.totalorder %v4276, %v4281
      %vm4311 = vcmp.eq.s32.totalorder %v4277, %v4281
      %vm4312 = vcmp.eq.s32.totalorder %v4278, %v4281
      %vm4313 = vcmp.eq.s32.totalorder %v4279, %v4281
      %v4314 = vsel %vm4282, 1, 0
      %v4315 = vsel %vm4283, 1, 0
      %v4316 = vsel %vm4284, 1, 0
      %v4317 = vsel %vm4285, 1, 0
      %v4318 = vsel %vm4286, 1, 0
      %v4319 = vsel %vm4287, 1, 0
      %v4320 = vsel %vm4288, 1, 0
      %v4321 = vsel %vm4289, 1, 0
      %v4322 = vsel %vm4290, 1, 0
      %v4323 = vsel %vm4291, 1, 0
      %v4324 = vsel %vm4292, 1, 0
      %v4325 = vsel %vm4293, 1, 0
      %v4326 = vsel %vm4294, 1, 0
      %v4327 = vsel %vm4295, 1, 0
      %v4328 = vsel %vm4296, 1, 0
      %v4329 = vsel %vm4297, 1, 0
      %v4330 = vsel %vm4298, 1, 0
      %v4331 = vsel %vm4299, 1, 0
      %v4332 = vsel %vm4300, 1, 0
      %v4333 = vsel %vm4301, 1, 0
      %v4334 = vsel %vm4302, 1, 0
      %v4335 = vsel %vm4303, 1, 0
      %v4336 = vsel %vm4304, 1, 0
      %v4337 = vsel %vm4305, 1, 0
      %v4338 = vsel %vm4306, 1, 0
      %v4339 = vsel %vm4307, 1, 0
      %v4340 = vsel %vm4308, 1, 0
      %v4341 = vsel %vm4309, 1, 0
      %v4342 = vsel %vm4310, 1, 0
      %v4343 = vsel %vm4311, 1, 0
      %v4344 = vsel %vm4312, 1, 0
      %v4345 = vsel %vm4313, 1, 0
      %4346 = vset.pattern.permute.xlu0 0
      %4347 = vperm.xlu0 %4346, %v4314
      %v4348 = vpop.permute.xlu0 %4347
      %4349 = vset.pattern.permute.xlu0 0
      %4350 = vperm.xlu0 %4349, %v4315
      %v4351 = vpop.permute.xlu0 %4350
      %4352 = vset.pattern.permute.xlu0 0
      %4353 = vperm.xlu0 %4352, %v4316
      %v4354 = vpop.permute.xlu0 %4353
      %4355 = vset.pattern.permute.xlu0 0
      %4356 = vperm.xlu0 %4355, %v4317
      %v4357 = vpop.permute.xlu0 %4356
      %4358 = vset.pattern.permute.xlu0 0
      %4359 = vperm.xlu0 %4358, %v4318
      %v4360 = vpop.permute.xlu0 %4359
      %4361 = vset.pattern.permute.xlu0 0
      %4362 = vperm.xlu0 %4361, %v4319
      %v4363 = vpop.permute.xlu0 %4362
      %4364 = vset.pattern.permute.xlu0 0
      %4365 = vperm.xlu0 %4364, %v4320
      %v4366 = vpop.permute.xlu0 %4365
      %4367 = vset.pattern.permute.xlu0 0
      %4368 = vperm.xlu0 %4367, %v4321
      %v4369 = vpop.permute.xlu0 %4368
      %4370 = vset.pattern.permute.xlu0 0
      %4371 = vperm.xlu0 %4370, %v4322
      %v4372 = vpop.permute.xlu0 %4371
      %4373 = vset.pattern.permute.xlu0 0
      %4374 = vperm.xlu0 %4373, %v4323
      %v4375 = vpop.permute.xlu0 %4374
      %4376 = vset.pattern.permute.xlu0 0
      %4377 = vperm.xlu0 %4376, %v4324
      %v4378 = vpop.permute.xlu0 %4377
      %4379 = vset.pattern.permute.xlu0 0
      %4380 = vperm.xlu0 %4379, %v4325
      %v4381 = vpop.permute.xlu0 %4380
      %4382 = vset.pattern.permute.xlu0 0
      %4383 = vperm.xlu0 %4382, %v4326
      %v4384 = vpop.permute.xlu0 %4383
      %4385 = vset.pattern.permute.xlu0 0
      %4386 = vperm.xlu0 %4385, %v4327
      %v4387 = vpop.permute.xlu0 %4386
      %4388 = vset.pattern.permute.xlu0 0
      %4389 = vperm.xlu0 %4388, %v4328
      %v4390 = vpop.permute.xlu0 %4389
      %4391 = vset.pattern.permute.xlu0 0
      %4392 = vperm.xlu0 %4391, %v4329
      %v4393 = vpop.permute.xlu0 %4392
      %4394 = vset.pattern.permute.xlu0 0
      %4395 = vperm.xlu0 %4394, %v4330
      %v4396 = vpop.permute.xlu0 %4395
      %4397 = vset.pattern.permute.xlu0 0
      %4398 = vperm.xlu0 %4397, %v4331
      %v4399 = vpop.permute.xlu0 %4398
      %4400 = vset.pattern.permute.xlu0 0
      %4401 = vperm.xlu0 %4400, %v4332
      %v4402 = vpop.permute.xlu0 %4401
      %4403 = vset.pattern.permute.xlu0 0
      %4404 = vperm.xlu0 %4403, %v4333
      %v4405 = vpop.permute.xlu0 %4404
      %4406 = vset.pattern.permute.xlu0 0
      %4407 = vperm.xlu0 %4406, %v4334
      %v4408 = vpop.permute.xlu0 %4407
      %4409 = vset.pattern.permute.xlu0 0
      %4410 = vperm.xlu0 %4409, %v4335
      %v4411 = vpop.permute.xlu0 %4410
      %4412 = vset.pattern.permute.xlu0 0
      %4413 = vperm.xlu0 %4412, %v4336
      %v4414 = vpop.permute.xlu0 %4413
      %4415 = vset.pattern.permute.xlu0 0
      %4416 = vperm.xlu0 %4415, %v4337
      %v4417 = vpop.permute.xlu0 %4416
      %4418 = vset.pattern.permute.xlu0 0
      %4419 = vperm.xlu0 %4418, %v4338
      %v4420 = vpop.permute.xlu0 %4419
      %4421 = vset.pattern.permute.xlu0 0
      %4422 = vperm.xlu0 %4421, %v4339
      %v4423 = vpop.permute.xlu0 %4422
      %4424 = vset.pattern.permute.xlu0 0
      %4425 = vperm.xlu0 %4424, %v4340
      %v4426 = vpop.permute.xlu0 %4425
      %4427 = vset.pattern.permute.xlu0 0
      %4428 = vperm.xlu0 %4427, %v4341
      %v4429 = vpop.permute.xlu0 %4428
      %4430 = vset.pattern.permute.xlu0 0
      %4431 = vperm.xlu0 %4430, %v4342
      %v4432 = vpop.permute.xlu0 %4431
      %4433 = vset.pattern.permute.xlu0 0
      %4434 = vperm.xlu0 %4433, %v4343
      %v4435 = vpop.permute.xlu0 %4434
      %4436 = vset.pattern.permute.xlu0 0
      %4437 = vperm.xlu0 %4436, %v4344
      %v4438 = vpop.permute.xlu0 %4437
      %4439 = vset.pattern.permute.xlu0 0
      %4440 = vperm.xlu0 %4439, %v4345
      %v4441 = vpop.permute.xlu0 %4440
      %vm4442 = vcmp.eq.s32.totalorder %v4348, 1
      %vm4443 = vcmp.eq.s32.totalorder %v4351, 1
      %vm4444 = vcmp.eq.s32.totalorder %v4354, 1
      %vm4445 = vcmp.eq.s32.totalorder %v4357, 1
      %vm4446 = vcmp.eq.s32.totalorder %v4360, 1
      %vm4447 = vcmp.eq.s32.totalorder %v4363, 1
      %vm4448 = vcmp.eq.s32.totalorder %v4366, 1
      %vm4449 = vcmp.eq.s32.totalorder %v4369, 1
      %vm4450 = vcmp.eq.s32.totalorder %v4372, 1
      %vm4451 = vcmp.eq.s32.totalorder %v4375, 1
      %vm4452 = vcmp.eq.s32.totalorder %v4378, 1
      %vm4453 = vcmp.eq.s32.totalorder %v4381, 1
      %vm4454 = vcmp.eq.s32.totalorder %v4384, 1
      %vm4455 = vcmp.eq.s32.totalorder %v4387, 1
      %vm4456 = vcmp.eq.s32.totalorder %v4390, 1
      %vm4457 = vcmp.eq.s32.totalorder %v4393, 1
      %vm4458 = vcmp.eq.s32.totalorder %v4396, 1
      %vm4459 = vcmp.eq.s32.totalorder %v4399, 1
      %vm4460 = vcmp.eq.s32.totalorder %v4402, 1
      %vm4461 = vcmp.eq.s32.totalorder %v4405, 1
      %vm4462 = vcmp.eq.s32.totalorder %v4408, 1
      %vm4463 = vcmp.eq.s32.totalorder %v4411, 1
      %vm4464 = vcmp.eq.s32.totalorder %v4414, 1
      %vm4465 = vcmp.eq.s32.totalorder %v4417, 1
      %vm4466 = vcmp.eq.s32.totalorder %v4420, 1
      %vm4467 = vcmp.eq.s32.totalorder %v4423, 1
      %vm4468 = vcmp.eq.s32.totalorder %v4426, 1
      %vm4469 = vcmp.eq.s32.totalorder %v4429, 1
      %vm4470 = vcmp.eq.s32.totalorder %v4432, 1
      %vm4471 = vcmp.eq.s32.totalorder %v4435, 1
      %vm4472 = vcmp.eq.s32.totalorder %v4438, 1
      %vm4473 = vcmp.eq.s32.totalorder %v4441, 1
      %v4474 = vsel %vm4442, %v735, 1e+30
      %v4475 = vsel %vm4442, %v736, 1e+30
      %v4476 = vsel %vm4443, %v737, 1e+30
      %v4477 = vsel %vm4443, %v738, 1e+30
      %v4478 = vsel %vm4444, %v739, 1e+30
      %v4479 = vsel %vm4444, %v740, 1e+30
      %v4480 = vsel %vm4445, %v741, 1e+30
      %v4481 = vsel %vm4445, %v742, 1e+30
      %v4482 = vsel %vm4446, %v743, 1e+30
      %v4483 = vsel %vm4446, %v744, 1e+30
      %v4484 = vsel %vm4447, %v745, 1e+30
      %v4485 = vsel %vm4447, %v746, 1e+30
      %v4486 = vsel %vm4448, %v747, 1e+30
      %v4487 = vsel %vm4448, %v748, 1e+30
      %v4488 = vsel %vm4449, %v749, 1e+30
      %v4489 = vsel %vm4449, %v750, 1e+30
      %v4490 = vsel %vm4450, %v751, 1e+30
      %v4491 = vsel %vm4450, %v752, 1e+30
      %v4492 = vsel %vm4451, %v753, 1e+30
      %v4493 = vsel %vm4451, %v754, 1e+30
      %v4494 = vsel %vm4452, %v755, 1e+30
      %v4495 = vsel %vm4452, %v756, 1e+30
      %v4496 = vsel %vm4453, %v757, 1e+30
      %v4497 = vsel %vm4453, %v758, 1e+30
      %v4498 = vsel %vm4454, %v759, 1e+30
      %v4499 = vsel %vm4454, %v760, 1e+30
      %v4500 = vsel %vm4455, %v761, 1e+30
      %v4501 = vsel %vm4455, %v762, 1e+30
      %v4502 = vsel %vm4456, %v763, 1e+30
      %v4503 = vsel %vm4456, %v764, 1e+30
      %v4504 = vsel %vm4457, %v765, 1e+30
      %v4505 = vsel %vm4457, %v766, 1e+30
      %v4506 = vsel %vm4458, %v767, 1e+30
      %v4507 = vsel %vm4458, %v768, 1e+30
      %v4508 = vsel %vm4459, %v769, 1e+30
      %v4509 = vsel %vm4459, %v770, 1e+30
      %v4510 = vsel %vm4460, %v771, 1e+30
      %v4511 = vsel %vm4460, %v772, 1e+30
      %v4512 = vsel %vm4461, %v773, 1e+30
      %v4513 = vsel %vm4461, %v774, 1e+30
      %v4514 = vsel %vm4462, %v775, 1e+30
      %v4515 = vsel %vm4462, %v776, 1e+30
      %v4516 = vsel %vm4463, %v777, 1e+30
      %v4517 = vsel %vm4463, %v778, 1e+30
      %v4518 = vsel %vm4464, %v779, 1e+30
      %v4519 = vsel %vm4464, %v780, 1e+30
      %v4520 = vsel %vm4465, %v781, 1e+30
      %v4521 = vsel %vm4465, %v782, 1e+30
      %v4522 = vsel %vm4466, %v783, 1e+30
      %v4523 = vsel %vm4466, %v784, 1e+30
      %v4524 = vsel %vm4467, %v785, 1e+30
      %v4525 = vsel %vm4467, %v786, 1e+30
      %v4526 = vsel %vm4468, %v787, 1e+30
      %v4527 = vsel %vm4468, %v788, 1e+30
      %v4528 = vsel %vm4469, %v789, 1e+30
      %v4529 = vsel %vm4469, %v790, 1e+30
      %v4530 = vsel %vm4470, %v791, 1e+30
      %v4531 = vsel %vm4470, %v792, 1e+30
      %v4532 = vsel %vm4471, %v793, 1e+30
      %v4533 = vsel %vm4471, %v794, 1e+30
      %v4534 = vsel %vm4472, %v795, 1e+30
      %v4535 = vsel %vm4472, %v796, 1e+30
      %v4536 = vsel %vm4473, %v797, 1e+30
      %v4537 = vsel %vm4473, %v798, 1e+30
      %v4538 = vmin.f32 %v4474, %v4478
      %v4539 = vmin.f32 %v4476, %v4480
      %v4540 = vmin.f32 %v4538, %v4482
      %v4541 = vmin.f32 %v4539, %v4484
      %v4542 = vmin.f32 %v4540, %v4486
      %v4543 = vmin.f32 %v4541, %v4488
      %v4544 = vmin.f32 %v4542, %v4490
      %v4545 = vmin.f32 %v4543, %v4492
      %v4546 = vmin.f32 %v4544, %v4494
      %v4547 = vmin.f32 %v4545, %v4496
      %v4548 = vmin.f32 %v4546, %v4498
      %v4549 = vmin.f32 %v4547, %v4500
      %v4550 = vmin.f32 %v4548, %v4502
      %v4551 = vmin.f32 %v4549, %v4504
      %v4552 = vmin.f32 %v4550, %v4506
      %v4553 = vmin.f32 %v4551, %v4508
      %v4554 = vmin.f32 %v4552, %v4510
      %v4555 = vmin.f32 %v4553, %v4512
      %v4556 = vmin.f32 %v4554, %v4514
      %v4557 = vmin.f32 %v4555, %v4516
      %v4558 = vmin.f32 %v4556, %v4518
      %v4559 = vmin.f32 %v4557, %v4520
      %v4560 = vmin.f32 %v4558, %v4522
      %v4561 = vmin.f32 %v4559, %v4524
      %v4562 = vmin.f32 %v4560, %v4526
      %v4563 = vmin.f32 %v4561, %v4528
      %v4564 = vmin.f32 %v4562, %v4530
      %v4565 = vmin.f32 %v4563, %v4532
      %v4566 = vmin.f32 %v4564, %v4534
      %v4567 = vmin.f32 %v4565, %v4536
      %v4568 = vmin.f32 %v4566, %v4567
      %v4569 = vrot.slane %v4568, 4
      %v4570 = vmin.f32 %v4568, %v4569
      %v4571 = vrot.slane %v4570, 2
      %v4572 = vmin.f32 %v4570, %v4571
      %v4573 = vrot.slane %v4572, 1
      %v4574 = vmin.f32 %v4572, %v4573
      %v4575 = vmin.f32 %v4475, %v4479
      %v4576 = vmin.f32 %v4477, %v4481
      %v4577 = vmin.f32 %v4575, %v4483
      %v4578 = vmin.f32 %v4576, %v4485
      %v4579 = vmin.f32 %v4577, %v4487
      %v4580 = vmin.f32 %v4578, %v4489
      %v4581 = vmin.f32 %v4579, %v4491
      %v4582 = vmin.f32 %v4580, %v4493
      %v4583 = vmin.f32 %v4581, %v4495
      %v4584 = vmin.f32 %v4582, %v4497
      %v4585 = vmin.f32 %v4583, %v4499
      %v4586 = vmin.f32 %v4584, %v4501
      %v4587 = vmin.f32 %v4585, %v4503
      %v4588 = vmin.f32 %v4586, %v4505
      %v4589 = vmin.f32 %v4587, %v4507
      %v4590 = vmin.f32 %v4588, %v4509
      %v4591 = vmin.f32 %v4589, %v4511
      %v4592 = vmin.f32 %v4590, %v4513
      %v4593 = vmin.f32 %v4591, %v4515
      %v4594 = vmin.f32 %v4592, %v4517
      %v4595 = vmin.f32 %v4593, %v4519
      %v4596 = vmin.f32 %v4594, %v4521
      %v4597 = vmin.f32 %v4595, %v4523
      %v4598 = vmin.f32 %v4596, %v4525
      %v4599 = vmin.f32 %v4597, %v4527
      %v4600 = vmin.f32 %v4598, %v4529
      %v4601 = vmin.f32 %v4599, %v4531
      %v4602 = vmin.f32 %v4600, %v4533
      %v4603 = vmin.f32 %v4601, %v4535
      %v4604 = vmin.f32 %v4602, %v4537
      %v4605 = vmin.f32 %v4603, %v4604
      %v4606 = vrot.slane %v4605, 4
      %v4607 = vmin.f32 %v4605, %v4606
      %v4608 = vrot.slane %v4607, 2
      %v4609 = vmin.f32 %v4607, %v4608
      %v4610 = vrot.slane %v4609, 1
      %v4611 = vmin.f32 %v4609, %v4610
      %s4612 = scalar_lea.vmem [#allocation3], 1
      %v4613 = vld [vmem:[%s4612] ss:$8 sm:$0x3]
      %v4616 = vrot.slane %v4611, 7
      %vm4617 = vcmask 1040384
      %v4618 = vsel %vm4617, %v4574, %v4616
      %v4620 = vmin.f32 %v4613, %v4618
      %v4621 = vlaneseq
      %vm4622 = vcmp.ge.s32.totalorder %v4621, 0
      %vm4623 = vcmp.lt.s32.totalorder %v4621, 256
      %vm4624 = vmand %vm4622, %vm4623
      %4625 = vst.msk [vmem:[%s4612] ss:$8 sm:$0x3] %vm4624, %v4620
      %4626 = vst.msk [vmem:[%s4612] ss:$8 sm:$0x0] %vm4624, %v4620
    $region93: #{_pairwise_hausdorff_sq.1} parent=1 // pred_fallthru
      _
    %p4627 = scmp.gt.s32.totalorder %s64, 2
    // Predicated region
    $region94: #{_pairwise_hausdorff_sq.1} parent=1 // pred_check
      %p4628 = pneg %p4627
    $region95: #{_pairwise_hausdorff_sq.1} parent=1 // pred_check_branch
      %4630 = sbr.rel (%p4628) target = $region97
    $region96: #{_pairwise_hausdorff_sq.1} parent=1 // pred_region
      %v4631 = vld [vmem:[%s4] sm:$0xff]
      %v4632 = vld [vmem:[%s4 + $0x8] sm:$0xff]
      %v4633 = vld [vmem:[%s4 + $0x10] sm:$0xff]
      %v4634 = vld [vmem:[%s4 + $0x18] sm:$0xff]
      %v4635 = vld [vmem:[%s4 + $0x20] sm:$0xff]
      %v4636 = vld [vmem:[%s4 + $0x28] sm:$0xff]
      %v4637 = vld [vmem:[%s4 + $0x30] sm:$0xff]
      %v4638 = vld [vmem:[%s4 + $0x38] sm:$0xff]
      %v4639 = vld [vmem:[%s4 + $0x40] sm:$0xff]
      %v4640 = vld [vmem:[%s4 + $0x48] sm:$0xff]
      %v4641 = vld [vmem:[%s4 + $0x50] sm:$0xff]
      %v4642 = vld [vmem:[%s4 + $0x58] sm:$0xff]
      %v4643 = vld [vmem:[%s4 + $0x60] sm:$0xff]
      %v4644 = vld [vmem:[%s4 + $0x68] sm:$0xff]
      %v4645 = vld [vmem:[%s4 + $0x70] sm:$0xff]
      %v4646 = vld [vmem:[%s4 + $0x78] sm:$0xff]
      %v4647 = vld [vmem:[%s4 + $0x80] sm:$0xff]
      %v4648 = vld [vmem:[%s4 + $0x88] sm:$0xff]
      %v4649 = vld [vmem:[%s4 + $0x90] sm:$0xff]
      %v4650 = vld [vmem:[%s4 + $0x98] sm:$0xff]
      %v4651 = vld [vmem:[%s4 + $0xa0] sm:$0xff]
      %v4652 = vld [vmem:[%s4 + $0xa8] sm:$0xff]
      %v4653 = vld [vmem:[%s4 + $0xb0] sm:$0xff]
      %v4654 = vld [vmem:[%s4 + $0xb8] sm:$0xff]
      %v4655 = vld [vmem:[%s4 + $0xc0] sm:$0xff]
      %v4656 = vld [vmem:[%s4 + $0xc8] sm:$0xff]
      %v4657 = vld [vmem:[%s4 + $0xd0] sm:$0xff]
      %v4658 = vld [vmem:[%s4 + $0xd8] sm:$0xff]
      %v4659 = vld [vmem:[%s4 + $0xe0] sm:$0xff]
      %v4660 = vld [vmem:[%s4 + $0xe8] sm:$0xff]
      %v4661 = vld [vmem:[%s4 + $0xf0] sm:$0xff]
      %v4662 = vld [vmem:[%s4 + $0xf8] sm:$0xff]
      %s4663 = sld [smem:[#allocation6 + $0x2]]
      %v4664 = vstv %s4663
      %vm4665 = vcmp.eq.s32.totalorder %v4631, %v4664
      %vm4666 = vcmp.eq.s32.totalorder %v4632, %v4664
      %vm4667 = vcmp.eq.s32.totalorder %v4633, %v4664
      %vm4668 = vcmp.eq.s32.totalorder %v4634, %v4664
      %vm4669 = vcmp.eq.s32.totalorder %v4635, %v4664
      %vm4670 = vcmp.eq.s32.totalorder %v4636, %v4664
      %vm4671 = vcmp.eq.s32.totalorder %v4637, %v4664
      %vm4672 = vcmp.eq.s32.totalorder %v4638, %v4664
      %vm4673 = vcmp.eq.s32.totalorder %v4639, %v4664
      %vm4674 = vcmp.eq.s32.totalorder %v4640, %v4664
      %vm4675 = vcmp.eq.s32.totalorder %v4641, %v4664
      %vm4676 = vcmp.eq.s32.totalorder %v4642, %v4664
      %vm4677 = vcmp.eq.s32.totalorder %v4643, %v4664
      %vm4678 = vcmp.eq.s32.totalorder %v4644, %v4664
      %vm4679 = vcmp.eq.s32.totalorder %v4645, %v4664
      %vm4680 = vcmp.eq.s32.totalorder %v4646, %v4664
      %vm4681 = vcmp.eq.s32.totalorder %v4647, %v4664
      %vm4682 = vcmp.eq.s32.totalorder %v4648, %v4664
      %vm4683 = vcmp.eq.s32.totalorder %v4649, %v4664
      %vm4684 = vcmp.eq.s32.totalorder %v4650, %v4664
      %vm4685 = vcmp.eq.s32.totalorder %v4651, %v4664
      %vm4686 = vcmp.eq.s32.totalorder %v4652, %v4664
      %vm4687 = vcmp.eq.s32.totalorder %v4653, %v4664
      %vm4688 = vcmp.eq.s32.totalorder %v4654, %v4664
      %vm4689 = vcmp.eq.s32.totalorder %v4655, %v4664
      %vm4690 = vcmp.eq.s32.totalorder %v4656, %v4664
      %vm4691 = vcmp.eq.s32.totalorder %v4657, %v4664
      %vm4692 = vcmp.eq.s32.totalorder %v4658, %v4664
      %vm4693 = vcmp.eq.s32.totalorder %v4659, %v4664
      %vm4694 = vcmp.eq.s32.totalorder %v4660, %v4664
      %vm4695 = vcmp.eq.s32.totalorder %v4661, %v4664
      %vm4696 = vcmp.eq.s32.totalorder %v4662, %v4664
      %v4697 = vsel %vm4665, 1, 0
      %v4698 = vsel %vm4666, 1, 0
      %v4699 = vsel %vm4667, 1, 0
      %v4700 = vsel %vm4668, 1, 0
      %v4701 = vsel %vm4669, 1, 0
      %v4702 = vsel %vm4670, 1, 0
      %v4703 = vsel %vm4671, 1, 0
      %v4704 = vsel %vm4672, 1, 0
      %v4705 = vsel %vm4673, 1, 0
      %v4706 = vsel %vm4674, 1, 0
      %v4707 = vsel %vm4675, 1, 0
      %v4708 = vsel %vm4676, 1, 0
      %v4709 = vsel %vm4677, 1, 0
      %v4710 = vsel %vm4678, 1, 0
      %v4711 = vsel %vm4679, 1, 0
      %v4712 = vsel %vm4680, 1, 0
      %v4713 = vsel %vm4681, 1, 0
      %v4714 = vsel %vm4682, 1, 0
      %v4715 = vsel %vm4683, 1, 0
      %v4716 = vsel %vm4684, 1, 0
      %v4717 = vsel %vm4685, 1, 0
      %v4718 = vsel %vm4686, 1, 0
      %v4719 = vsel %vm4687, 1, 0
      %v4720 = vsel %vm4688, 1, 0
      %v4721 = vsel %vm4689, 1, 0
      %v4722 = vsel %vm4690, 1, 0
      %v4723 = vsel %vm4691, 1, 0
      %v4724 = vsel %vm4692, 1, 0
      %v4725 = vsel %vm4693, 1, 0
      %v4726 = vsel %vm4694, 1, 0
      %v4727 = vsel %vm4695, 1, 0
      %v4728 = vsel %vm4696, 1, 0
      %4729 = vset.pattern.permute.xlu0 0
      %4730 = vperm.xlu0 %4729, %v4697
      %v4731 = vpop.permute.xlu0 %4730
      %4732 = vset.pattern.permute.xlu0 0
      %4733 = vperm.xlu0 %4732, %v4698
      %v4734 = vpop.permute.xlu0 %4733
      %4735 = vset.pattern.permute.xlu0 0
      %4736 = vperm.xlu0 %4735, %v4699
      %v4737 = vpop.permute.xlu0 %4736
      %4738 = vset.pattern.permute.xlu0 0
      %4739 = vperm.xlu0 %4738, %v4700
      %v4740 = vpop.permute.xlu0 %4739
      %4741 = vset.pattern.permute.xlu0 0
      %4742 = vperm.xlu0 %4741, %v4701
      %v4743 = vpop.permute.xlu0 %4742
      %4744 = vset.pattern.permute.xlu0 0
      %4745 = vperm.xlu0 %4744, %v4702
      %v4746 = vpop.permute.xlu0 %4745
      %4747 = vset.pattern.permute.xlu0 0
      %4748 = vperm.xlu0 %4747, %v4703
      %v4749 = vpop.permute.xlu0 %4748
      %4750 = vset.pattern.permute.xlu0 0
      %4751 = vperm.xlu0 %4750, %v4704
      %v4752 = vpop.permute.xlu0 %4751
      %4753 = vset.pattern.permute.xlu0 0
      %4754 = vperm.xlu0 %4753, %v4705
      %v4755 = vpop.permute.xlu0 %4754
      %4756 = vset.pattern.permute.xlu0 0
      %4757 = vperm.xlu0 %4756, %v4706
      %v4758 = vpop.permute.xlu0 %4757
      %4759 = vset.pattern.permute.xlu0 0
      %4760 = vperm.xlu0 %4759, %v4707
      %v4761 = vpop.permute.xlu0 %4760
      %4762 = vset.pattern.permute.xlu0 0
      %4763 = vperm.xlu0 %4762, %v4708
      %v4764 = vpop.permute.xlu0 %4763
      %4765 = vset.pattern.permute.xlu0 0
      %4766 = vperm.xlu0 %4765, %v4709
      %v4767 = vpop.permute.xlu0 %4766
      %4768 = vset.pattern.permute.xlu0 0
      %4769 = vperm.xlu0 %4768, %v4710
      %v4770 = vpop.permute.xlu0 %4769
      %4771 = vset.pattern.permute.xlu0 0
      %4772 = vperm.xlu0 %4771, %v4711
      %v4773 = vpop.permute.xlu0 %4772
      %4774 = vset.pattern.permute.xlu0 0
      %4775 = vperm.xlu0 %4774, %v4712
      %v4776 = vpop.permute.xlu0 %4775
      %4777 = vset.pattern.permute.xlu0 0
      %4778 = vperm.xlu0 %4777, %v4713
      %v4779 = vpop.permute.xlu0 %4778
      %4780 = vset.pattern.permute.xlu0 0
      %4781 = vperm.xlu0 %4780, %v4714
      %v4782 = vpop.permute.xlu0 %4781
      %4783 = vset.pattern.permute.xlu0 0
      %4784 = vperm.xlu0 %4783, %v4715
      %v4785 = vpop.permute.xlu0 %4784
      %4786 = vset.pattern.permute.xlu0 0
      %4787 = vperm.xlu0 %4786, %v4716
      %v4788 = vpop.permute.xlu0 %4787
      %4789 = vset.pattern.permute.xlu0 0
      %4790 = vperm.xlu0 %4789, %v4717
      %v4791 = vpop.permute.xlu0 %4790
      %4792 = vset.pattern.permute.xlu0 0
      %4793 = vperm.xlu0 %4792, %v4718
      %v4794 = vpop.permute.xlu0 %4793
      %4795 = vset.pattern.permute.xlu0 0
      %4796 = vperm.xlu0 %4795, %v4719
      %v4797 = vpop.permute.xlu0 %4796
      %4798 = vset.pattern.permute.xlu0 0
      %4799 = vperm.xlu0 %4798, %v4720
      %v4800 = vpop.permute.xlu0 %4799
      %4801 = vset.pattern.permute.xlu0 0
      %4802 = vperm.xlu0 %4801, %v4721
      %v4803 = vpop.permute.xlu0 %4802
      %4804 = vset.pattern.permute.xlu0 0
      %4805 = vperm.xlu0 %4804, %v4722
      %v4806 = vpop.permute.xlu0 %4805
      %4807 = vset.pattern.permute.xlu0 0
      %4808 = vperm.xlu0 %4807, %v4723
      %v4809 = vpop.permute.xlu0 %4808
      %4810 = vset.pattern.permute.xlu0 0
      %4811 = vperm.xlu0 %4810, %v4724
      %v4812 = vpop.permute.xlu0 %4811
      %4813 = vset.pattern.permute.xlu0 0
      %4814 = vperm.xlu0 %4813, %v4725
      %v4815 = vpop.permute.xlu0 %4814
      %4816 = vset.pattern.permute.xlu0 0
      %4817 = vperm.xlu0 %4816, %v4726
      %v4818 = vpop.permute.xlu0 %4817
      %4819 = vset.pattern.permute.xlu0 0
      %4820 = vperm.xlu0 %4819, %v4727
      %v4821 = vpop.permute.xlu0 %4820
      %4822 = vset.pattern.permute.xlu0 0
      %4823 = vperm.xlu0 %4822, %v4728
      %v4824 = vpop.permute.xlu0 %4823
      %vm4825 = vcmp.eq.s32.totalorder %v4731, 1
      %vm4826 = vcmp.eq.s32.totalorder %v4734, 1
      %vm4827 = vcmp.eq.s32.totalorder %v4737, 1
      %vm4828 = vcmp.eq.s32.totalorder %v4740, 1
      %vm4829 = vcmp.eq.s32.totalorder %v4743, 1
      %vm4830 = vcmp.eq.s32.totalorder %v4746, 1
      %vm4831 = vcmp.eq.s32.totalorder %v4749, 1
      %vm4832 = vcmp.eq.s32.totalorder %v4752, 1
      %vm4833 = vcmp.eq.s32.totalorder %v4755, 1
      %vm4834 = vcmp.eq.s32.totalorder %v4758, 1
      %vm4835 = vcmp.eq.s32.totalorder %v4761, 1
      %vm4836 = vcmp.eq.s32.totalorder %v4764, 1
      %vm4837 = vcmp.eq.s32.totalorder %v4767, 1
      %vm4838 = vcmp.eq.s32.totalorder %v4770, 1
      %vm4839 = vcmp.eq.s32.totalorder %v4773, 1
      %vm4840 = vcmp.eq.s32.totalorder %v4776, 1
      %vm4841 = vcmp.eq.s32.totalorder %v4779, 1
      %vm4842 = vcmp.eq.s32.totalorder %v4782, 1
      %vm4843 = vcmp.eq.s32.totalorder %v4785, 1
      %vm4844 = vcmp.eq.s32.totalorder %v4788, 1
      %vm4845 = vcmp.eq.s32.totalorder %v4791, 1
      %vm4846 = vcmp.eq.s32.totalorder %v4794, 1
      %vm4847 = vcmp.eq.s32.totalorder %v4797, 1
      %vm4848 = vcmp.eq.s32.totalorder %v4800, 1
      %vm4849 = vcmp.eq.s32.totalorder %v4803, 1
      %vm4850 = vcmp.eq.s32.totalorder %v4806, 1
      %vm4851 = vcmp.eq.s32.totalorder %v4809, 1
      %vm4852 = vcmp.eq.s32.totalorder %v4812, 1
      %vm4853 = vcmp.eq.s32.totalorder %v4815, 1
      %vm4854 = vcmp.eq.s32.totalorder %v4818, 1
      %vm4855 = vcmp.eq.s32.totalorder %v4821, 1
      %vm4856 = vcmp.eq.s32.totalorder %v4824, 1
      %v4857 = vsel %vm4825, %v735, 1e+30
      %v4858 = vsel %vm4825, %v736, 1e+30
      %v4859 = vsel %vm4826, %v737, 1e+30
      %v4860 = vsel %vm4826, %v738, 1e+30
      %v4861 = vsel %vm4827, %v739, 1e+30
      %v4862 = vsel %vm4827, %v740, 1e+30
      %v4863 = vsel %vm4828, %v741, 1e+30
      %v4864 = vsel %vm4828, %v742, 1e+30
      %v4865 = vsel %vm4829, %v743, 1e+30
      %v4866 = vsel %vm4829, %v744, 1e+30
      %v4867 = vsel %vm4830, %v745, 1e+30
      %v4868 = vsel %vm4830, %v746, 1e+30
      %v4869 = vsel %vm4831, %v747, 1e+30
      %v4870 = vsel %vm4831, %v748, 1e+30
      %v4871 = vsel %vm4832, %v749, 1e+30
      %v4872 = vsel %vm4832, %v750, 1e+30
      %v4873 = vsel %vm4833, %v751, 1e+30
      %v4874 = vsel %vm4833, %v752, 1e+30
      %v4875 = vsel %vm4834, %v753, 1e+30
      %v4876 = vsel %vm4834, %v754, 1e+30
      %v4877 = vsel %vm4835, %v755, 1e+30
      %v4878 = vsel %vm4835, %v756, 1e+30
      %v4879 = vsel %vm4836, %v757, 1e+30
      %v4880 = vsel %vm4836, %v758, 1e+30
      %v4881 = vsel %vm4837, %v759, 1e+30
      %v4882 = vsel %vm4837, %v760, 1e+30
      %v4883 = vsel %vm4838, %v761, 1e+30
      %v4884 = vsel %vm4838, %v762, 1e+30
      %v4885 = vsel %vm4839, %v763, 1e+30
      %v4886 = vsel %vm4839, %v764, 1e+30
      %v4887 = vsel %vm4840, %v765, 1e+30
      %v4888 = vsel %vm4840, %v766, 1e+30
      %v4889 = vsel %vm4841, %v767, 1e+30
      %v4890 = vsel %vm4841, %v768, 1e+30
      %v4891 = vsel %vm4842, %v769, 1e+30
      %v4892 = vsel %vm4842, %v770, 1e+30
      %v4893 = vsel %vm4843, %v771, 1e+30
      %v4894 = vsel %vm4843, %v772, 1e+30
      %v4895 = vsel %vm4844, %v773, 1e+30
      %v4896 = vsel %vm4844, %v774, 1e+30
      %v4897 = vsel %vm4845, %v775, 1e+30
      %v4898 = vsel %vm4845, %v776, 1e+30
      %v4899 = vsel %vm4846, %v777, 1e+30
      %v4900 = vsel %vm4846, %v778, 1e+30
      %v4901 = vsel %vm4847, %v779, 1e+30
      %v4902 = vsel %vm4847, %v780, 1e+30
      %v4903 = vsel %vm4848, %v781, 1e+30
      %v4904 = vsel %vm4848, %v782, 1e+30
      %v4905 = vsel %vm4849, %v783, 1e+30
      %v4906 = vsel %vm4849, %v784, 1e+30
      %v4907 = vsel %vm4850, %v785, 1e+30
      %v4908 = vsel %vm4850, %v786, 1e+30
      %v4909 = vsel %vm4851, %v787, 1e+30
      %v4910 = vsel %vm4851, %v788, 1e+30
      %v4911 = vsel %vm4852, %v789, 1e+30
      %v4912 = vsel %vm4852, %v790, 1e+30
      %v4913 = vsel %vm4853, %v791, 1e+30
      %v4914 = vsel %vm4853, %v792, 1e+30
      %v4915 = vsel %vm4854, %v793, 1e+30
      %v4916 = vsel %vm4854, %v794, 1e+30
      %v4917 = vsel %vm4855, %v795, 1e+30
      %v4918 = vsel %vm4855, %v796, 1e+30
      %v4919 = vsel %vm4856, %v797, 1e+30
      %v4920 = vsel %vm4856, %v798, 1e+30
      %v4921 = vmin.f32 %v4857, %v4861
      %v4922 = vmin.f32 %v4859, %v4863
      %v4923 = vmin.f32 %v4921, %v4865
      %v4924 = vmin.f32 %v4922, %v4867
      %v4925 = vmin.f32 %v4923, %v4869
      %v4926 = vmin.f32 %v4924, %v4871
      %v4927 = vmin.f32 %v4925, %v4873
      %v4928 = vmin.f32 %v4926, %v4875
      %v4929 = vmin.f32 %v4927, %v4877
      %v4930 = vmin.f32 %v4928, %v4879
      %v4931 = vmin.f32 %v4929, %v4881
      %v4932 = vmin.f32 %v4930, %v4883
      %v4933 = vmin.f32 %v4931, %v4885
      %v4934 = vmin.f32 %v4932, %v4887
      %v4935 = vmin.f32 %v4933, %v4889
      %v4936 = vmin.f32 %v4934, %v4891
      %v4937 = vmin.f32 %v4935, %v4893
      %v4938 = vmin.f32 %v4936, %v4895
      %v4939 = vmin.f32 %v4937, %v4897
      %v4940 = vmin.f32 %v4938, %v4899
      %v4941 = vmin.f32 %v4939, %v4901
      %v4942 = vmin.f32 %v4940, %v4903
      %v4943 = vmin.f32 %v4941, %v4905
      %v4944 = vmin.f32 %v4942, %v4907
      %v4945 = vmin.f32 %v4943, %v4909
      %v4946 = vmin.f32 %v4944, %v4911
      %v4947 = vmin.f32 %v4945, %v4913
      %v4948 = vmin.f32 %v4946, %v4915
      %v4949 = vmin.f32 %v4947, %v4917
      %v4950 = vmin.f32 %v4948, %v4919
      %v4951 = vmin.f32 %v4949, %v4950
      %v4952 = vrot.slane %v4951, 4
      %v4953 = vmin.f32 %v4951, %v4952
      %v4954 = vrot.slane %v4953, 2
      %v4955 = vmin.f32 %v4953, %v4954
      %v4956 = vrot.slane %v4955, 1
      %v4957 = vmin.f32 %v4955, %v4956
      %v4958 = vmin.f32 %v4858, %v4862
      %v4959 = vmin.f32 %v4860, %v4864
      %v4960 = vmin.f32 %v4958, %v4866
      %v4961 = vmin.f32 %v4959, %v4868
      %v4962 = vmin.f32 %v4960, %v4870
      %v4963 = vmin.f32 %v4961, %v4872
      %v4964 = vmin.f32 %v4962, %v4874
      %v4965 = vmin.f32 %v4963, %v4876
      %v4966 = vmin.f32 %v4964, %v4878
      %v4967 = vmin.f32 %v4965, %v4880
      %v4968 = vmin.f32 %v4966, %v4882
      %v4969 = vmin.f32 %v4967, %v4884
      %v4970 = vmin.f32 %v4968, %v4886
      %v4971 = vmin.f32 %v4969, %v4888
      %v4972 = vmin.f32 %v4970, %v4890
      %v4973 = vmin.f32 %v4971, %v4892
      %v4974 = vmin.f32 %v4972, %v4894
      %v4975 = vmin.f32 %v4973, %v4896
      %v4976 = vmin.f32 %v4974, %v4898
      %v4977 = vmin.f32 %v4975, %v4900
      %v4978 = vmin.f32 %v4976, %v4902
      %v4979 = vmin.f32 %v4977, %v4904
      %v4980 = vmin.f32 %v4978, %v4906
      %v4981 = vmin.f32 %v4979, %v4908
      %v4982 = vmin.f32 %v4980, %v4910
      %v4983 = vmin.f32 %v4981, %v4912
      %v4984 = vmin.f32 %v4982, %v4914
      %v4985 = vmin.f32 %v4983, %v4916
      %v4986 = vmin.f32 %v4984, %v4918
      %v4987 = vmin.f32 %v4985, %v4920
      %v4988 = vmin.f32 %v4986, %v4987
      %v4989 = vrot.slane %v4988, 4
      %v4990 = vmin.f32 %v4988, %v4989
      %v4991 = vrot.slane %v4990, 2
      %v4992 = vmin.f32 %v4990, %v4991
      %v4993 = vrot.slane %v4992, 1
      %v4994 = vmin.f32 %v4992, %v4993
      %s4995 = scalar_lea.vmem [#allocation3], 2
      %v4996 = vld [vmem:[%s4995] ss:$8 sm:$0x3]
      %v4999 = vrot.slane %v4994, 7
      %vm5000 = vcmask 1040384
      %v5001 = vsel %vm5000, %v4957, %v4999
      %v5003 = vmin.f32 %v4996, %v5001
      %v5004 = vlaneseq
      %vm5005 = vcmp.ge.s32.totalorder %v5004, 0
      %vm5006 = vcmp.lt.s32.totalorder %v5004, 256
      %vm5007 = vmand %vm5005, %vm5006
      %5008 = vst.msk [vmem:[%s4995] ss:$8 sm:$0x3] %vm5007, %v5003
      %5009 = vst.msk [vmem:[%s4995] ss:$8 sm:$0x0] %vm5007, %v5003
    $region97: #{_pairwise_hausdorff_sq.1} parent=1 // pred_fallthru
      _
    %p5010 = scmp.gt.s32.totalorder %s64, 3
    // Predicated region
    $region98: #{_pairwise_hausdorff_sq.1} parent=1 // pred_check
      %p5011 = pneg %p5010
    $region99: #{_pairwise_hausdorff_sq.1} parent=1 // pred_check_branch
      %5013 = sbr.rel (%p5011) target = $region101
    $region100: #{_pairwise_hausdorff_sq.1} parent=1 // pred_region
      %v5014 = vld [vmem:[%s4] sm:$0xff]
      %v5015 = vld [vmem:[%s4 + $0x8] sm:$0xff]
      %v5016 = vld [vmem:[%s4 + $0x10] sm:$0xff]
      %v5017 = vld [vmem:[%s4 + $0x18] sm:$0xff]
      %v5018 = vld [vmem:[%s4 + $0x20] sm:$0xff]
      %v5019 = vld [vmem:[%s4 + $0x28] sm:$0xff]
      %v5020 = vld [vmem:[%s4 + $0x30] sm:$0xff]
      %v5021 = vld [vmem:[%s4 + $0x38] sm:$0xff]
      %v5022 = vld [vmem:[%s4 + $0x40] sm:$0xff]
      %v5023 = vld [vmem:[%s4 + $0x48] sm:$0xff]
      %v5024 = vld [vmem:[%s4 + $0x50] sm:$0xff]
      %v5025 = vld [vmem:[%s4 + $0x58] sm:$0xff]
      %v5026 = vld [vmem:[%s4 + $0x60] sm:$0xff]
      %v5027 = vld [vmem:[%s4 + $0x68] sm:$0xff]
      %v5028 = vld [vmem:[%s4 + $0x70] sm:$0xff]
      %v5029 = vld [vmem:[%s4 + $0x78] sm:$0xff]
      %v5030 = vld [vmem:[%s4 + $0x80] sm:$0xff]
      %v5031 = vld [vmem:[%s4 + $0x88] sm:$0xff]
      %v5032 = vld [vmem:[%s4 + $0x90] sm:$0xff]
      %v5033 = vld [vmem:[%s4 + $0x98] sm:$0xff]
      %v5034 = vld [vmem:[%s4 + $0xa0] sm:$0xff]
      %v5035 = vld [vmem:[%s4 + $0xa8] sm:$0xff]
      %v5036 = vld [vmem:[%s4 + $0xb0] sm:$0xff]
      %v5037 = vld [vmem:[%s4 + $0xb8] sm:$0xff]
      %v5038 = vld [vmem:[%s4 + $0xc0] sm:$0xff]
      %v5039 = vld [vmem:[%s4 + $0xc8] sm:$0xff]
      %v5040 = vld [vmem:[%s4 + $0xd0] sm:$0xff]
      %v5041 = vld [vmem:[%s4 + $0xd8] sm:$0xff]
      %v5042 = vld [vmem:[%s4 + $0xe0] sm:$0xff]
      %v5043 = vld [vmem:[%s4 + $0xe8] sm:$0xff]
      %v5044 = vld [vmem:[%s4 + $0xf0] sm:$0xff]
      %v5045 = vld [vmem:[%s4 + $0xf8] sm:$0xff]
      %s5046 = sld [smem:[#allocation6 + $0x3]]
      %v5047 = vstv %s5046
      %vm5048 = vcmp.eq.s32.totalorder %v5014, %v5047
      %vm5049 = vcmp.eq.s32.totalorder %v5015, %v5047
      %vm5050 = vcmp.eq.s32.totalorder %v5016, %v5047
      %vm5051 = vcmp.eq.s32.totalorder %v5017, %v5047
      %vm5052 = vcmp.eq.s32.totalorder %v5018, %v5047
      %vm5053 = vcmp.eq.s32.totalorder %v5019, %v5047
      %vm5054 = vcmp.eq.s32.totalorder %v5020, %v5047
      %vm5055 = vcmp.eq.s32.totalorder %v5021, %v5047
      %vm5056 = vcmp.eq.s32.totalorder %v5022, %v5047
      %vm5057 = vcmp.eq.s32.totalorder %v5023, %v5047
      %vm5058 = vcmp.eq.s32.totalorder %v5024, %v5047
      %vm5059 = vcmp.eq.s32.totalorder %v5025, %v5047
      %vm5060 = vcmp.eq.s32.totalorder %v5026, %v5047
      %vm5061 = vcmp.eq.s32.totalorder %v5027, %v5047
      %vm5062 = vcmp.eq.s32.totalorder %v5028, %v5047
      %vm5063 = vcmp.eq.s32.totalorder %v5029, %v5047
      %vm5064 = vcmp.eq.s32.totalorder %v5030, %v5047
      %vm5065 = vcmp.eq.s32.totalorder %v5031, %v5047
      %vm5066 = vcmp.eq.s32.totalorder %v5032, %v5047
      %vm5067 = vcmp.eq.s32.totalorder %v5033, %v5047
      %vm5068 = vcmp.eq.s32.totalorder %v5034, %v5047
      %vm5069 = vcmp.eq.s32.totalorder %v5035, %v5047
      %vm5070 = vcmp.eq.s32.totalorder %v5036, %v5047
      %vm5071 = vcmp.eq.s32.totalorder %v5037, %v5047
      %vm5072 = vcmp.eq.s32.totalorder %v5038, %v5047
      %vm5073 = vcmp.eq.s32.totalorder %v5039, %v5047
      %vm5074 = vcmp.eq.s32.totalorder %v5040, %v5047
      %vm5075 = vcmp.eq.s32.totalorder %v5041, %v5047
      %vm5076 = vcmp.eq.s32.totalorder %v5042, %v5047
      %vm5077 = vcmp.eq.s32.totalorder %v5043, %v5047
      %vm5078 = vcmp.eq.s32.totalorder %v5044, %v5047
      %vm5079 = vcmp.eq.s32.totalorder %v5045, %v5047
      %v5080 = vsel %vm5048, 1, 0
      %v5081 = vsel %vm5049, 1, 0
      %v5082 = vsel %vm5050, 1, 0
      %v5083 = vsel %vm5051, 1, 0
      %v5084 = vsel %vm5052, 1, 0
      %v5085 = vsel %vm5053, 1, 0
      %v5086 = vsel %vm5054, 1, 0
      %v5087 = vsel %vm5055, 1, 0
      %v5088 = vsel %vm5056, 1, 0
      %v5089 = vsel %vm5057, 1, 0
      %v5090 = vsel %vm5058, 1, 0
      %v5091 = vsel %vm5059, 1, 0
      %v5092 = vsel %vm5060, 1, 0
      %v5093 = vsel %vm5061, 1, 0
      %v5094 = vsel %vm5062, 1, 0
      %v5095 = vsel %vm5063, 1, 0
      %v5096 = vsel %vm5064, 1, 0
      %v5097 = vsel %vm5065, 1, 0
      %v5098 = vsel %vm5066, 1, 0
      %v5099 = vsel %vm5067, 1, 0
      %v5100 = vsel %vm5068, 1, 0
      %v5101 = vsel %vm5069, 1, 0
      %v5102 = vsel %vm5070, 1, 0
      %v5103 = vsel %vm5071, 1, 0
      %v5104 = vsel %vm5072, 1, 0
      %v5105 = vsel %vm5073, 1, 0
      %v5106 = vsel %vm5074, 1, 0
      %v5107 = vsel %vm5075, 1, 0
      %v5108 = vsel %vm5076, 1, 0
      %v5109 = vsel %vm5077, 1, 0
      %v5110 = vsel %vm5078, 1, 0
      %v5111 = vsel %vm5079, 1, 0
      %5112 = vset.pattern.permute.xlu0 0
      %5113 = vperm.xlu0 %5112, %v5080
      %v5114 = vpop.permute.xlu0 %5113
      %5115 = vset.pattern.permute.xlu0 0
      %5116 = vperm.xlu0 %5115, %v5081
      %v5117 = vpop.permute.xlu0 %5116
      %5118 = vset.pattern.permute.xlu0 0
      %5119 = vperm.xlu0 %5118, %v5082
      %v5120 = vpop.permute.xlu0 %5119
      %5121 = vset.pattern.permute.xlu0 0
      %5122 = vperm.xlu0 %5121, %v5083
      %v5123 = vpop.permute.xlu0 %5122
      %5124 = vset.pattern.permute.xlu0 0
      %5125 = vperm.xlu0 %5124, %v5084
      %v5126 = vpop.permute.xlu0 %5125
      %5127 = vset.pattern.permute.xlu0 0
      %5128 = vperm.xlu0 %5127, %v5085
      %v5129 = vpop.permute.xlu0 %5128
      %5130 = vset.pattern.permute.xlu0 0
      %5131 = vperm.xlu0 %5130, %v5086
      %v5132 = vpop.permute.xlu0 %5131
      %5133 = vset.pattern.permute.xlu0 0
      %5134 = vperm.xlu0 %5133, %v5087
      %v5135 = vpop.permute.xlu0 %5134
      %5136 = vset.pattern.permute.xlu0 0
      %5137 = vperm.xlu0 %5136, %v5088
      %v5138 = vpop.permute.xlu0 %5137
      %5139 = vset.pattern.permute.xlu0 0
      %5140 = vperm.xlu0 %5139, %v5089
      %v5141 = vpop.permute.xlu0 %5140
      %5142 = vset.pattern.permute.xlu0 0
      %5143 = vperm.xlu0 %5142, %v5090
      %v5144 = vpop.permute.xlu0 %5143
      %5145 = vset.pattern.permute.xlu0 0
      %5146 = vperm.xlu0 %5145, %v5091
      %v5147 = vpop.permute.xlu0 %5146
      %5148 = vset.pattern.permute.xlu0 0
      %5149 = vperm.xlu0 %5148, %v5092
      %v5150 = vpop.permute.xlu0 %5149
      %5151 = vset.pattern.permute.xlu0 0
      %5152 = vperm.xlu0 %5151, %v5093
      %v5153 = vpop.permute.xlu0 %5152
      %5154 = vset.pattern.permute.xlu0 0
      %5155 = vperm.xlu0 %5154, %v5094
      %v5156 = vpop.permute.xlu0 %5155
      %5157 = vset.pattern.permute.xlu0 0
      %5158 = vperm.xlu0 %5157, %v5095
      %v5159 = vpop.permute.xlu0 %5158
      %5160 = vset.pattern.permute.xlu0 0
      %5161 = vperm.xlu0 %5160, %v5096
      %v5162 = vpop.permute.xlu0 %5161
      %5163 = vset.pattern.permute.xlu0 0
      %5164 = vperm.xlu0 %5163, %v5097
      %v5165 = vpop.permute.xlu0 %5164
      %5166 = vset.pattern.permute.xlu0 0
      %5167 = vperm.xlu0 %5166, %v5098
      %v5168 = vpop.permute.xlu0 %5167
      %5169 = vset.pattern.permute.xlu0 0
      %5170 = vperm.xlu0 %5169, %v5099
      %v5171 = vpop.permute.xlu0 %5170
      %5172 = vset.pattern.permute.xlu0 0
      %5173 = vperm.xlu0 %5172, %v5100
      %v5174 = vpop.permute.xlu0 %5173
      %5175 = vset.pattern.permute.xlu0 0
      %5176 = vperm.xlu0 %5175, %v5101
      %v5177 = vpop.permute.xlu0 %5176
      %5178 = vset.pattern.permute.xlu0 0
      %5179 = vperm.xlu0 %5178, %v5102
      %v5180 = vpop.permute.xlu0 %5179
      %5181 = vset.pattern.permute.xlu0 0
      %5182 = vperm.xlu0 %5181, %v5103
      %v5183 = vpop.permute.xlu0 %5182
      %5184 = vset.pattern.permute.xlu0 0
      %5185 = vperm.xlu0 %5184, %v5104
      %v5186 = vpop.permute.xlu0 %5185
      %5187 = vset.pattern.permute.xlu0 0
      %5188 = vperm.xlu0 %5187, %v5105
      %v5189 = vpop.permute.xlu0 %5188
      %5190 = vset.pattern.permute.xlu0 0
      %5191 = vperm.xlu0 %5190, %v5106
      %v5192 = vpop.permute.xlu0 %5191
      %5193 = vset.pattern.permute.xlu0 0
      %5194 = vperm.xlu0 %5193, %v5107
      %v5195 = vpop.permute.xlu0 %5194
      %5196 = vset.pattern.permute.xlu0 0
      %5197 = vperm.xlu0 %5196, %v5108
      %v5198 = vpop.permute.xlu0 %5197
      %5199 = vset.pattern.permute.xlu0 0
      %5200 = vperm.xlu0 %5199, %v5109
      %v5201 = vpop.permute.xlu0 %5200
      %5202 = vset.pattern.permute.xlu0 0
      %5203 = vperm.xlu0 %5202, %v5110
      %v5204 = vpop.permute.xlu0 %5203
      %5205 = vset.pattern.permute.xlu0 0
      %5206 = vperm.xlu0 %5205, %v5111
      %v5207 = vpop.permute.xlu0 %5206
      %vm5208 = vcmp.eq.s32.totalorder %v5114, 1
      %vm5209 = vcmp.eq.s32.totalorder %v5117, 1
      %vm5210 = vcmp.eq.s32.totalorder %v5120, 1
      %vm5211 = vcmp.eq.s32.totalorder %v5123, 1
      %vm5212 = vcmp.eq.s32.totalorder %v5126, 1
      %vm5213 = vcmp.eq.s32.totalorder %v5129, 1
      %vm5214 = vcmp.eq.s32.totalorder %v5132, 1
      %vm5215 = vcmp.eq.s32.totalorder %v5135, 1
      %vm5216 = vcmp.eq.s32.totalorder %v5138, 1
      %vm5217 = vcmp.eq.s32.totalorder %v5141, 1
      %vm5218 = vcmp.eq.s32.totalorder %v5144, 1
      %vm5219 = vcmp.eq.s32.totalorder %v5147, 1
      %vm5220 = vcmp.eq.s32.totalorder %v5150, 1
      %vm5221 = vcmp.eq.s32.totalorder %v5153, 1
      %vm5222 = vcmp.eq.s32.totalorder %v5156, 1
      %vm5223 = vcmp.eq.s32.totalorder %v5159, 1
      %vm5224 = vcmp.eq.s32.totalorder %v5162, 1
      %vm5225 = vcmp.eq.s32.totalorder %v5165, 1
      %vm5226 = vcmp.eq.s32.totalorder %v5168, 1
      %vm5227 = vcmp.eq.s32.totalorder %v5171, 1
      %vm5228 = vcmp.eq.s32.totalorder %v5174, 1
      %vm5229 = vcmp.eq.s32.totalorder %v5177, 1
      %vm5230 = vcmp.eq.s32.totalorder %v5180, 1
      %vm5231 = vcmp.eq.s32.totalorder %v5183, 1
      %vm5232 = vcmp.eq.s32.totalorder %v5186, 1
      %vm5233 = vcmp.eq.s32.totalorder %v5189, 1
      %vm5234 = vcmp.eq.s32.totalorder %v5192, 1
      %vm5235 = vcmp.eq.s32.totalorder %v5195, 1
      %vm5236 = vcmp.eq.s32.totalorder %v5198, 1
      %vm5237 = vcmp.eq.s32.totalorder %v5201, 1
      %vm5238 = vcmp.eq.s32.totalorder %v5204, 1
      %vm5239 = vcmp.eq.s32.totalorder %v5207, 1
      %v5240 = vsel %vm5208, %v735, 1e+30
      %v5241 = vsel %vm5208, %v736, 1e+30
      %v5242 = vsel %vm5209, %v737, 1e+30
      %v5243 = vsel %vm5209, %v738, 1e+30
      %v5244 = vsel %vm5210, %v739, 1e+30
      %v5245 = vsel %vm5210, %v740, 1e+30
      %v5246 = vsel %vm5211, %v741, 1e+30
      %v5247 = vsel %vm5211, %v742, 1e+30
      %v5248 = vsel %vm5212, %v743, 1e+30
      %v5249 = vsel %vm5212, %v744, 1e+30
      %v5250 = vsel %vm5213, %v745, 1e+30
      %v5251 = vsel %vm5213, %v746, 1e+30
      %v5252 = vsel %vm5214, %v747, 1e+30
      %v5253 = vsel %vm5214, %v748, 1e+30
      %v5254 = vsel %vm5215, %v749, 1e+30
      %v5255 = vsel %vm5215, %v750, 1e+30
      %v5256 = vsel %vm5216, %v751, 1e+30
      %v5257 = vsel %vm5216, %v752, 1e+30
      %v5258 = vsel %vm5217, %v753, 1e+30
      %v5259 = vsel %vm5217, %v754, 1e+30
      %v5260 = vsel %vm5218, %v755, 1e+30
      %v5261 = vsel %vm5218, %v756, 1e+30
      %v5262 = vsel %vm5219, %v757, 1e+30
      %v5263 = vsel %vm5219, %v758, 1e+30
      %v5264 = vsel %vm5220, %v759, 1e+30
      %v5265 = vsel %vm5220, %v760, 1e+30
      %v5266 = vsel %vm5221, %v761, 1e+30
      %v5267 = vsel %vm5221, %v762, 1e+30
      %v5268 = vsel %vm5222, %v763, 1e+30
      %v5269 = vsel %vm5222, %v764, 1e+30
      %v5270 = vsel %vm5223, %v765, 1e+30
      %v5271 = vsel %vm5223, %v766, 1e+30
      %v5272 = vsel %vm5224, %v767, 1e+30
      %v5273 = vsel %vm5224, %v768, 1e+30
      %v5274 = vsel %vm5225, %v769, 1e+30
      %v5275 = vsel %vm5225, %v770, 1e+30
      %v5276 = vsel %vm5226, %v771, 1e+30
      %v5277 = vsel %vm5226, %v772, 1e+30
      %v5278 = vsel %vm5227, %v773, 1e+30
      %v5279 = vsel %vm5227, %v774, 1e+30
      %v5280 = vsel %vm5228, %v775, 1e+30
      %v5281 = vsel %vm5228, %v776, 1e+30
      %v5282 = vsel %vm5229, %v777, 1e+30
      %v5283 = vsel %vm5229, %v778, 1e+30
      %v5284 = vsel %vm5230, %v779, 1e+30
      %v5285 = vsel %vm5230, %v780, 1e+30
      %v5286 = vsel %vm5231, %v781, 1e+30
      %v5287 = vsel %vm5231, %v782, 1e+30
      %v5288 = vsel %vm5232, %v783, 1e+30
      %v5289 = vsel %vm5232, %v784, 1e+30
      %v5290 = vsel %vm5233, %v785, 1e+30
      %v5291 = vsel %vm5233, %v786, 1e+30
      %v5292 = vsel %vm5234, %v787, 1e+30
      %v5293 = vsel %vm5234, %v788, 1e+30
      %v5294 = vsel %vm5235, %v789, 1e+30
      %v5295 = vsel %vm5235, %v790, 1e+30
      %v5296 = vsel %vm5236, %v791, 1e+30
      %v5297 = vsel %vm5236, %v792, 1e+30
      %v5298 = vsel %vm5237, %v793, 1e+30
      %v5299 = vsel %vm5237, %v794, 1e+30
      %v5300 = vsel %vm5238, %v795, 1e+30
      %v5301 = vsel %vm5238, %v796, 1e+30
      %v5302 = vsel %vm5239, %v797, 1e+30
      %v5303 = vsel %vm5239, %v798, 1e+30
      %v5304 = vmin.f32 %v5240, %v5244
      %v5305 = vmin.f32 %v5242, %v5246
      %v5306 = vmin.f32 %v5304, %v5248
      %v5307 = vmin.f32 %v5305, %v5250
      %v5308 = vmin.f32 %v5306, %v5252
      %v5309 = vmin.f32 %v5307, %v5254
      %v5310 = vmin.f32 %v5308, %v5256
      %v5311 = vmin.f32 %v5309, %v5258
      %v5312 = vmin.f32 %v5310, %v5260
      %v5313 = vmin.f32 %v5311, %v5262
      %v5314 = vmin.f32 %v5312, %v5264
      %v5315 = vmin.f32 %v5313, %v5266
      %v5316 = vmin.f32 %v5314, %v5268
      %v5317 = vmin.f32 %v5315, %v5270
      %v5318 = vmin.f32 %v5316, %v5272
      %v5319 = vmin.f32 %v5317, %v5274
      %v5320 = vmin.f32 %v5318, %v5276
      %v5321 = vmin.f32 %v5319, %v5278
      %v5322 = vmin.f32 %v5320, %v5280
      %v5323 = vmin.f32 %v5321, %v5282
      %v5324 = vmin.f32 %v5322, %v5284
      %v5325 = vmin.f32 %v5323, %v5286
      %v5326 = vmin.f32 %v5324, %v5288
      %v5327 = vmin.f32 %v5325, %v5290
      %v5328 = vmin.f32 %v5326, %v5292
      %v5329 = vmin.f32 %v5327, %v5294
      %v5330 = vmin.f32 %v5328, %v5296
      %v5331 = vmin.f32 %v5329, %v5298
      %v5332 = vmin.f32 %v5330, %v5300
      %v5333 = vmin.f32 %v5331, %v5302
      %v5334 = vmin.f32 %v5332, %v5333
      %v5335 = vrot.slane %v5334, 4
      %v5336 = vmin.f32 %v5334, %v5335
      %v5337 = vrot.slane %v5336, 2
      %v5338 = vmin.f32 %v5336, %v5337
      %v5339 = vrot.slane %v5338, 1
      %v5340 = vmin.f32 %v5338, %v5339
      %v5341 = vmin.f32 %v5241, %v5245
      %v5342 = vmin.f32 %v5243, %v5247
      %v5343 = vmin.f32 %v5341, %v5249
      %v5344 = vmin.f32 %v5342, %v5251
      %v5345 = vmin.f32 %v5343, %v5253
      %v5346 = vmin.f32 %v5344, %v5255
      %v5347 = vmin.f32 %v5345, %v5257
      %v5348 = vmin.f32 %v5346, %v5259
      %v5349 = vmin.f32 %v5347, %v5261
      %v5350 = vmin.f32 %v5348, %v5263
      %v5351 = vmin.f32 %v5349, %v5265
      %v5352 = vmin.f32 %v5350, %v5267
      %v5353 = vmin.f32 %v5351, %v5269
      %v5354 = vmin.f32 %v5352, %v5271
      %v5355 = vmin.f32 %v5353, %v5273
      %v5356 = vmin.f32 %v5354, %v5275
      %v5357 = vmin.f32 %v5355, %v5277
      %v5358 = vmin.f32 %v5356, %v5279
      %v5359 = vmin.f32 %v5357, %v5281
      %v5360 = vmin.f32 %v5358, %v5283
      %v5361 = vmin.f32 %v5359, %v5285
      %v5362 = vmin.f32 %v5360, %v5287
      %v5363 = vmin.f32 %v5361, %v5289
      %v5364 = vmin.f32 %v5362, %v5291
      %v5365 = vmin.f32 %v5363, %v5293
      %v5366 = vmin.f32 %v5364, %v5295
      %v5367 = vmin.f32 %v5365, %v5297
      %v5368 = vmin.f32 %v5366, %v5299
      %v5369 = vmin.f32 %v5367, %v5301
      %v5370 = vmin.f32 %v5368, %v5303
      %v5371 = vmin.f32 %v5369, %v5370
      %v5372 = vrot.slane %v5371, 4
      %v5373 = vmin.f32 %v5371, %v5372
      %v5374 = vrot.slane %v5373, 2
      %v5375 = vmin.f32 %v5373, %v5374
      %v5376 = vrot.slane %v5375, 1
      %v5377 = vmin.f32 %v5375, %v5376
      %s5378 = scalar_lea.vmem [#allocation3], 3
      %v5379 = vld [vmem:[%s5378] ss:$8 sm:$0x3]
      %v5382 = vrot.slane %v5377, 7
      %vm5383 = vcmask 1040384
      %v5384 = vsel %vm5383, %v5340, %v5382
      %v5386 = vmin.f32 %v5379, %v5384
      %v5387 = vlaneseq
      %vm5388 = vcmp.ge.s32.totalorder %v5387, 0
      %vm5389 = vcmp.lt.s32.totalorder %v5387, 256
      %vm5390 = vmand %vm5388, %vm5389
      %5391 = vst.msk [vmem:[%s5378] ss:$8 sm:$0x3] %vm5390, %v5386
      %5392 = vst.msk [vmem:[%s5378] ss:$8 sm:$0x0] %vm5390, %v5386
    $region101: #{_pairwise_hausdorff_sq.1} parent=1 // pred_fallthru
      _
    %p5393 = scmp.gt.s32.totalorder %s64, 4
    // Predicated region
    $region102: #{_pairwise_hausdorff_sq.1} parent=1 // pred_check
      %p5394 = pneg %p5393
    $region103: #{_pairwise_hausdorff_sq.1} parent=1 // pred_check_branch
      %5396 = sbr.rel (%p5394) target = $region105
    $region104: #{_pairwise_hausdorff_sq.1} parent=1 // pred_region
      %v5397 = vld [vmem:[%s4] sm:$0xff]
      %v5398 = vld [vmem:[%s4 + $0x8] sm:$0xff]
      %v5399 = vld [vmem:[%s4 + $0x10] sm:$0xff]
      %v5400 = vld [vmem:[%s4 + $0x18] sm:$0xff]
      %v5401 = vld [vmem:[%s4 + $0x20] sm:$0xff]
      %v5402 = vld [vmem:[%s4 + $0x28] sm:$0xff]
      %v5403 = vld [vmem:[%s4 + $0x30] sm:$0xff]
      %v5404 = vld [vmem:[%s4 + $0x38] sm:$0xff]
      %v5405 = vld [vmem:[%s4 + $0x40] sm:$0xff]
      %v5406 = vld [vmem:[%s4 + $0x48] sm:$0xff]
      %v5407 = vld [vmem:[%s4 + $0x50] sm:$0xff]
      %v5408 = vld [vmem:[%s4 + $0x58] sm:$0xff]
      %v5409 = vld [vmem:[%s4 + $0x60] sm:$0xff]
      %v5410 = vld [vmem:[%s4 + $0x68] sm:$0xff]
      %v5411 = vld [vmem:[%s4 + $0x70] sm:$0xff]
      %v5412 = vld [vmem:[%s4 + $0x78] sm:$0xff]
      %v5413 = vld [vmem:[%s4 + $0x80] sm:$0xff]
      %v5414 = vld [vmem:[%s4 + $0x88] sm:$0xff]
      %v5415 = vld [vmem:[%s4 + $0x90] sm:$0xff]
      %v5416 = vld [vmem:[%s4 + $0x98] sm:$0xff]
      %v5417 = vld [vmem:[%s4 + $0xa0] sm:$0xff]
      %v5418 = vld [vmem:[%s4 + $0xa8] sm:$0xff]
      %v5419 = vld [vmem:[%s4 + $0xb0] sm:$0xff]
      %v5420 = vld [vmem:[%s4 + $0xb8] sm:$0xff]
      %v5421 = vld [vmem:[%s4 + $0xc0] sm:$0xff]
      %v5422 = vld [vmem:[%s4 + $0xc8] sm:$0xff]
      %v5423 = vld [vmem:[%s4 + $0xd0] sm:$0xff]
      %v5424 = vld [vmem:[%s4 + $0xd8] sm:$0xff]
      %v5425 = vld [vmem:[%s4 + $0xe0] sm:$0xff]
      %v5426 = vld [vmem:[%s4 + $0xe8] sm:$0xff]
      %v5427 = vld [vmem:[%s4 + $0xf0] sm:$0xff]
      %v5428 = vld [vmem:[%s4 + $0xf8] sm:$0xff]
      %s5429 = sld [smem:[#allocation6 + $0x4]]
      %v5430 = vstv %s5429
      %vm5431 = vcmp.eq.s32.totalorder %v5397, %v5430
      %vm5432 = vcmp.eq.s32.totalorder %v5398, %v5430
      %vm5433 = vcmp.eq.s32.totalorder %v5399, %v5430
      %vm5434 = vcmp.eq.s32.totalorder %v5400, %v5430
      %vm5435 = vcmp.eq.s32.totalorder %v5401, %v5430
      %vm5436 = vcmp.eq.s32.totalorder %v5402, %v5430
      %vm5437 = vcmp.eq.s32.totalorder %v5403, %v5430
      %vm5438 = vcmp.eq.s32.totalorder %v5404, %v5430
      %vm5439 = vcmp.eq.s32.totalorder %v5405, %v5430
      %vm5440 = vcmp.eq.s32.totalorder %v5406, %v5430
      %vm5441 = vcmp.eq.s32.totalorder %v5407, %v5430
      %vm5442 = vcmp.eq.s32.totalorder %v5408, %v5430
      %vm5443 = vcmp.eq.s32.totalorder %v5409, %v5430
      %vm5444 = vcmp.eq.s32.totalorder %v5410, %v5430
      %vm5445 = vcmp.eq.s32.totalorder %v5411, %v5430
      %vm5446 = vcmp.eq.s32.totalorder %v5412, %v5430
      %vm5447 = vcmp.eq.s32.totalorder %v5413, %v5430
      %vm5448 = vcmp.eq.s32.totalorder %v5414, %v5430
      %vm5449 = vcmp.eq.s32.totalorder %v5415, %v5430
      %vm5450 = vcmp.eq.s32.totalorder %v5416, %v5430
      %vm5451 = vcmp.eq.s32.totalorder %v5417, %v5430
      %vm5452 = vcmp.eq.s32.totalorder %v5418, %v5430
      %vm5453 = vcmp.eq.s32.totalorder %v5419, %v5430
      %vm5454 = vcmp.eq.s32.totalorder %v5420, %v5430
      %vm5455 = vcmp.eq.s32.totalorder %v5421, %v5430
      %vm5456 = vcmp.eq.s32.totalorder %v5422, %v5430
      %vm5457 = vcmp.eq.s32.totalorder %v5423, %v5430
      %vm5458 = vcmp.eq.s32.totalorder %v5424, %v5430
      %vm5459 = vcmp.eq.s32.totalorder %v5425, %v5430
      %vm5460 = vcmp.eq.s32.totalorder %v5426, %v5430
      %vm5461 = vcmp.eq.s32.totalorder %v5427, %v5430
      %vm5462 = vcmp.eq.s32.totalorder %v5428, %v5430
      %v5463 = vsel %vm5431, 1, 0
      %v5464 = vsel %vm5432, 1, 0
      %v5465 = vsel %vm5433, 1, 0
      %v5466 = vsel %vm5434, 1, 0
      %v5467 = vsel %vm5435, 1, 0
      %v5468 = vsel %vm5436, 1, 0
      %v5469 = vsel %vm5437, 1, 0
      %v5470 = vsel %vm5438, 1, 0
      %v5471 = vsel %vm5439, 1, 0
      %v5472 = vsel %vm5440, 1, 0
      %v5473 = vsel %vm5441, 1, 0
      %v5474 = vsel %vm5442, 1, 0
      %v5475 = vsel %vm5443, 1, 0
      %v5476 = vsel %vm5444, 1, 0
      %v5477 = vsel %vm5445, 1, 0
      %v5478 = vsel %vm5446, 1, 0
      %v5479 = vsel %vm5447, 1, 0
      %v5480 = vsel %vm5448, 1, 0
      %v5481 = vsel %vm5449, 1, 0
      %v5482 = vsel %vm5450, 1, 0
      %v5483 = vsel %vm5451, 1, 0
      %v5484 = vsel %vm5452, 1, 0
      %v5485 = vsel %vm5453, 1, 0
      %v5486 = vsel %vm5454, 1, 0
      %v5487 = vsel %vm5455, 1, 0
      %v5488 = vsel %vm5456, 1, 0
      %v5489 = vsel %vm5457, 1, 0
      %v5490 = vsel %vm5458, 1, 0
      %v5491 = vsel %vm5459, 1, 0
      %v5492 = vsel %vm5460, 1, 0
      %v5493 = vsel %vm5461, 1, 0
      %v5494 = vsel %vm5462, 1, 0
      %5495 = vset.pattern.permute.xlu0 0
      %5496 = vperm.xlu0 %5495, %v5463
      %v5497 = vpop.permute.xlu0 %5496
      %5498 = vset.pattern.permute.xlu0 0
      %5499 = vperm.xlu0 %5498, %v5464
      %v5500 = vpop.permute.xlu0 %5499
      %5501 = vset.pattern.permute.xlu0 0
      %5502 = vperm.xlu0 %5501, %v5465
      %v5503 = vpop.permute.xlu0 %5502
      %5504 = vset.pattern.permute.xlu0 0
      %5505 = vperm.xlu0 %5504, %v5466
      %v5506 = vpop.permute.xlu0 %5505
      %5507 = vset.pattern.permute.xlu0 0
      %5508 = vperm.xlu0 %5507, %v5467
      %v5509 = vpop.permute.xlu0 %5508
      %5510 = vset.pattern.permute.xlu0 0
      %5511 = vperm.xlu0 %5510, %v5468
      %v5512 = vpop.permute.xlu0 %5511
      %5513 = vset.pattern.permute.xlu0 0
      %5514 = vperm.xlu0 %5513, %v5469
      %v5515 = vpop.permute.xlu0 %5514
      %5516 = vset.pattern.permute.xlu0 0
      %5517 = vperm.xlu0 %5516, %v5470
      %v5518 = vpop.permute.xlu0 %5517
      %5519 = vset.pattern.permute.xlu0 0
      %5520 = vperm.xlu0 %5519, %v5471
      %v5521 = vpop.permute.xlu0 %5520
      %5522 = vset.pattern.permute.xlu0 0
      %5523 = vperm.xlu0 %5522, %v5472
      %v5524 = vpop.permute.xlu0 %5523
      %5525 = vset.pattern.permute.xlu0 0
      %5526 = vperm.xlu0 %5525, %v5473
      %v5527 = vpop.permute.xlu0 %5526
      %5528 = vset.pattern.permute.xlu0 0
      %5529 = vperm.xlu0 %5528, %v5474
      %v5530 = vpop.permute.xlu0 %5529
      %5531 = vset.pattern.permute.xlu0 0
      %5532 = vperm.xlu0 %5531, %v5475
      %v5533 = vpop.permute.xlu0 %5532
      %5534 = vset.pattern.permute.xlu0 0
      %5535 = vperm.xlu0 %5534, %v5476
      %v5536 = vpop.permute.xlu0 %5535
      %5537 = vset.pattern.permute.xlu0 0
      %5538 = vperm.xlu0 %5537, %v5477
      %v5539 = vpop.permute.xlu0 %5538
      %5540 = vset.pattern.permute.xlu0 0
      %5541 = vperm.xlu0 %5540, %v5478
      %v5542 = vpop.permute.xlu0 %5541
      %5543 = vset.pattern.permute.xlu0 0
      %5544 = vperm.xlu0 %5543, %v5479
      %v5545 = vpop.permute.xlu0 %5544
      %5546 = vset.pattern.permute.xlu0 0
      %5547 = vperm.xlu0 %5546, %v5480
      %v5548 = vpop.permute.xlu0 %5547
      %5549 = vset.pattern.permute.xlu0 0
      %5550 = vperm.xlu0 %5549, %v5481
      %v5551 = vpop.permute.xlu0 %5550
      %5552 = vset.pattern.permute.xlu0 0
      %5553 = vperm.xlu0 %5552, %v5482
      %v5554 = vpop.permute.xlu0 %5553
      %5555 = vset.pattern.permute.xlu0 0
      %5556 = vperm.xlu0 %5555, %v5483
      %v5557 = vpop.permute.xlu0 %5556
      %5558 = vset.pattern.permute.xlu0 0
      %5559 = vperm.xlu0 %5558, %v5484
      %v5560 = vpop.permute.xlu0 %5559
      %5561 = vset.pattern.permute.xlu0 0
      %5562 = vperm.xlu0 %5561, %v5485
      %v5563 = vpop.permute.xlu0 %5562
      %5564 = vset.pattern.permute.xlu0 0
      %5565 = vperm.xlu0 %5564, %v5486
      %v5566 = vpop.permute.xlu0 %5565
      %5567 = vset.pattern.permute.xlu0 0
      %5568 = vperm.xlu0 %5567, %v5487
      %v5569 = vpop.permute.xlu0 %5568
      %5570 = vset.pattern.permute.xlu0 0
      %5571 = vperm.xlu0 %5570, %v5488
      %v5572 = vpop.permute.xlu0 %5571
      %5573 = vset.pattern.permute.xlu0 0
      %5574 = vperm.xlu0 %5573, %v5489
      %v5575 = vpop.permute.xlu0 %5574
      %5576 = vset.pattern.permute.xlu0 0
      %5577 = vperm.xlu0 %5576, %v5490
      %v5578 = vpop.permute.xlu0 %5577
      %5579 = vset.pattern.permute.xlu0 0
      %5580 = vperm.xlu0 %5579, %v5491
      %v5581 = vpop.permute.xlu0 %5580
      %5582 = vset.pattern.permute.xlu0 0
      %5583 = vperm.xlu0 %5582, %v5492
      %v5584 = vpop.permute.xlu0 %5583
      %5585 = vset.pattern.permute.xlu0 0
      %5586 = vperm.xlu0 %5585, %v5493
      %v5587 = vpop.permute.xlu0 %5586
      %5588 = vset.pattern.permute.xlu0 0
      %5589 = vperm.xlu0 %5588, %v5494
      %v5590 = vpop.permute.xlu0 %5589
      %vm5591 = vcmp.eq.s32.totalorder %v5497, 1
      %vm5592 = vcmp.eq.s32.totalorder %v5500, 1
      %vm5593 = vcmp.eq.s32.totalorder %v5503, 1
      %vm5594 = vcmp.eq.s32.totalorder %v5506, 1
      %vm5595 = vcmp.eq.s32.totalorder %v5509, 1
      %vm5596 = vcmp.eq.s32.totalorder %v5512, 1
      %vm5597 = vcmp.eq.s32.totalorder %v5515, 1
      %vm5598 = vcmp.eq.s32.totalorder %v5518, 1
      %vm5599 = vcmp.eq.s32.totalorder %v5521, 1
      %vm5600 = vcmp.eq.s32.totalorder %v5524, 1
      %vm5601 = vcmp.eq.s32.totalorder %v5527, 1
      %vm5602 = vcmp.eq.s32.totalorder %v5530, 1
      %vm5603 = vcmp.eq.s32.totalorder %v5533, 1
      %vm5604 = vcmp.eq.s32.totalorder %v5536, 1
      %vm5605 = vcmp.eq.s32.totalorder %v5539, 1
      %vm5606 = vcmp.eq.s32.totalorder %v5542, 1
      %vm5607 = vcmp.eq.s32.totalorder %v5545, 1
      %vm5608 = vcmp.eq.s32.totalorder %v5548, 1
      %vm5609 = vcmp.eq.s32.totalorder %v5551, 1
      %vm5610 = vcmp.eq.s32.totalorder %v5554, 1
      %vm5611 = vcmp.eq.s32.totalorder %v5557, 1
      %vm5612 = vcmp.eq.s32.totalorder %v5560, 1
      %vm5613 = vcmp.eq.s32.totalorder %v5563, 1
      %vm5614 = vcmp.eq.s32.totalorder %v5566, 1
      %vm5615 = vcmp.eq.s32.totalorder %v5569, 1
      %vm5616 = vcmp.eq.s32.totalorder %v5572, 1
      %vm5617 = vcmp.eq.s32.totalorder %v5575, 1
      %vm5618 = vcmp.eq.s32.totalorder %v5578, 1
      %vm5619 = vcmp.eq.s32.totalorder %v5581, 1
      %vm5620 = vcmp.eq.s32.totalorder %v5584, 1
      %vm5621 = vcmp.eq.s32.totalorder %v5587, 1
      %vm5622 = vcmp.eq.s32.totalorder %v5590, 1
      %v5623 = vsel %vm5591, %v735, 1e+30
      %v5624 = vsel %vm5591, %v736, 1e+30
      %v5625 = vsel %vm5592, %v737, 1e+30
      %v5626 = vsel %vm5592, %v738, 1e+30
      %v5627 = vsel %vm5593, %v739, 1e+30
      %v5628 = vsel %vm5593, %v740, 1e+30
      %v5629 = vsel %vm5594, %v741, 1e+30
      %v5630 = vsel %vm5594, %v742, 1e+30
      %v5631 = vsel %vm5595, %v743, 1e+30
      %v5632 = vsel %vm5595, %v744, 1e+30
      %v5633 = vsel %vm5596, %v745, 1e+30
      %v5634 = vsel %vm5596, %v746, 1e+30
      %v5635 = vsel %vm5597, %v747, 1e+30
      %v5636 = vsel %vm5597, %v748, 1e+30
      %v5637 = vsel %vm5598, %v749, 1e+30
      %v5638 = vsel %vm5598, %v750, 1e+30
      %v5639 = vsel %vm5599, %v751, 1e+30
      %v5640 = vsel %vm5599, %v752, 1e+30
      %v5641 = vsel %vm5600, %v753, 1e+30
      %v5642 = vsel %vm5600, %v754, 1e+30
      %v5643 = vsel %vm5601, %v755, 1e+30
      %v5644 = vsel %vm5601, %v756, 1e+30
      %v5645 = vsel %vm5602, %v757, 1e+30
      %v5646 = vsel %vm5602, %v758, 1e+30
      %v5647 = vsel %vm5603, %v759, 1e+30
      %v5648 = vsel %vm5603, %v760, 1e+30
      %v5649 = vsel %vm5604, %v761, 1e+30
      %v5650 = vsel %vm5604, %v762, 1e+30
      %v5651 = vsel %vm5605, %v763, 1e+30
      %v5652 = vsel %vm5605, %v764, 1e+30
      %v5653 = vsel %vm5606, %v765, 1e+30
      %v5654 = vsel %vm5606, %v766, 1e+30
      %v5655 = vsel %vm5607, %v767, 1e+30
      %v5656 = vsel %vm5607, %v768, 1e+30
      %v5657 = vsel %vm5608, %v769, 1e+30
      %v5658 = vsel %vm5608, %v770, 1e+30
      %v5659 = vsel %vm5609, %v771, 1e+30
      %v5660 = vsel %vm5609, %v772, 1e+30
      %v5661 = vsel %vm5610, %v773, 1e+30
      %v5662 = vsel %vm5610, %v774, 1e+30
      %v5663 = vsel %vm5611, %v775, 1e+30
      %v5664 = vsel %vm5611, %v776, 1e+30
      %v5665 = vsel %vm5612, %v777, 1e+30
      %v5666 = vsel %vm5612, %v778, 1e+30
      %v5667 = vsel %vm5613, %v779, 1e+30
      %v5668 = vsel %vm5613, %v780, 1e+30
      %v5669 = vsel %vm5614, %v781, 1e+30
      %v5670 = vsel %vm5614, %v782, 1e+30
      %v5671 = vsel %vm5615, %v783, 1e+30
      %v5672 = vsel %vm5615, %v784, 1e+30
      %v5673 = vsel %vm5616, %v785, 1e+30
      %v5674 = vsel %vm5616, %v786, 1e+30
      %v5675 = vsel %vm5617, %v787, 1e+30
      %v5676 = vsel %vm5617, %v788, 1e+30
      %v5677 = vsel %vm5618, %v789, 1e+30
      %v5678 = vsel %vm5618, %v790, 1e+30
      %v5679 = vsel %vm5619, %v791, 1e+30
      %v5680 = vsel %vm5619, %v792, 1e+30
      %v5681 = vsel %vm5620, %v793, 1e+30
      %v5682 = vsel %vm5620, %v794, 1e+30
      %v5683 = vsel %vm5621, %v795, 1e+30
      %v5684 = vsel %vm5621, %v796, 1e+30
      %v5685 = vsel %vm5622, %v797, 1e+30
      %v5686 = vsel %vm5622, %v798, 1e+30
      %v5687 = vmin.f32 %v5623, %v5627
      %v5688 = vmin.f32 %v5625, %v5629
      %v5689 = vmin.f32 %v5687, %v5631
      %v5690 = vmin.f32 %v5688, %v5633
      %v5691 = vmin.f32 %v5689, %v5635
      %v5692 = vmin.f32 %v5690, %v5637
      %v5693 = vmin.f32 %v5691, %v5639
      %v5694 = vmin.f32 %v5692, %v5641
      %v5695 = vmin.f32 %v5693, %v5643
      %v5696 = vmin.f32 %v5694, %v5645
      %v5697 = vmin.f32 %v5695, %v5647
      %v5698 = vmin.f32 %v5696, %v5649
      %v5699 = vmin.f32 %v5697, %v5651
      %v5700 = vmin.f32 %v5698, %v5653
      %v5701 = vmin.f32 %v5699, %v5655
      %v5702 = vmin.f32 %v5700, %v5657
      %v5703 = vmin.f32 %v5701, %v5659
      %v5704 = vmin.f32 %v5702, %v5661
      %v5705 = vmin.f32 %v5703, %v5663
      %v5706 = vmin.f32 %v5704, %v5665
      %v5707 = vmin.f32 %v5705, %v5667
      %v5708 = vmin.f32 %v5706, %v5669
      %v5709 = vmin.f32 %v5707, %v5671
      %v5710 = vmin.f32 %v5708, %v5673
      %v5711 = vmin.f32 %v5709, %v5675
      %v5712 = vmin.f32 %v5710, %v5677
      %v5713 = vmin.f32 %v5711, %v5679
      %v5714 = vmin.f32 %v5712, %v5681
      %v5715 = vmin.f32 %v5713, %v5683
      %v5716 = vmin.f32 %v5714, %v5685
      %v5717 = vmin.f32 %v5715, %v5716
      %v5718 = vrot.slane %v5717, 4
      %v5719 = vmin.f32 %v5717, %v5718
      %v5720 = vrot.slane %v5719, 2
      %v5721 = vmin.f32 %v5719, %v5720
      %v5722 = vrot.slane %v5721, 1
      %v5723 = vmin.f32 %v5721, %v5722
      %v5724 = vmin.f32 %v5624, %v5628
      %v5725 = vmin.f32 %v5626, %v5630
      %v5726 = vmin.f32 %v5724, %v5632
      %v5727 = vmin.f32 %v5725, %v5634
      %v5728 = vmin.f32 %v5726, %v5636
      %v5729 = vmin.f32 %v5727, %v5638
      %v5730 = vmin.f32 %v5728, %v5640
      %v5731 = vmin.f32 %v5729, %v5642
      %v5732 = vmin.f32 %v5730, %v5644
      %v5733 = vmin.f32 %v5731, %v5646
      %v5734 = vmin.f32 %v5732, %v5648
      %v5735 = vmin.f32 %v5733, %v5650
      %v5736 = vmin.f32 %v5734, %v5652
      %v5737 = vmin.f32 %v5735, %v5654
      %v5738 = vmin.f32 %v5736, %v5656
      %v5739 = vmin.f32 %v5737, %v5658
      %v5740 = vmin.f32 %v5738, %v5660
      %v5741 = vmin.f32 %v5739, %v5662
      %v5742 = vmin.f32 %v5740, %v5664
      %v5743 = vmin.f32 %v5741, %v5666
      %v5744 = vmin.f32 %v5742, %v5668
      %v5745 = vmin.f32 %v5743, %v5670
      %v5746 = vmin.f32 %v5744, %v5672
      %v5747 = vmin.f32 %v5745, %v5674
      %v5748 = vmin.f32 %v5746, %v5676
      %v5749 = vmin.f32 %v5747, %v5678
      %v5750 = vmin.f32 %v5748, %v5680
      %v5751 = vmin.f32 %v5749, %v5682
      %v5752 = vmin.f32 %v5750, %v5684
      %v5753 = vmin.f32 %v5751, %v5686
      %v5754 = vmin.f32 %v5752, %v5753
      %v5755 = vrot.slane %v5754, 4
      %v5756 = vmin.f32 %v5754, %v5755
      %v5757 = vrot.slane %v5756, 2
      %v5758 = vmin.f32 %v5756, %v5757
      %v5759 = vrot.slane %v5758, 1
      %v5760 = vmin.f32 %v5758, %v5759
      %s5761 = scalar_lea.vmem [#allocation3], 4
      %v5762 = vld [vmem:[%s5761] ss:$8 sm:$0x3]
      %v5765 = vrot.slane %v5760, 7
      %vm5766 = vcmask 1040384
      %v5767 = vsel %vm5766, %v5723, %v5765
      %v5769 = vmin.f32 %v5762, %v5767
      %v5770 = vlaneseq
      %vm5771 = vcmp.ge.s32.totalorder %v5770, 0
      %vm5772 = vcmp.lt.s32.totalorder %v5770, 256
      %vm5773 = vmand %vm5771, %vm5772
      %5774 = vst.msk [vmem:[%s5761] ss:$8 sm:$0x3] %vm5773, %v5769
      %5775 = vst.msk [vmem:[%s5761] ss:$8 sm:$0x0] %vm5773, %v5769
    $region105: #{_pairwise_hausdorff_sq.1} parent=1 // pred_fallthru
      _
    %p5776 = scmp.gt.s32.totalorder %s64, 5
    // Predicated region
    $region106: #{_pairwise_hausdorff_sq.1} parent=1 // pred_check
      %p5777 = pneg %p5776
    $region107: #{_pairwise_hausdorff_sq.1} parent=1 // pred_check_branch
      %5779 = sbr.rel (%p5777) target = $region109
    $region108: #{_pairwise_hausdorff_sq.1} parent=1 // pred_region
      %v5780 = vld [vmem:[%s4] sm:$0xff]
      %v5781 = vld [vmem:[%s4 + $0x8] sm:$0xff]
      %v5782 = vld [vmem:[%s4 + $0x10] sm:$0xff]
      %v5783 = vld [vmem:[%s4 + $0x18] sm:$0xff]
      %v5784 = vld [vmem:[%s4 + $0x20] sm:$0xff]
      %v5785 = vld [vmem:[%s4 + $0x28] sm:$0xff]
      %v5786 = vld [vmem:[%s4 + $0x30] sm:$0xff]
      %v5787 = vld [vmem:[%s4 + $0x38] sm:$0xff]
      %v5788 = vld [vmem:[%s4 + $0x40] sm:$0xff]
      %v5789 = vld [vmem:[%s4 + $0x48] sm:$0xff]
      %v5790 = vld [vmem:[%s4 + $0x50] sm:$0xff]
      %v5791 = vld [vmem:[%s4 + $0x58] sm:$0xff]
      %v5792 = vld [vmem:[%s4 + $0x60] sm:$0xff]
      %v5793 = vld [vmem:[%s4 + $0x68] sm:$0xff]
      %v5794 = vld [vmem:[%s4 + $0x70] sm:$0xff]
      %v5795 = vld [vmem:[%s4 + $0x78] sm:$0xff]
      %v5796 = vld [vmem:[%s4 + $0x80] sm:$0xff]
      %v5797 = vld [vmem:[%s4 + $0x88] sm:$0xff]
      %v5798 = vld [vmem:[%s4 + $0x90] sm:$0xff]
      %v5799 = vld [vmem:[%s4 + $0x98] sm:$0xff]
      %v5800 = vld [vmem:[%s4 + $0xa0] sm:$0xff]
      %v5801 = vld [vmem:[%s4 + $0xa8] sm:$0xff]
      %v5802 = vld [vmem:[%s4 + $0xb0] sm:$0xff]
      %v5803 = vld [vmem:[%s4 + $0xb8] sm:$0xff]
      %v5804 = vld [vmem:[%s4 + $0xc0] sm:$0xff]
      %v5805 = vld [vmem:[%s4 + $0xc8] sm:$0xff]
      %v5806 = vld [vmem:[%s4 + $0xd0] sm:$0xff]
      %v5807 = vld [vmem:[%s4 + $0xd8] sm:$0xff]
      %v5808 = vld [vmem:[%s4 + $0xe0] sm:$0xff]
      %v5809 = vld [vmem:[%s4 + $0xe8] sm:$0xff]
      %v5810 = vld [vmem:[%s4 + $0xf0] sm:$0xff]
      %v5811 = vld [vmem:[%s4 + $0xf8] sm:$0xff]
      %s5812 = sld [smem:[#allocation6 + $0x5]]
      %v5813 = vstv %s5812
      %vm5814 = vcmp.eq.s32.totalorder %v5780, %v5813
      %vm5815 = vcmp.eq.s32.totalorder %v5781, %v5813
      %vm5816 = vcmp.eq.s32.totalorder %v5782, %v5813
      %vm5817 = vcmp.eq.s32.totalorder %v5783, %v5813
      %vm5818 = vcmp.eq.s32.totalorder %v5784, %v5813
      %vm5819 = vcmp.eq.s32.totalorder %v5785, %v5813
      %vm5820 = vcmp.eq.s32.totalorder %v5786, %v5813
      %vm5821 = vcmp.eq.s32.totalorder %v5787, %v5813
      %vm5822 = vcmp.eq.s32.totalorder %v5788, %v5813
      %vm5823 = vcmp.eq.s32.totalorder %v5789, %v5813
      %vm5824 = vcmp.eq.s32.totalorder %v5790, %v5813
      %vm5825 = vcmp.eq.s32.totalorder %v5791, %v5813
      %vm5826 = vcmp.eq.s32.totalorder %v5792, %v5813
      %vm5827 = vcmp.eq.s32.totalorder %v5793, %v5813
      %vm5828 = vcmp.eq.s32.totalorder %v5794, %v5813
      %vm5829 = vcmp.eq.s32.totalorder %v5795, %v5813
      %vm5830 = vcmp.eq.s32.totalorder %v5796, %v5813
      %vm5831 = vcmp.eq.s32.totalorder %v5797, %v5813
      %vm5832 = vcmp.eq.s32.totalorder %v5798, %v5813
      %vm5833 = vcmp.eq.s32.totalorder %v5799, %v5813
      %vm5834 = vcmp.eq.s32.totalorder %v5800, %v5813
      %vm5835 = vcmp.eq.s32.totalorder %v5801, %v5813
      %vm5836 = vcmp.eq.s32.totalorder %v5802, %v5813
      %vm5837 = vcmp.eq.s32.totalorder %v5803, %v5813
      %vm5838 = vcmp.eq.s32.totalorder %v5804, %v5813
      %vm5839 = vcmp.eq.s32.totalorder %v5805, %v5813
      %vm5840 = vcmp.eq.s32.totalorder %v5806, %v5813
      %vm5841 = vcmp.eq.s32.totalorder %v5807, %v5813
      %vm5842 = vcmp.eq.s32.totalorder %v5808, %v5813
      %vm5843 = vcmp.eq.s32.totalorder %v5809, %v5813
      %vm5844 = vcmp.eq.s32.totalorder %v5810, %v5813
      %vm5845 = vcmp.eq.s32.totalorder %v5811, %v5813
      %v5846 = vsel %vm5814, 1, 0
      %v5847 = vsel %vm5815, 1, 0
      %v5848 = vsel %vm5816, 1, 0
      %v5849 = vsel %vm5817, 1, 0
      %v5850 = vsel %vm5818, 1, 0
      %v5851 = vsel %vm5819, 1, 0
      %v5852 = vsel %vm5820, 1, 0
      %v5853 = vsel %vm5821, 1, 0
      %v5854 = vsel %vm5822, 1, 0
      %v5855 = vsel %vm5823, 1, 0
      %v5856 = vsel %vm5824, 1, 0
      %v5857 = vsel %vm5825, 1, 0
      %v5858 = vsel %vm5826, 1, 0
      %v5859 = vsel %vm5827, 1, 0
      %v5860 = vsel %vm5828, 1, 0
      %v5861 = vsel %vm5829, 1, 0
      %v5862 = vsel %vm5830, 1, 0
      %v5863 = vsel %vm5831, 1, 0
      %v5864 = vsel %vm5832, 1, 0
      %v5865 = vsel %vm5833, 1, 0
      %v5866 = vsel %vm5834, 1, 0
      %v5867 = vsel %vm5835, 1, 0
      %v5868 = vsel %vm5836, 1, 0
      %v5869 = vsel %vm5837, 1, 0
      %v5870 = vsel %vm5838, 1, 0
      %v5871 = vsel %vm5839, 1, 0
      %v5872 = vsel %vm5840, 1, 0
      %v5873 = vsel %vm5841, 1, 0
      %v5874 = vsel %vm5842, 1, 0
      %v5875 = vsel %vm5843, 1, 0
      %v5876 = vsel %vm5844, 1, 0
      %v5877 = vsel %vm5845, 1, 0
      %5878 = vset.pattern.permute.xlu0 0
      %5879 = vperm.xlu0 %5878, %v5846
      %v5880 = vpop.permute.xlu0 %5879
      %5881 = vset.pattern.permute.xlu0 0
      %5882 = vperm.xlu0 %5881, %v5847
      %v5883 = vpop.permute.xlu0 %5882
      %5884 = vset.pattern.permute.xlu0 0
      %5885 = vperm.xlu0 %5884, %v5848
      %v5886 = vpop.permute.xlu0 %5885
      %5887 = vset.pattern.permute.xlu0 0
      %5888 = vperm.xlu0 %5887, %v5849
      %v5889 = vpop.permute.xlu0 %5888
      %5890 = vset.pattern.permute.xlu0 0
      %5891 = vperm.xlu0 %5890, %v5850
      %v5892 = vpop.permute.xlu0 %5891
      %5893 = vset.pattern.permute.xlu0 0
      %5894 = vperm.xlu0 %5893, %v5851
      %v5895 = vpop.permute.xlu0 %5894
      %5896 = vset.pattern.permute.xlu0 0
      %5897 = vperm.xlu0 %5896, %v5852
      %v5898 = vpop.permute.xlu0 %5897
      %5899 = vset.pattern.permute.xlu0 0
      %5900 = vperm.xlu0 %5899, %v5853
      %v5901 = vpop.permute.xlu0 %5900
      %5902 = vset.pattern.permute.xlu0 0
      %5903 = vperm.xlu0 %5902, %v5854
      %v5904 = vpop.permute.xlu0 %5903
      %5905 = vset.pattern.permute.xlu0 0
      %5906 = vperm.xlu0 %5905, %v5855
      %v5907 = vpop.permute.xlu0 %5906
      %5908 = vset.pattern.permute.xlu0 0
      %5909 = vperm.xlu0 %5908, %v5856
      %v5910 = vpop.permute.xlu0 %5909
      %5911 = vset.pattern.permute.xlu0 0
      %5912 = vperm.xlu0 %5911, %v5857
      %v5913 = vpop.permute.xlu0 %5912
      %5914 = vset.pattern.permute.xlu0 0
      %5915 = vperm.xlu0 %5914, %v5858
      %v5916 = vpop.permute.xlu0 %5915
      %5917 = vset.pattern.permute.xlu0 0
      %5918 = vperm.xlu0 %5917, %v5859
      %v5919 = vpop.permute.xlu0 %5918
      %5920 = vset.pattern.permute.xlu0 0
      %5921 = vperm.xlu0 %5920, %v5860
      %v5922 = vpop.permute.xlu0 %5921
      %5923 = vset.pattern.permute.xlu0 0
      %5924 = vperm.xlu0 %5923, %v5861
      %v5925 = vpop.permute.xlu0 %5924
      %5926 = vset.pattern.permute.xlu0 0
      %5927 = vperm.xlu0 %5926, %v5862
      %v5928 = vpop.permute.xlu0 %5927
      %5929 = vset.pattern.permute.xlu0 0
      %5930 = vperm.xlu0 %5929, %v5863
      %v5931 = vpop.permute.xlu0 %5930
      %5932 = vset.pattern.permute.xlu0 0
      %5933 = vperm.xlu0 %5932, %v5864
      %v5934 = vpop.permute.xlu0 %5933
      %5935 = vset.pattern.permute.xlu0 0
      %5936 = vperm.xlu0 %5935, %v5865
      %v5937 = vpop.permute.xlu0 %5936
      %5938 = vset.pattern.permute.xlu0 0
      %5939 = vperm.xlu0 %5938, %v5866
      %v5940 = vpop.permute.xlu0 %5939
      %5941 = vset.pattern.permute.xlu0 0
      %5942 = vperm.xlu0 %5941, %v5867
      %v5943 = vpop.permute.xlu0 %5942
      %5944 = vset.pattern.permute.xlu0 0
      %5945 = vperm.xlu0 %5944, %v5868
      %v5946 = vpop.permute.xlu0 %5945
      %5947 = vset.pattern.permute.xlu0 0
      %5948 = vperm.xlu0 %5947, %v5869
      %v5949 = vpop.permute.xlu0 %5948
      %5950 = vset.pattern.permute.xlu0 0
      %5951 = vperm.xlu0 %5950, %v5870
      %v5952 = vpop.permute.xlu0 %5951
      %5953 = vset.pattern.permute.xlu0 0
      %5954 = vperm.xlu0 %5953, %v5871
      %v5955 = vpop.permute.xlu0 %5954
      %5956 = vset.pattern.permute.xlu0 0
      %5957 = vperm.xlu0 %5956, %v5872
      %v5958 = vpop.permute.xlu0 %5957
      %5959 = vset.pattern.permute.xlu0 0
      %5960 = vperm.xlu0 %5959, %v5873
      %v5961 = vpop.permute.xlu0 %5960
      %5962 = vset.pattern.permute.xlu0 0
      %5963 = vperm.xlu0 %5962, %v5874
      %v5964 = vpop.permute.xlu0 %5963
      %5965 = vset.pattern.permute.xlu0 0
      %5966 = vperm.xlu0 %5965, %v5875
      %v5967 = vpop.permute.xlu0 %5966
      %5968 = vset.pattern.permute.xlu0 0
      %5969 = vperm.xlu0 %5968, %v5876
      %v5970 = vpop.permute.xlu0 %5969
      %5971 = vset.pattern.permute.xlu0 0
      %5972 = vperm.xlu0 %5971, %v5877
      %v5973 = vpop.permute.xlu0 %5972
      %vm5974 = vcmp.eq.s32.totalorder %v5880, 1
      %vm5975 = vcmp.eq.s32.totalorder %v5883, 1
      %vm5976 = vcmp.eq.s32.totalorder %v5886, 1
      %vm5977 = vcmp.eq.s32.totalorder %v5889, 1
      %vm5978 = vcmp.eq.s32.totalorder %v5892, 1
      %vm5979 = vcmp.eq.s32.totalorder %v5895, 1
      %vm5980 = vcmp.eq.s32.totalorder %v5898, 1
      %vm5981 = vcmp.eq.s32.totalorder %v5901, 1
      %vm5982 = vcmp.eq.s32.totalorder %v5904, 1
      %vm5983 = vcmp.eq.s32.totalorder %v5907, 1
      %vm5984 = vcmp.eq.s32.totalorder %v5910, 1
      %vm5985 = vcmp.eq.s32.totalorder %v5913, 1
      %vm5986 = vcmp.eq.s32.totalorder %v5916, 1
      %vm5987 = vcmp.eq.s32.totalorder %v5919, 1
      %vm5988 = vcmp.eq.s32.totalorder %v5922, 1
      %vm5989 = vcmp.eq.s32.totalorder %v5925, 1
      %vm5990 = vcmp.eq.s32.totalorder %v5928, 1
      %vm5991 = vcmp.eq.s32.totalorder %v5931, 1
      %vm5992 = vcmp.eq.s32.totalorder %v5934, 1
      %vm5993 = vcmp.eq.s32.totalorder %v5937, 1
      %vm5994 = vcmp.eq.s32.totalorder %v5940, 1
      %vm5995 = vcmp.eq.s32.totalorder %v5943, 1
      %vm5996 = vcmp.eq.s32.totalorder %v5946, 1
      %vm5997 = vcmp.eq.s32.totalorder %v5949, 1
      %vm5998 = vcmp.eq.s32.totalorder %v5952, 1
      %vm5999 = vcmp.eq.s32.totalorder %v5955, 1
      %vm6000 = vcmp.eq.s32.totalorder %v5958, 1
      %vm6001 = vcmp.eq.s32.totalorder %v5961, 1
      %vm6002 = vcmp.eq.s32.totalorder %v5964, 1
      %vm6003 = vcmp.eq.s32.totalorder %v5967, 1
      %vm6004 = vcmp.eq.s32.totalorder %v5970, 1
      %vm6005 = vcmp.eq.s32.totalorder %v5973, 1
      %v6006 = vsel %vm5974, %v735, 1e+30
      %v6007 = vsel %vm5974, %v736, 1e+30
      %v6008 = vsel %vm5975, %v737, 1e+30
      %v6009 = vsel %vm5975, %v738, 1e+30
      %v6010 = vsel %vm5976, %v739, 1e+30
      %v6011 = vsel %vm5976, %v740, 1e+30
      %v6012 = vsel %vm5977, %v741, 1e+30
      %v6013 = vsel %vm5977, %v742, 1e+30
      %v6014 = vsel %vm5978, %v743, 1e+30
      %v6015 = vsel %vm5978, %v744, 1e+30
      %v6016 = vsel %vm5979, %v745, 1e+30
      %v6017 = vsel %vm5979, %v746, 1e+30
      %v6018 = vsel %vm5980, %v747, 1e+30
      %v6019 = vsel %vm5980, %v748, 1e+30
      %v6020 = vsel %vm5981, %v749, 1e+30
      %v6021 = vsel %vm5981, %v750, 1e+30
      %v6022 = vsel %vm5982, %v751, 1e+30
      %v6023 = vsel %vm5982, %v752, 1e+30
      %v6024 = vsel %vm5983, %v753, 1e+30
      %v6025 = vsel %vm5983, %v754, 1e+30
      %v6026 = vsel %vm5984, %v755, 1e+30
      %v6027 = vsel %vm5984, %v756, 1e+30
      %v6028 = vsel %vm5985, %v757, 1e+30
      %v6029 = vsel %vm5985, %v758, 1e+30
      %v6030 = vsel %vm5986, %v759, 1e+30
      %v6031 = vsel %vm5986, %v760, 1e+30
      %v6032 = vsel %vm5987, %v761, 1e+30
      %v6033 = vsel %vm5987, %v762, 1e+30
      %v6034 = vsel %vm5988, %v763, 1e+30
      %v6035 = vsel %vm5988, %v764, 1e+30
      %v6036 = vsel %vm5989, %v765, 1e+30
      %v6037 = vsel %vm5989, %v766, 1e+30
      %v6038 = vsel %vm5990, %v767, 1e+30
      %v6039 = vsel %vm5990, %v768, 1e+30
      %v6040 = vsel %vm5991, %v769, 1e+30
      %v6041 = vsel %vm5991, %v770, 1e+30
      %v6042 = vsel %vm5992, %v771, 1e+30
      %v6043 = vsel %vm5992, %v772, 1e+30
      %v6044 = vsel %vm5993, %v773, 1e+30
      %v6045 = vsel %vm5993, %v774, 1e+30
      %v6046 = vsel %vm5994, %v775, 1e+30
      %v6047 = vsel %vm5994, %v776, 1e+30
      %v6048 = vsel %vm5995, %v777, 1e+30
      %v6049 = vsel %vm5995, %v778, 1e+30
      %v6050 = vsel %vm5996, %v779, 1e+30
      %v6051 = vsel %vm5996, %v780, 1e+30
      %v6052 = vsel %vm5997, %v781, 1e+30
      %v6053 = vsel %vm5997, %v782, 1e+30
      %v6054 = vsel %vm5998, %v783, 1e+30
      %v6055 = vsel %vm5998, %v784, 1e+30
      %v6056 = vsel %vm5999, %v785, 1e+30
      %v6057 = vsel %vm5999, %v786, 1e+30
      %v6058 = vsel %vm6000, %v787, 1e+30
      %v6059 = vsel %vm6000, %v788, 1e+30
      %v6060 = vsel %vm6001, %v789, 1e+30
      %v6061 = vsel %vm6001, %v790, 1e+30
      %v6062 = vsel %vm6002, %v791, 1e+30
      %v6063 = vsel %vm6002, %v792, 1e+30
      %v6064 = vsel %vm6003, %v793, 1e+30
      %v6065 = vsel %vm6003, %v794, 1e+30
      %v6066 = vsel %vm6004, %v795, 1e+30
      %v6067 = vsel %vm6004, %v796, 1e+30
      %v6068 = vsel %vm6005, %v797, 1e+30
      %v6069 = vsel %vm6005, %v798, 1e+30
      %v6070 = vmin.f32 %v6006, %v6010
      %v6071 = vmin.f32 %v6008, %v6012
      %v6072 = vmin.f32 %v6070, %v6014
      %v6073 = vmin.f32 %v6071, %v6016
      %v6074 = vmin.f32 %v6072, %v6018
      %v6075 = vmin.f32 %v6073, %v6020
      %v6076 = vmin.f32 %v6074, %v6022
      %v6077 = vmin.f32 %v6075, %v6024
      %v6078 = vmin.f32 %v6076, %v6026
      %v6079 = vmin.f32 %v6077, %v6028
      %v6080 = vmin.f32 %v6078, %v6030
      %v6081 = vmin.f32 %v6079, %v6032
      %v6082 = vmin.f32 %v6080, %v6034
      %v6083 = vmin.f32 %v6081, %v6036
      %v6084 = vmin.f32 %v6082, %v6038
      %v6085 = vmin.f32 %v6083, %v6040
      %v6086 = vmin.f32 %v6084, %v6042
      %v6087 = vmin.f32 %v6085, %v6044
      %v6088 = vmin.f32 %v6086, %v6046
      %v6089 = vmin.f32 %v6087, %v6048
      %v6090 = vmin.f32 %v6088, %v6050
      %v6091 = vmin.f32 %v6089, %v6052
      %v6092 = vmin.f32 %v6090, %v6054
      %v6093 = vmin.f32 %v6091, %v6056
      %v6094 = vmin.f32 %v6092, %v6058
      %v6095 = vmin.f32 %v6093, %v6060
      %v6096 = vmin.f32 %v6094, %v6062
      %v6097 = vmin.f32 %v6095, %v6064
      %v6098 = vmin.f32 %v6096, %v6066
      %v6099 = vmin.f32 %v6097, %v6068
      %v6100 = vmin.f32 %v6098, %v6099
      %v6101 = vrot.slane %v6100, 4
      %v6102 = vmin.f32 %v6100, %v6101
      %v6103 = vrot.slane %v6102, 2
      %v6104 = vmin.f32 %v6102, %v6103
      %v6105 = vrot.slane %v6104, 1
      %v6106 = vmin.f32 %v6104, %v6105
      %v6107 = vmin.f32 %v6007, %v6011
      %v6108 = vmin.f32 %v6009, %v6013
      %v6109 = vmin.f32 %v6107, %v6015
      %v6110 = vmin.f32 %v6108, %v6017
      %v6111 = vmin.f32 %v6109, %v6019
      %v6112 = vmin.f32 %v6110, %v6021
      %v6113 = vmin.f32 %v6111, %v6023
      %v6114 = vmin.f32 %v6112, %v6025
      %v6115 = vmin.f32 %v6113, %v6027
      %v6116 = vmin.f32 %v6114, %v6029
      %v6117 = vmin.f32 %v6115, %v6031
      %v6118 = vmin.f32 %v6116, %v6033
      %v6119 = vmin.f32 %v6117, %v6035
      %v6120 = vmin.f32 %v6118, %v6037
      %v6121 = vmin.f32 %v6119, %v6039
      %v6122 = vmin.f32 %v6120, %v6041
      %v6123 = vmin.f32 %v6121, %v6043
      %v6124 = vmin.f32 %v6122, %v6045
      %v6125 = vmin.f32 %v6123, %v6047
      %v6126 = vmin.f32 %v6124, %v6049
      %v6127 = vmin.f32 %v6125, %v6051
      %v6128 = vmin.f32 %v6126, %v6053
      %v6129 = vmin.f32 %v6127, %v6055
      %v6130 = vmin.f32 %v6128, %v6057
      %v6131 = vmin.f32 %v6129, %v6059
      %v6132 = vmin.f32 %v6130, %v6061
      %v6133 = vmin.f32 %v6131, %v6063
      %v6134 = vmin.f32 %v6132, %v6065
      %v6135 = vmin.f32 %v6133, %v6067
      %v6136 = vmin.f32 %v6134, %v6069
      %v6137 = vmin.f32 %v6135, %v6136
      %v6138 = vrot.slane %v6137, 4
      %v6139 = vmin.f32 %v6137, %v6138
      %v6140 = vrot.slane %v6139, 2
      %v6141 = vmin.f32 %v6139, %v6140
      %v6142 = vrot.slane %v6141, 1
      %v6143 = vmin.f32 %v6141, %v6142
      %s6144 = scalar_lea.vmem [#allocation3], 5
      %v6145 = vld [vmem:[%s6144] ss:$8 sm:$0x3]
      %v6148 = vrot.slane %v6143, 7
      %vm6149 = vcmask 1040384
      %v6150 = vsel %vm6149, %v6106, %v6148
      %v6152 = vmin.f32 %v6145, %v6150
      %v6153 = vlaneseq
      %vm6154 = vcmp.ge.s32.totalorder %v6153, 0
      %vm6155 = vcmp.lt.s32.totalorder %v6153, 256
      %vm6156 = vmand %vm6154, %vm6155
      %6157 = vst.msk [vmem:[%s6144] ss:$8 sm:$0x3] %vm6156, %v6152
      %6158 = vst.msk [vmem:[%s6144] ss:$8 sm:$0x0] %vm6156, %v6152
    $region109: #{_pairwise_hausdorff_sq.1} parent=1 // pred_fallthru
      _
    %p6159 = scmp.gt.s32.totalorder %s64, 6
    // Predicated region
    $region110: #{_pairwise_hausdorff_sq.1} parent=1 // pred_check
      %p6160 = pneg %p6159
    $region111: #{_pairwise_hausdorff_sq.1} parent=1 // pred_check_branch
      %6162 = sbr.rel (%p6160) target = $region113
    $region112: #{_pairwise_hausdorff_sq.1} parent=1 // pred_region
      %v6163 = vld [vmem:[%s4] sm:$0xff]
      %v6164 = vld [vmem:[%s4 + $0x8] sm:$0xff]
      %v6165 = vld [vmem:[%s4 + $0x10] sm:$0xff]
      %v6166 = vld [vmem:[%s4 + $0x18] sm:$0xff]
      %v6167 = vld [vmem:[%s4 + $0x20] sm:$0xff]
      %v6168 = vld [vmem:[%s4 + $0x28] sm:$0xff]
      %v6169 = vld [vmem:[%s4 + $0x30] sm:$0xff]
      %v6170 = vld [vmem:[%s4 + $0x38] sm:$0xff]
      %v6171 = vld [vmem:[%s4 + $0x40] sm:$0xff]
      %v6172 = vld [vmem:[%s4 + $0x48] sm:$0xff]
      %v6173 = vld [vmem:[%s4 + $0x50] sm:$0xff]
      %v6174 = vld [vmem:[%s4 + $0x58] sm:$0xff]
      %v6175 = vld [vmem:[%s4 + $0x60] sm:$0xff]
      %v6176 = vld [vmem:[%s4 + $0x68] sm:$0xff]
      %v6177 = vld [vmem:[%s4 + $0x70] sm:$0xff]
      %v6178 = vld [vmem:[%s4 + $0x78] sm:$0xff]
      %v6179 = vld [vmem:[%s4 + $0x80] sm:$0xff]
      %v6180 = vld [vmem:[%s4 + $0x88] sm:$0xff]
      %v6181 = vld [vmem:[%s4 + $0x90] sm:$0xff]
      %v6182 = vld [vmem:[%s4 + $0x98] sm:$0xff]
      %v6183 = vld [vmem:[%s4 + $0xa0] sm:$0xff]
      %v6184 = vld [vmem:[%s4 + $0xa8] sm:$0xff]
      %v6185 = vld [vmem:[%s4 + $0xb0] sm:$0xff]
      %v6186 = vld [vmem:[%s4 + $0xb8] sm:$0xff]
      %v6187 = vld [vmem:[%s4 + $0xc0] sm:$0xff]
      %v6188 = vld [vmem:[%s4 + $0xc8] sm:$0xff]
      %v6189 = vld [vmem:[%s4 + $0xd0] sm:$0xff]
      %v6190 = vld [vmem:[%s4 + $0xd8] sm:$0xff]
      %v6191 = vld [vmem:[%s4 + $0xe0] sm:$0xff]
      %v6192 = vld [vmem:[%s4 + $0xe8] sm:$0xff]
      %v6193 = vld [vmem:[%s4 + $0xf0] sm:$0xff]
      %v6194 = vld [vmem:[%s4 + $0xf8] sm:$0xff]
      %s6195 = sld [smem:[#allocation6 + $0x6]]
      %v6196 = vstv %s6195
      %vm6197 = vcmp.eq.s32.totalorder %v6163, %v6196
      %vm6198 = vcmp.eq.s32.totalorder %v6164, %v6196
      %vm6199 = vcmp.eq.s32.totalorder %v6165, %v6196
      %vm6200 = vcmp.eq.s32.totalorder %v6166, %v6196
      %vm6201 = vcmp.eq.s32.totalorder %v6167, %v6196
      %vm6202 = vcmp.eq.s32.totalorder %v6168, %v6196
      %vm6203 = vcmp.eq.s32.totalorder %v6169, %v6196
      %vm6204 = vcmp.eq.s32.totalorder %v6170, %v6196
      %vm6205 = vcmp.eq.s32.totalorder %v6171, %v6196
      %vm6206 = vcmp.eq.s32.totalorder %v6172, %v6196
      %vm6207 = vcmp.eq.s32.totalorder %v6173, %v6196
      %vm6208 = vcmp.eq.s32.totalorder %v6174, %v6196
      %vm6209 = vcmp.eq.s32.totalorder %v6175, %v6196
      %vm6210 = vcmp.eq.s32.totalorder %v6176, %v6196
      %vm6211 = vcmp.eq.s32.totalorder %v6177, %v6196
      %vm6212 = vcmp.eq.s32.totalorder %v6178, %v6196
      %vm6213 = vcmp.eq.s32.totalorder %v6179, %v6196
      %vm6214 = vcmp.eq.s32.totalorder %v6180, %v6196
      %vm6215 = vcmp.eq.s32.totalorder %v6181, %v6196
      %vm6216 = vcmp.eq.s32.totalorder %v6182, %v6196
      %vm6217 = vcmp.eq.s32.totalorder %v6183, %v6196
      %vm6218 = vcmp.eq.s32.totalorder %v6184, %v6196
      %vm6219 = vcmp.eq.s32.totalorder %v6185, %v6196
      %vm6220 = vcmp.eq.s32.totalorder %v6186, %v6196
      %vm6221 = vcmp.eq.s32.totalorder %v6187, %v6196
      %vm6222 = vcmp.eq.s32.totalorder %v6188, %v6196
      %vm6223 = vcmp.eq.s32.totalorder %v6189, %v6196
      %vm6224 = vcmp.eq.s32.totalorder %v6190, %v6196
      %vm6225 = vcmp.eq.s32.totalorder %v6191, %v6196
      %vm6226 = vcmp.eq.s32.totalorder %v6192, %v6196
      %vm6227 = vcmp.eq.s32.totalorder %v6193, %v6196
      %vm6228 = vcmp.eq.s32.totalorder %v6194, %v6196
      %v6229 = vsel %vm6197, 1, 0
      %v6230 = vsel %vm6198, 1, 0
      %v6231 = vsel %vm6199, 1, 0
      %v6232 = vsel %vm6200, 1, 0
      %v6233 = vsel %vm6201, 1, 0
      %v6234 = vsel %vm6202, 1, 0
      %v6235 = vsel %vm6203, 1, 0
      %v6236 = vsel %vm6204, 1, 0
      %v6237 = vsel %vm6205, 1, 0
      %v6238 = vsel %vm6206, 1, 0
      %v6239 = vsel %vm6207, 1, 0
      %v6240 = vsel %vm6208, 1, 0
      %v6241 = vsel %vm6209, 1, 0
      %v6242 = vsel %vm6210, 1, 0
      %v6243 = vsel %vm6211, 1, 0
      %v6244 = vsel %vm6212, 1, 0
      %v6245 = vsel %vm6213, 1, 0
      %v6246 = vsel %vm6214, 1, 0
      %v6247 = vsel %vm6215, 1, 0
      %v6248 = vsel %vm6216, 1, 0
      %v6249 = vsel %vm6217, 1, 0
      %v6250 = vsel %vm6218, 1, 0
      %v6251 = vsel %vm6219, 1, 0
      %v6252 = vsel %vm6220, 1, 0
      %v6253 = vsel %vm6221, 1, 0
      %v6254 = vsel %vm6222, 1, 0
      %v6255 = vsel %vm6223, 1, 0
      %v6256 = vsel %vm6224, 1, 0
      %v6257 = vsel %vm6225, 1, 0
      %v6258 = vsel %vm6226, 1, 0
      %v6259 = vsel %vm6227, 1, 0
      %v6260 = vsel %vm6228, 1, 0
      %6261 = vset.pattern.permute.xlu0 0
      %6262 = vperm.xlu0 %6261, %v6229
      %v6263 = vpop.permute.xlu0 %6262
      %6264 = vset.pattern.permute.xlu0 0
      %6265 = vperm.xlu0 %6264, %v6230
      %v6266 = vpop.permute.xlu0 %6265
      %6267 = vset.pattern.permute.xlu0 0
      %6268 = vperm.xlu0 %6267, %v6231
      %v6269 = vpop.permute.xlu0 %6268
      %6270 = vset.pattern.permute.xlu0 0
      %6271 = vperm.xlu0 %6270, %v6232
      %v6272 = vpop.permute.xlu0 %6271
      %6273 = vset.pattern.permute.xlu0 0
      %6274 = vperm.xlu0 %6273, %v6233
      %v6275 = vpop.permute.xlu0 %6274
      %6276 = vset.pattern.permute.xlu0 0
      %6277 = vperm.xlu0 %6276, %v6234
      %v6278 = vpop.permute.xlu0 %6277
      %6279 = vset.pattern.permute.xlu0 0
      %6280 = vperm.xlu0 %6279, %v6235
      %v6281 = vpop.permute.xlu0 %6280
      %6282 = vset.pattern.permute.xlu0 0
      %6283 = vperm.xlu0 %6282, %v6236
      %v6284 = vpop.permute.xlu0 %6283
      %6285 = vset.pattern.permute.xlu0 0
      %6286 = vperm.xlu0 %6285, %v6237
      %v6287 = vpop.permute.xlu0 %6286
      %6288 = vset.pattern.permute.xlu0 0
      %6289 = vperm.xlu0 %6288, %v6238
      %v6290 = vpop.permute.xlu0 %6289
      %6291 = vset.pattern.permute.xlu0 0
      %6292 = vperm.xlu0 %6291, %v6239
      %v6293 = vpop.permute.xlu0 %6292
      %6294 = vset.pattern.permute.xlu0 0
      %6295 = vperm.xlu0 %6294, %v6240
      %v6296 = vpop.permute.xlu0 %6295
      %6297 = vset.pattern.permute.xlu0 0
      %6298 = vperm.xlu0 %6297, %v6241
      %v6299 = vpop.permute.xlu0 %6298
      %6300 = vset.pattern.permute.xlu0 0
      %6301 = vperm.xlu0 %6300, %v6242
      %v6302 = vpop.permute.xlu0 %6301
      %6303 = vset.pattern.permute.xlu0 0
      %6304 = vperm.xlu0 %6303, %v6243
      %v6305 = vpop.permute.xlu0 %6304
      %6306 = vset.pattern.permute.xlu0 0
      %6307 = vperm.xlu0 %6306, %v6244
      %v6308 = vpop.permute.xlu0 %6307
      %6309 = vset.pattern.permute.xlu0 0
      %6310 = vperm.xlu0 %6309, %v6245
      %v6311 = vpop.permute.xlu0 %6310
      %6312 = vset.pattern.permute.xlu0 0
      %6313 = vperm.xlu0 %6312, %v6246
      %v6314 = vpop.permute.xlu0 %6313
      %6315 = vset.pattern.permute.xlu0 0
      %6316 = vperm.xlu0 %6315, %v6247
      %v6317 = vpop.permute.xlu0 %6316
      %6318 = vset.pattern.permute.xlu0 0
      %6319 = vperm.xlu0 %6318, %v6248
      %v6320 = vpop.permute.xlu0 %6319
      %6321 = vset.pattern.permute.xlu0 0
      %6322 = vperm.xlu0 %6321, %v6249
      %v6323 = vpop.permute.xlu0 %6322
      %6324 = vset.pattern.permute.xlu0 0
      %6325 = vperm.xlu0 %6324, %v6250
      %v6326 = vpop.permute.xlu0 %6325
      %6327 = vset.pattern.permute.xlu0 0
      %6328 = vperm.xlu0 %6327, %v6251
      %v6329 = vpop.permute.xlu0 %6328
      %6330 = vset.pattern.permute.xlu0 0
      %6331 = vperm.xlu0 %6330, %v6252
      %v6332 = vpop.permute.xlu0 %6331
      %6333 = vset.pattern.permute.xlu0 0
      %6334 = vperm.xlu0 %6333, %v6253
      %v6335 = vpop.permute.xlu0 %6334
      %6336 = vset.pattern.permute.xlu0 0
      %6337 = vperm.xlu0 %6336, %v6254
      %v6338 = vpop.permute.xlu0 %6337
      %6339 = vset.pattern.permute.xlu0 0
      %6340 = vperm.xlu0 %6339, %v6255
      %v6341 = vpop.permute.xlu0 %6340
      %6342 = vset.pattern.permute.xlu0 0
      %6343 = vperm.xlu0 %6342, %v6256
      %v6344 = vpop.permute.xlu0 %6343
      %6345 = vset.pattern.permute.xlu0 0
      %6346 = vperm.xlu0 %6345, %v6257
      %v6347 = vpop.permute.xlu0 %6346
      %6348 = vset.pattern.permute.xlu0 0
      %6349 = vperm.xlu0 %6348, %v6258
      %v6350 = vpop.permute.xlu0 %6349
      %6351 = vset.pattern.permute.xlu0 0
      %6352 = vperm.xlu0 %6351, %v6259
      %v6353 = vpop.permute.xlu0 %6352
      %6354 = vset.pattern.permute.xlu0 0
      %6355 = vperm.xlu0 %6354, %v6260
      %v6356 = vpop.permute.xlu0 %6355
      %vm6357 = vcmp.eq.s32.totalorder %v6263, 1
      %vm6358 = vcmp.eq.s32.totalorder %v6266, 1
      %vm6359 = vcmp.eq.s32.totalorder %v6269, 1
      %vm6360 = vcmp.eq.s32.totalorder %v6272, 1
      %vm6361 = vcmp.eq.s32.totalorder %v6275, 1
      %vm6362 = vcmp.eq.s32.totalorder %v6278, 1
      %vm6363 = vcmp.eq.s32.totalorder %v6281, 1
      %vm6364 = vcmp.eq.s32.totalorder %v6284, 1
      %vm6365 = vcmp.eq.s32.totalorder %v6287, 1
      %vm6366 = vcmp.eq.s32.totalorder %v6290, 1
      %vm6367 = vcmp.eq.s32.totalorder %v6293, 1
      %vm6368 = vcmp.eq.s32.totalorder %v6296, 1
      %vm6369 = vcmp.eq.s32.totalorder %v6299, 1
      %vm6370 = vcmp.eq.s32.totalorder %v6302, 1
      %vm6371 = vcmp.eq.s32.totalorder %v6305, 1
      %vm6372 = vcmp.eq.s32.totalorder %v6308, 1
      %vm6373 = vcmp.eq.s32.totalorder %v6311, 1
      %vm6374 = vcmp.eq.s32.totalorder %v6314, 1
      %vm6375 = vcmp.eq.s32.totalorder %v6317, 1
      %vm6376 = vcmp.eq.s32.totalorder %v6320, 1
      %vm6377 = vcmp.eq.s32.totalorder %v6323, 1
      %vm6378 = vcmp.eq.s32.totalorder %v6326, 1
      %vm6379 = vcmp.eq.s32.totalorder %v6329, 1
      %vm6380 = vcmp.eq.s32.totalorder %v6332, 1
      %vm6381 = vcmp.eq.s32.totalorder %v6335, 1
      %vm6382 = vcmp.eq.s32.totalorder %v6338, 1
      %vm6383 = vcmp.eq.s32.totalorder %v6341, 1
      %vm6384 = vcmp.eq.s32.totalorder %v6344, 1
      %vm6385 = vcmp.eq.s32.totalorder %v6347, 1
      %vm6386 = vcmp.eq.s32.totalorder %v6350, 1
      %vm6387 = vcmp.eq.s32.totalorder %v6353, 1
      %vm6388 = vcmp.eq.s32.totalorder %v6356, 1
      %v6389 = vsel %vm6357, %v735, 1e+30
      %v6390 = vsel %vm6357, %v736, 1e+30
      %v6391 = vsel %vm6358, %v737, 1e+30
      %v6392 = vsel %vm6358, %v738, 1e+30
      %v6393 = vsel %vm6359, %v739, 1e+30
      %v6394 = vsel %vm6359, %v740, 1e+30
      %v6395 = vsel %vm6360, %v741, 1e+30
      %v6396 = vsel %vm6360, %v742, 1e+30
      %v6397 = vsel %vm6361, %v743, 1e+30
      %v6398 = vsel %vm6361, %v744, 1e+30
      %v6399 = vsel %vm6362, %v745, 1e+30
      %v6400 = vsel %vm6362, %v746, 1e+30
      %v6401 = vsel %vm6363, %v747, 1e+30
      %v6402 = vsel %vm6363, %v748, 1e+30
      %v6403 = vsel %vm6364, %v749, 1e+30
      %v6404 = vsel %vm6364, %v750, 1e+30
      %v6405 = vsel %vm6365, %v751, 1e+30
      %v6406 = vsel %vm6365, %v752, 1e+30
      %v6407 = vsel %vm6366, %v753, 1e+30
      %v6408 = vsel %vm6366, %v754, 1e+30
      %v6409 = vsel %vm6367, %v755, 1e+30
      %v6410 = vsel %vm6367, %v756, 1e+30
      %v6411 = vsel %vm6368, %v757, 1e+30
      %v6412 = vsel %vm6368, %v758, 1e+30
      %v6413 = vsel %vm6369, %v759, 1e+30
      %v6414 = vsel %vm6369, %v760, 1e+30
      %v6415 = vsel %vm6370, %v761, 1e+30
      %v6416 = vsel %vm6370, %v762, 1e+30
      %v6417 = vsel %vm6371, %v763, 1e+30
      %v6418 = vsel %vm6371, %v764, 1e+30
      %v6419 = vsel %vm6372, %v765, 1e+30
      %v6420 = vsel %vm6372, %v766, 1e+30
      %v6421 = vsel %vm6373, %v767, 1e+30
      %v6422 = vsel %vm6373, %v768, 1e+30
      %v6423 = vsel %vm6374, %v769, 1e+30
      %v6424 = vsel %vm6374, %v770, 1e+30
      %v6425 = vsel %vm6375, %v771, 1e+30
      %v6426 = vsel %vm6375, %v772, 1e+30
      %v6427 = vsel %vm6376, %v773, 1e+30
      %v6428 = vsel %vm6376, %v774, 1e+30
      %v6429 = vsel %vm6377, %v775, 1e+30
      %v6430 = vsel %vm6377, %v776, 1e+30
      %v6431 = vsel %vm6378, %v777, 1e+30
      %v6432 = vsel %vm6378, %v778, 1e+30
      %v6433 = vsel %vm6379, %v779, 1e+30
      %v6434 = vsel %vm6379, %v780, 1e+30
      %v6435 = vsel %vm6380, %v781, 1e+30
      %v6436 = vsel %vm6380, %v782, 1e+30
      %v6437 = vsel %vm6381, %v783, 1e+30
      %v6438 = vsel %vm6381, %v784, 1e+30
      %v6439 = vsel %vm6382, %v785, 1e+30
      %v6440 = vsel %vm6382, %v786, 1e+30
      %v6441 = vsel %vm6383, %v787, 1e+30
      %v6442 = vsel %vm6383, %v788, 1e+30
      %v6443 = vsel %vm6384, %v789, 1e+30
      %v6444 = vsel %vm6384, %v790, 1e+30
      %v6445 = vsel %vm6385, %v791, 1e+30
      %v6446 = vsel %vm6385, %v792, 1e+30
      %v6447 = vsel %vm6386, %v793, 1e+30
      %v6448 = vsel %vm6386, %v794, 1e+30
      %v6449 = vsel %vm6387, %v795, 1e+30
      %v6450 = vsel %vm6387, %v796, 1e+30
      %v6451 = vsel %vm6388, %v797, 1e+30
      %v6452 = vsel %vm6388, %v798, 1e+30
      %v6453 = vmin.f32 %v6389, %v6393
      %v6454 = vmin.f32 %v6391, %v6395
      %v6455 = vmin.f32 %v6453, %v6397
      %v6456 = vmin.f32 %v6454, %v6399
      %v6457 = vmin.f32 %v6455, %v6401
      %v6458 = vmin.f32 %v6456, %v6403
      %v6459 = vmin.f32 %v6457, %v6405
      %v6460 = vmin.f32 %v6458, %v6407
      %v6461 = vmin.f32 %v6459, %v6409
      %v6462 = vmin.f32 %v6460, %v6411
      %v6463 = vmin.f32 %v6461, %v6413
      %v6464 = vmin.f32 %v6462, %v6415
      %v6465 = vmin.f32 %v6463, %v6417
      %v6466 = vmin.f32 %v6464, %v6419
      %v6467 = vmin.f32 %v6465, %v6421
      %v6468 = vmin.f32 %v6466, %v6423
      %v6469 = vmin.f32 %v6467, %v6425
      %v6470 = vmin.f32 %v6468, %v6427
      %v6471 = vmin.f32 %v6469, %v6429
      %v6472 = vmin.f32 %v6470, %v6431
      %v6473 = vmin.f32 %v6471, %v6433
      %v6474 = vmin.f32 %v6472, %v6435
      %v6475 = vmin.f32 %v6473, %v6437
      %v6476 = vmin.f32 %v6474, %v6439
      %v6477 = vmin.f32 %v6475, %v6441
      %v6478 = vmin.f32 %v6476, %v6443
      %v6479 = vmin.f32 %v6477, %v6445
      %v6480 = vmin.f32 %v6478, %v6447
      %v6481 = vmin.f32 %v6479, %v6449
      %v6482 = vmin.f32 %v6480, %v6451
      %v6483 = vmin.f32 %v6481, %v6482
      %v6484 = vrot.slane %v6483, 4
      %v6485 = vmin.f32 %v6483, %v6484
      %v6486 = vrot.slane %v6485, 2
      %v6487 = vmin.f32 %v6485, %v6486
      %v6488 = vrot.slane %v6487, 1
      %v6489 = vmin.f32 %v6487, %v6488
      %v6490 = vmin.f32 %v6390, %v6394
      %v6491 = vmin.f32 %v6392, %v6396
      %v6492 = vmin.f32 %v6490, %v6398
      %v6493 = vmin.f32 %v6491, %v6400
      %v6494 = vmin.f32 %v6492, %v6402
      %v6495 = vmin.f32 %v6493, %v6404
      %v6496 = vmin.f32 %v6494, %v6406
      %v6497 = vmin.f32 %v6495, %v6408
      %v6498 = vmin.f32 %v6496, %v6410
      %v6499 = vmin.f32 %v6497, %v6412
      %v6500 = vmin.f32 %v6498, %v6414
      %v6501 = vmin.f32 %v6499, %v6416
      %v6502 = vmin.f32 %v6500, %v6418
      %v6503 = vmin.f32 %v6501, %v6420
      %v6504 = vmin.f32 %v6502, %v6422
      %v6505 = vmin.f32 %v6503, %v6424
      %v6506 = vmin.f32 %v6504, %v6426
      %v6507 = vmin.f32 %v6505, %v6428
      %v6508 = vmin.f32 %v6506, %v6430
      %v6509 = vmin.f32 %v6507, %v6432
      %v6510 = vmin.f32 %v6508, %v6434
      %v6511 = vmin.f32 %v6509, %v6436
      %v6512 = vmin.f32 %v6510, %v6438
      %v6513 = vmin.f32 %v6511, %v6440
      %v6514 = vmin.f32 %v6512, %v6442
      %v6515 = vmin.f32 %v6513, %v6444
      %v6516 = vmin.f32 %v6514, %v6446
      %v6517 = vmin.f32 %v6515, %v6448
      %v6518 = vmin.f32 %v6516, %v6450
      %v6519 = vmin.f32 %v6517, %v6452
      %v6520 = vmin.f32 %v6518, %v6519
      %v6521 = vrot.slane %v6520, 4
      %v6522 = vmin.f32 %v6520, %v6521
      %v6523 = vrot.slane %v6522, 2
      %v6524 = vmin.f32 %v6522, %v6523
      %v6525 = vrot.slane %v6524, 1
      %v6526 = vmin.f32 %v6524, %v6525
      %s6527 = scalar_lea.vmem [#allocation3], 6
      %v6528 = vld [vmem:[%s6527] ss:$8 sm:$0x3]
      %v6531 = vrot.slane %v6526, 7
      %vm6532 = vcmask 1040384
      %v6533 = vsel %vm6532, %v6489, %v6531
      %v6535 = vmin.f32 %v6528, %v6533
      %v6536 = vlaneseq
      %vm6537 = vcmp.ge.s32.totalorder %v6536, 0
      %vm6538 = vcmp.lt.s32.totalorder %v6536, 256
      %vm6539 = vmand %vm6537, %vm6538
      %6540 = vst.msk [vmem:[%s6527] ss:$8 sm:$0x3] %vm6539, %v6535
      %6541 = vst.msk [vmem:[%s6527] ss:$8 sm:$0x0] %vm6539, %v6535
    $region113: #{_pairwise_hausdorff_sq.1} parent=1 // pred_fallthru
      _
    %p6542 = scmp.gt.s32.totalorder %s64, 7
    // Predicated region
    $region114: #{_pairwise_hausdorff_sq.1} parent=1 // pred_check
      %p6543 = pneg %p6542
    $region115: #{_pairwise_hausdorff_sq.1} parent=1 // pred_check_branch
      %6545 = sbr.rel (%p6543) target = $region117
    $region116: #{_pairwise_hausdorff_sq.1} parent=1 // pred_region
      %v6546 = vld [vmem:[%s4] sm:$0xff]
      %v6547 = vld [vmem:[%s4 + $0x8] sm:$0xff]
      %v6548 = vld [vmem:[%s4 + $0x10] sm:$0xff]
      %v6549 = vld [vmem:[%s4 + $0x18] sm:$0xff]
      %v6550 = vld [vmem:[%s4 + $0x20] sm:$0xff]
      %v6551 = vld [vmem:[%s4 + $0x28] sm:$0xff]
      %v6552 = vld [vmem:[%s4 + $0x30] sm:$0xff]
      %v6553 = vld [vmem:[%s4 + $0x38] sm:$0xff]
      %v6554 = vld [vmem:[%s4 + $0x40] sm:$0xff]
      %v6555 = vld [vmem:[%s4 + $0x48] sm:$0xff]
      %v6556 = vld [vmem:[%s4 + $0x50] sm:$0xff]
      %v6557 = vld [vmem:[%s4 + $0x58] sm:$0xff]
      %v6558 = vld [vmem:[%s4 + $0x60] sm:$0xff]
      %v6559 = vld [vmem:[%s4 + $0x68] sm:$0xff]
      %v6560 = vld [vmem:[%s4 + $0x70] sm:$0xff]
      %v6561 = vld [vmem:[%s4 + $0x78] sm:$0xff]
      %v6562 = vld [vmem:[%s4 + $0x80] sm:$0xff]
      %v6563 = vld [vmem:[%s4 + $0x88] sm:$0xff]
      %v6564 = vld [vmem:[%s4 + $0x90] sm:$0xff]
      %v6565 = vld [vmem:[%s4 + $0x98] sm:$0xff]
      %v6566 = vld [vmem:[%s4 + $0xa0] sm:$0xff]
      %v6567 = vld [vmem:[%s4 + $0xa8] sm:$0xff]
      %v6568 = vld [vmem:[%s4 + $0xb0] sm:$0xff]
      %v6569 = vld [vmem:[%s4 + $0xb8] sm:$0xff]
      %v6570 = vld [vmem:[%s4 + $0xc0] sm:$0xff]
      %v6571 = vld [vmem:[%s4 + $0xc8] sm:$0xff]
      %v6572 = vld [vmem:[%s4 + $0xd0] sm:$0xff]
      %v6573 = vld [vmem:[%s4 + $0xd8] sm:$0xff]
      %v6574 = vld [vmem:[%s4 + $0xe0] sm:$0xff]
      %v6575 = vld [vmem:[%s4 + $0xe8] sm:$0xff]
      %v6576 = vld [vmem:[%s4 + $0xf0] sm:$0xff]
      %v6577 = vld [vmem:[%s4 + $0xf8] sm:$0xff]
      %s6578 = sld [smem:[#allocation6 + $0x7]]
      %v6579 = vstv %s6578
      %vm6580 = vcmp.eq.s32.totalorder %v6546, %v6579
      %vm6581 = vcmp.eq.s32.totalorder %v6547, %v6579
      %vm6582 = vcmp.eq.s32.totalorder %v6548, %v6579
      %vm6583 = vcmp.eq.s32.totalorder %v6549, %v6579
      %vm6584 = vcmp.eq.s32.totalorder %v6550, %v6579
      %vm6585 = vcmp.eq.s32.totalorder %v6551, %v6579
      %vm6586 = vcmp.eq.s32.totalorder %v6552, %v6579
      %vm6587 = vcmp.eq.s32.totalorder %v6553, %v6579
      %vm6588 = vcmp.eq.s32.totalorder %v6554, %v6579
      %vm6589 = vcmp.eq.s32.totalorder %v6555, %v6579
      %vm6590 = vcmp.eq.s32.totalorder %v6556, %v6579
      %vm6591 = vcmp.eq.s32.totalorder %v6557, %v6579
      %vm6592 = vcmp.eq.s32.totalorder %v6558, %v6579
      %vm6593 = vcmp.eq.s32.totalorder %v6559, %v6579
      %vm6594 = vcmp.eq.s32.totalorder %v6560, %v6579
      %vm6595 = vcmp.eq.s32.totalorder %v6561, %v6579
      %vm6596 = vcmp.eq.s32.totalorder %v6562, %v6579
      %vm6597 = vcmp.eq.s32.totalorder %v6563, %v6579
      %vm6598 = vcmp.eq.s32.totalorder %v6564, %v6579
      %vm6599 = vcmp.eq.s32.totalorder %v6565, %v6579
      %vm6600 = vcmp.eq.s32.totalorder %v6566, %v6579
      %vm6601 = vcmp.eq.s32.totalorder %v6567, %v6579
      %vm6602 = vcmp.eq.s32.totalorder %v6568, %v6579
      %vm6603 = vcmp.eq.s32.totalorder %v6569, %v6579
      %vm6604 = vcmp.eq.s32.totalorder %v6570, %v6579
      %vm6605 = vcmp.eq.s32.totalorder %v6571, %v6579
      %vm6606 = vcmp.eq.s32.totalorder %v6572, %v6579
      %vm6607 = vcmp.eq.s32.totalorder %v6573, %v6579
      %vm6608 = vcmp.eq.s32.totalorder %v6574, %v6579
      %vm6609 = vcmp.eq.s32.totalorder %v6575, %v6579
      %vm6610 = vcmp.eq.s32.totalorder %v6576, %v6579
      %vm6611 = vcmp.eq.s32.totalorder %v6577, %v6579
      %v6612 = vsel %vm6580, 1, 0
      %v6613 = vsel %vm6581, 1, 0
      %v6614 = vsel %vm6582, 1, 0
      %v6615 = vsel %vm6583, 1, 0
      %v6616 = vsel %vm6584, 1, 0
      %v6617 = vsel %vm6585, 1, 0
      %v6618 = vsel %vm6586, 1, 0
      %v6619 = vsel %vm6587, 1, 0
      %v6620 = vsel %vm6588, 1, 0
      %v6621 = vsel %vm6589, 1, 0
      %v6622 = vsel %vm6590, 1, 0
      %v6623 = vsel %vm6591, 1, 0
      %v6624 = vsel %vm6592, 1, 0
      %v6625 = vsel %vm6593, 1, 0
      %v6626 = vsel %vm6594, 1, 0
      %v6627 = vsel %vm6595, 1, 0
      %v6628 = vsel %vm6596, 1, 0
      %v6629 = vsel %vm6597, 1, 0
      %v6630 = vsel %vm6598, 1, 0
      %v6631 = vsel %vm6599, 1, 0
      %v6632 = vsel %vm6600, 1, 0
      %v6633 = vsel %vm6601, 1, 0
      %v6634 = vsel %vm6602, 1, 0
      %v6635 = vsel %vm6603, 1, 0
      %v6636 = vsel %vm6604, 1, 0
      %v6637 = vsel %vm6605, 1, 0
      %v6638 = vsel %vm6606, 1, 0
      %v6639 = vsel %vm6607, 1, 0
      %v6640 = vsel %vm6608, 1, 0
      %v6641 = vsel %vm6609, 1, 0
      %v6642 = vsel %vm6610, 1, 0
      %v6643 = vsel %vm6611, 1, 0
      %6644 = vset.pattern.permute.xlu0 0
      %6645 = vperm.xlu0 %6644, %v6612
      %v6646 = vpop.permute.xlu0 %6645
      %6647 = vset.pattern.permute.xlu0 0
      %6648 = vperm.xlu0 %6647, %v6613
      %v6649 = vpop.permute.xlu0 %6648
      %6650 = vset.pattern.permute.xlu0 0
      %6651 = vperm.xlu0 %6650, %v6614
      %v6652 = vpop.permute.xlu0 %6651
      %6653 = vset.pattern.permute.xlu0 0
      %6654 = vperm.xlu0 %6653, %v6615
      %v6655 = vpop.permute.xlu0 %6654
      %6656 = vset.pattern.permute.xlu0 0
      %6657 = vperm.xlu0 %6656, %v6616
      %v6658 = vpop.permute.xlu0 %6657
      %6659 = vset.pattern.permute.xlu0 0
      %6660 = vperm.xlu0 %6659, %v6617
      %v6661 = vpop.permute.xlu0 %6660
      %6662 = vset.pattern.permute.xlu0 0
      %6663 = vperm.xlu0 %6662, %v6618
      %v6664 = vpop.permute.xlu0 %6663
      %6665 = vset.pattern.permute.xlu0 0
      %6666 = vperm.xlu0 %6665, %v6619
      %v6667 = vpop.permute.xlu0 %6666
      %6668 = vset.pattern.permute.xlu0 0
      %6669 = vperm.xlu0 %6668, %v6620
      %v6670 = vpop.permute.xlu0 %6669
      %6671 = vset.pattern.permute.xlu0 0
      %6672 = vperm.xlu0 %6671, %v6621
      %v6673 = vpop.permute.xlu0 %6672
      %6674 = vset.pattern.permute.xlu0 0
      %6675 = vperm.xlu0 %6674, %v6622
      %v6676 = vpop.permute.xlu0 %6675
      %6677 = vset.pattern.permute.xlu0 0
      %6678 = vperm.xlu0 %6677, %v6623
      %v6679 = vpop.permute.xlu0 %6678
      %6680 = vset.pattern.permute.xlu0 0
      %6681 = vperm.xlu0 %6680, %v6624
      %v6682 = vpop.permute.xlu0 %6681
      %6683 = vset.pattern.permute.xlu0 0
      %6684 = vperm.xlu0 %6683, %v6625
      %v6685 = vpop.permute.xlu0 %6684
      %6686 = vset.pattern.permute.xlu0 0
      %6687 = vperm.xlu0 %6686, %v6626
      %v6688 = vpop.permute.xlu0 %6687
      %6689 = vset.pattern.permute.xlu0 0
      %6690 = vperm.xlu0 %6689, %v6627
      %v6691 = vpop.permute.xlu0 %6690
      %6692 = vset.pattern.permute.xlu0 0
      %6693 = vperm.xlu0 %6692, %v6628
      %v6694 = vpop.permute.xlu0 %6693
      %6695 = vset.pattern.permute.xlu0 0
      %6696 = vperm.xlu0 %6695, %v6629
      %v6697 = vpop.permute.xlu0 %6696
      %6698 = vset.pattern.permute.xlu0 0
      %6699 = vperm.xlu0 %6698, %v6630
      %v6700 = vpop.permute.xlu0 %6699
      %6701 = vset.pattern.permute.xlu0 0
      %6702 = vperm.xlu0 %6701, %v6631
      %v6703 = vpop.permute.xlu0 %6702
      %6704 = vset.pattern.permute.xlu0 0
      %6705 = vperm.xlu0 %6704, %v6632
      %v6706 = vpop.permute.xlu0 %6705
      %6707 = vset.pattern.permute.xlu0 0
      %6708 = vperm.xlu0 %6707, %v6633
      %v6709 = vpop.permute.xlu0 %6708
      %6710 = vset.pattern.permute.xlu0 0
      %6711 = vperm.xlu0 %6710, %v6634
      %v6712 = vpop.permute.xlu0 %6711
      %6713 = vset.pattern.permute.xlu0 0
      %6714 = vperm.xlu0 %6713, %v6635
      %v6715 = vpop.permute.xlu0 %6714
      %6716 = vset.pattern.permute.xlu0 0
      %6717 = vperm.xlu0 %6716, %v6636
      %v6718 = vpop.permute.xlu0 %6717
      %6719 = vset.pattern.permute.xlu0 0
      %6720 = vperm.xlu0 %6719, %v6637
      %v6721 = vpop.permute.xlu0 %6720
      %6722 = vset.pattern.permute.xlu0 0
      %6723 = vperm.xlu0 %6722, %v6638
      %v6724 = vpop.permute.xlu0 %6723
      %6725 = vset.pattern.permute.xlu0 0
      %6726 = vperm.xlu0 %6725, %v6639
      %v6727 = vpop.permute.xlu0 %6726
      %6728 = vset.pattern.permute.xlu0 0
      %6729 = vperm.xlu0 %6728, %v6640
      %v6730 = vpop.permute.xlu0 %6729
      %6731 = vset.pattern.permute.xlu0 0
      %6732 = vperm.xlu0 %6731, %v6641
      %v6733 = vpop.permute.xlu0 %6732
      %6734 = vset.pattern.permute.xlu0 0
      %6735 = vperm.xlu0 %6734, %v6642
      %v6736 = vpop.permute.xlu0 %6735
      %6737 = vset.pattern.permute.xlu0 0
      %6738 = vperm.xlu0 %6737, %v6643
      %v6739 = vpop.permute.xlu0 %6738
      %vm6740 = vcmp.eq.s32.totalorder %v6646, 1
      %vm6741 = vcmp.eq.s32.totalorder %v6649, 1
      %vm6742 = vcmp.eq.s32.totalorder %v6652, 1
      %vm6743 = vcmp.eq.s32.totalorder %v6655, 1
      %vm6744 = vcmp.eq.s32.totalorder %v6658, 1
      %vm6745 = vcmp.eq.s32.totalorder %v6661, 1
      %vm6746 = vcmp.eq.s32.totalorder %v6664, 1
      %vm6747 = vcmp.eq.s32.totalorder %v6667, 1
      %vm6748 = vcmp.eq.s32.totalorder %v6670, 1
      %vm6749 = vcmp.eq.s32.totalorder %v6673, 1
      %vm6750 = vcmp.eq.s32.totalorder %v6676, 1
      %vm6751 = vcmp.eq.s32.totalorder %v6679, 1
      %vm6752 = vcmp.eq.s32.totalorder %v6682, 1
      %vm6753 = vcmp.eq.s32.totalorder %v6685, 1
      %vm6754 = vcmp.eq.s32.totalorder %v6688, 1
      %vm6755 = vcmp.eq.s32.totalorder %v6691, 1
      %vm6756 = vcmp.eq.s32.totalorder %v6694, 1
      %vm6757 = vcmp.eq.s32.totalorder %v6697, 1
      %vm6758 = vcmp.eq.s32.totalorder %v6700, 1
      %vm6759 = vcmp.eq.s32.totalorder %v6703, 1
      %vm6760 = vcmp.eq.s32.totalorder %v6706, 1
      %vm6761 = vcmp.eq.s32.totalorder %v6709, 1
      %vm6762 = vcmp.eq.s32.totalorder %v6712, 1
      %vm6763 = vcmp.eq.s32.totalorder %v6715, 1
      %vm6764 = vcmp.eq.s32.totalorder %v6718, 1
      %vm6765 = vcmp.eq.s32.totalorder %v6721, 1
      %vm6766 = vcmp.eq.s32.totalorder %v6724, 1
      %vm6767 = vcmp.eq.s32.totalorder %v6727, 1
      %vm6768 = vcmp.eq.s32.totalorder %v6730, 1
      %vm6769 = vcmp.eq.s32.totalorder %v6733, 1
      %vm6770 = vcmp.eq.s32.totalorder %v6736, 1
      %vm6771 = vcmp.eq.s32.totalorder %v6739, 1
      %v6772 = vsel %vm6740, %v735, 1e+30
      %v6773 = vsel %vm6740, %v736, 1e+30
      %v6774 = vsel %vm6741, %v737, 1e+30
      %v6775 = vsel %vm6741, %v738, 1e+30
      %v6776 = vsel %vm6742, %v739, 1e+30
      %v6777 = vsel %vm6742, %v740, 1e+30
      %v6778 = vsel %vm6743, %v741, 1e+30
      %v6779 = vsel %vm6743, %v742, 1e+30
      %v6780 = vsel %vm6744, %v743, 1e+30
      %v6781 = vsel %vm6744, %v744, 1e+30
      %v6782 = vsel %vm6745, %v745, 1e+30
      %v6783 = vsel %vm6745, %v746, 1e+30
      %v6784 = vsel %vm6746, %v747, 1e+30
      %v6785 = vsel %vm6746, %v748, 1e+30
      %v6786 = vsel %vm6747, %v749, 1e+30
      %v6787 = vsel %vm6747, %v750, 1e+30
      %v6788 = vsel %vm6748, %v751, 1e+30
      %v6789 = vsel %vm6748, %v752, 1e+30
      %v6790 = vsel %vm6749, %v753, 1e+30
      %v6791 = vsel %vm6749, %v754, 1e+30
      %v6792 = vsel %vm6750, %v755, 1e+30
      %v6793 = vsel %vm6750, %v756, 1e+30
      %v6794 = vsel %vm6751, %v757, 1e+30
      %v6795 = vsel %vm6751, %v758, 1e+30
      %v6796 = vsel %vm6752, %v759, 1e+30
      %v6797 = vsel %vm6752, %v760, 1e+30
      %v6798 = vsel %vm6753, %v761, 1e+30
      %v6799 = vsel %vm6753, %v762, 1e+30
      %v6800 = vsel %vm6754, %v763, 1e+30
      %v6801 = vsel %vm6754, %v764, 1e+30
      %v6802 = vsel %vm6755, %v765, 1e+30
      %v6803 = vsel %vm6755, %v766, 1e+30
      %v6804 = vsel %vm6756, %v767, 1e+30
      %v6805 = vsel %vm6756, %v768, 1e+30
      %v6806 = vsel %vm6757, %v769, 1e+30
      %v6807 = vsel %vm6757, %v770, 1e+30
      %v6808 = vsel %vm6758, %v771, 1e+30
      %v6809 = vsel %vm6758, %v772, 1e+30
      %v6810 = vsel %vm6759, %v773, 1e+30
      %v6811 = vsel %vm6759, %v774, 1e+30
      %v6812 = vsel %vm6760, %v775, 1e+30
      %v6813 = vsel %vm6760, %v776, 1e+30
      %v6814 = vsel %vm6761, %v777, 1e+30
      %v6815 = vsel %vm6761, %v778, 1e+30
      %v6816 = vsel %vm6762, %v779, 1e+30
      %v6817 = vsel %vm6762, %v780, 1e+30
      %v6818 = vsel %vm6763, %v781, 1e+30
      %v6819 = vsel %vm6763, %v782, 1e+30
      %v6820 = vsel %vm6764, %v783, 1e+30
      %v6821 = vsel %vm6764, %v784, 1e+30
      %v6822 = vsel %vm6765, %v785, 1e+30
      %v6823 = vsel %vm6765, %v786, 1e+30
      %v6824 = vsel %vm6766, %v787, 1e+30
      %v6825 = vsel %vm6766, %v788, 1e+30
      %v6826 = vsel %vm6767, %v789, 1e+30
      %v6827 = vsel %vm6767, %v790, 1e+30
      %v6828 = vsel %vm6768, %v791, 1e+30
      %v6829 = vsel %vm6768, %v792, 1e+30
      %v6830 = vsel %vm6769, %v793, 1e+30
      %v6831 = vsel %vm6769, %v794, 1e+30
      %v6832 = vsel %vm6770, %v795, 1e+30
      %v6833 = vsel %vm6770, %v796, 1e+30
      %v6834 = vsel %vm6771, %v797, 1e+30
      %v6835 = vsel %vm6771, %v798, 1e+30
      %v6836 = vmin.f32 %v6772, %v6776
      %v6837 = vmin.f32 %v6774, %v6778
      %v6838 = vmin.f32 %v6836, %v6780
      %v6839 = vmin.f32 %v6837, %v6782
      %v6840 = vmin.f32 %v6838, %v6784
      %v6841 = vmin.f32 %v6839, %v6786
      %v6842 = vmin.f32 %v6840, %v6788
      %v6843 = vmin.f32 %v6841, %v6790
      %v6844 = vmin.f32 %v6842, %v6792
      %v6845 = vmin.f32 %v6843, %v6794
      %v6846 = vmin.f32 %v6844, %v6796
      %v6847 = vmin.f32 %v6845, %v6798
      %v6848 = vmin.f32 %v6846, %v6800
      %v6849 = vmin.f32 %v6847, %v6802
      %v6850 = vmin.f32 %v6848, %v6804
      %v6851 = vmin.f32 %v6849, %v6806
      %v6852 = vmin.f32 %v6850, %v6808
      %v6853 = vmin.f32 %v6851, %v6810
      %v6854 = vmin.f32 %v6852, %v6812
      %v6855 = vmin.f32 %v6853, %v6814
      %v6856 = vmin.f32 %v6854, %v6816
      %v6857 = vmin.f32 %v6855, %v6818
      %v6858 = vmin.f32 %v6856, %v6820
      %v6859 = vmin.f32 %v6857, %v6822
      %v6860 = vmin.f32 %v6858, %v6824
      %v6861 = vmin.f32 %v6859, %v6826
      %v6862 = vmin.f32 %v6860, %v6828
      %v6863 = vmin.f32 %v6861, %v6830
      %v6864 = vmin.f32 %v6862, %v6832
      %v6865 = vmin.f32 %v6863, %v6834
      %v6866 = vmin.f32 %v6864, %v6865
      %v6867 = vrot.slane %v6866, 4
      %v6868 = vmin.f32 %v6866, %v6867
      %v6869 = vrot.slane %v6868, 2
      %v6870 = vmin.f32 %v6868, %v6869
      %v6871 = vrot.slane %v6870, 1
      %v6872 = vmin.f32 %v6870, %v6871
      %v6873 = vmin.f32 %v6773, %v6777
      %v6874 = vmin.f32 %v6775, %v6779
      %v6875 = vmin.f32 %v6873, %v6781
      %v6876 = vmin.f32 %v6874, %v6783
      %v6877 = vmin.f32 %v6875, %v6785
      %v6878 = vmin.f32 %v6876, %v6787
      %v6879 = vmin.f32 %v6877, %v6789
      %v6880 = vmin.f32 %v6878, %v6791
      %v6881 = vmin.f32 %v6879, %v6793
      %v6882 = vmin.f32 %v6880, %v6795
      %v6883 = vmin.f32 %v6881, %v6797
      %v6884 = vmin.f32 %v6882, %v6799
      %v6885 = vmin.f32 %v6883, %v6801
      %v6886 = vmin.f32 %v6884, %v6803
      %v6887 = vmin.f32 %v6885, %v6805
      %v6888 = vmin.f32 %v6886, %v6807
      %v6889 = vmin.f32 %v6887, %v6809
      %v6890 = vmin.f32 %v6888, %v6811
      %v6891 = vmin.f32 %v6889, %v6813
      %v6892 = vmin.f32 %v6890, %v6815
      %v6893 = vmin.f32 %v6891, %v6817
      %v6894 = vmin.f32 %v6892, %v6819
      %v6895 = vmin.f32 %v6893, %v6821
      %v6896 = vmin.f32 %v6894, %v6823
      %v6897 = vmin.f32 %v6895, %v6825
      %v6898 = vmin.f32 %v6896, %v6827
      %v6899 = vmin.f32 %v6897, %v6829
      %v6900 = vmin.f32 %v6898, %v6831
      %v6901 = vmin.f32 %v6899, %v6833
      %v6902 = vmin.f32 %v6900, %v6835
      %v6903 = vmin.f32 %v6901, %v6902
      %v6904 = vrot.slane %v6903, 4
      %v6905 = vmin.f32 %v6903, %v6904
      %v6906 = vrot.slane %v6905, 2
      %v6907 = vmin.f32 %v6905, %v6906
      %v6908 = vrot.slane %v6907, 1
      %v6909 = vmin.f32 %v6907, %v6908
      %s6910 = scalar_lea.vmem [#allocation3], 7
      %v6911 = vld [vmem:[%s6910] ss:$8 sm:$0x3]
      %v6914 = vrot.slane %v6909, 7
      %vm6915 = vcmask 1040384
      %v6916 = vsel %vm6915, %v6872, %v6914
      %v6918 = vmin.f32 %v6911, %v6916
      %v6919 = vlaneseq
      %vm6920 = vcmp.ge.s32.totalorder %v6919, 0
      %vm6921 = vcmp.lt.s32.totalorder %v6919, 256
      %vm6922 = vmand %vm6920, %vm6921
      %6923 = vst.msk [vmem:[%s6910] ss:$8 sm:$0x3] %vm6922, %v6918
      %6924 = vst.msk [vmem:[%s6910] ss:$8 sm:$0x0] %vm6922, %v6918
    $region117: #{_pairwise_hausdorff_sq.1} parent=1 // pred_fallthru
      _
    // Predicated region
    $region118: #{_pairwise_hausdorff_sq.1} parent=1 // pred_check
      %p6925 = pneg %p66
    $region119: #{_pairwise_hausdorff_sq.1} parent=1 // pred_check_branch
      %6927 = sbr.rel (%p6925) target = $region121
    $region120: #{_pairwise_hausdorff_sq.1} parent=1 // pred_region
      %v6928 = vld [vmem:[%s3] sm:$0x3]
      %v6929 = vld [vmem:[%s12] sm:$0xff]
      %v6930 = vperm.slane %v6928, 0
      %v6931 = vperm.slane %v6928, 1
      %6932 = vset.pattern.permute.xlu0 0
      %6933 = vperm.xlu0 %6932, %v6929
      %v6934 = vpop.permute.xlu0 %6933
      %vm6935 = vcmp.eq.s32.totalorder %v6930, %v6934
      %vm6936 = vcmp.eq.s32.totalorder %v6931, %v6934
      %v6937 = vsel %vm6935, 1, 0
      %v6938 = vsel %vm6936, 1, 0
      %v6939 = vcvt.s32.f32 %v6937
      %v6940 = vcvt.s32.f32 %v6938
      %v6941 = vld [vmem:[%s5] sm:$0xff]
      %v6942 = vld [vmem:[%s5 + $0x8] sm:$0xff]
      %v6943 = vld [vmem:[%s5 + $0x10] sm:$0xff]
      %v6944 = vld [vmem:[%s5 + $0x18] sm:$0xff]
      %v6945 = vld [vmem:[%s5 + $0x20] sm:$0xff]
      %v6946 = vld [vmem:[%s5 + $0x28] sm:$0xff]
      %v6947 = vld [vmem:[%s5 + $0x30] sm:$0xff]
      %v6948 = vld [vmem:[%s5 + $0x38] sm:$0xff]
      %v6949 = vld [vmem:[%s5 + $0x40] sm:$0xff]
      %v6950 = vld [vmem:[%s5 + $0x48] sm:$0xff]
      %v6951 = vld [vmem:[%s5 + $0x50] sm:$0xff]
      %v6952 = vld [vmem:[%s5 + $0x58] sm:$0xff]
      %v6953 = vld [vmem:[%s5 + $0x60] sm:$0xff]
      %v6954 = vld [vmem:[%s5 + $0x68] sm:$0xff]
      %v6955 = vld [vmem:[%s5 + $0x70] sm:$0xff]
      %v6956 = vld [vmem:[%s5 + $0x78] sm:$0xff]
      %v6957 = vld [vmem:[%s5 + $0x80] sm:$0xff]
      %v6958 = vld [vmem:[%s5 + $0x88] sm:$0xff]
      %v6959 = vld [vmem:[%s5 + $0x90] sm:$0xff]
      %v6960 = vld [vmem:[%s5 + $0x98] sm:$0xff]
      %v6961 = vld [vmem:[%s5 + $0xa0] sm:$0xff]
      %v6962 = vld [vmem:[%s5 + $0xa8] sm:$0xff]
      %v6963 = vld [vmem:[%s5 + $0xb0] sm:$0xff]
      %v6964 = vld [vmem:[%s5 + $0xb8] sm:$0xff]
      %v6965 = vld [vmem:[%s5 + $0xc0] sm:$0xff]
      %v6966 = vld [vmem:[%s5 + $0xc8] sm:$0xff]
      %v6967 = vld [vmem:[%s5 + $0xd0] sm:$0xff]
      %v6968 = vld [vmem:[%s5 + $0xd8] sm:$0xff]
      %v6969 = vld [vmem:[%s5 + $0xe0] sm:$0xff]
      %v6970 = vld [vmem:[%s5 + $0xe8] sm:$0xff]
      %v6971 = vld [vmem:[%s5 + $0xf0] sm:$0xff]
      %v6972 = vld [vmem:[%s5 + $0xf8] sm:$0xff]
      %v6973 = vld [vmem:[%s13] sm:$0x1]
      %6974 = vset.pattern.permute.xlu0 0
      %6975 = vperm.xlu0 %6974, %v6941
      %v6976 = vpop.permute.xlu0 %6975
      %6977 = vset.pattern.permute.xlu0 0
      %6978 = vperm.xlu0 %6977, %v6942
      %v6979 = vpop.permute.xlu0 %6978
      %6980 = vset.pattern.permute.xlu0 0
      %6981 = vperm.xlu0 %6980, %v6943
      %v6982 = vpop.permute.xlu0 %6981
      %6983 = vset.pattern.permute.xlu0 0
      %6984 = vperm.xlu0 %6983, %v6944
      %v6985 = vpop.permute.xlu0 %6984
      %6986 = vset.pattern.permute.xlu0 0
      %6987 = vperm.xlu0 %6986, %v6945
      %v6988 = vpop.permute.xlu0 %6987
      %6989 = vset.pattern.permute.xlu0 0
      %6990 = vperm.xlu0 %6989, %v6946
      %v6991 = vpop.permute.xlu0 %6990
      %6992 = vset.pattern.permute.xlu0 0
      %6993 = vperm.xlu0 %6992, %v6947
      %v6994 = vpop.permute.xlu0 %6993
      %6995 = vset.pattern.permute.xlu0 0
      %6996 = vperm.xlu0 %6995, %v6948
      %v6997 = vpop.permute.xlu0 %6996
      %6998 = vset.pattern.permute.xlu0 0
      %6999 = vperm.xlu0 %6998, %v6949
      %v7000 = vpop.permute.xlu0 %6999
      %7001 = vset.pattern.permute.xlu0 0
      %7002 = vperm.xlu0 %7001, %v6950
      %v7003 = vpop.permute.xlu0 %7002
      %7004 = vset.pattern.permute.xlu0 0
      %7005 = vperm.xlu0 %7004, %v6951
      %v7006 = vpop.permute.xlu0 %7005
      %7007 = vset.pattern.permute.xlu0 0
      %7008 = vperm.xlu0 %7007, %v6952
      %v7009 = vpop.permute.xlu0 %7008
      %7010 = vset.pattern.permute.xlu0 0
      %7011 = vperm.xlu0 %7010, %v6953
      %v7012 = vpop.permute.xlu0 %7011
      %7013 = vset.pattern.permute.xlu0 0
      %7014 = vperm.xlu0 %7013, %v6954
      %v7015 = vpop.permute.xlu0 %7014
      %7016 = vset.pattern.permute.xlu0 0
      %7017 = vperm.xlu0 %7016, %v6955
      %v7018 = vpop.permute.xlu0 %7017
      %7019 = vset.pattern.permute.xlu0 0
      %7020 = vperm.xlu0 %7019, %v6956
      %v7021 = vpop.permute.xlu0 %7020
      %7022 = vset.pattern.permute.xlu0 0
      %7023 = vperm.xlu0 %7022, %v6957
      %v7024 = vpop.permute.xlu0 %7023
      %7025 = vset.pattern.permute.xlu0 0
      %7026 = vperm.xlu0 %7025, %v6958
      %v7027 = vpop.permute.xlu0 %7026
      %7028 = vset.pattern.permute.xlu0 0
      %7029 = vperm.xlu0 %7028, %v6959
      %v7030 = vpop.permute.xlu0 %7029
      %7031 = vset.pattern.permute.xlu0 0
      %7032 = vperm.xlu0 %7031, %v6960
      %v7033 = vpop.permute.xlu0 %7032
      %7034 = vset.pattern.permute.xlu0 0
      %7035 = vperm.xlu0 %7034, %v6961
      %v7036 = vpop.permute.xlu0 %7035
      %7037 = vset.pattern.permute.xlu0 0
      %7038 = vperm.xlu0 %7037, %v6962
      %v7039 = vpop.permute.xlu0 %7038
      %7040 = vset.pattern.permute.xlu0 0
      %7041 = vperm.xlu0 %7040, %v6963
      %v7042 = vpop.permute.xlu0 %7041
      %7043 = vset.pattern.permute.xlu0 0
      %7044 = vperm.xlu0 %7043, %v6964
      %v7045 = vpop.permute.xlu0 %7044
      %7046 = vset.pattern.permute.xlu0 0
      %7047 = vperm.xlu0 %7046, %v6965
      %v7048 = vpop.permute.xlu0 %7047
      %7049 = vset.pattern.permute.xlu0 0
      %7050 = vperm.xlu0 %7049, %v6966
      %v7051 = vpop.permute.xlu0 %7050
      %7052 = vset.pattern.permute.xlu0 0
      %7053 = vperm.xlu0 %7052, %v6967
      %v7054 = vpop.permute.xlu0 %7053
      %7055 = vset.pattern.permute.xlu0 0
      %7056 = vperm.xlu0 %7055, %v6968
      %v7057 = vpop.permute.xlu0 %7056
      %7058 = vset.pattern.permute.xlu0 0
      %7059 = vperm.xlu0 %7058, %v6969
      %v7060 = vpop.permute.xlu0 %7059
      %7061 = vset.pattern.permute.xlu0 0
      %7062 = vperm.xlu0 %7061, %v6970
      %v7063 = vpop.permute.xlu0 %7062
      %7064 = vset.pattern.permute.xlu0 0
      %7065 = vperm.xlu0 %7064, %v6971
      %v7066 = vpop.permute.xlu0 %7065
      %7067 = vset.pattern.permute.xlu0 0
      %7068 = vperm.xlu0 %7067, %v6972
      %v7069 = vpop.permute.xlu0 %7068
      %v7070 = vperm.slane %v6973, 0
      %vm7071 = vcmp.eq.s32.totalorder %v6976, %v7070
      %vm7072 = vcmp.eq.s32.totalorder %v6979, %v7070
      %vm7073 = vcmp.eq.s32.totalorder %v6982, %v7070
      %vm7074 = vcmp.eq.s32.totalorder %v6985, %v7070
      %vm7075 = vcmp.eq.s32.totalorder %v6988, %v7070
      %vm7076 = vcmp.eq.s32.totalorder %v6991, %v7070
      %vm7077 = vcmp.eq.s32.totalorder %v6994, %v7070
      %vm7078 = vcmp.eq.s32.totalorder %v6997, %v7070
      %vm7079 = vcmp.eq.s32.totalorder %v7000, %v7070
      %vm7080 = vcmp.eq.s32.totalorder %v7003, %v7070
      %vm7081 = vcmp.eq.s32.totalorder %v7006, %v7070
      %vm7082 = vcmp.eq.s32.totalorder %v7009, %v7070
      %vm7083 = vcmp.eq.s32.totalorder %v7012, %v7070
      %vm7084 = vcmp.eq.s32.totalorder %v7015, %v7070
      %vm7085 = vcmp.eq.s32.totalorder %v7018, %v7070
      %vm7086 = vcmp.eq.s32.totalorder %v7021, %v7070
      %vm7087 = vcmp.eq.s32.totalorder %v7024, %v7070
      %vm7088 = vcmp.eq.s32.totalorder %v7027, %v7070
      %vm7089 = vcmp.eq.s32.totalorder %v7030, %v7070
      %vm7090 = vcmp.eq.s32.totalorder %v7033, %v7070
      %vm7091 = vcmp.eq.s32.totalorder %v7036, %v7070
      %vm7092 = vcmp.eq.s32.totalorder %v7039, %v7070
      %vm7093 = vcmp.eq.s32.totalorder %v7042, %v7070
      %vm7094 = vcmp.eq.s32.totalorder %v7045, %v7070
      %vm7095 = vcmp.eq.s32.totalorder %v7048, %v7070
      %vm7096 = vcmp.eq.s32.totalorder %v7051, %v7070
      %vm7097 = vcmp.eq.s32.totalorder %v7054, %v7070
      %vm7098 = vcmp.eq.s32.totalorder %v7057, %v7070
      %vm7099 = vcmp.eq.s32.totalorder %v7060, %v7070
      %vm7100 = vcmp.eq.s32.totalorder %v7063, %v7070
      %vm7101 = vcmp.eq.s32.totalorder %v7066, %v7070
      %vm7102 = vcmp.eq.s32.totalorder %v7069, %v7070
      %v7103 = vsel %vm7071, 1, 0
      %v7104 = vsel %vm7072, 1, 0
      %v7105 = vsel %vm7073, 1, 0
      %v7106 = vsel %vm7074, 1, 0
      %v7107 = vsel %vm7075, 1, 0
      %v7108 = vsel %vm7076, 1, 0
      %v7109 = vsel %vm7077, 1, 0
      %v7110 = vsel %vm7078, 1, 0
      %v7111 = vsel %vm7079, 1, 0
      %v7112 = vsel %vm7080, 1, 0
      %v7113 = vsel %vm7081, 1, 0
      %v7114 = vsel %vm7082, 1, 0
      %v7115 = vsel %vm7083, 1, 0
      %v7116 = vsel %vm7084, 1, 0
      %v7117 = vsel %vm7085, 1, 0
      %v7118 = vsel %vm7086, 1, 0
      %v7119 = vsel %vm7087, 1, 0
      %v7120 = vsel %vm7088, 1, 0
      %v7121 = vsel %vm7089, 1, 0
      %v7122 = vsel %vm7090, 1, 0
      %v7123 = vsel %vm7091, 1, 0
      %v7124 = vsel %vm7092, 1, 0
      %v7125 = vsel %vm7093, 1, 0
      %v7126 = vsel %vm7094, 1, 0
      %v7127 = vsel %vm7095, 1, 0
      %v7128 = vsel %vm7096, 1, 0
      %v7129 = vsel %vm7097, 1, 0
      %v7130 = vsel %vm7098, 1, 0
      %v7131 = vsel %vm7099, 1, 0
      %v7132 = vsel %vm7100, 1, 0
      %v7133 = vsel %vm7101, 1, 0
      %v7134 = vsel %vm7102, 1, 0
      %v7135 = vcvt.s32.f32 %v7103
      %v7136 = vcvt.s32.f32 %v7104
      %v7137 = vcvt.s32.f32 %v7105
      %v7138 = vcvt.s32.f32 %v7106
      %v7139 = vcvt.s32.f32 %v7107
      %v7140 = vcvt.s32.f32 %v7108
      %v7141 = vcvt.s32.f32 %v7109
      %v7142 = vcvt.s32.f32 %v7110
      %v7143 = vcvt.s32.f32 %v7111
      %v7144 = vcvt.s32.f32 %v7112
      %v7145 = vcvt.s32.f32 %v7113
      %v7146 = vcvt.s32.f32 %v7114
      %v7147 = vcvt.s32.f32 %v7115
      %v7148 = vcvt.s32.f32 %v7116
      %v7149 = vcvt.s32.f32 %v7117
      %v7150 = vcvt.s32.f32 %v7118
      %v7151 = vcvt.s32.f32 %v7119
      %v7152 = vcvt.s32.f32 %v7120
      %v7153 = vcvt.s32.f32 %v7121
      %v7154 = vcvt.s32.f32 %v7122
      %v7155 = vcvt.s32.f32 %v7123
      %v7156 = vcvt.s32.f32 %v7124
      %v7157 = vcvt.s32.f32 %v7125
      %v7158 = vcvt.s32.f32 %v7126
      %v7159 = vcvt.s32.f32 %v7127
      %v7160 = vcvt.s32.f32 %v7128
      %v7161 = vcvt.s32.f32 %v7129
      %v7162 = vcvt.s32.f32 %v7130
      %v7163 = vcvt.s32.f32 %v7131
      %v7164 = vcvt.s32.f32 %v7132
      %v7165 = vcvt.s32.f32 %v7133
      %v7166 = vcvt.s32.f32 %v7134
      %v7167 = vld [vmem:[#allocation12] sm:$0xff]
      %7168 = vmatpush.msra.mxu0 %v7150
      %7169 = vmatpush.msra.mxu0 %v7149
      %7170 = vmatpush.msra.mxu0 %v7148
      %7171 = vmatpush.msra.mxu0 %v7147
      %7172 = vmatpush.msra.mxu0 %v7146
      %7173 = vmatpush.msra.mxu0 %v7145
      %7174 = vmatpush.msra.mxu0 %v7144
      %7175 = vmatpush.msra.mxu0 %v7143
      %7176 = vmatpush.msra.mxu0 %v7142
      %7177 = vmatpush.msra.mxu0 %v7141
      %7178 = vmatpush.msra.mxu0 %v7140
      %7179 = vmatpush.msra.mxu0 %v7139
      %7180 = vmatpush.msra.mxu0 %v7138
      %7181 = vmatpush.msra.mxu0 %v7137
      %7182 = vmatpush.msra.mxu0 %v7136
      %7183 = vmatpush.msra.mxu0 %v7135
      %7184 = vmatmul.f32.gmra.mxu0 %v6939
      %v7185 = vpop.f32.mrf.mxu0
      %v7186 = vadd.f32 0.0, %v7185
      %7187 = vdwg.mxu0
      %7188 = vmatpush.msra.mxu0 %v7166
      %7189 = vmatpush.msra.mxu0 %v7165
      %7190 = vmatpush.msra.mxu0 %v7164
      %7191 = vmatpush.msra.mxu0 %v7163
      %7192 = vmatpush.msra.mxu0 %v7162
      %7193 = vmatpush.msra.mxu0 %v7161
      %7194 = vmatpush.msra.mxu0 %v7160
      %7195 = vmatpush.msra.mxu0 %v7159
      %7196 = vmatpush.msra.mxu0 %v7158
      %7197 = vmatpush.msra.mxu0 %v7157
      %7198 = vmatpush.msra.mxu0 %v7156
      %7199 = vmatpush.msra.mxu0 %v7155
      %7200 = vmatpush.msra.mxu0 %v7154
      %7201 = vmatpush.msra.mxu0 %v7153
      %7202 = vmatpush.msra.mxu0 %v7152
      %7203 = vmatpush.msra.mxu0 %v7151
      %7204 = vmatmul.f32.gmra.mxu0 %v6940
      %v7205 = vpop.f32.mrf.mxu0
      %v7206 = vadd.f32 %v7186, %v7205
      %7207 = vdwg.mxu0
      %v7208 = vadd.f32 %v7167, %v7206
      %vm7209 = vcmask 64512
      %7210 = vst.msk [vmem:[#allocation12] sm:$0xff] %vm7209, %v7208
    $region121: #{_pairwise_hausdorff_sq.1} parent=1 // pred_fallthru
      _
    // Predicated region
    $region122: #{_pairwise_hausdorff_sq.1} parent=1 // pred_check
      %p7211 = pneg %p67
    $region123: #{_pairwise_hausdorff_sq.1} parent=1 // pred_check_branch
      %7213 = sbr.rel (%p7211) target = $region125
    $region124: #{_pairwise_hausdorff_sq.1} parent=1 // pred_region
      %v7214 = vlaneseq
      %v7215 = vand.u32 %v7214, 127
      %v7216 = vld [vmem:[%s8] sm:$0x3]
      %s7217 = sld [smem:[#allocation6]]
      %v7218 = vstv %s7217
      %vm7219 = vcmp.eq.s32.totalorder %v7216, %v7218
      %v7220 = vld [vmem:[#allocation2] sm:$0xff]
      %v7221 = vld [vmem:[#allocation2 + $0x8] sm:$0xff]
      %v7222 = vsel %vm7219, 1, 0
      %v7223 = vperm.slane %v7222, 0
      %v7224 = vperm.slane %v7222, 1
      %vm7225 = vcmp.eq.s32.totalorder %v7223, 1
      %vm7226 = vcmp.eq.s32.totalorder %v7224, 1
      %v7227 = vsel %vm7225, %v7220, -1.0
      %v7228 = vsel %vm7226, %v7221, -1.0
      %v7229 = vmax.f32 %v7227, %v7228
      %7230 = vmax.xlane.f32.xlu0 %v7229
      %v7231 = vpop.xlane.xlu0 %7230
      %vm7232 = vcmp.eq.s32.totalorder %v7215, 0
      %v7233 = vsel %vm7232, %v7231, -1.0
      %s7234 = sld [smem:[#allocation6 + $0x1]]
      %v7235 = vstv %s7234
      %vm7236 = vcmp.eq.s32.totalorder %v7216, %v7235
      %v7237 = vsel %vm7236, 1, 0
      %v7238 = vperm.slane %v7237, 0
      %v7239 = vperm.slane %v7237, 1
      %vm7240 = vcmp.eq.s32.totalorder %v7238, 1
      %vm7241 = vcmp.eq.s32.totalorder %v7239, 1
      %v7242 = vsel %vm7240, %v7220, -1.0
      %v7243 = vsel %vm7241, %v7221, -1.0
      %v7244 = vmax.f32 %v7242, %v7243
      %7245 = vmax.xlane.f32.xlu0 %v7244
      %v7246 = vpop.xlane.xlu0 %7245
      %vm7247 = vcmp.eq.s32.totalorder %v7215, 1
      %v7248 = vsel %vm7247, %v7246, %v7233
      %s7249 = sld [smem:[#allocation6 + $0x2]]
      %v7250 = vstv %s7249
      %vm7251 = vcmp.eq.s32.totalorder %v7216, %v7250
      %v7252 = vsel %vm7251, 1, 0
      %v7253 = vperm.slane %v7252, 0
      %v7254 = vperm.slane %v7252, 1
      %vm7255 = vcmp.eq.s32.totalorder %v7253, 1
      %vm7256 = vcmp.eq.s32.totalorder %v7254, 1
      %v7257 = vsel %vm7255, %v7220, -1.0
      %v7258 = vsel %vm7256, %v7221, -1.0
      %v7259 = vmax.f32 %v7257, %v7258
      %7260 = vmax.xlane.f32.xlu0 %v7259
      %v7261 = vpop.xlane.xlu0 %7260
      %vm7262 = vcmp.eq.s32.totalorder %v7215, 2
      %v7263 = vsel %vm7262, %v7261, %v7248
      %s7264 = sld [smem:[#allocation6 + $0x3]]
      %v7265 = vstv %s7264
      %vm7266 = vcmp.eq.s32.totalorder %v7216, %v7265
      %v7267 = vsel %vm7266, 1, 0
      %v7268 = vperm.slane %v7267, 0
      %v7269 = vperm.slane %v7267, 1
      %vm7270 = vcmp.eq.s32.totalorder %v7268, 1
      %vm7271 = vcmp.eq.s32.totalorder %v7269, 1
      %v7272 = vsel %vm7270, %v7220, -1.0
      %v7273 = vsel %vm7271, %v7221, -1.0
      %v7274 = vmax.f32 %v7272, %v7273
      %7275 = vmax.xlane.f32.xlu0 %v7274
      %v7276 = vpop.xlane.xlu0 %7275
      %vm7277 = vcmp.eq.s32.totalorder %v7215, 3
      %v7278 = vsel %vm7277, %v7276, %v7263
      %s7279 = sld [smem:[#allocation6 + $0x4]]
      %v7280 = vstv %s7279
      %vm7281 = vcmp.eq.s32.totalorder %v7216, %v7280
      %v7282 = vsel %vm7281, 1, 0
      %v7283 = vperm.slane %v7282, 0
      %v7284 = vperm.slane %v7282, 1
      %vm7285 = vcmp.eq.s32.totalorder %v7283, 1
      %vm7286 = vcmp.eq.s32.totalorder %v7284, 1
      %v7287 = vsel %vm7285, %v7220, -1.0
      %v7288 = vsel %vm7286, %v7221, -1.0
      %v7289 = vmax.f32 %v7287, %v7288
      %7290 = vmax.xlane.f32.xlu0 %v7289
      %v7291 = vpop.xlane.xlu0 %7290
      %vm7292 = vcmp.eq.s32.totalorder %v7215, 4
      %v7293 = vsel %vm7292, %v7291, %v7278
      %s7294 = sld [smem:[#allocation6 + $0x5]]
      %v7295 = vstv %s7294
      %vm7296 = vcmp.eq.s32.totalorder %v7216, %v7295
      %v7297 = vsel %vm7296, 1, 0
      %v7298 = vperm.slane %v7297, 0
      %v7299 = vperm.slane %v7297, 1
      %vm7300 = vcmp.eq.s32.totalorder %v7298, 1
      %vm7301 = vcmp.eq.s32.totalorder %v7299, 1
      %v7302 = vsel %vm7300, %v7220, -1.0
      %v7303 = vsel %vm7301, %v7221, -1.0
      %v7304 = vmax.f32 %v7302, %v7303
      %7305 = vmax.xlane.f32.xlu0 %v7304
      %v7306 = vpop.xlane.xlu0 %7305
      %vm7307 = vcmp.eq.s32.totalorder %v7215, 5
      %v7308 = vsel %vm7307, %v7306, %v7293
      %s7309 = sld [smem:[#allocation6 + $0x6]]
      %v7310 = vstv %s7309
      %vm7311 = vcmp.eq.s32.totalorder %v7216, %v7310
      %v7312 = vsel %vm7311, 1, 0
      %v7313 = vperm.slane %v7312, 0
      %v7314 = vperm.slane %v7312, 1
      %vm7315 = vcmp.eq.s32.totalorder %v7313, 1
      %vm7316 = vcmp.eq.s32.totalorder %v7314, 1
      %v7317 = vsel %vm7315, %v7220, -1.0
      %v7318 = vsel %vm7316, %v7221, -1.0
      %v7319 = vmax.f32 %v7317, %v7318
      %7320 = vmax.xlane.f32.xlu0 %v7319
      %v7321 = vpop.xlane.xlu0 %7320
      %vm7322 = vcmp.eq.s32.totalorder %v7215, 6
      %v7323 = vsel %vm7322, %v7321, %v7308
      %s7324 = sld [smem:[#allocation6 + $0x7]]
      %v7325 = vstv %s7324
      %vm7326 = vcmp.eq.s32.totalorder %v7216, %v7325
      %v7327 = vsel %vm7326, 1, 0
      %v7328 = vperm.slane %v7327, 0
      %v7329 = vperm.slane %v7327, 1
      %vm7330 = vcmp.eq.s32.totalorder %v7328, 1
      %vm7331 = vcmp.eq.s32.totalorder %v7329, 1
      %v7332 = vsel %vm7330, %v7220, -1.0
      %v7333 = vsel %vm7331, %v7221, -1.0
      %v7334 = vmax.f32 %v7332, %v7333
      %7335 = vmax.xlane.f32.xlu0 %v7334
      %v7336 = vpop.xlane.xlu0 %7335
      %vm7337 = vcmp.eq.s32.totalorder %v7215, 7
      %v7338 = vsel %vm7337, %v7336, %v7323
      %v7339 = vld [vmem:[#allocation8] sm:$0xff]
      %v7340 = vmax.f32 %v7339, %v7338
      %vm7341 = vcmask 64512
      %7342 = vst.msk [vmem:[#allocation8] sm:$0xff] %vm7341, %v7340
      %v7343 = vld [vmem:[%s9] sm:$0x3]
      %s7344 = sld [smem:[#allocation7]]
      %v7345 = vstv %s7344
      %vm7346 = vcmp.eq.s32.totalorder %v7343, %v7345
      %v7347 = vld [vmem:[#allocation3] sm:$0xff]
      %v7348 = vld [vmem:[#allocation3 + $0x8] sm:$0xff]
      %v7349 = vsel %vm7346, 1, 0
      %v7350 = vperm.slane %v7349, 0
      %v7351 = vperm.slane %v7349, 1
      %vm7352 = vcmp.eq.s32.totalorder %v7350, 1
      %vm7353 = vcmp.eq.s32.totalorder %v7351, 1
      %v7354 = vsel %vm7352, %v7347, -1.0
      %v7355 = vsel %vm7353, %v7348, -1.0
      %v7356 = vmax.f32 %v7354, %v7355
      %7357 = vmax.xlane.f32.xlu0 %v7356
      %v7358 = vpop.xlane.xlu0 %7357
      %v7359 = vsel %vm7232, %v7358, -1.0
      %s7360 = sld [smem:[#allocation7 + $0x1]]
      %v7361 = vstv %s7360
      %vm7362 = vcmp.eq.s32.totalorder %v7343, %v7361
      %v7363 = vsel %vm7362, 1, 0
      %v7364 = vperm.slane %v7363, 0
      %v7365 = vperm.slane %v7363, 1
      %vm7366 = vcmp.eq.s32.totalorder %v7364, 1
      %vm7367 = vcmp.eq.s32.totalorder %v7365, 1
      %v7368 = vsel %vm7366, %v7347, -1.0
      %v7369 = vsel %vm7367, %v7348, -1.0
      %v7370 = vmax.f32 %v7368, %v7369
      %7371 = vmax.xlane.f32.xlu0 %v7370
      %v7372 = vpop.xlane.xlu0 %7371
      %v7373 = vsel %vm7247, %v7372, %v7359
      %s7374 = sld [smem:[#allocation7 + $0x2]]
      %v7375 = vstv %s7374
      %vm7376 = vcmp.eq.s32.totalorder %v7343, %v7375
      %v7377 = vsel %vm7376, 1, 0
      %v7378 = vperm.slane %v7377, 0
      %v7379 = vperm.slane %v7377, 1
      %vm7380 = vcmp.eq.s32.totalorder %v7378, 1
      %vm7381 = vcmp.eq.s32.totalorder %v7379, 1
      %v7382 = vsel %vm7380, %v7347, -1.0
      %v7383 = vsel %vm7381, %v7348, -1.0
      %v7384 = vmax.f32 %v7382, %v7383
      %7385 = vmax.xlane.f32.xlu0 %v7384
      %v7386 = vpop.xlane.xlu0 %7385
      %v7387 = vsel %vm7262, %v7386, %v7373
      %s7388 = sld [smem:[#allocation7 + $0x3]]
      %v7389 = vstv %s7388
      %vm7390 = vcmp.eq.s32.totalorder %v7343, %v7389
      %v7391 = vsel %vm7390, 1, 0
      %v7392 = vperm.slane %v7391, 0
      %v7393 = vperm.slane %v7391, 1
      %vm7394 = vcmp.eq.s32.totalorder %v7392, 1
      %vm7395 = vcmp.eq.s32.totalorder %v7393, 1
      %v7396 = vsel %vm7394, %v7347, -1.0
      %v7397 = vsel %vm7395, %v7348, -1.0
      %v7398 = vmax.f32 %v7396, %v7397
      %7399 = vmax.xlane.f32.xlu0 %v7398
      %v7400 = vpop.xlane.xlu0 %7399
      %v7401 = vsel %vm7277, %v7400, %v7387
      %s7402 = sld [smem:[#allocation7 + $0x4]]
      %v7403 = vstv %s7402
      %vm7404 = vcmp.eq.s32.totalorder %v7343, %v7403
      %v7405 = vsel %vm7404, 1, 0
      %v7406 = vperm.slane %v7405, 0
      %v7407 = vperm.slane %v7405, 1
      %vm7408 = vcmp.eq.s32.totalorder %v7406, 1
      %vm7409 = vcmp.eq.s32.totalorder %v7407, 1
      %v7410 = vsel %vm7408, %v7347, -1.0
      %v7411 = vsel %vm7409, %v7348, -1.0
      %v7412 = vmax.f32 %v7410, %v7411
      %7413 = vmax.xlane.f32.xlu0 %v7412
      %v7414 = vpop.xlane.xlu0 %7413
      %v7415 = vsel %vm7292, %v7414, %v7401
      %s7416 = sld [smem:[#allocation7 + $0x5]]
      %v7417 = vstv %s7416
      %vm7418 = vcmp.eq.s32.totalorder %v7343, %v7417
      %v7419 = vsel %vm7418, 1, 0
      %v7420 = vperm.slane %v7419, 0
      %v7421 = vperm.slane %v7419, 1
      %vm7422 = vcmp.eq.s32.totalorder %v7420, 1
      %vm7423 = vcmp.eq.s32.totalorder %v7421, 1
      %v7424 = vsel %vm7422, %v7347, -1.0
      %v7425 = vsel %vm7423, %v7348, -1.0
      %v7426 = vmax.f32 %v7424, %v7425
      %7427 = vmax.xlane.f32.xlu0 %v7426
      %v7428 = vpop.xlane.xlu0 %7427
      %v7429 = vsel %vm7307, %v7428, %v7415
      %s7430 = sld [smem:[#allocation7 + $0x6]]
      %v7431 = vstv %s7430
      %vm7432 = vcmp.eq.s32.totalorder %v7343, %v7431
      %v7433 = vsel %vm7432, 1, 0
      %v7434 = vperm.slane %v7433, 0
      %v7435 = vperm.slane %v7433, 1
      %vm7436 = vcmp.eq.s32.totalorder %v7434, 1
      %vm7437 = vcmp.eq.s32.totalorder %v7435, 1
      %v7438 = vsel %vm7436, %v7347, -1.0
      %v7439 = vsel %vm7437, %v7348, -1.0
      %v7440 = vmax.f32 %v7438, %v7439
      %7441 = vmax.xlane.f32.xlu0 %v7440
      %v7442 = vpop.xlane.xlu0 %7441
      %v7443 = vsel %vm7322, %v7442, %v7429
      %s7444 = sld [smem:[#allocation7 + $0x7]]
      %v7445 = vstv %s7444
      %vm7446 = vcmp.eq.s32.totalorder %v7343, %v7445
      %v7447 = vsel %vm7446, 1, 0
      %v7448 = vperm.slane %v7447, 0
      %v7449 = vperm.slane %v7447, 1
      %vm7450 = vcmp.eq.s32.totalorder %v7448, 1
      %vm7451 = vcmp.eq.s32.totalorder %v7449, 1
      %v7452 = vsel %vm7450, %v7347, -1.0
      %v7453 = vsel %vm7451, %v7348, -1.0
      %v7454 = vmax.f32 %v7452, %v7453
      %7455 = vmax.xlane.f32.xlu0 %v7454
      %v7456 = vpop.xlane.xlu0 %7455
      %v7457 = vsel %vm7337, %v7456, %v7443
      %v7458 = vld [vmem:[#allocation10] sm:$0xff]
      %v7459 = vmax.f32 %v7458, %v7457
      %7460 = vst.msk [vmem:[#allocation10] sm:$0xff] %vm7341, %v7459
    $region125: #{_pairwise_hausdorff_sq.1} parent=1 // pred_fallthru
      _
    // Predicated region
    $region126: #{_pairwise_hausdorff_sq.1} parent=1 // pred_check
      _
    $region127: #{_pairwise_hausdorff_sq.1} parent=1 // pred_check_branch
      %7462 = sbr.rel (0) target = $region129
    $region128: #{_pairwise_hausdorff_sq.1} parent=1 // pred_region
      %7464 = vsyncadd [#allocation9], 0
      %s7466 = sshll.u32 [#allocation8], 4
      %s7467 = int_to_ptr.vmem [resolvable:$true] %s7466
      %s7468 = sshll.u32 %s14, 4
      %s7469 = int_to_ptr.hbm [resolvable:$true] %s7468
      %7471 = dma.vmem_to_hbm [thread:$0]  %s7467, 128, %s7469, [#allocation9]
    $region129: #{_pairwise_hausdorff_sq.1} parent=1 // pred_fallthru
      _
    // Predicated region
    $region130: #{_pairwise_hausdorff_sq.1} parent=1 // pred_check
      _
    $region131: #{_pairwise_hausdorff_sq.1} parent=1 // pred_check_branch
      %7473 = sbr.rel (0) target = $region133
    $region132: #{_pairwise_hausdorff_sq.1} parent=1 // pred_region
      %7475 = vsyncadd [#allocation11], 0
      %s7477 = sshll.u32 [#allocation10], 4
      %s7478 = int_to_ptr.vmem [resolvable:$true] %s7477
      %s7479 = sshll.u32 %s15, 4
      %s7480 = int_to_ptr.hbm [resolvable:$true] %s7479
      %7482 = dma.vmem_to_hbm [thread:$0]  %s7478, 128, %s7480, [#allocation11]
    $region133: #{_pairwise_hausdorff_sq.1} parent=1 // pred_fallthru
      _
    // Predicated region
    $region134: #{_pairwise_hausdorff_sq.1} parent=1 // pred_check
      _
    $region135: #{_pairwise_hausdorff_sq.1} parent=1 // pred_check_branch
      %7484 = sbr.rel (0) target = $region137
    $region136: #{_pairwise_hausdorff_sq.1} parent=1 // pred_region
      %7486 = vsyncadd [#allocation11], 0
      %s7488 = sshll.u32 [#allocation12], 4
      %s7489 = int_to_ptr.vmem [resolvable:$true] %s7488
      %s7490 = sshll.u32 %s16, 4
      %s7491 = int_to_ptr.hbm [resolvable:$true] %s7490
      %7493 = dma.vmem_to_hbm [thread:$0]  %s7489, 128, %s7491, [#allocation11]
    $region137: #{_pairwise_hausdorff_sq.1} parent=1 // pred_fallthru
      _
    // Predicated region
    $region138: #{_pairwise_hausdorff_sq.1} parent=1 // pred_check
      _
    $region139: #{_pairwise_hausdorff_sq.1} parent=1 // pred_check_branch
      %7495 = sbr.rel (0) target = $region141
    $region140: #{_pairwise_hausdorff_sq.1} parent=1 // pred_region
      %7497 = dma.done [#allocation9], 128
    $region141: #{_pairwise_hausdorff_sq.1} parent=1 // pred_fallthru
      _
    // Predicated region
    $region142: #{_pairwise_hausdorff_sq.1} parent=1 // pred_check
      _
    $region143: #{_pairwise_hausdorff_sq.1} parent=1 // pred_check_branch
      %7499 = sbr.rel (0) target = $region145
    $region144: #{_pairwise_hausdorff_sq.1} parent=1 // pred_region
      %7501 = dma.done [#allocation11], 128
    $region145: #{_pairwise_hausdorff_sq.1} parent=1 // pred_fallthru
      _
    // Predicated region
    $region146: #{_pairwise_hausdorff_sq.1} parent=1 // pred_check
      _
    $region147: #{_pairwise_hausdorff_sq.1} parent=1 // pred_check_branch
      %7503 = sbr.rel (0) target = $region149
    $region148: #{_pairwise_hausdorff_sq.1} parent=1 // pred_region
      %7505 = dma.done [#allocation11], 128
    $region149: #{_pairwise_hausdorff_sq.1} parent=1 // pred_fallthru
      _
    %7506 = vsyncpa [#allocation9], 1
    %7507 = vsyncpa [#allocation11], 1

</llo_original>
